<compile_context>
chip_gen: v5e
topology: v5e:2x2
jax: 0.10.0
libtpu: 0.0.40
codegen_flags: <defaults>
</compile_context>

<pallas_src>
import jax
import jax.numpy as jnp
from jax import lax
from jax.experimental import pallas as pl
from jax.experimental.pallas import tpu as pltpu

N_EXP = 50
N_SHAPE = 300

# 224-branch backbone channel widths, zero-padded to lane-tile (128) multiples.
POSE_C, POSE_CP = 576, 640
BIG_C, BIG_CP = 960, 1024
C224P = POSE_CP + 2 * BIG_CP          # 2688

SMALL_OUT = 6 + N_SHAPE + (N_EXP + 5)  # 361  (pose_cam | shape | expr)
SMALL_PAD = 384                        # padded to a 128 multiple
TOK_OUT = 5 * 512                      # 2560
OUT_W = SMALL_PAD + TOK_OUT            # 2944  (23 * 128, lane-dense)


# ----------------------------- fused kernel ------------------------------

def smirk_fused_kernel(
    a224_ref, a1_ref, a2_ref, a5_ref,            # pooled patch activations (bf16)
    wbb224_ref, bbb224_ref,                      # merged pose/shape/expr backbone
    wbb12_ref, bbb12_ref,                        # merged f1|f2 backbone
    wbb34_ref, bbb34_ref,                        # merged f3|f4 backbone
    wbb5_ref, bbb5_ref,                          # f5 backbone
    wpose_ref, bpose_ref,
    wshape_ref, bshape_ref,
    wexpr_ref, bexpr_ref,
    wt0_ref, wt1_ref, wt2_ref, wt3_ref, wt4_ref, btok_ref,
    out_ref,
):
    f32 = jnp.float32
    bf16 = jnp.bfloat16
    B = out_ref.shape[0]

    def mm(x, w, b=None):
        y = jnp.dot(x, w, preferred_element_type=f32)
        return y if b is None else y + b

    # -------- 224 branch (pose / shape / expr); 1x1 pool pre-folded --------
    f224 = mm(a224_ref[...], wbb224_ref[...], bbb224_ref[...]).astype(bf16)  # (B, 2688)
    pose_cam = mm(f224[:, 0:POSE_CP], wpose_ref[...], bpose_ref[...])                 # (B, 6)
    shape_p = mm(f224[:, POSE_CP:POSE_CP + BIG_CP], wshape_ref[...], bshape_ref[...])  # (B, 300)
    expr_p = mm(f224[:, POSE_CP + BIG_CP:C224P], wexpr_ref[...], bexpr_ref[...])       # (B, 55)

    # expression post-processing on the full (B,55) slab:
    #   cols [0,50): identity; [50,52): clamp[0,1]; 52: relu; [53,55): clamp[-0.2,0.2]
    col = lax.broadcasted_iota(jnp.int32, expr_p.shape, 1)
    expr_t = jnp.where(
        col < N_EXP, expr_p,
        jnp.where(col < N_EXP + 2, jnp.clip(expr_p, 0.0, 1.0),
                  jnp.where(col == N_EXP + 2, jnp.maximum(expr_p, 0.0),
                            jnp.clip(expr_p, -0.2, 0.2))))

    # -------- 512 branch (token encoder) --------
    # f1|f2 (1x1 pool pre-folded): one (B,192)@(192,1536) GEMM; aligned splits.
    f12 = mm(a1_ref[...], wbb12_ref[...], bbb12_ref[...]).astype(bf16)       # (B, 1536)
    t0 = mm(f12[:, 0:1024], wt0_ref[...])
    t1 = mm(f12[:, 1024:1536], wt1_ref[...])

    # f3|f4 (2x2 pool pre-folded onto activations; one cell per leading index).
    # Head applied per cell and accumulated == torch flatten(1) @ head.
    t2 = jnp.zeros((B, 512), f32)
    t3 = jnp.zeros((B, 512), f32)
    for k in range(4):
        f34 = mm(a2_ref[k], wbb34_ref[...], bbb34_ref[...]).astype(bf16)     # (B, 384)
        t2 = t2 + mm(f34[:, 0:256], wt2_ref[k])
        t3 = t3 + mm(f34[:, 256:384], wt3_ref[k])

    # f5 (4x4 pool pre-folded): 16 pooled cells.
    t4 = jnp.zeros((B, 512), f32)
    for k in range(16):
        f5 = mm(a5_ref[k], wbb5_ref[...], bbb5_ref[...]).astype(bf16)        # (B, 32)
        t4 = t4 + mm(f5, wt4_ref[k])

    # -------- single lane-dense output slab --------
    out_ref[:, 0:SMALL_PAD] = jnp.concatenate(
        [pose_cam, shape_p, expr_t,
         jnp.zeros((B, SMALL_PAD - SMALL_OUT), f32)], axis=-1)
    toks = (t0, t1, t2, t3, t4)
    for i in range(5):
        lo = SMALL_PAD + i * 512
        out_ref[:, lo:lo + 512] = toks[i] + btok_ref[:, i * 512:(i + 1) * 512]


# ------------------------------- glue -----------------------------------

def extract_pooled_patches(img, patch, out_hw):
    """Patch-extract + adaptive-avg-pool fold.

    The stand-in backbones are per-patch linear (patch-embedding GEMMs), so
    adaptive_avg_pool2d over the feature grid commutes with the GEMM; the
    pooling is therefore applied to the raw patch vectors here, in the wrapper.
    Returns (oh*ow, B, patch*patch*C) with cells in (oh, ow) row-major order.
    Requires the patch grid to be divisible by the pool output size (true for
    the 224/512-style inputs and for the small test images used below).
    """
    B, H, W, C = img.shape
    Hp, Wp = H // patch, W // patch
    oh, ow = out_hw
    bh, bw = Hp // oh, Wp // ow
    x = img.reshape(B, oh, bh, patch, ow, bw, patch, C)
    x = x.transpose(1, 4, 0, 2, 5, 3, 6, 7)       # (oh, ow, B, bh, bw, ph, pw, C)
    x = x.mean(axis=(3, 4))                       # (oh, ow, B, ph, pw, C)
    return x.reshape(oh * ow, B, patch * patch * C)


def smirk_encoder_forward(params, img, img_512):
    B = img.shape[0]
    bf16 = jnp.bfloat16
    # bf16 casts hoisted into the wrapper (halves activation DMA bytes).
    a224 = extract_pooled_patches(img, 4, (1, 1))[0].astype(bf16)      # (B, 48)
    a1 = extract_pooled_patches(img_512, 8, (1, 1))[0].astype(bf16)    # (B, 192)
    a2 = extract_pooled_patches(img_512, 8, (2, 2)).astype(bf16)       # (4, B, 192)
    a5 = extract_pooled_patches(img_512, 4, (4, 4)).astype(bf16)       # (16, B, 48)

    out = pl.pallas_call(
        smirk_fused_kernel,
        out_shape=jax.ShapeDtypeStruct((B, OUT_W), jnp.float32),
        in_specs=[pl.BlockSpec(memory_space=pltpu.MemorySpace.VMEM)] * 24,
        out_specs=pl.BlockSpec(memory_space=pltpu.MemorySpace.VMEM),
        compiler_params=pltpu.CompilerParams(vmem_limit_bytes=32 * 1024 * 1024),
    )(
        a224, a1, a2, a5,
        params['w_bb224'], params['b_bb224'],
        params['w_bb12'], params['b_bb12'],
        params['w_bb34'], params['b_bb34'],
        params['w_bb5'], params['b_bb5'],
        params['w_pose'], params['b_pose'],
        params['w_shape'], params['b_shape'],
        params['w_expr'], params['b_expr'],
        params['w_t0'], params['w_t1'], params['w_t2'], params['w_t3'],
        params['w_t4'], params['b_tok'],
    )

    pose_cam = out[:, 0:6]
    shape_p = out[:, 6:6 + N_SHAPE]
    expr = out[:, 6 + N_SHAPE:SMALL_OUT]
    tok = out[:, SMALL_PAD:OUT_W].reshape(B, 5, 512).transpose(1, 0, 2)   # (5, B, 512)

    return {
        'pose_params': pose_cam[:, :3],
        'cam': pose_cam[:, 3:],
        'shape_params': shape_p,
        'expression_params': expr[:, :N_EXP],
        'eyelid_params': expr[:, N_EXP:N_EXP + 2],
        'jaw_params': expr[:, N_EXP + 2:N_EXP + 5],
        'token': tok,
    }


# --------------------------- parameter init ------------------------------

def linear_params(key, fan_in, fan_out):
    kw, kb = jax.random.split(key)
    bound = 1.0 / jnp.sqrt(jnp.float32(fan_in))
    w = jax.random.uniform(kw, (fan_in, fan_out), jnp.float32, -bound, bound)
    b = jax.random.uniform(kb, (fan_out,), jnp.float32, -bound, bound)
    return w, b


def init_smirk_params(key, n_exp=N_EXP, n_shape=N_SHAPE):
    keys = jax.random.split(key, 16)
    params = {}
    # synthetic backbones (patch-embedding GEMM stand-ins for the timm models)
    params['pose_bb'] = linear_params(keys[0], 4 * 4 * 3, POSE_C)   # mobilenetv3 small minimal
    params['shape_bb'] = linear_params(keys[1], 4 * 4 * 3, BIG_C)   # mobilenetv3 large minimal
    params['expr_bb'] = linear_params(keys[2], 4 * 4 * 3, BIG_C)    # mobilenetv3 large minimal
    params['tok_bb'] = {                                            # ResNet50 stand-in pyramid
        'f1': linear_params(keys[3], 8 * 8 * 3, 1024),
        'f2': linear_params(keys[4], 8 * 8 * 3, 512),
        'f3': linear_params(keys[5], 8 * 8 * 3, 256),
        'f4': linear_params(keys[6], 8 * 8 * 3, 128),
        'f5': linear_params(keys[7], 4 * 4 * 3, 32),
    }
    # PoseEncoder head: Linear(576, 6); w*=1e-3, b*=1e-3, w[3]=0, b[3]=7
    w, b = linear_params(keys[8], POSE_C, 6)
    w, b = w * 0.001, b * 0.001
    w = w.at[:, 3].set(0.0)
    b = b.at[3].set(7.0)
    params['pose_head'] = (w, b)
    # ShapeEncoder head: Linear(960, n_shape); zeroed
    w, b = linear_params(keys[9], BIG_C, n_shape)
    params['shape_head'] = (w * 0.0, b * 0.0)
    # ExpressionEncoder head: Linear(960, n_exp+2+3); *0.1
    w, b = linear_params(keys[10], BIG_C, n_exp + 2 + 3)
    params['expr_head'] = (w * 0.1, b * 0.1)
    # TokenEncoder heads: Linear(d, 512); w*=1e-3, b*=1e-3, w[3]=0, b[3]=7
    dims = [1024, 512, 1024, 512, 512]
    tok_heads = []
    for i, d in enumerate(dims):
        w, b = linear_params(keys[11 + i], d, 512)
        w, b = w * 0.001, b * 0.001
        w = w.at[:, 3].set(0.0)
        b = b.at[3].set(7.0)
        tok_heads.append((w, b))
    params['token_heads'] = tok_heads
    return params


def _pad_cols(x, n):
    return jnp.pad(x, ((0, 0), (0, n - x.shape[1])))


def _pad_rows(x, n):
    return jnp.pad(x, ((0, n - x.shape[0]), (0, 0)))


def _head_rows_to_cells(w, C, oh, ow):
    # torch flatten(1) of the adaptive_avg_pool2d output orders fan-in as
    # (C, oh, ow); the kernel consumes per-cell (cell, C) blocks, so reorder
    # the (static) weight rows once at pack time.
    n = w.shape[1]
    return w.reshape(C, oh, ow, n).transpose(1, 2, 0, 3).reshape(oh * ow, C, n)


def pack_params(raw):
    bf16 = jnp.bfloat16
    w_p, b_p = raw['pose_bb']
    w_s, b_s = raw['shape_bb']
    w_e, b_e = raw['expr_bb']
    # merged 224-image backbone, each segment zero-padded to a 128 multiple
    w_bb224 = jnp.concatenate(
        [_pad_cols(w_p, POSE_CP), _pad_cols(w_s, BIG_CP), _pad_cols(w_e, BIG_CP)],
        axis=1).astype(bf16)                                                  # (48, 2688)
    b_bb224 = jnp.concatenate(
        [jnp.pad(b_p, (0, POSE_CP - POSE_C)), jnp.pad(b_s, (0, BIG_CP - BIG_C)),
         jnp.pad(b_e, (0, BIG_CP - BIG_C))]).reshape(1, -1)
    t = raw['tok_bb']
    w_bb12 = jnp.concatenate([t['f1'][0], t['f2'][0]], axis=1).astype(bf16)   # (192, 1536)
    b_bb12 = jnp.concatenate([t['f1'][1], t['f2'][1]]).reshape(1, -1)
    w_bb34 = jnp.concatenate([t['f3'][0], t['f4'][0]], axis=1).astype(bf16)   # (192, 384)
    b_bb34 = jnp.concatenate([t['f3'][1], t['f4'][1]]).reshape(1, -1)
    w_bb5 = t['f5'][0].astype(bf16)                                           # (48, 32)
    b_bb5 = t['f5'][1].reshape(1, -1)
    # heads: fan-in zero-padded to the padded backbone widths (keeps slices aligned)
    w_pose, b_pose = raw['pose_head']
    w_shape, b_shape = raw['shape_head']
    w_expr, b_expr = raw['expr_head']
    th = raw['token_heads']
    return {
        'w_bb224': w_bb224, 'b_bb224': b_bb224,
        'w_bb12': w_bb12, 'b_bb12': b_bb12,
        'w_bb34': w_bb34, 'b_bb34': b_bb34,
        'w_bb5': w_bb5, 'b_bb5': b_bb5,
        'w_pose': _pad_rows(w_pose, POSE_CP).astype(bf16), 'b_pose': b_pose.reshape(1, -1),
        'w_shape': _pad_rows(w_shape, BIG_CP).astype(bf16), 'b_shape': b_shape.reshape(1, -1),
        'w_expr': _pad_rows(w_expr, BIG_CP).astype(bf16), 'b_expr': b_expr.reshape(1, -1),
        'w_t0': th[0][0].astype(bf16),
        'w_t1': th[1][0].astype(bf16),
        'w_t2': _head_rows_to_cells(th[2][0], 256, 2, 2).astype(bf16),   # (4, 256, 512)
        'w_t3': _head_rows_to_cells(th[3][0], 128, 2, 2).astype(bf16),   # (4, 128, 512)
        'w_t4': _head_rows_to_cells(th[4][0], 32, 4, 4).astype(bf16),    # (16, 32, 512)
        'b_tok': jnp.concatenate([th[i][1] for i in range(5)]).reshape(1, -1),  # (1, 2560)
    }


# -------------------------------- main -----------------------------------

if __name__ == "__main__":
    key = jax.random.PRNGKey(0)
    kp, k1, k2 = jax.random.split(key, 3)
    params = pack_params(init_smirk_params(kp))

    # small stand-in images (NHWC); patch grids 4x4 (img) and 4x4 / 8x8 (img_512)
    img = jax.random.normal(k1, (2, 16, 16, 3), jnp.float32)
    img_512 = jax.random.normal(k2, (2, 32, 32, 3), jnp.float32)

    out = jax.jit(smirk_encoder_forward)(params, img, img_512)
    out = jax.block_until_ready(out)

    assert out['pose_params'].shape == (2, 3)
    assert out['cam'].shape == (2, 3)
    assert out['shape_params'].shape == (2, N_SHAPE)
    assert out['expression_params'].shape == (2, N_EXP)
    assert out['eyelid_params'].shape == (2, 2)
    assert out['jaw_params'].shape == (2, 3)
    assert out['token'].shape == (5, 2, 512)
    # shape head is zero-initialized exactly like the PyTorch module
    assert bool(jnp.all(out['shape_params'] == 0.0))
    # token/pose heads force output index 3: zeroed weight column, bias = 7
    assert bool(jnp.allclose(out['token'][:, :, 3], 7.0))
    assert bool(jnp.allclose(out['cam'][:, 0], 7.0))
    # eyelid / jaw post-processing ranges
    assert bool(jnp.all((out['eyelid_params'] >= 0.0) & (out['eyelid_params'] <= 1.0)))
    assert bool(jnp.all(out['jaw_params'][:, 0] >= 0.0))
    assert bool(jnp.all(jnp.abs(out['jaw_params'][:, 1:]) <= 0.2))

    print("KERNEL_OK")
</pallas_src>

<mosaic_0001>
module attributes {stable_mosaic.version = 11 : i64} {
  func.func @smirk_fused_kernel(%arg0: memref<2x48xbf16, #tpu.memory_space<vmem>>, %arg1: memref<2x192xbf16, #tpu.memory_space<vmem>>, %arg2: memref<4x2x192xbf16, #tpu.memory_space<vmem>>, %arg3: memref<16x2x48xbf16, #tpu.memory_space<vmem>>, %arg4: memref<48x2688xbf16, #tpu.memory_space<vmem>>, %arg5: memref<1x2688xf32, #tpu.memory_space<vmem>>, %arg6: memref<192x1536xbf16, #tpu.memory_space<vmem>>, %arg7: memref<1x1536xf32, #tpu.memory_space<vmem>>, %arg8: memref<192x384xbf16, #tpu.memory_space<vmem>>, %arg9: memref<1x384xf32, #tpu.memory_space<vmem>>, %arg10: memref<48x32xbf16, #tpu.memory_space<vmem>>, %arg11: memref<1x32xf32, #tpu.memory_space<vmem>>, %arg12: memref<640x6xbf16, #tpu.memory_space<vmem>>, %arg13: memref<1x6xf32, #tpu.memory_space<vmem>>, %arg14: memref<1024x300xbf16, #tpu.memory_space<vmem>>, %arg15: memref<1x300xf32, #tpu.memory_space<vmem>>, %arg16: memref<1024x55xbf16, #tpu.memory_space<vmem>>, %arg17: memref<1x55xf32, #tpu.memory_space<vmem>>, %arg18: memref<1024x512xbf16, #tpu.memory_space<vmem>>, %arg19: memref<512x512xbf16, #tpu.memory_space<vmem>>, %arg20: memref<4x256x512xbf16, #tpu.memory_space<vmem>>, %arg21: memref<4x128x512xbf16, #tpu.memory_space<vmem>>, %arg22: memref<16x32x512xbf16, #tpu.memory_space<vmem>>, %arg23: memref<1x2560xf32, #tpu.memory_space<vmem>>, %arg24: memref<2x2944xf32, #tpu.memory_space<vmem>>) attributes {dimension_semantics = [], scalar_prefetch = 0 : i64, scratch_operands = 0 : i64, tpu.core_type = #tpu.core_type<tc>} {
    %c0 = arith.constant 0 : index
    %c0_0 = arith.constant 0 : index
    %0 = vector.load %arg0[%c0, %c0_0] : memref<2x48xbf16, #tpu.memory_space<vmem>>, vector<2x48xbf16>
    %c0_1 = arith.constant 0 : index
    %c0_2 = arith.constant 0 : index
    %1 = vector.load %arg4[%c0_1, %c0_2] : memref<48x2688xbf16, #tpu.memory_space<vmem>>, vector<48x2688xbf16>
    %c0_3 = arith.constant 0 : index
    %c0_4 = arith.constant 0 : index
    %2 = vector.load %arg5[%c0_3, %c0_4] : memref<1x2688xf32, #tpu.memory_space<vmem>>, vector<1x2688xf32>
    %cst = arith.constant dense<0.000000e+00> : vector<2x2688xf32>
    %3 = tpu.matmul %0, %1, %cst {dimension_numbers = #tpu.dot_dimension_numbers<[1], [0], [0], [1], [0, 0, 1, 1], [], []>} : vector<2x48xbf16>, vector<48x2688xbf16>, vector<2x2688xf32> -> vector<2x2688xf32>
    %4 = vector.broadcast %2 : vector<1x2688xf32> to vector<2x2688xf32>
    %5 = arith.addf %3, %4 : vector<2x2688xf32>
    %6 = arith.truncf %5 : vector<2x2688xf32> to vector<2x2688xbf16>
    %7 = vector.extract_strided_slice %6 {offsets = [0, 0], sizes = [2, 640], strides = [1, 1]} : vector<2x2688xbf16> to vector<2x640xbf16>
    %c0_5 = arith.constant 0 : index
    %c0_6 = arith.constant 0 : index
    %8 = vector.load %arg12[%c0_5, %c0_6] : memref<640x6xbf16, #tpu.memory_space<vmem>>, vector<640x6xbf16>
    %c0_7 = arith.constant 0 : index
    %c0_8 = arith.constant 0 : index
    %9 = vector.load %arg13[%c0_7, %c0_8] : memref<1x6xf32, #tpu.memory_space<vmem>>, vector<1x6xf32>
    %cst_9 = arith.constant dense<0.000000e+00> : vector<2x6xf32>
    %10 = tpu.matmul %7, %8, %cst_9 {dimension_numbers = #tpu.dot_dimension_numbers<[1], [0], [0], [1], [0, 0, 1, 1], [], []>} : vector<2x640xbf16>, vector<640x6xbf16>, vector<2x6xf32> -> vector<2x6xf32>
    %11 = vector.broadcast %9 : vector<1x6xf32> to vector<2x6xf32>
    %12 = arith.addf %10, %11 : vector<2x6xf32>
    %13 = vector.extract_strided_slice %6 {offsets = [0, 640], sizes = [2, 1024], strides = [1, 1]} : vector<2x2688xbf16> to vector<2x1024xbf16>
    %c0_10 = arith.constant 0 : index
    %c0_11 = arith.constant 0 : index
    %14 = vector.load %arg14[%c0_10, %c0_11] : memref<1024x300xbf16, #tpu.memory_space<vmem>>, vector<1024x300xbf16>
    %c0_12 = arith.constant 0 : index
    %c0_13 = arith.constant 0 : index
    %15 = vector.load %arg15[%c0_12, %c0_13] : memref<1x300xf32, #tpu.memory_space<vmem>>, vector<1x300xf32>
    %cst_14 = arith.constant dense<0.000000e+00> : vector<2x300xf32>
    %16 = tpu.matmul %13, %14, %cst_14 {dimension_numbers = #tpu.dot_dimension_numbers<[1], [0], [0], [1], [0, 0, 1, 1], [], []>} : vector<2x1024xbf16>, vector<1024x300xbf16>, vector<2x300xf32> -> vector<2x300xf32>
    %17 = vector.broadcast %15 : vector<1x300xf32> to vector<2x300xf32>
    %18 = arith.addf %16, %17 : vector<2x300xf32>
    %19 = vector.extract_strided_slice %6 {offsets = [0, 1664], sizes = [2, 1024], strides = [1, 1]} : vector<2x2688xbf16> to vector<2x1024xbf16>
    %c0_15 = arith.constant 0 : index
    %c0_16 = arith.constant 0 : index
    %20 = vector.load %arg16[%c0_15, %c0_16] : memref<1024x55xbf16, #tpu.memory_space<vmem>>, vector<1024x55xbf16>
    %c0_17 = arith.constant 0 : index
    %c0_18 = arith.constant 0 : index
    %21 = vector.load %arg17[%c0_17, %c0_18] : memref<1x55xf32, #tpu.memory_space<vmem>>, vector<1x55xf32>
    %cst_19 = arith.constant dense<0.000000e+00> : vector<2x55xf32>
    %22 = tpu.matmul %19, %20, %cst_19 {dimension_numbers = #tpu.dot_dimension_numbers<[1], [0], [0], [1], [0, 0, 1, 1], [], []>} : vector<2x1024xbf16>, vector<1024x55xbf16>, vector<2x55xf32> -> vector<2x55xf32>
    %23 = vector.broadcast %21 : vector<1x55xf32> to vector<2x55xf32>
    %24 = arith.addf %22, %23 : vector<2x55xf32>
    %25 = tpu.iota {dimensions = array<i32: 1>} : vector<2x55xi32>
    %c50_i32 = arith.constant 50 : i32
    %26 = vector.broadcast %c50_i32 : i32 to vector<2x55xi32>
    %27 = arith.cmpi slt, %25, %26 : vector<2x55xi32>
    %c52_i32 = arith.constant 52 : i32
    %28 = vector.broadcast %c52_i32 : i32 to vector<2x55xi32>
    %29 = arith.cmpi slt, %25, %28 : vector<2x55xi32>
    %cst_20 = arith.constant 0.000000e+00 : f32
    %cst_21 = arith.constant 1.000000e+00 : f32
    %30 = vector.broadcast %cst_20 : f32 to vector<2x55xf32>
    %31 = arith.maximumf %30, %24 : vector<2x55xf32>
    %32 = vector.broadcast %cst_21 : f32 to vector<2x55xf32>
    %33 = arith.minimumf %32, %31 : vector<2x55xf32>
    %c52_i32_22 = arith.constant 52 : i32
    %34 = vector.broadcast %c52_i32_22 : i32 to vector<2x55xi32>
    %35 = arith.cmpi eq, %25, %34 : vector<2x55xi32>
    %cst_23 = arith.constant 0.000000e+00 : f32
    %36 = vector.broadcast %cst_23 : f32 to vector<2x55xf32>
    %37 = arith.maximumf %24, %36 : vector<2x55xf32>
    %cst_24 = arith.constant -2.000000e-01 : f32
    %cst_25 = arith.constant 2.000000e-01 : f32
    %38 = vector.broadcast %cst_24 : f32 to vector<2x55xf32>
    %39 = arith.maximumf %38, %24 : vector<2x55xf32>
    %40 = vector.broadcast %cst_25 : f32 to vector<2x55xf32>
    %41 = arith.minimumf %40, %39 : vector<2x55xf32>
    %42 = arith.select %35, %37, %41 : vector<2x55xi1>, vector<2x55xf32>
    %43 = arith.select %29, %33, %42 : vector<2x55xi1>, vector<2x55xf32>
    %44 = arith.select %27, %24, %43 : vector<2x55xi1>, vector<2x55xf32>
    %c0_26 = arith.constant 0 : index
    %c0_27 = arith.constant 0 : index
    %45 = vector.load %arg1[%c0_26, %c0_27] : memref<2x192xbf16, #tpu.memory_space<vmem>>, vector<2x192xbf16>
    %c0_28 = arith.constant 0 : index
    %c0_29 = arith.constant 0 : index
    %46 = vector.load %arg6[%c0_28, %c0_29] : memref<192x1536xbf16, #tpu.memory_space<vmem>>, vector<192x1536xbf16>
    %c0_30 = arith.constant 0 : index
    %c0_31 = arith.constant 0 : index
    %47 = vector.load %arg7[%c0_30, %c0_31] : memref<1x1536xf32, #tpu.memory_space<vmem>>, vector<1x1536xf32>
    %cst_32 = arith.constant dense<0.000000e+00> : vector<2x1536xf32>
    %48 = tpu.matmul %45, %46, %cst_32 {dimension_numbers = #tpu.dot_dimension_numbers<[1], [0], [0], [1], [0, 0, 1, 1], [], []>} : vector<2x192xbf16>, vector<192x1536xbf16>, vector<2x1536xf32> -> vector<2x1536xf32>
    %49 = vector.broadcast %47 : vector<1x1536xf32> to vector<2x1536xf32>
    %50 = arith.addf %48, %49 : vector<2x1536xf32>
    %51 = arith.truncf %50 : vector<2x1536xf32> to vector<2x1536xbf16>
    %52 = vector.extract_strided_slice %51 {offsets = [0, 0], sizes = [2, 1024], strides = [1, 1]} : vector<2x1536xbf16> to vector<2x1024xbf16>
    %c0_33 = arith.constant 0 : index
    %c0_34 = arith.constant 0 : index
    %53 = vector.load %arg18[%c0_33, %c0_34] : memref<1024x512xbf16, #tpu.memory_space<vmem>>, vector<1024x512xbf16>
    %cst_35 = arith.constant dense<0.000000e+00> : vector<2x512xf32>
    %54 = tpu.matmul %52, %53, %cst_35 {dimension_numbers = #tpu.dot_dimension_numbers<[1], [0], [0], [1], [0, 0, 1, 1], [], []>} : vector<2x1024xbf16>, vector<1024x512xbf16>, vector<2x512xf32> -> vector<2x512xf32>
    %55 = vector.extract_strided_slice %51 {offsets = [0, 1024], sizes = [2, 512], strides = [1, 1]} : vector<2x1536xbf16> to vector<2x512xbf16>
    %c0_36 = arith.constant 0 : index
    %c0_37 = arith.constant 0 : index
    %56 = vector.load %arg19[%c0_36, %c0_37] : memref<512x512xbf16, #tpu.memory_space<vmem>>, vector<512x512xbf16>
    %cst_38 = arith.constant dense<0.000000e+00> : vector<2x512xf32>
    %57 = tpu.matmul %55, %56, %cst_38 {dimension_numbers = #tpu.dot_dimension_numbers<[1], [0], [0], [1], [0, 0, 1, 1], [], []>} : vector<2x512xbf16>, vector<512x512xbf16>, vector<2x512xf32> -> vector<2x512xf32>
    %cst_39 = arith.constant 0.000000e+00 : f32
    %58 = vector.broadcast %cst_39 : f32 to vector<2x512xf32>
    %cst_40 = arith.constant 0.000000e+00 : f32
    %59 = vector.broadcast %cst_40 : f32 to vector<2x512xf32>
    %c0_41 = arith.constant 0 : index
    %c0_42 = arith.constant 0 : index
    %c0_43 = arith.constant 0 : index
    %60 = vector.load %arg2[%c0_41, %c0_42, %c0_43] : memref<4x2x192xbf16, #tpu.memory_space<vmem>>, vector<1x2x192xbf16>
    %61 = vector.shape_cast %60 : vector<1x2x192xbf16> to vector<2x192xbf16>
    %c0_44 = arith.constant 0 : index
    %c0_45 = arith.constant 0 : index
    %62 = vector.load %arg8[%c0_44, %c0_45] : memref<192x384xbf16, #tpu.memory_space<vmem>>, vector<192x384xbf16>
    %c0_46 = arith.constant 0 : index
    %c0_47 = arith.constant 0 : index
    %63 = vector.load %arg9[%c0_46, %c0_47] : memref<1x384xf32, #tpu.memory_space<vmem>>, vector<1x384xf32>
    %cst_48 = arith.constant dense<0.000000e+00> : vector<2x384xf32>
    %64 = tpu.matmul %61, %62, %cst_48 {dimension_numbers = #tpu.dot_dimension_numbers<[1], [0], [0], [1], [0, 0, 1, 1], [], []>} : vector<2x192xbf16>, vector<192x384xbf16>, vector<2x384xf32> -> vector<2x384xf32>
    %65 = vector.broadcast %63 : vector<1x384xf32> to vector<2x384xf32>
    %66 = arith.addf %64, %65 : vector<2x384xf32>
    %67 = arith.truncf %66 : vector<2x384xf32> to vector<2x384xbf16>
    %68 = vector.extract_strided_slice %67 {offsets = [0, 0], sizes = [2, 256], strides = [1, 1]} : vector<2x384xbf16> to vector<2x256xbf16>
    %c0_49 = arith.constant 0 : index
    %c0_50 = arith.constant 0 : index
    %c0_51 = arith.constant 0 : index
    %69 = vector.load %arg20[%c0_49, %c0_50, %c0_51] : memref<4x256x512xbf16, #tpu.memory_space<vmem>>, vector<1x256x512xbf16>
    %70 = vector.shape_cast %69 : vector<1x256x512xbf16> to vector<256x512xbf16>
    %cst_52 = arith.constant dense<0.000000e+00> : vector<2x512xf32>
    %71 = tpu.matmul %68, %70, %cst_52 {dimension_numbers = #tpu.dot_dimension_numbers<[1], [0], [0], [1], [0, 0, 1, 1], [], []>} : vector<2x256xbf16>, vector<256x512xbf16>, vector<2x512xf32> -> vector<2x512xf32>
    %72 = arith.addf %58, %71 : vector<2x512xf32>
    %73 = vector.extract_strided_slice %67 {offsets = [0, 256], sizes = [2, 128], strides = [1, 1]} : vector<2x384xbf16> to vector<2x128xbf16>
    %c0_53 = arith.constant 0 : index
    %c0_54 = arith.constant 0 : index
    %c0_55 = arith.constant 0 : index
    %74 = vector.load %arg21[%c0_53, %c0_54, %c0_55] : memref<4x128x512xbf16, #tpu.memory_space<vmem>>, vector<1x128x512xbf16>
    %75 = vector.shape_cast %74 : vector<1x128x512xbf16> to vector<128x512xbf16>
    %cst_56 = arith.constant dense<0.000000e+00> : vector<2x512xf32>
    %76 = tpu.matmul %73, %75, %cst_56 {dimension_numbers = #tpu.dot_dimension_numbers<[1], [0], [0], [1], [0, 0, 1, 1], [], []>} : vector<2x128xbf16>, vector<128x512xbf16>, vector<2x512xf32> -> vector<2x512xf32>
    %77 = arith.addf %59, %76 : vector<2x512xf32>
    %c1 = arith.constant 1 : index
    %c0_57 = arith.constant 0 : index
    %c0_58 = arith.constant 0 : index
    %78 = vector.load %arg2[%c1, %c0_57, %c0_58] : memref<4x2x192xbf16, #tpu.memory_space<vmem>>, vector<1x2x192xbf16>
    %79 = vector.shape_cast %78 : vector<1x2x192xbf16> to vector<2x192xbf16>
    %c0_59 = arith.constant 0 : index
    %c0_60 = arith.constant 0 : index
    %80 = vector.load %arg8[%c0_59, %c0_60] : memref<192x384xbf16, #tpu.memory_space<vmem>>, vector<192x384xbf16>
    %c0_61 = arith.constant 0 : index
    %c0_62 = arith.constant 0 : index
    %81 = vector.load %arg9[%c0_61, %c0_62] : memref<1x384xf32, #tpu.memory_space<vmem>>, vector<1x384xf32>
    %cst_63 = arith.constant dense<0.000000e+00> : vector<2x384xf32>
    %82 = tpu.matmul %79, %80, %cst_63 {dimension_numbers = #tpu.dot_dimension_numbers<[1], [0], [0], [1], [0, 0, 1, 1], [], []>} : vector<2x192xbf16>, vector<192x384xbf16>, vector<2x384xf32> -> vector<2x384xf32>
    %83 = vector.broadcast %81 : vector<1x384xf32> to vector<2x384xf32>
    %84 = arith.addf %82, %83 : vector<2x384xf32>
    %85 = arith.truncf %84 : vector<2x384xf32> to vector<2x384xbf16>
    %86 = vector.extract_strided_slice %85 {offsets = [0, 0], sizes = [2, 256], strides = [1, 1]} : vector<2x384xbf16> to vector<2x256xbf16>
    %c1_64 = arith.constant 1 : index
    %c0_65 = arith.constant 0 : index
    %c0_66 = arith.constant 0 : index
    %87 = vector.load %arg20[%c1_64, %c0_65, %c0_66] : memref<4x256x512xbf16, #tpu.memory_space<vmem>>, vector<1x256x512xbf16>
    %88 = vector.shape_cast %87 : vector<1x256x512xbf16> to vector<256x512xbf16>
    %cst_67 = arith.constant dense<0.000000e+00> : vector<2x512xf32>
    %89 = tpu.matmul %86, %88, %cst_67 {dimension_numbers = #tpu.dot_dimension_numbers<[1], [0], [0], [1], [0, 0, 1, 1], [], []>} : vector<2x256xbf16>, vector<256x512xbf16>, vector<2x512xf32> -> vector<2x512xf32>
    %90 = arith.addf %72, %89 : vector<2x512xf32>
    %91 = vector.extract_strided_slice %85 {offsets = [0, 256], sizes = [2, 128], strides = [1, 1]} : vector<2x384xbf16> to vector<2x128xbf16>
    %c1_68 = arith.constant 1 : index
    %c0_69 = arith.constant 0 : index
    %c0_70 = arith.constant 0 : index
    %92 = vector.load %arg21[%c1_68, %c0_69, %c0_70] : memref<4x128x512xbf16, #tpu.memory_space<vmem>>, vector<1x128x512xbf16>
    %93 = vector.shape_cast %92 : vector<1x128x512xbf16> to vector<128x512xbf16>
    %cst_71 = arith.constant dense<0.000000e+00> : vector<2x512xf32>
    %94 = tpu.matmul %91, %93, %cst_71 {dimension_numbers = #tpu.dot_dimension_numbers<[1], [0], [0], [1], [0, 0, 1, 1], [], []>} : vector<2x128xbf16>, vector<128x512xbf16>, vector<2x512xf32> -> vector<2x512xf32>
    %95 = arith.addf %77, %94 : vector<2x512xf32>
    %c2 = arith.constant 2 : index
    %c0_72 = arith.constant 0 : index
    %c0_73 = arith.constant 0 : index
    %96 = vector.load %arg2[%c2, %c0_72, %c0_73] : memref<4x2x192xbf16, #tpu.memory_space<vmem>>, vector<1x2x192xbf16>
    %97 = vector.shape_cast %96 : vector<1x2x192xbf16> to vector<2x192xbf16>
    %c0_74 = arith.constant 0 : index
    %c0_75 = arith.constant 0 : index
    %98 = vector.load %arg8[%c0_74, %c0_75] : memref<192x384xbf16, #tpu.memory_space<vmem>>, vector<192x384xbf16>
    %c0_76 = arith.constant 0 : index
    %c0_77 = arith.constant 0 : index
    %99 = vector.load %arg9[%c0_76, %c0_77] : memref<1x384xf32, #tpu.memory_space<vmem>>, vector<1x384xf32>
    %cst_78 = arith.constant dense<0.000000e+00> : vector<2x384xf32>
    %100 = tpu.matmul %97, %98, %cst_78 {dimension_numbers = #tpu.dot_dimension_numbers<[1], [0], [0], [1], [0, 0, 1, 1], [], []>} : vector<2x192xbf16>, vector<192x384xbf16>, vector<2x384xf32> -> vector<2x384xf32>
    %101 = vector.broadcast %99 : vector<1x384xf32> to vector<2x384xf32>
    %102 = arith.addf %100, %101 : vector<2x384xf32>
    %103 = arith.truncf %102 : vector<2x384xf32> to vector<2x384xbf16>
    %104 = vector.extract_strided_slice %103 {offsets = [0, 0], sizes = [2, 256], strides = [1, 1]} : vector<2x384xbf16> to vector<2x256xbf16>
    %c2_79 = arith.constant 2 : index
    %c0_80 = arith.constant 0 : index
    %c0_81 = arith.constant 0 : index
    %105 = vector.load %arg20[%c2_79, %c0_80, %c0_81] : memref<4x256x512xbf16, #tpu.memory_space<vmem>>, vector<1x256x512xbf16>
    %106 = vector.shape_cast %105 : vector<1x256x512xbf16> to vector<256x512xbf16>
    %cst_82 = arith.constant dense<0.000000e+00> : vector<2x512xf32>
    %107 = tpu.matmul %104, %106, %cst_82 {dimension_numbers = #tpu.dot_dimension_numbers<[1], [0], [0], [1], [0, 0, 1, 1], [], []>} : vector<2x256xbf16>, vector<256x512xbf16>, vector<2x512xf32> -> vector<2x512xf32>
    %108 = arith.addf %90, %107 : vector<2x512xf32>
    %109 = vector.extract_strided_slice %103 {offsets = [0, 256], sizes = [2, 128], strides = [1, 1]} : vector<2x384xbf16> to vector<2x128xbf16>
    %c2_83 = arith.constant 2 : index
    %c0_84 = arith.constant 0 : index
    %c0_85 = arith.constant 0 : index
    %110 = vector.load %arg21[%c2_83, %c0_84, %c0_85] : memref<4x128x512xbf16, #tpu.memory_space<vmem>>, vector<1x128x512xbf16>
    %111 = vector.shape_cast %110 : vector<1x128x512xbf16> to vector<128x512xbf16>
    %cst_86 = arith.constant dense<0.000000e+00> : vector<2x512xf32>
    %112 = tpu.matmul %109, %111, %cst_86 {dimension_numbers = #tpu.dot_dimension_numbers<[1], [0], [0], [1], [0, 0, 1, 1], [], []>} : vector<2x128xbf16>, vector<128x512xbf16>, vector<2x512xf32> -> vector<2x512xf32>
    %113 = arith.addf %95, %112 : vector<2x512xf32>
    %c3 = arith.constant 3 : index
    %c0_87 = arith.constant 0 : index
    %c0_88 = arith.constant 0 : index
    %114 = vector.load %arg2[%c3, %c0_87, %c0_88] : memref<4x2x192xbf16, #tpu.memory_space<vmem>>, vector<1x2x192xbf16>
    %115 = vector.shape_cast %114 : vector<1x2x192xbf16> to vector<2x192xbf16>
    %c0_89 = arith.constant 0 : index
    %c0_90 = arith.constant 0 : index
    %116 = vector.load %arg8[%c0_89, %c0_90] : memref<192x384xbf16, #tpu.memory_space<vmem>>, vector<192x384xbf16>
    %c0_91 = arith.constant 0 : index
    %c0_92 = arith.constant 0 : index
    %117 = vector.load %arg9[%c0_91, %c0_92] : memref<1x384xf32, #tpu.memory_space<vmem>>, vector<1x384xf32>
    %cst_93 = arith.constant dense<0.000000e+00> : vector<2x384xf32>
    %118 = tpu.matmul %115, %116, %cst_93 {dimension_numbers = #tpu.dot_dimension_numbers<[1], [0], [0], [1], [0, 0, 1, 1], [], []>} : vector<2x192xbf16>, vector<192x384xbf16>, vector<2x384xf32> -> vector<2x384xf32>
    %119 = vector.broadcast %117 : vector<1x384xf32> to vector<2x384xf32>
    %120 = arith.addf %118, %119 : vector<2x384xf32>
    %121 = arith.truncf %120 : vector<2x384xf32> to vector<2x384xbf16>
    %122 = vector.extract_strided_slice %121 {offsets = [0, 0], sizes = [2, 256], strides = [1, 1]} : vector<2x384xbf16> to vector<2x256xbf16>
    %c3_94 = arith.constant 3 : index
    %c0_95 = arith.constant 0 : index
    %c0_96 = arith.constant 0 : index
    %123 = vector.load %arg20[%c3_94, %c0_95, %c0_96] : memref<4x256x512xbf16, #tpu.memory_space<vmem>>, vector<1x256x512xbf16>
    %124 = vector.shape_cast %123 : vector<1x256x512xbf16> to vector<256x512xbf16>
    %cst_97 = arith.constant dense<0.000000e+00> : vector<2x512xf32>
    %125 = tpu.matmul %122, %124, %cst_97 {dimension_numbers = #tpu.dot_dimension_numbers<[1], [0], [0], [1], [0, 0, 1, 1], [], []>} : vector<2x256xbf16>, vector<256x512xbf16>, vector<2x512xf32> -> vector<2x512xf32>
    %126 = arith.addf %108, %125 : vector<2x512xf32>
    %127 = vector.extract_strided_slice %121 {offsets = [0, 256], sizes = [2, 128], strides = [1, 1]} : vector<2x384xbf16> to vector<2x128xbf16>
    %c3_98 = arith.constant 3 : index
    %c0_99 = arith.constant 0 : index
    %c0_100 = arith.constant 0 : index
    %128 = vector.load %arg21[%c3_98, %c0_99, %c0_100] : memref<4x128x512xbf16, #tpu.memory_space<vmem>>, vector<1x128x512xbf16>
    %129 = vector.shape_cast %128 : vector<1x128x512xbf16> to vector<128x512xbf16>
    %cst_101 = arith.constant dense<0.000000e+00> : vector<2x512xf32>
    %130 = tpu.matmul %127, %129, %cst_101 {dimension_numbers = #tpu.dot_dimension_numbers<[1], [0], [0], [1], [0, 0, 1, 1], [], []>} : vector<2x128xbf16>, vector<128x512xbf16>, vector<2x512xf32> -> vector<2x512xf32>
    %131 = arith.addf %113, %130 : vector<2x512xf32>
    %cst_102 = arith.constant 0.000000e+00 : f32
    %132 = vector.broadcast %cst_102 : f32 to vector<2x512xf32>
    %c0_103 = arith.constant 0 : index
    %c0_104 = arith.constant 0 : index
    %c0_105 = arith.constant 0 : index
    %133 = vector.load %arg3[%c0_103, %c0_104, %c0_105] : memref<16x2x48xbf16, #tpu.memory_space<vmem>>, vector<1x2x48xbf16>
    %134 = vector.shape_cast %133 : vector<1x2x48xbf16> to vector<2x48xbf16>
    %c0_106 = arith.constant 0 : index
    %c0_107 = arith.constant 0 : index
    %135 = vector.load %arg10[%c0_106, %c0_107] : memref<48x32xbf16, #tpu.memory_space<vmem>>, vector<48x32xbf16>
    %c0_108 = arith.constant 0 : index
    %c0_109 = arith.constant 0 : index
    %136 = vector.load %arg11[%c0_108, %c0_109] : memref<1x32xf32, #tpu.memory_space<vmem>>, vector<1x32xf32>
    %cst_110 = arith.constant dense<0.000000e+00> : vector<2x32xf32>
    %137 = tpu.matmul %134, %135, %cst_110 {dimension_numbers = #tpu.dot_dimension_numbers<[1], [0], [0], [1], [0, 0, 1, 1], [], []>} : vector<2x48xbf16>, vector<48x32xbf16>, vector<2x32xf32> -> vector<2x32xf32>
    %138 = vector.broadcast %136 : vector<1x32xf32> to vector<2x32xf32>
    %139 = arith.addf %137, %138 : vector<2x32xf32>
    %140 = arith.truncf %139 : vector<2x32xf32> to vector<2x32xbf16>
    %c0_111 = arith.constant 0 : index
    %c0_112 = arith.constant 0 : index
    %c0_113 = arith.constant 0 : index
    %141 = vector.load %arg22[%c0_111, %c0_112, %c0_113] : memref<16x32x512xbf16, #tpu.memory_space<vmem>>, vector<1x32x512xbf16>
    %142 = vector.shape_cast %141 : vector<1x32x512xbf16> to vector<32x512xbf16>
    %cst_114 = arith.constant dense<0.000000e+00> : vector<2x512xf32>
    %143 = tpu.matmul %140, %142, %cst_114 {dimension_numbers = #tpu.dot_dimension_numbers<[1], [0], [0], [1], [0, 0, 1, 1], [], []>} : vector<2x32xbf16>, vector<32x512xbf16>, vector<2x512xf32> -> vector<2x512xf32>
    %144 = arith.addf %132, %143 : vector<2x512xf32>
    %c1_115 = arith.constant 1 : index
    %c0_116 = arith.constant 0 : index
    %c0_117 = arith.constant 0 : index
    %145 = vector.load %arg3[%c1_115, %c0_116, %c0_117] : memref<16x2x48xbf16, #tpu.memory_space<vmem>>, vector<1x2x48xbf16>
    %146 = vector.shape_cast %145 : vector<1x2x48xbf16> to vector<2x48xbf16>
    %c0_118 = arith.constant 0 : index
    %c0_119 = arith.constant 0 : index
    %147 = vector.load %arg10[%c0_118, %c0_119] : memref<48x32xbf16, #tpu.memory_space<vmem>>, vector<48x32xbf16>
    %c0_120 = arith.constant 0 : index
    %c0_121 = arith.constant 0 : index
    %148 = vector.load %arg11[%c0_120, %c0_121] : memref<1x32xf32, #tpu.memory_space<vmem>>, vector<1x32xf32>
    %cst_122 = arith.constant dense<0.000000e+00> : vector<2x32xf32>
    %149 = tpu.matmul %146, %147, %cst_122 {dimension_numbers = #tpu.dot_dimension_numbers<[1], [0], [0], [1], [0, 0, 1, 1], [], []>} : vector<2x48xbf16>, vector<48x32xbf16>, vector<2x32xf32> -> vector<2x32xf32>
    %150 = vector.broadcast %148 : vector<1x32xf32> to vector<2x32xf32>
    %151 = arith.addf %149, %150 : vector<2x32xf32>
    %152 = arith.truncf %151 : vector<2x32xf32> to vector<2x32xbf16>
    %c1_123 = arith.constant 1 : index
    %c0_124 = arith.constant 0 : index
    %c0_125 = arith.constant 0 : index
    %153 = vector.load %arg22[%c1_123, %c0_124, %c0_125] : memref<16x32x512xbf16, #tpu.memory_space<vmem>>, vector<1x32x512xbf16>
    %154 = vector.shape_cast %153 : vector<1x32x512xbf16> to vector<32x512xbf16>
    %cst_126 = arith.constant dense<0.000000e+00> : vector<2x512xf32>
    %155 = tpu.matmul %152, %154, %cst_126 {dimension_numbers = #tpu.dot_dimension_numbers<[1], [0], [0], [1], [0, 0, 1, 1], [], []>} : vector<2x32xbf16>, vector<32x512xbf16>, vector<2x512xf32> -> vector<2x512xf32>
    %156 = arith.addf %144, %155 : vector<2x512xf32>
    %c2_127 = arith.constant 2 : index
    %c0_128 = arith.constant 0 : index
    %c0_129 = arith.constant 0 : index
    %157 = vector.load %arg3[%c2_127, %c0_128, %c0_129] : memref<16x2x48xbf16, #tpu.memory_space<vmem>>, vector<1x2x48xbf16>
    %158 = vector.shape_cast %157 : vector<1x2x48xbf16> to vector<2x48xbf16>
    %c0_130 = arith.constant 0 : index
    %c0_131 = arith.constant 0 : index
    %159 = vector.load %arg10[%c0_130, %c0_131] : memref<48x32xbf16, #tpu.memory_space<vmem>>, vector<48x32xbf16>
    %c0_132 = arith.constant 0 : index
    %c0_133 = arith.constant 0 : index
    %160 = vector.load %arg11[%c0_132, %c0_133] : memref<1x32xf32, #tpu.memory_space<vmem>>, vector<1x32xf32>
    %cst_134 = arith.constant dense<0.000000e+00> : vector<2x32xf32>
    %161 = tpu.matmul %158, %159, %cst_134 {dimension_numbers = #tpu.dot_dimension_numbers<[1], [0], [0], [1], [0, 0, 1, 1], [], []>} : vector<2x48xbf16>, vector<48x32xbf16>, vector<2x32xf32> -> vector<2x32xf32>
    %162 = vector.broadcast %160 : vector<1x32xf32> to vector<2x32xf32>
    %163 = arith.addf %161, %162 : vector<2x32xf32>
    %164 = arith.truncf %163 : vector<2x32xf32> to vector<2x32xbf16>
    %c2_135 = arith.constant 2 : index
    %c0_136 = arith.constant 0 : index
    %c0_137 = arith.constant 0 : index
    %165 = vector.load %arg22[%c2_135, %c0_136, %c0_137] : memref<16x32x512xbf16, #tpu.memory_space<vmem>>, vector<1x32x512xbf16>
    %166 = vector.shape_cast %165 : vector<1x32x512xbf16> to vector<32x512xbf16>
    %cst_138 = arith.constant dense<0.000000e+00> : vector<2x512xf32>
    %167 = tpu.matmul %164, %166, %cst_138 {dimension_numbers = #tpu.dot_dimension_numbers<[1], [0], [0], [1], [0, 0, 1, 1], [], []>} : vector<2x32xbf16>, vector<32x512xbf16>, vector<2x512xf32> -> vector<2x512xf32>
    %168 = arith.addf %156, %167 : vector<2x512xf32>
    %c3_139 = arith.constant 3 : index
    %c0_140 = arith.constant 0 : index
    %c0_141 = arith.constant 0 : index
    %169 = vector.load %arg3[%c3_139, %c0_140, %c0_141] : memref<16x2x48xbf16, #tpu.memory_space<vmem>>, vector<1x2x48xbf16>
    %170 = vector.shape_cast %169 : vector<1x2x48xbf16> to vector<2x48xbf16>
    %c0_142 = arith.constant 0 : index
    %c0_143 = arith.constant 0 : index
    %171 = vector.load %arg10[%c0_142, %c0_143] : memref<48x32xbf16, #tpu.memory_space<vmem>>, vector<48x32xbf16>
    %c0_144 = arith.constant 0 : index
    %c0_145 = arith.constant 0 : index
    %172 = vector.load %arg11[%c0_144, %c0_145] : memref<1x32xf32, #tpu.memory_space<vmem>>, vector<1x32xf32>
    %cst_146 = arith.constant dense<0.000000e+00> : vector<2x32xf32>
    %173 = tpu.matmul %170, %171, %cst_146 {dimension_numbers = #tpu.dot_dimension_numbers<[1], [0], [0], [1], [0, 0, 1, 1], [], []>} : vector<2x48xbf16>, vector<48x32xbf16>, vector<2x32xf32> -> vector<2x32xf32>
    %174 = vector.broadcast %172 : vector<1x32xf32> to vector<2x32xf32>
    %175 = arith.addf %173, %174 : vector<2x32xf32>
    %176 = arith.truncf %175 : vector<2x32xf32> to vector<2x32xbf16>
    %c3_147 = arith.constant 3 : index
    %c0_148 = arith.constant 0 : index
    %c0_149 = arith.constant 0 : index
    %177 = vector.load %arg22[%c3_147, %c0_148, %c0_149] : memref<16x32x512xbf16, #tpu.memory_space<vmem>>, vector<1x32x512xbf16>
    %178 = vector.shape_cast %177 : vector<1x32x512xbf16> to vector<32x512xbf16>
    %cst_150 = arith.constant dense<0.000000e+00> : vector<2x512xf32>
    %179 = tpu.matmul %176, %178, %cst_150 {dimension_numbers = #tpu.dot_dimension_numbers<[1], [0], [0], [1], [0, 0, 1, 1], [], []>} : vector<2x32xbf16>, vector<32x512xbf16>, vector<2x512xf32> -> vector<2x512xf32>
    %180 = arith.addf %168, %179 : vector<2x512xf32>
    %c4 = arith.constant 4 : index
    %c0_151 = arith.constant 0 : index
    %c0_152 = arith.constant 0 : index
    %181 = vector.load %arg3[%c4, %c0_151, %c0_152] : memref<16x2x48xbf16, #tpu.memory_space<vmem>>, vector<1x2x48xbf16>
    %182 = vector.shape_cast %181 : vector<1x2x48xbf16> to vector<2x48xbf16>
    %c0_153 = arith.constant 0 : index
    %c0_154 = arith.constant 0 : index
    %183 = vector.load %arg10[%c0_153, %c0_154] : memref<48x32xbf16, #tpu.memory_space<vmem>>, vector<48x32xbf16>
    %c0_155 = arith.constant 0 : index
    %c0_156 = arith.constant 0 : index
    %184 = vector.load %arg11[%c0_155, %c0_156] : memref<1x32xf32, #tpu.memory_space<vmem>>, vector<1x32xf32>
    %cst_157 = arith.constant dense<0.000000e+00> : vector<2x32xf32>
    %185 = tpu.matmul %182, %183, %cst_157 {dimension_numbers = #tpu.dot_dimension_numbers<[1], [0], [0], [1], [0, 0, 1, 1], [], []>} : vector<2x48xbf16>, vector<48x32xbf16>, vector<2x32xf32> -> vector<2x32xf32>
    %186 = vector.broadcast %184 : vector<1x32xf32> to vector<2x32xf32>
    %187 = arith.addf %185, %186 : vector<2x32xf32>
    %188 = arith.truncf %187 : vector<2x32xf32> to vector<2x32xbf16>
    %c4_158 = arith.constant 4 : index
    %c0_159 = arith.constant 0 : index
    %c0_160 = arith.constant 0 : index
    %189 = vector.load %arg22[%c4_158, %c0_159, %c0_160] : memref<16x32x512xbf16, #tpu.memory_space<vmem>>, vector<1x32x512xbf16>
    %190 = vector.shape_cast %189 : vector<1x32x512xbf16> to vector<32x512xbf16>
    %cst_161 = arith.constant dense<0.000000e+00> : vector<2x512xf32>
    %191 = tpu.matmul %188, %190, %cst_161 {dimension_numbers = #tpu.dot_dimension_numbers<[1], [0], [0], [1], [0, 0, 1, 1], [], []>} : vector<2x32xbf16>, vector<32x512xbf16>, vector<2x512xf32> -> vector<2x512xf32>
    %192 = arith.addf %180, %191 : vector<2x512xf32>
    %c5 = arith.constant 5 : index
    %c0_162 = arith.constant 0 : index
    %c0_163 = arith.constant 0 : index
    %193 = vector.load %arg3[%c5, %c0_162, %c0_163] : memref<16x2x48xbf16, #tpu.memory_space<vmem>>, vector<1x2x48xbf16>
    %194 = vector.shape_cast %193 : vector<1x2x48xbf16> to vector<2x48xbf16>
    %c0_164 = arith.constant 0 : index
    %c0_165 = arith.constant 0 : index
    %195 = vector.load %arg10[%c0_164, %c0_165] : memref<48x32xbf16, #tpu.memory_space<vmem>>, vector<48x32xbf16>
    %c0_166 = arith.constant 0 : index
    %c0_167 = arith.constant 0 : index
    %196 = vector.load %arg11[%c0_166, %c0_167] : memref<1x32xf32, #tpu.memory_space<vmem>>, vector<1x32xf32>
    %cst_168 = arith.constant dense<0.000000e+00> : vector<2x32xf32>
    %197 = tpu.matmul %194, %195, %cst_168 {dimension_numbers = #tpu.dot_dimension_numbers<[1], [0], [0], [1], [0, 0, 1, 1], [], []>} : vector<2x48xbf16>, vector<48x32xbf16>, vector<2x32xf32> -> vector<2x32xf32>
    %198 = vector.broadcast %196 : vector<1x32xf32> to vector<2x32xf32>
    %199 = arith.addf %197, %198 : vector<2x32xf32>
    %200 = arith.truncf %199 : vector<2x32xf32> to vector<2x32xbf16>
    %c5_169 = arith.constant 5 : index
    %c0_170 = arith.constant 0 : index
    %c0_171 = arith.constant 0 : index
    %201 = vector.load %arg22[%c5_169, %c0_170, %c0_171] : memref<16x32x512xbf16, #tpu.memory_space<vmem>>, vector<1x32x512xbf16>
    %202 = vector.shape_cast %201 : vector<1x32x512xbf16> to vector<32x512xbf16>
    %cst_172 = arith.constant dense<0.000000e+00> : vector<2x512xf32>
    %203 = tpu.matmul %200, %202, %cst_172 {dimension_numbers = #tpu.dot_dimension_numbers<[1], [0], [0], [1], [0, 0, 1, 1], [], []>} : vector<2x32xbf16>, vector<32x512xbf16>, vector<2x512xf32> -> vector<2x512xf32>
    %204 = arith.addf %192, %203 : vector<2x512xf32>
    %c6 = arith.constant 6 : index
    %c0_173 = arith.constant 0 : index
    %c0_174 = arith.constant 0 : index
    %205 = vector.load %arg3[%c6, %c0_173, %c0_174] : memref<16x2x48xbf16, #tpu.memory_space<vmem>>, vector<1x2x48xbf16>
    %206 = vector.shape_cast %205 : vector<1x2x48xbf16> to vector<2x48xbf16>
    %c0_175 = arith.constant 0 : index
    %c0_176 = arith.constant 0 : index
    %207 = vector.load %arg10[%c0_175, %c0_176] : memref<48x32xbf16, #tpu.memory_space<vmem>>, vector<48x32xbf16>
    %c0_177 = arith.constant 0 : index
    %c0_178 = arith.constant 0 : index
    %208 = vector.load %arg11[%c0_177, %c0_178] : memref<1x32xf32, #tpu.memory_space<vmem>>, vector<1x32xf32>
    %cst_179 = arith.constant dense<0.000000e+00> : vector<2x32xf32>
    %209 = tpu.matmul %206, %207, %cst_179 {dimension_numbers = #tpu.dot_dimension_numbers<[1], [0], [0], [1], [0, 0, 1, 1], [], []>} : vector<2x48xbf16>, vector<48x32xbf16>, vector<2x32xf32> -> vector<2x32xf32>
    %210 = vector.broadcast %208 : vector<1x32xf32> to vector<2x32xf32>
    %211 = arith.addf %209, %210 : vector<2x32xf32>
    %212 = arith.truncf %211 : vector<2x32xf32> to vector<2x32xbf16>
    %c6_180 = arith.constant 6 : index
    %c0_181 = arith.constant 0 : index
    %c0_182 = arith.constant 0 : index
    %213 = vector.load %arg22[%c6_180, %c0_181, %c0_182] : memref<16x32x512xbf16, #tpu.memory_space<vmem>>, vector<1x32x512xbf16>
    %214 = vector.shape_cast %213 : vector<1x32x512xbf16> to vector<32x512xbf16>
    %cst_183 = arith.constant dense<0.000000e+00> : vector<2x512xf32>
    %215 = tpu.matmul %212, %214, %cst_183 {dimension_numbers = #tpu.dot_dimension_numbers<[1], [0], [0], [1], [0, 0, 1, 1], [], []>} : vector<2x32xbf16>, vector<32x512xbf16>, vector<2x512xf32> -> vector<2x512xf32>
    %216 = arith.addf %204, %215 : vector<2x512xf32>
    %c7 = arith.constant 7 : index
    %c0_184 = arith.constant 0 : index
    %c0_185 = arith.constant 0 : index
    %217 = vector.load %arg3[%c7, %c0_184, %c0_185] : memref<16x2x48xbf16, #tpu.memory_space<vmem>>, vector<1x2x48xbf16>
    %218 = vector.shape_cast %217 : vector<1x2x48xbf16> to vector<2x48xbf16>
    %c0_186 = arith.constant 0 : index
    %c0_187 = arith.constant 0 : index
    %219 = vector.load %arg10[%c0_186, %c0_187] : memref<48x32xbf16, #tpu.memory_space<vmem>>, vector<48x32xbf16>
    %c0_188 = arith.constant 0 : index
    %c0_189 = arith.constant 0 : index
    %220 = vector.load %arg11[%c0_188, %c0_189] : memref<1x32xf32, #tpu.memory_space<vmem>>, vector<1x32xf32>
    %cst_190 = arith.constant dense<0.000000e+00> : vector<2x32xf32>
    %221 = tpu.matmul %218, %219, %cst_190 {dimension_numbers = #tpu.dot_dimension_numbers<[1], [0], [0], [1], [0, 0, 1, 1], [], []>} : vector<2x48xbf16>, vector<48x32xbf16>, vector<2x32xf32> -> vector<2x32xf32>
    %222 = vector.broadcast %220 : vector<1x32xf32> to vector<2x32xf32>
    %223 = arith.addf %221, %222 : vector<2x32xf32>
    %224 = arith.truncf %223 : vector<2x32xf32> to vector<2x32xbf16>
    %c7_191 = arith.constant 7 : index
    %c0_192 = arith.constant 0 : index
    %c0_193 = arith.constant 0 : index
    %225 = vector.load %arg22[%c7_191, %c0_192, %c0_193] : memref<16x32x512xbf16, #tpu.memory_space<vmem>>, vector<1x32x512xbf16>
    %226 = vector.shape_cast %225 : vector<1x32x512xbf16> to vector<32x512xbf16>
    %cst_194 = arith.constant dense<0.000000e+00> : vector<2x512xf32>
    %227 = tpu.matmul %224, %226, %cst_194 {dimension_numbers = #tpu.dot_dimension_numbers<[1], [0], [0], [1], [0, 0, 1, 1], [], []>} : vector<2x32xbf16>, vector<32x512xbf16>, vector<2x512xf32> -> vector<2x512xf32>
    %228 = arith.addf %216, %227 : vector<2x512xf32>
    %c8 = arith.constant 8 : index
    %c0_195 = arith.constant 0 : index
    %c0_196 = arith.constant 0 : index
    %229 = vector.load %arg3[%c8, %c0_195, %c0_196] : memref<16x2x48xbf16, #tpu.memory_space<vmem>>, vector<1x2x48xbf16>
    %230 = vector.shape_cast %229 : vector<1x2x48xbf16> to vector<2x48xbf16>
    %c0_197 = arith.constant 0 : index
    %c0_198 = arith.constant 0 : index
    %231 = vector.load %arg10[%c0_197, %c0_198] : memref<48x32xbf16, #tpu.memory_space<vmem>>, vector<48x32xbf16>
    %c0_199 = arith.constant 0 : index
    %c0_200 = arith.constant 0 : index
    %232 = vector.load %arg11[%c0_199, %c0_200] : memref<1x32xf32, #tpu.memory_space<vmem>>, vector<1x32xf32>
    %cst_201 = arith.constant dense<0.000000e+00> : vector<2x32xf32>
    %233 = tpu.matmul %230, %231, %cst_201 {dimension_numbers = #tpu.dot_dimension_numbers<[1], [0], [0], [1], [0, 0, 1, 1], [], []>} : vector<2x48xbf16>, vector<48x32xbf16>, vector<2x32xf32> -> vector<2x32xf32>
    %234 = vector.broadcast %232 : vector<1x32xf32> to vector<2x32xf32>
    %235 = arith.addf %233, %234 : vector<2x32xf32>
    %236 = arith.truncf %235 : vector<2x32xf32> to vector<2x32xbf16>
    %c8_202 = arith.constant 8 : index
    %c0_203 = arith.constant 0 : index
    %c0_204 = arith.constant 0 : index
    %237 = vector.load %arg22[%c8_202, %c0_203, %c0_204] : memref<16x32x512xbf16, #tpu.memory_space<vmem>>, vector<1x32x512xbf16>
    %238 = vector.shape_cast %237 : vector<1x32x512xbf16> to vector<32x512xbf16>
    %cst_205 = arith.constant dense<0.000000e+00> : vector<2x512xf32>
    %239 = tpu.matmul %236, %238, %cst_205 {dimension_numbers = #tpu.dot_dimension_numbers<[1], [0], [0], [1], [0, 0, 1, 1], [], []>} : vector<2x32xbf16>, vector<32x512xbf16>, vector<2x512xf32> -> vector<2x512xf32>
    %240 = arith.addf %228, %239 : vector<2x512xf32>
    %c9 = arith.constant 9 : index
    %c0_206 = arith.constant 0 : index
    %c0_207 = arith.constant 0 : index
    %241 = vector.load %arg3[%c9, %c0_206, %c0_207] : memref<16x2x48xbf16, #tpu.memory_space<vmem>>, vector<1x2x48xbf16>
    %242 = vector.shape_cast %241 : vector<1x2x48xbf16> to vector<2x48xbf16>
    %c0_208 = arith.constant 0 : index
    %c0_209 = arith.constant 0 : index
    %243 = vector.load %arg10[%c0_208, %c0_209] : memref<48x32xbf16, #tpu.memory_space<vmem>>, vector<48x32xbf16>
    %c0_210 = arith.constant 0 : index
    %c0_211 = arith.constant 0 : index
    %244 = vector.load %arg11[%c0_210, %c0_211] : memref<1x32xf32, #tpu.memory_space<vmem>>, vector<1x32xf32>
    %cst_212 = arith.constant dense<0.000000e+00> : vector<2x32xf32>
    %245 = tpu.matmul %242, %243, %cst_212 {dimension_numbers = #tpu.dot_dimension_numbers<[1], [0], [0], [1], [0, 0, 1, 1], [], []>} : vector<2x48xbf16>, vector<48x32xbf16>, vector<2x32xf32> -> vector<2x32xf32>
    %246 = vector.broadcast %244 : vector<1x32xf32> to vector<2x32xf32>
    %247 = arith.addf %245, %246 : vector<2x32xf32>
    %248 = arith.truncf %247 : vector<2x32xf32> to vector<2x32xbf16>
    %c9_213 = arith.constant 9 : index
    %c0_214 = arith.constant 0 : index
    %c0_215 = arith.constant 0 : index
    %249 = vector.load %arg22[%c9_213, %c0_214, %c0_215] : memref<16x32x512xbf16, #tpu.memory_space<vmem>>, vector<1x32x512xbf16>
    %250 = vector.shape_cast %249 : vector<1x32x512xbf16> to vector<32x512xbf16>
    %cst_216 = arith.constant dense<0.000000e+00> : vector<2x512xf32>
    %251 = tpu.matmul %248, %250, %cst_216 {dimension_numbers = #tpu.dot_dimension_numbers<[1], [0], [0], [1], [0, 0, 1, 1], [], []>} : vector<2x32xbf16>, vector<32x512xbf16>, vector<2x512xf32> -> vector<2x512xf32>
    %252 = arith.addf %240, %251 : vector<2x512xf32>
    %c10 = arith.constant 10 : index
    %c0_217 = arith.constant 0 : index
    %c0_218 = arith.constant 0 : index
    %253 = vector.load %arg3[%c10, %c0_217, %c0_218] : memref<16x2x48xbf16, #tpu.memory_space<vmem>>, vector<1x2x48xbf16>
    %254 = vector.shape_cast %253 : vector<1x2x48xbf16> to vector<2x48xbf16>
    %c0_219 = arith.constant 0 : index
    %c0_220 = arith.constant 0 : index
    %255 = vector.load %arg10[%c0_219, %c0_220] : memref<48x32xbf16, #tpu.memory_space<vmem>>, vector<48x32xbf16>
    %c0_221 = arith.constant 0 : index
    %c0_222 = arith.constant 0 : index
    %256 = vector.load %arg11[%c0_221, %c0_222] : memref<1x32xf32, #tpu.memory_space<vmem>>, vector<1x32xf32>
    %cst_223 = arith.constant dense<0.000000e+00> : vector<2x32xf32>
    %257 = tpu.matmul %254, %255, %cst_223 {dimension_numbers = #tpu.dot_dimension_numbers<[1], [0], [0], [1], [0, 0, 1, 1], [], []>} : vector<2x48xbf16>, vector<48x32xbf16>, vector<2x32xf32> -> vector<2x32xf32>
    %258 = vector.broadcast %256 : vector<1x32xf32> to vector<2x32xf32>
    %259 = arith.addf %257, %258 : vector<2x32xf32>
    %260 = arith.truncf %259 : vector<2x32xf32> to vector<2x32xbf16>
    %c10_224 = arith.constant 10 : index
    %c0_225 = arith.constant 0 : index
    %c0_226 = arith.constant 0 : index
    %261 = vector.load %arg22[%c10_224, %c0_225, %c0_226] : memref<16x32x512xbf16, #tpu.memory_space<vmem>>, vector<1x32x512xbf16>
    %262 = vector.shape_cast %261 : vector<1x32x512xbf16> to vector<32x512xbf16>
    %cst_227 = arith.constant dense<0.000000e+00> : vector<2x512xf32>
    %263 = tpu.matmul %260, %262, %cst_227 {dimension_numbers = #tpu.dot_dimension_numbers<[1], [0], [0], [1], [0, 0, 1, 1], [], []>} : vector<2x32xbf16>, vector<32x512xbf16>, vector<2x512xf32> -> vector<2x512xf32>
    %264 = arith.addf %252, %263 : vector<2x512xf32>
    %c11 = arith.constant 11 : index
    %c0_228 = arith.constant 0 : index
    %c0_229 = arith.constant 0 : index
    %265 = vector.load %arg3[%c11, %c0_228, %c0_229] : memref<16x2x48xbf16, #tpu.memory_space<vmem>>, vector<1x2x48xbf16>
    %266 = vector.shape_cast %265 : vector<1x2x48xbf16> to vector<2x48xbf16>
    %c0_230 = arith.constant 0 : index
    %c0_231 = arith.constant 0 : index
    %267 = vector.load %arg10[%c0_230, %c0_231] : memref<48x32xbf16, #tpu.memory_space<vmem>>, vector<48x32xbf16>
    %c0_232 = arith.constant 0 : index
    %c0_233 = arith.constant 0 : index
    %268 = vector.load %arg11[%c0_232, %c0_233] : memref<1x32xf32, #tpu.memory_space<vmem>>, vector<1x32xf32>
    %cst_234 = arith.constant dense<0.000000e+00> : vector<2x32xf32>
    %269 = tpu.matmul %266, %267, %cst_234 {dimension_numbers = #tpu.dot_dimension_numbers<[1], [0], [0], [1], [0, 0, 1, 1], [], []>} : vector<2x48xbf16>, vector<48x32xbf16>, vector<2x32xf32> -> vector<2x32xf32>
    %270 = vector.broadcast %268 : vector<1x32xf32> to vector<2x32xf32>
    %271 = arith.addf %269, %270 : vector<2x32xf32>
    %272 = arith.truncf %271 : vector<2x32xf32> to vector<2x32xbf16>
    %c11_235 = arith.constant 11 : index
    %c0_236 = arith.constant 0 : index
    %c0_237 = arith.constant 0 : index
    %273 = vector.load %arg22[%c11_235, %c0_236, %c0_237] : memref<16x32x512xbf16, #tpu.memory_space<vmem>>, vector<1x32x512xbf16>
    %274 = vector.shape_cast %273 : vector<1x32x512xbf16> to vector<32x512xbf16>
    %cst_238 = arith.constant dense<0.000000e+00> : vector<2x512xf32>
    %275 = tpu.matmul %272, %274, %cst_238 {dimension_numbers = #tpu.dot_dimension_numbers<[1], [0], [0], [1], [0, 0, 1, 1], [], []>} : vector<2x32xbf16>, vector<32x512xbf16>, vector<2x512xf32> -> vector<2x512xf32>
    %276 = arith.addf %264, %275 : vector<2x512xf32>
    %c12 = arith.constant 12 : index
    %c0_239 = arith.constant 0 : index
    %c0_240 = arith.constant 0 : index
    %277 = vector.load %arg3[%c12, %c0_239, %c0_240] : memref<16x2x48xbf16, #tpu.memory_space<vmem>>, vector<1x2x48xbf16>
    %278 = vector.shape_cast %277 : vector<1x2x48xbf16> to vector<2x48xbf16>
    %c0_241 = arith.constant 0 : index
    %c0_242 = arith.constant 0 : index
    %279 = vector.load %arg10[%c0_241, %c0_242] : memref<48x32xbf16, #tpu.memory_space<vmem>>, vector<48x32xbf16>
    %c0_243 = arith.constant 0 : index
    %c0_244 = arith.constant 0 : index
    %280 = vector.load %arg11[%c0_243, %c0_244] : memref<1x32xf32, #tpu.memory_space<vmem>>, vector<1x32xf32>
    %cst_245 = arith.constant dense<0.000000e+00> : vector<2x32xf32>
    %281 = tpu.matmul %278, %279, %cst_245 {dimension_numbers = #tpu.dot_dimension_numbers<[1], [0], [0], [1], [0, 0, 1, 1], [], []>} : vector<2x48xbf16>, vector<48x32xbf16>, vector<2x32xf32> -> vector<2x32xf32>
    %282 = vector.broadcast %280 : vector<1x32xf32> to vector<2x32xf32>
    %283 = arith.addf %281, %282 : vector<2x32xf32>
    %284 = arith.truncf %283 : vector<2x32xf32> to vector<2x32xbf16>
    %c12_246 = arith.constant 12 : index
    %c0_247 = arith.constant 0 : index
    %c0_248 = arith.constant 0 : index
    %285 = vector.load %arg22[%c12_246, %c0_247, %c0_248] : memref<16x32x512xbf16, #tpu.memory_space<vmem>>, vector<1x32x512xbf16>
    %286 = vector.shape_cast %285 : vector<1x32x512xbf16> to vector<32x512xbf16>
    %cst_249 = arith.constant dense<0.000000e+00> : vector<2x512xf32>
    %287 = tpu.matmul %284, %286, %cst_249 {dimension_numbers = #tpu.dot_dimension_numbers<[1], [0], [0], [1], [0, 0, 1, 1], [], []>} : vector<2x32xbf16>, vector<32x512xbf16>, vector<2x512xf32> -> vector<2x512xf32>
    %288 = arith.addf %276, %287 : vector<2x512xf32>
    %c13 = arith.constant 13 : index
    %c0_250 = arith.constant 0 : index
    %c0_251 = arith.constant 0 : index
    %289 = vector.load %arg3[%c13, %c0_250, %c0_251] : memref<16x2x48xbf16, #tpu.memory_space<vmem>>, vector<1x2x48xbf16>
    %290 = vector.shape_cast %289 : vector<1x2x48xbf16> to vector<2x48xbf16>
    %c0_252 = arith.constant 0 : index
    %c0_253 = arith.constant 0 : index
    %291 = vector.load %arg10[%c0_252, %c0_253] : memref<48x32xbf16, #tpu.memory_space<vmem>>, vector<48x32xbf16>
    %c0_254 = arith.constant 0 : index
    %c0_255 = arith.constant 0 : index
    %292 = vector.load %arg11[%c0_254, %c0_255] : memref<1x32xf32, #tpu.memory_space<vmem>>, vector<1x32xf32>
    %cst_256 = arith.constant dense<0.000000e+00> : vector<2x32xf32>
    %293 = tpu.matmul %290, %291, %cst_256 {dimension_numbers = #tpu.dot_dimension_numbers<[1], [0], [0], [1], [0, 0, 1, 1], [], []>} : vector<2x48xbf16>, vector<48x32xbf16>, vector<2x32xf32> -> vector<2x32xf32>
    %294 = vector.broadcast %292 : vector<1x32xf32> to vector<2x32xf32>
    %295 = arith.addf %293, %294 : vector<2x32xf32>
    %296 = arith.truncf %295 : vector<2x32xf32> to vector<2x32xbf16>
    %c13_257 = arith.constant 13 : index
    %c0_258 = arith.constant 0 : index
    %c0_259 = arith.constant 0 : index
    %297 = vector.load %arg22[%c13_257, %c0_258, %c0_259] : memref<16x32x512xbf16, #tpu.memory_space<vmem>>, vector<1x32x512xbf16>
    %298 = vector.shape_cast %297 : vector<1x32x512xbf16> to vector<32x512xbf16>
    %cst_260 = arith.constant dense<0.000000e+00> : vector<2x512xf32>
    %299 = tpu.matmul %296, %298, %cst_260 {dimension_numbers = #tpu.dot_dimension_numbers<[1], [0], [0], [1], [0, 0, 1, 1], [], []>} : vector<2x32xbf16>, vector<32x512xbf16>, vector<2x512xf32> -> vector<2x512xf32>
    %300 = arith.addf %288, %299 : vector<2x512xf32>
    %c14 = arith.constant 14 : index
    %c0_261 = arith.constant 0 : index
    %c0_262 = arith.constant 0 : index
    %301 = vector.load %arg3[%c14, %c0_261, %c0_262] : memref<16x2x48xbf16, #tpu.memory_space<vmem>>, vector<1x2x48xbf16>
    %302 = vector.shape_cast %301 : vector<1x2x48xbf16> to vector<2x48xbf16>
    %c0_263 = arith.constant 0 : index
    %c0_264 = arith.constant 0 : index
    %303 = vector.load %arg10[%c0_263, %c0_264] : memref<48x32xbf16, #tpu.memory_space<vmem>>, vector<48x32xbf16>
    %c0_265 = arith.constant 0 : index
    %c0_266 = arith.constant 0 : index
    %304 = vector.load %arg11[%c0_265, %c0_266] : memref<1x32xf32, #tpu.memory_space<vmem>>, vector<1x32xf32>
    %cst_267 = arith.constant dense<0.000000e+00> : vector<2x32xf32>
    %305 = tpu.matmul %302, %303, %cst_267 {dimension_numbers = #tpu.dot_dimension_numbers<[1], [0], [0], [1], [0, 0, 1, 1], [], []>} : vector<2x48xbf16>, vector<48x32xbf16>, vector<2x32xf32> -> vector<2x32xf32>
    %306 = vector.broadcast %304 : vector<1x32xf32> to vector<2x32xf32>
    %307 = arith.addf %305, %306 : vector<2x32xf32>
    %308 = arith.truncf %307 : vector<2x32xf32> to vector<2x32xbf16>
    %c14_268 = arith.constant 14 : index
    %c0_269 = arith.constant 0 : index
    %c0_270 = arith.constant 0 : index
    %309 = vector.load %arg22[%c14_268, %c0_269, %c0_270] : memref<16x32x512xbf16, #tpu.memory_space<vmem>>, vector<1x32x512xbf16>
    %310 = vector.shape_cast %309 : vector<1x32x512xbf16> to vector<32x512xbf16>
    %cst_271 = arith.constant dense<0.000000e+00> : vector<2x512xf32>
    %311 = tpu.matmul %308, %310, %cst_271 {dimension_numbers = #tpu.dot_dimension_numbers<[1], [0], [0], [1], [0, 0, 1, 1], [], []>} : vector<2x32xbf16>, vector<32x512xbf16>, vector<2x512xf32> -> vector<2x512xf32>
    %312 = arith.addf %300, %311 : vector<2x512xf32>
    %c15 = arith.constant 15 : index
    %c0_272 = arith.constant 0 : index
    %c0_273 = arith.constant 0 : index
    %313 = vector.load %arg3[%c15, %c0_272, %c0_273] : memref<16x2x48xbf16, #tpu.memory_space<vmem>>, vector<1x2x48xbf16>
    %314 = vector.shape_cast %313 : vector<1x2x48xbf16> to vector<2x48xbf16>
    %c0_274 = arith.constant 0 : index
    %c0_275 = arith.constant 0 : index
    %315 = vector.load %arg10[%c0_274, %c0_275] : memref<48x32xbf16, #tpu.memory_space<vmem>>, vector<48x32xbf16>
    %c0_276 = arith.constant 0 : index
    %c0_277 = arith.constant 0 : index
    %316 = vector.load %arg11[%c0_276, %c0_277] : memref<1x32xf32, #tpu.memory_space<vmem>>, vector<1x32xf32>
    %cst_278 = arith.constant dense<0.000000e+00> : vector<2x32xf32>
    %317 = tpu.matmul %314, %315, %cst_278 {dimension_numbers = #tpu.dot_dimension_numbers<[1], [0], [0], [1], [0, 0, 1, 1], [], []>} : vector<2x48xbf16>, vector<48x32xbf16>, vector<2x32xf32> -> vector<2x32xf32>
    %318 = vector.broadcast %316 : vector<1x32xf32> to vector<2x32xf32>
    %319 = arith.addf %317, %318 : vector<2x32xf32>
    %320 = arith.truncf %319 : vector<2x32xf32> to vector<2x32xbf16>
    %c15_279 = arith.constant 15 : index
    %c0_280 = arith.constant 0 : index
    %c0_281 = arith.constant 0 : index
    %321 = vector.load %arg22[%c15_279, %c0_280, %c0_281] : memref<16x32x512xbf16, #tpu.memory_space<vmem>>, vector<1x32x512xbf16>
    %322 = vector.shape_cast %321 : vector<1x32x512xbf16> to vector<32x512xbf16>
    %cst_282 = arith.constant dense<0.000000e+00> : vector<2x512xf32>
    %323 = tpu.matmul %320, %322, %cst_282 {dimension_numbers = #tpu.dot_dimension_numbers<[1], [0], [0], [1], [0, 0, 1, 1], [], []>} : vector<2x32xbf16>, vector<32x512xbf16>, vector<2x512xf32> -> vector<2x512xf32>
    %324 = arith.addf %312, %323 : vector<2x512xf32>
    %cst_283 = arith.constant 0.000000e+00 : f32
    %325 = vector.broadcast %cst_283 : f32 to vector<2x23xf32>
    %326 = tpu.concatenate %12, %18, %44, %325 in 1 : vector<2x6xf32>, vector<2x300xf32>, vector<2x55xf32>, vector<2x23xf32> -> vector<2x384xf32>
    %c0_284 = arith.constant 0 : index
    %c0_285 = arith.constant 0 : index
    %327 = vector.load %arg24[%c0_284, %c0_285] : memref<2x2944xf32, #tpu.memory_space<vmem>>, vector<2x384xf32>
    tpu.vector_store %arg24[%c0_284, %c0_285], %326 {strides = array<i32>} : memref<2x2944xf32, #tpu.memory_space<vmem>>, vector<2x384xf32>,
    %c0_286 = arith.constant 0 : index
    %c0_287 = arith.constant 0 : index
    %328 = vector.load %arg23[%c0_286, %c0_287] : memref<1x2560xf32, #tpu.memory_space<vmem>>, vector<1x512xf32>
    %329 = vector.broadcast %328 : vector<1x512xf32> to vector<2x512xf32>
    %330 = arith.addf %54, %329 : vector<2x512xf32>
    %c0_288 = arith.constant 0 : index
    %c384 = arith.constant 384 : index
    %331 = vector.load %arg24[%c0_288, %c384] : memref<2x2944xf32, #tpu.memory_space<vmem>>, vector<2x512xf32>
    tpu.vector_store %arg24[%c0_288, %c384], %330 {strides = array<i32>} : memref<2x2944xf32, #tpu.memory_space<vmem>>, vector<2x512xf32>,
    %c0_289 = arith.constant 0 : index
    %c512 = arith.constant 512 : index
    %332 = vector.load %arg23[%c0_289, %c512] : memref<1x2560xf32, #tpu.memory_space<vmem>>, vector<1x512xf32>
    %333 = vector.broadcast %332 : vector<1x512xf32> to vector<2x512xf32>
    %334 = arith.addf %57, %333 : vector<2x512xf32>
    %c0_290 = arith.constant 0 : index
    %c896 = arith.constant 896 : index
    %335 = vector.load %arg24[%c0_290, %c896] : memref<2x2944xf32, #tpu.memory_space<vmem>>, vector<2x512xf32>
    tpu.vector_store %arg24[%c0_290, %c896], %334 {strides = array<i32>} : memref<2x2944xf32, #tpu.memory_space<vmem>>, vector<2x512xf32>,
    %c0_291 = arith.constant 0 : index
    %c1024 = arith.constant 1024 : index
    %336 = vector.load %arg23[%c0_291, %c1024] : memref<1x2560xf32, #tpu.memory_space<vmem>>, vector<1x512xf32>
    %337 = vector.broadcast %336 : vector<1x512xf32> to vector<2x512xf32>
    %338 = arith.addf %126, %337 : vector<2x512xf32>
    %c0_292 = arith.constant 0 : index
    %c1408 = arith.constant 1408 : index
    %339 = vector.load %arg24[%c0_292, %c1408] : memref<2x2944xf32, #tpu.memory_space<vmem>>, vector<2x512xf32>
    tpu.vector_store %arg24[%c0_292, %c1408], %338 {strides = array<i32>} : memref<2x2944xf32, #tpu.memory_space<vmem>>, vector<2x512xf32>,
    %c0_293 = arith.constant 0 : index
    %c1536 = arith.constant 1536 : index
    %340 = vector.load %arg23[%c0_293, %c1536] : memref<1x2560xf32, #tpu.memory_space<vmem>>, vector<1x512xf32>
    %341 = vector.broadcast %340 : vector<1x512xf32> to vector<2x512xf32>
    %342 = arith.addf %131, %341 : vector<2x512xf32>
    %c0_294 = arith.constant 0 : index
    %c1920 = arith.constant 1920 : index
    %343 = vector.load %arg24[%c0_294, %c1920] : memref<2x2944xf32, #tpu.memory_space<vmem>>, vector<2x512xf32>
    tpu.vector_store %arg24[%c0_294, %c1920], %342 {strides = array<i32>} : memref<2x2944xf32, #tpu.memory_space<vmem>>, vector<2x512xf32>,
    %c0_295 = arith.constant 0 : index
    %c2048 = arith.constant 2048 : index
    %344 = vector.load %arg23[%c0_295, %c2048] : memref<1x2560xf32, #tpu.memory_space<vmem>>, vector<1x512xf32>
    %345 = vector.broadcast %344 : vector<1x512xf32> to vector<2x512xf32>
    %346 = arith.addf %324, %345 : vector<2x512xf32>
    %c0_296 = arith.constant 0 : index
    %c2432 = arith.constant 2432 : index
    %347 = vector.load %arg24[%c0_296, %c2432] : memref<2x2944xf32, #tpu.memory_space<vmem>>, vector<2x512xf32>
    tpu.vector_store %arg24[%c0_296, %c2432], %346 {strides = array<i32>} : memref<2x2944xf32, #tpu.memory_space<vmem>>, vector<2x512xf32>,
    return
  }
}

</mosaic_0001>

<llo_original>
// kernel: smirk_encoder_forward.1
$region0: #{smirk_encoder_forward.1}
  #allocation0 [shape = 'u32[]', space=smem, size = 0x4, offset = 0x4, fixed_abs, tag = 'smem constant byte address 0x4 - core index']
  #allocation1 [shape = 'u32[72,128]{1,0:T(1,128)}', space=vmem, size = 0x9000, scoped, tag = 'internal scratch']
  %s0 = inlined_call_operand.vmem [shape: bf16[2,48], index: 0, kind: input, shape index: {}]
  %s1 = inlined_call_operand.vmem [shape: bf16[2,192], index: 1, kind: input, shape index: {}]
  %s2 = inlined_call_operand.vmem [shape: bf16[4,2,192], index: 2, kind: input, shape index: {}]
  %s3 = inlined_call_operand.vmem [shape: bf16[16,2,48], index: 3, kind: input, shape index: {}]
  %s4 = inlined_call_operand.vmem [shape: bf16[48,2688], index: 4, kind: input, shape index: {}]
  %s5 = inlined_call_operand.vmem [shape: f32[1,2688], index: 5, kind: input, shape index: {}]
  %s6 = inlined_call_operand.vmem [shape: bf16[192,1536], index: 6, kind: input, shape index: {}]
  %s7 = inlined_call_operand.vmem [shape: f32[1,1536], index: 7, kind: input, shape index: {}]
  %s8 = inlined_call_operand.vmem [shape: bf16[192,384], index: 8, kind: input, shape index: {}]
  %s9 = inlined_call_operand.vmem [shape: f32[1,384], index: 9, kind: input, shape index: {}]
  %s10 = inlined_call_operand.vmem [shape: bf16[48,32], index: 10, kind: input, shape index: {}]
  %s11 = inlined_call_operand.vmem [shape: f32[1,32], index: 11, kind: input, shape index: {}]
  %s12 = inlined_call_operand.vmem [shape: bf16[640,6], index: 12, kind: input, shape index: {}]
  %s13 = inlined_call_operand.vmem [shape: f32[1,6], index: 13, kind: input, shape index: {}]
  %s14 = inlined_call_operand.vmem [shape: bf16[1024,300], index: 14, kind: input, shape index: {}]
  %s15 = inlined_call_operand.vmem [shape: f32[1,300], index: 15, kind: input, shape index: {}]
  %s16 = inlined_call_operand.vmem [shape: bf16[1024,55], index: 16, kind: input, shape index: {}]
  %s17 = inlined_call_operand.vmem [shape: f32[1,55], index: 17, kind: input, shape index: {}]
  %s18 = inlined_call_operand.vmem [shape: bf16[1024,512], index: 18, kind: input, shape index: {}]
  %s19 = inlined_call_operand.vmem [shape: bf16[512,512], index: 19, kind: input, shape index: {}]
  %s20 = inlined_call_operand.vmem [shape: bf16[4,256,512], index: 20, kind: input, shape index: {}]
  %s21 = inlined_call_operand.vmem [shape: bf16[4,128,512], index: 21, kind: input, shape index: {}]
  %s22 = inlined_call_operand.vmem [shape: bf16[16,32,512], index: 22, kind: input, shape index: {}]
  %s23 = inlined_call_operand.vmem [shape: f32[1,2560], index: 23, kind: input, shape index: {}]
  %s24 = inlined_call_operand.vmem [shape: f32[2,2944], index: 24, kind: output, shape index: {}]
  %s25 = sld [smem:[#allocation0]]
  $region106: #{smirk_encoder_forward.1} parent=0
    _
  %s27 = ssub.s32 1, %s25
  %s28 = scalar_select 0, %s27, %s25
  // Predicated region
  $region2: #{smirk_encoder_forward.1} parent=0 // pred_check
    _
  $region3: #{smirk_encoder_forward.1} parent=0 // pred_check_branch
    %30 = sbr.rel (0) target = $region5
  $region4: #{smirk_encoder_forward.1} parent=0 // pred_region
    _
  $region5: #{smirk_encoder_forward.1} parent=0 // pred_fallthru
    _
  // Predicated region
  $region6: #{smirk_encoder_forward.1} parent=0 // pred_check
    _
  $region7: #{smirk_encoder_forward.1} parent=0 // pred_check_branch
    %32 = sbr.rel (0) target = $region9
  $region8: #{smirk_encoder_forward.1} parent=0 // pred_region
    _
  $region9: #{smirk_encoder_forward.1} parent=0 // pred_fallthru
    _
  // Predicated region
  $region10: #{smirk_encoder_forward.1} parent=0 // pred_check
    _
  $region11: #{smirk_encoder_forward.1} parent=0 // pred_check_branch
    %34 = sbr.rel (0) target = $region13
  $region12: #{smirk_encoder_forward.1} parent=0 // pred_region
    _
  $region13: #{smirk_encoder_forward.1} parent=0 // pred_fallthru
    _
  // Predicated region
  $region14: #{smirk_encoder_forward.1} parent=0 // pred_check
    _
  $region15: #{smirk_encoder_forward.1} parent=0 // pred_check_branch
    %36 = sbr.rel (0) target = $region17
  $region16: #{smirk_encoder_forward.1} parent=0 // pred_region
    _
  $region17: #{smirk_encoder_forward.1} parent=0 // pred_fallthru
    _
  // Predicated region
  $region18: #{smirk_encoder_forward.1} parent=0 // pred_check
    _
  $region19: #{smirk_encoder_forward.1} parent=0 // pred_check_branch
    %38 = sbr.rel (0) target = $region21
  $region20: #{smirk_encoder_forward.1} parent=0 // pred_region
    _
  $region21: #{smirk_encoder_forward.1} parent=0 // pred_fallthru
    _
  // Predicated region
  $region22: #{smirk_encoder_forward.1} parent=0 // pred_check
    _
  $region23: #{smirk_encoder_forward.1} parent=0 // pred_check_branch
    %40 = sbr.rel (0) target = $region25
  $region24: #{smirk_encoder_forward.1} parent=0 // pred_region
    _
  $region25: #{smirk_encoder_forward.1} parent=0 // pred_fallthru
    _
  // Predicated region
  $region26: #{smirk_encoder_forward.1} parent=0 // pred_check
    _
  $region27: #{smirk_encoder_forward.1} parent=0 // pred_check_branch
    %42 = sbr.rel (0) target = $region29
  $region28: #{smirk_encoder_forward.1} parent=0 // pred_region
    _
  $region29: #{smirk_encoder_forward.1} parent=0 // pred_fallthru
    _
  // Predicated region
  $region30: #{smirk_encoder_forward.1} parent=0 // pred_check
    _
  $region31: #{smirk_encoder_forward.1} parent=0 // pred_check_branch
    %44 = sbr.rel (0) target = $region33
  $region32: #{smirk_encoder_forward.1} parent=0 // pred_region
    _
  $region33: #{smirk_encoder_forward.1} parent=0 // pred_fallthru
    _
  // Predicated region
  $region34: #{smirk_encoder_forward.1} parent=0 // pred_check
    _
  $region35: #{smirk_encoder_forward.1} parent=0 // pred_check_branch
    %46 = sbr.rel (0) target = $region37
  $region36: #{smirk_encoder_forward.1} parent=0 // pred_region
    _
  $region37: #{smirk_encoder_forward.1} parent=0 // pred_fallthru
    _
  // Predicated region
  $region38: #{smirk_encoder_forward.1} parent=0 // pred_check
    _
  $region39: #{smirk_encoder_forward.1} parent=0 // pred_check_branch
    %48 = sbr.rel (0) target = $region41
  $region40: #{smirk_encoder_forward.1} parent=0 // pred_region
    _
  $region41: #{smirk_encoder_forward.1} parent=0 // pred_fallthru
    _
  // Predicated region
  $region42: #{smirk_encoder_forward.1} parent=0 // pred_check
    _
  $region43: #{smirk_encoder_forward.1} parent=0 // pred_check_branch
    %50 = sbr.rel (0) target = $region45
  $region44: #{smirk_encoder_forward.1} parent=0 // pred_region
    _
  $region45: #{smirk_encoder_forward.1} parent=0 // pred_fallthru
    _
  // Predicated region
  $region46: #{smirk_encoder_forward.1} parent=0 // pred_check
    _
  $region47: #{smirk_encoder_forward.1} parent=0 // pred_check_branch
    %52 = sbr.rel (0) target = $region49
  $region48: #{smirk_encoder_forward.1} parent=0 // pred_region
    _
  $region49: #{smirk_encoder_forward.1} parent=0 // pred_fallthru
    _
  // Predicated region
  $region50: #{smirk_encoder_forward.1} parent=0 // pred_check
    _
  $region51: #{smirk_encoder_forward.1} parent=0 // pred_check_branch
    %54 = sbr.rel (0) target = $region53
  $region52: #{smirk_encoder_forward.1} parent=0 // pred_region
    _
  $region53: #{smirk_encoder_forward.1} parent=0 // pred_fallthru
    _
  // Predicated region
  $region54: #{smirk_encoder_forward.1} parent=0 // pred_check
    _
  $region55: #{smirk_encoder_forward.1} parent=0 // pred_check_branch
    %56 = sbr.rel (0) target = $region57
  $region56: #{smirk_encoder_forward.1} parent=0 // pred_region
    _
  $region57: #{smirk_encoder_forward.1} parent=0 // pred_fallthru
    _
  // Predicated region
  $region58: #{smirk_encoder_forward.1} parent=0 // pred_check
    _
  $region59: #{smirk_encoder_forward.1} parent=0 // pred_check_branch
    %58 = sbr.rel (0) target = $region61
  $region60: #{smirk_encoder_forward.1} parent=0 // pred_region
    _
  $region61: #{smirk_encoder_forward.1} parent=0 // pred_fallthru
    _
  // Predicated region
  $region62: #{smirk_encoder_forward.1} parent=0 // pred_check
    _
  $region63: #{smirk_encoder_forward.1} parent=0 // pred_check_branch
    %60 = sbr.rel (0) target = $region65
  $region64: #{smirk_encoder_forward.1} parent=0 // pred_region
    _
  $region65: #{smirk_encoder_forward.1} parent=0 // pred_fallthru
    _
  // Predicated region
  $region66: #{smirk_encoder_forward.1} parent=0 // pred_check
    _
  $region67: #{smirk_encoder_forward.1} parent=0 // pred_check_branch
    %62 = sbr.rel (0) target = $region69
  $region68: #{smirk_encoder_forward.1} parent=0 // pred_region
    _
  $region69: #{smirk_encoder_forward.1} parent=0 // pred_fallthru
    _
  // Predicated region
  $region70: #{smirk_encoder_forward.1} parent=0 // pred_check
    _
  $region71: #{smirk_encoder_forward.1} parent=0 // pred_check_branch
    %64 = sbr.rel (0) target = $region73
  $region72: #{smirk_encoder_forward.1} parent=0 // pred_region
    _
  $region73: #{smirk_encoder_forward.1} parent=0 // pred_fallthru
    _
  // Predicated region
  $region74: #{smirk_encoder_forward.1} parent=0 // pred_check
    _
  $region75: #{smirk_encoder_forward.1} parent=0 // pred_check_branch
    %66 = sbr.rel (0) target = $region77
  $region76: #{smirk_encoder_forward.1} parent=0 // pred_region
    _
  $region77: #{smirk_encoder_forward.1} parent=0 // pred_fallthru
    _
  // Predicated region
  $region78: #{smirk_encoder_forward.1} parent=0 // pred_check
    _
  $region79: #{smirk_encoder_forward.1} parent=0 // pred_check_branch
    %68 = sbr.rel (0) target = $region81
  $region80: #{smirk_encoder_forward.1} parent=0 // pred_region
    _
  $region81: #{smirk_encoder_forward.1} parent=0 // pred_fallthru
    _
  // Predicated region
  $region82: #{smirk_encoder_forward.1} parent=0 // pred_check
    _
  $region83: #{smirk_encoder_forward.1} parent=0 // pred_check_branch
    %70 = sbr.rel (0) target = $region85
  $region84: #{smirk_encoder_forward.1} parent=0 // pred_region
    _
  $region85: #{smirk_encoder_forward.1} parent=0 // pred_fallthru
    _
  // Predicated region
  $region86: #{smirk_encoder_forward.1} parent=0 // pred_check
    _
  $region87: #{smirk_encoder_forward.1} parent=0 // pred_check_branch
    %72 = sbr.rel (0) target = $region89
  $region88: #{smirk_encoder_forward.1} parent=0 // pred_region
    _
  $region89: #{smirk_encoder_forward.1} parent=0 // pred_fallthru
    _
  // Predicated region
  $region90: #{smirk_encoder_forward.1} parent=0 // pred_check
    _
  $region91: #{smirk_encoder_forward.1} parent=0 // pred_check_branch
    %74 = sbr.rel (0) target = $region93
  $region92: #{smirk_encoder_forward.1} parent=0 // pred_region
    _
  $region93: #{smirk_encoder_forward.1} parent=0 // pred_fallthru
    _
  // Predicated region
  $region94: #{smirk_encoder_forward.1} parent=0 // pred_check
    _
  $region95: #{smirk_encoder_forward.1} parent=0 // pred_check_branch
    %76 = sbr.rel (0) target = $region97
  $region96: #{smirk_encoder_forward.1} parent=0 // pred_region
    _
  $region97: #{smirk_encoder_forward.1} parent=0 // pred_fallthru
    _
  %v78 = vld [vmem:[%s0] sm:$0x1]
  %v79 = vld [vmem:[%s4] sm:$0xff]
  %v80 = vld [vmem:[%s4 + $0x8] sm:$0xff]
  %v81 = vld [vmem:[%s4 + $0x10] sm:$0xff]
  %v82 = vld [vmem:[%s4 + $0x18] sm:$0xff]
  %v83 = vld [vmem:[%s4 + $0x20] sm:$0xff]
  %v84 = vld [vmem:[%s4 + $0x28] sm:$0xff]
  %v85 = vld [vmem:[%s4 + $0x30] sm:$0xff]
  %v86 = vld [vmem:[%s4 + $0x38] sm:$0xff]
  %v87 = vld [vmem:[%s4 + $0x40] sm:$0xff]
  %v88 = vld [vmem:[%s4 + $0x48] sm:$0xff]
  %v89 = vld [vmem:[%s4 + $0x50] sm:$0xf]
  %v90 = vld [vmem:[%s4 + $0x54] sm:$0xff]
  %v91 = vld [vmem:[%s4 + $0x5c] sm:$0xff]
  %v92 = vld [vmem:[%s4 + $0x64] sm:$0xff]
  %v93 = vld [vmem:[%s4 + $0x6c] sm:$0xff]
  %v94 = vld [vmem:[%s4 + $0x74] sm:$0xff]
  %v95 = vld [vmem:[%s4 + $0x7c] sm:$0xff]
  %v96 = vld [vmem:[%s4 + $0x84] sm:$0xff]
  %v97 = vld [vmem:[%s4 + $0x8c] sm:$0xff]
  %v98 = vld [vmem:[%s4 + $0x94] sm:$0xff]
  %v99 = vld [vmem:[%s4 + $0x9c] sm:$0xff]
  %v100 = vld [vmem:[%s4 + $0xa4] sm:$0xf]
  %v101 = vld [vmem:[%s4 + $0xa8] sm:$0xff]
  %v102 = vld [vmem:[%s4 + $0xb0] sm:$0xff]
  %v103 = vld [vmem:[%s4 + $0xb8] sm:$0xff]
  %v104 = vld [vmem:[%s4 + $0xc0] sm:$0xff]
  %v105 = vld [vmem:[%s4 + $0xc8] sm:$0xff]
  %v106 = vld [vmem:[%s4 + $0xd0] sm:$0xff]
  %v107 = vld [vmem:[%s4 + $0xd8] sm:$0xff]
  %v108 = vld [vmem:[%s4 + $0xe0] sm:$0xff]
  %v109 = vld [vmem:[%s4 + $0xe8] sm:$0xff]
  %v110 = vld [vmem:[%s4 + $0xf0] sm:$0xff]
  %v111 = vld [vmem:[%s4 + $0xf8] sm:$0xf]
  %v112 = vld [vmem:[%s4 + $0xfc] sm:$0xff]
  %v113 = vld [vmem:[%s4 + $0x104] sm:$0xff]
  %v114 = vld [vmem:[%s4 + $0x10c] sm:$0xff]
  %v115 = vld [vmem:[%s4 + $0x114] sm:$0xff]
  %v116 = vld [vmem:[%s4 + $0x11c] sm:$0xff]
  %v117 = vld [vmem:[%s4 + $0x124] sm:$0xff]
  %v118 = vld [vmem:[%s4 + $0x12c] sm:$0xff]
  %v119 = vld [vmem:[%s4 + $0x134] sm:$0xff]
  %v120 = vld [vmem:[%s4 + $0x13c] sm:$0xff]
  %v121 = vld [vmem:[%s4 + $0x144] sm:$0xff]
  %v122 = vld [vmem:[%s4 + $0x14c] sm:$0xf]
  %v123 = vld [vmem:[%s4 + $0x150] sm:$0xff]
  %v124 = vld [vmem:[%s4 + $0x158] sm:$0xff]
  %v125 = vld [vmem:[%s4 + $0x160] sm:$0xff]
  %v126 = vld [vmem:[%s4 + $0x168] sm:$0xff]
  %v127 = vld [vmem:[%s4 + $0x170] sm:$0xff]
  %v128 = vld [vmem:[%s4 + $0x178] sm:$0xff]
  %v129 = vld [vmem:[%s4 + $0x180] sm:$0xff]
  %v130 = vld [vmem:[%s4 + $0x188] sm:$0xff]
  %v131 = vld [vmem:[%s4 + $0x190] sm:$0xff]
  %v132 = vld [vmem:[%s4 + $0x198] sm:$0xff]
  %v133 = vld [vmem:[%s4 + $0x1a0] sm:$0xf]
  %v134 = vld [vmem:[%s4 + $0x1a4] sm:$0xff]
  %v135 = vld [vmem:[%s4 + $0x1ac] sm:$0xff]
  %v136 = vld [vmem:[%s4 + $0x1b4] sm:$0xff]
  %v137 = vld [vmem:[%s4 + $0x1bc] sm:$0xff]
  %v138 = vld [vmem:[%s4 + $0x1c4] sm:$0xff]
  %v139 = vld [vmem:[%s4 + $0x1cc] sm:$0xff]
  %v140 = vld [vmem:[%s4 + $0x1d4] sm:$0xff]
  %v141 = vld [vmem:[%s4 + $0x1dc] sm:$0xff]
  %v142 = vld [vmem:[%s4 + $0x1e4] sm:$0xff]
  %v143 = vld [vmem:[%s4 + $0x1ec] sm:$0xff]
  %v144 = vld [vmem:[%s4 + $0x1f4] sm:$0xf]
  %v145 = vld [vmem:[%s5] sm:$0xff]
  %v146 = vld [vmem:[%s5 + $0x8] sm:$0xff]
  %v147 = vld [vmem:[%s5 + $0x10] sm:$0x1f]
  %v151 = vperm.slane %v145, 0
  %v152 = vperm.slane %v145, 1
  %v153 = vperm.slane %v145, 2
  %v154 = vperm.slane %v145, 3
  %v155 = vperm.slane %v145, 4
  %v156 = vperm.slane %v145, 5
  %v157 = vperm.slane %v145, 6
  %v158 = vperm.slane %v145, 7
  %v159 = vperm.slane %v146, 0
  %v160 = vperm.slane %v146, 1
  %v161 = vperm.slane %v146, 2
  %v162 = vperm.slane %v146, 3
  %v163 = vperm.slane %v146, 4
  %v164 = vperm.slane %v146, 5
  %v165 = vperm.slane %v146, 6
  %v166 = vperm.slane %v146, 7
  %v167 = vperm.slane %v147, 0
  %v168 = vperm.slane %v147, 1
  %v169 = vperm.slane %v147, 2
  %v170 = vperm.slane %v147, 3
  %v171 = vperm.slane %v147, 4
  %v259 = vunpack.c.l.b16 %v79
  %v260 = vunpack.c.h.b16 %v79
  %v261 = vunpack.c.l.b16 %v80
  %v262 = vunpack.c.h.b16 %v80
  %v263 = vunpack.c.l.b16 %v81
  %v264 = vunpack.c.h.b16 %v81
  %v265 = vunpack.c.l.b16 %v82
  %v266 = vunpack.c.h.b16 %v82
  %v267 = vunpack.c.l.b16 %v83
  %v268 = vunpack.c.h.b16 %v83
  %v269 = vunpack.c.l.b16 %v84
  %v270 = vunpack.c.h.b16 %v84
  %v271 = vunpack.c.l.b16 %v85
  %v272 = vunpack.c.h.b16 %v85
  %v273 = vunpack.c.l.b16 %v86
  %v274 = vunpack.c.h.b16 %v86
  %v275 = vunpack.c.l.b16 %v87
  %v276 = vunpack.c.h.b16 %v87
  %v277 = vunpack.c.l.b16 %v88
  %v278 = vunpack.c.h.b16 %v88
  %v279 = vunpack.c.l.b16 %v89
  %v280 = vunpack.c.l.b16 %v90
  %v281 = vunpack.c.h.b16 %v90
  %v282 = vunpack.c.l.b16 %v91
  %v283 = vunpack.c.h.b16 %v91
  %v284 = vunpack.c.l.b16 %v92
  %v285 = vunpack.c.h.b16 %v92
  %v286 = vunpack.c.l.b16 %v93
  %v287 = vunpack.c.h.b16 %v93
  %v288 = vunpack.c.l.b16 %v94
  %v289 = vunpack.c.h.b16 %v94
  %v290 = vunpack.c.l.b16 %v95
  %v291 = vunpack.c.h.b16 %v95
  %v292 = vunpack.c.l.b16 %v96
  %v293 = vunpack.c.h.b16 %v96
  %v294 = vunpack.c.l.b16 %v97
  %v295 = vunpack.c.h.b16 %v97
  %v296 = vunpack.c.l.b16 %v98
  %v297 = vunpack.c.h.b16 %v98
  %v298 = vunpack.c.l.b16 %v99
  %v299 = vunpack.c.h.b16 %v99
  %v300 = vunpack.c.l.b16 %v100
  %v301 = vunpack.c.l.b16 %v101
  %v302 = vunpack.c.h.b16 %v101
  %v303 = vunpack.c.l.b16 %v102
  %v304 = vunpack.c.h.b16 %v102
  %v305 = vunpack.c.l.b16 %v103
  %v306 = vunpack.c.h.b16 %v103
  %v307 = vunpack.c.l.b16 %v104
  %v308 = vunpack.c.h.b16 %v104
  %v309 = vunpack.c.l.b16 %v105
  %v310 = vunpack.c.h.b16 %v105
  %v311 = vunpack.c.l.b16 %v106
  %v312 = vunpack.c.h.b16 %v106
  %v313 = vunpack.c.l.b16 %v107
  %v314 = vunpack.c.h.b16 %v107
  %v315 = vunpack.c.l.b16 %v108
  %v316 = vunpack.c.h.b16 %v108
  %v317 = vunpack.c.l.b16 %v109
  %v318 = vunpack.c.h.b16 %v109
  %v319 = vunpack.c.l.b16 %v110
  %v320 = vunpack.c.h.b16 %v110
  %v321 = vunpack.c.l.b16 %v111
  %v322 = vunpack.c.l.b16 %v112
  %v323 = vunpack.c.h.b16 %v112
  %v324 = vunpack.c.l.b16 %v113
  %v325 = vunpack.c.h.b16 %v113
  %v326 = vunpack.c.l.b16 %v114
  %v327 = vunpack.c.h.b16 %v114
  %v328 = vunpack.c.l.b16 %v115
  %v329 = vunpack.c.h.b16 %v115
  %v330 = vunpack.c.l.b16 %v116
  %v331 = vunpack.c.h.b16 %v116
  %v332 = vunpack.c.l.b16 %v117
  %v333 = vunpack.c.h.b16 %v117
  %v334 = vunpack.c.l.b16 %v118
  %v335 = vunpack.c.h.b16 %v118
  %v336 = vunpack.c.l.b16 %v119
  %v337 = vunpack.c.h.b16 %v119
  %v338 = vunpack.c.l.b16 %v120
  %v339 = vunpack.c.h.b16 %v120
  %v340 = vunpack.c.l.b16 %v121
  %v341 = vunpack.c.h.b16 %v121
  %v342 = vunpack.c.l.b16 %v122
  %v343 = vunpack.c.l.b16 %v123
  %v344 = vunpack.c.h.b16 %v123
  %v345 = vunpack.c.l.b16 %v124
  %v346 = vunpack.c.h.b16 %v124
  %v347 = vunpack.c.l.b16 %v125
  %v348 = vunpack.c.h.b16 %v125
  %v349 = vunpack.c.l.b16 %v126
  %v350 = vunpack.c.h.b16 %v126
  %v351 = vunpack.c.l.b16 %v127
  %v352 = vunpack.c.h.b16 %v127
  %v353 = vunpack.c.l.b16 %v128
  %v354 = vunpack.c.h.b16 %v128
  %v355 = vunpack.c.l.b16 %v129
  %v356 = vunpack.c.h.b16 %v129
  %v357 = vunpack.c.l.b16 %v130
  %v358 = vunpack.c.h.b16 %v130
  %v359 = vunpack.c.l.b16 %v131
  %v360 = vunpack.c.h.b16 %v131
  %v361 = vunpack.c.l.b16 %v132
  %v362 = vunpack.c.h.b16 %v132
  %v363 = vunpack.c.l.b16 %v133
  %v364 = vunpack.c.l.b16 %v134
  %v365 = vunpack.c.h.b16 %v134
  %v366 = vunpack.c.l.b16 %v135
  %v367 = vunpack.c.h.b16 %v135
  %v368 = vunpack.c.l.b16 %v136
  %v369 = vunpack.c.h.b16 %v136
  %v370 = vunpack.c.l.b16 %v137
  %v371 = vunpack.c.h.b16 %v137
  %v372 = vunpack.c.l.b16 %v138
  %v373 = vunpack.c.h.b16 %v138
  %v374 = vunpack.c.l.b16 %v139
  %v375 = vunpack.c.h.b16 %v139
  %v376 = vunpack.c.l.b16 %v140
  %v377 = vunpack.c.h.b16 %v140
  %v378 = vunpack.c.l.b16 %v141
  %v379 = vunpack.c.h.b16 %v141
  %v380 = vunpack.c.l.b16 %v142
  %v381 = vunpack.c.h.b16 %v142
  %v382 = vunpack.c.l.b16 %v143
  %v383 = vunpack.c.h.b16 %v143
  %v384 = vunpack.c.l.b16 %v144
  %v385 = vpack.c.b16 %v280, %v259
  %v386 = vpack.c.b16 %v281, %v260
  %v387 = vpack.c.b16 %v282, %v261
  %v388 = vpack.c.b16 %v283, %v262
  %v389 = vpack.c.b16 %v284, %v263
  %v390 = vpack.c.b16 %v285, %v264
  %v391 = vpack.c.b16 %v286, %v265
  %v392 = vpack.c.b16 %v287, %v266
  %v393 = vpack.c.b16 %v288, %v267
  %v394 = vpack.c.b16 %v289, %v268
  %v395 = vpack.c.b16 %v290, %v269
  %v396 = vpack.c.b16 %v291, %v270
  %v397 = vpack.c.b16 %v292, %v271
  %v398 = vpack.c.b16 %v293, %v272
  %v399 = vpack.c.b16 %v294, %v273
  %v400 = vpack.c.b16 %v295, %v274
  %v401 = vpack.c.b16 %v296, %v275
  %v402 = vpack.c.b16 %v297, %v276
  %v403 = vpack.c.b16 %v298, %v277
  %v404 = vpack.c.b16 %v299, %v278
  %v405 = vpack.c.b16 %v300, %v279
  %v406 = vpack.c.b16 %v322, %v301
  %v407 = vpack.c.b16 %v323, %v302
  %v408 = vpack.c.b16 %v324, %v303
  %v409 = vpack.c.b16 %v325, %v304
  %v410 = vpack.c.b16 %v326, %v305
  %v411 = vpack.c.b16 %v327, %v306
  %v412 = vpack.c.b16 %v328, %v307
  %v413 = vpack.c.b16 %v329, %v308
  %v414 = vpack.c.b16 %v330, %v309
  %v415 = vpack.c.b16 %v331, %v310
  %v416 = vpack.c.b16 %v332, %v311
  %v417 = vpack.c.b16 %v333, %v312
  %v418 = vpack.c.b16 %v334, %v313
  %v419 = vpack.c.b16 %v335, %v314
  %v420 = vpack.c.b16 %v336, %v315
  %v421 = vpack.c.b16 %v337, %v316
  %v422 = vpack.c.b16 %v338, %v317
  %v423 = vpack.c.b16 %v339, %v318
  %v424 = vpack.c.b16 %v340, %v319
  %v425 = vpack.c.b16 %v341, %v320
  %v426 = vpack.c.b16 %v342, %v321
  %v427 = vpack.c.b16 %v364, %v343
  %v428 = vpack.c.b16 %v365, %v344
  %v429 = vpack.c.b16 %v366, %v345
  %v430 = vpack.c.b16 %v367, %v346
  %v431 = vpack.c.b16 %v368, %v347
  %v432 = vpack.c.b16 %v369, %v348
  %v433 = vpack.c.b16 %v370, %v349
  %v434 = vpack.c.b16 %v371, %v350
  %v435 = vpack.c.b16 %v372, %v351
  %v436 = vpack.c.b16 %v373, %v352
  %v437 = vpack.c.b16 %v374, %v353
  %v438 = vpack.c.b16 %v375, %v354
  %v439 = vpack.c.b16 %v376, %v355
  %v440 = vpack.c.b16 %v377, %v356
  %v441 = vpack.c.b16 %v378, %v357
  %v442 = vpack.c.b16 %v379, %v358
  %v443 = vpack.c.b16 %v380, %v359
  %v444 = vpack.c.b16 %v381, %v360
  %v445 = vpack.c.b16 %v382, %v361
  %v446 = vpack.c.b16 %v383, %v362
  %v447 = vpack.c.b16 %v384, %v363
  %vm511 = vcmask 392192
  %v513 = vsel %vm511, %v78, 0
  %515 = vmatpush.bf16.msra.mxu0 0
  %516 = vmatpush.bf16.msra.mxu0 0
  %517 = vmatpush.bf16.msra.mxu0 0
  %518 = vmatpush.bf16.msra.mxu0 0
  %519 = vmatpush.bf16.msra.mxu0 0
  %520 = vmatpush.bf16.msra.mxu0 %v427
  %521 = vmatpush.bf16.msra.mxu0 %v406
  %522 = vmatpush.bf16.msra.mxu0 %v385
  %523 = vmatmul.bf16.gmra.mxu0 %v513
  %v524 = vpop.f32.mrf.mxu0
  %v525 = vadd.f32 %v151, %v524
  %v526 = vpop.f32.mrf.mxu0
  %527 = vdwg.mxu0
  %528 = vmatpush.bf16.msra.mxu0 0
  %529 = vmatpush.bf16.msra.mxu0 0
  %530 = vmatpush.bf16.msra.mxu0 0
  %531 = vmatpush.bf16.msra.mxu0 0
  %532 = vmatpush.bf16.msra.mxu0 0
  %533 = vmatpush.bf16.msra.mxu0 %v428
  %534 = vmatpush.bf16.msra.mxu0 %v407
  %535 = vmatpush.bf16.msra.mxu0 %v386
  %536 = vmatmul.bf16.gmra.mxu0 %v513
  %v537 = vpop.f32.mrf.mxu0
  %v538 = vadd.f32 %v152, %v537
  %v539 = vpop.f32.mrf.mxu0
  %540 = vdwg.mxu0
  %541 = vmatpush.bf16.msra.mxu0 0
  %542 = vmatpush.bf16.msra.mxu0 0
  %543 = vmatpush.bf16.msra.mxu0 0
  %544 = vmatpush.bf16.msra.mxu0 0
  %545 = vmatpush.bf16.msra.mxu0 0
  %546 = vmatpush.bf16.msra.mxu0 %v429
  %547 = vmatpush.bf16.msra.mxu0 %v408
  %548 = vmatpush.bf16.msra.mxu0 %v387
  %549 = vmatmul.bf16.gmra.mxu0 %v513
  %v550 = vpop.f32.mrf.mxu0
  %v551 = vadd.f32 %v153, %v550
  %v552 = vpop.f32.mrf.mxu0
  %553 = vdwg.mxu0
  %554 = vmatpush.bf16.msra.mxu0 0
  %555 = vmatpush.bf16.msra.mxu0 0
  %556 = vmatpush.bf16.msra.mxu0 0
  %557 = vmatpush.bf16.msra.mxu0 0
  %558 = vmatpush.bf16.msra.mxu0 0
  %559 = vmatpush.bf16.msra.mxu0 %v430
  %560 = vmatpush.bf16.msra.mxu0 %v409
  %561 = vmatpush.bf16.msra.mxu0 %v388
  %562 = vmatmul.bf16.gmra.mxu0 %v513
  %v563 = vpop.f32.mrf.mxu0
  %v564 = vadd.f32 %v154, %v563
  %v565 = vpop.f32.mrf.mxu0
  %566 = vdwg.mxu0
  %567 = vmatpush.bf16.msra.mxu0 0
  %568 = vmatpush.bf16.msra.mxu0 0
  %569 = vmatpush.bf16.msra.mxu0 0
  %570 = vmatpush.bf16.msra.mxu0 0
  %571 = vmatpush.bf16.msra.mxu0 0
  %572 = vmatpush.bf16.msra.mxu0 %v431
  %573 = vmatpush.bf16.msra.mxu0 %v410
  %574 = vmatpush.bf16.msra.mxu0 %v389
  %575 = vmatmul.bf16.gmra.mxu0 %v513
  %v576 = vpop.f32.mrf.mxu0
  %v577 = vadd.f32 %v155, %v576
  %v578 = vpop.f32.mrf.mxu0
  %579 = vdwg.mxu0
  %580 = vmatpush.bf16.msra.mxu0 0
  %581 = vmatpush.bf16.msra.mxu0 0
  %582 = vmatpush.bf16.msra.mxu0 0
  %583 = vmatpush.bf16.msra.mxu0 0
  %584 = vmatpush.bf16.msra.mxu0 0
  %585 = vmatpush.bf16.msra.mxu0 %v432
  %586 = vmatpush.bf16.msra.mxu0 %v411
  %587 = vmatpush.bf16.msra.mxu0 %v390
  %588 = vmatmul.bf16.gmra.mxu0 %v513
  %v589 = vpop.f32.mrf.mxu0
  %v590 = vadd.f32 %v156, %v589
  %v591 = vpop.f32.mrf.mxu0
  %592 = vdwg.mxu0
  %593 = vmatpush.bf16.msra.mxu0 0
  %594 = vmatpush.bf16.msra.mxu0 0
  %595 = vmatpush.bf16.msra.mxu0 0
  %596 = vmatpush.bf16.msra.mxu0 0
  %597 = vmatpush.bf16.msra.mxu0 0
  %598 = vmatpush.bf16.msra.mxu0 %v433
  %599 = vmatpush.bf16.msra.mxu0 %v412
  %600 = vmatpush.bf16.msra.mxu0 %v391
  %601 = vmatmul.bf16.gmra.mxu0 %v513
  %v602 = vpop.f32.mrf.mxu0
  %v603 = vadd.f32 %v157, %v602
  %v604 = vpop.f32.mrf.mxu0
  %605 = vdwg.mxu0
  %606 = vmatpush.bf16.msra.mxu0 0
  %607 = vmatpush.bf16.msra.mxu0 0
  %608 = vmatpush.bf16.msra.mxu0 0
  %609 = vmatpush.bf16.msra.mxu0 0
  %610 = vmatpush.bf16.msra.mxu0 0
  %611 = vmatpush.bf16.msra.mxu0 %v434
  %612 = vmatpush.bf16.msra.mxu0 %v413
  %613 = vmatpush.bf16.msra.mxu0 %v392
  %614 = vmatmul.bf16.gmra.mxu0 %v513
  %v615 = vpop.f32.mrf.mxu0
  %v616 = vadd.f32 %v158, %v615
  %v617 = vpop.f32.mrf.mxu0
  %618 = vdwg.mxu0
  %619 = vmatpush.bf16.msra.mxu0 0
  %620 = vmatpush.bf16.msra.mxu0 0
  %621 = vmatpush.bf16.msra.mxu0 0
  %622 = vmatpush.bf16.msra.mxu0 0
  %623 = vmatpush.bf16.msra.mxu0 0
  %624 = vmatpush.bf16.msra.mxu0 %v435
  %625 = vmatpush.bf16.msra.mxu0 %v414
  %626 = vmatpush.bf16.msra.mxu0 %v393
  %627 = vmatmul.bf16.gmra.mxu0 %v513
  %v628 = vpop.f32.mrf.mxu0
  %v629 = vadd.f32 %v159, %v628
  %v630 = vpop.f32.mrf.mxu0
  %631 = vdwg.mxu0
  %632 = vmatpush.bf16.msra.mxu0 0
  %633 = vmatpush.bf16.msra.mxu0 0
  %634 = vmatpush.bf16.msra.mxu0 0
  %635 = vmatpush.bf16.msra.mxu0 0
  %636 = vmatpush.bf16.msra.mxu0 0
  %637 = vmatpush.bf16.msra.mxu0 %v436
  %638 = vmatpush.bf16.msra.mxu0 %v415
  %639 = vmatpush.bf16.msra.mxu0 %v394
  %640 = vmatmul.bf16.gmra.mxu0 %v513
  %v641 = vpop.f32.mrf.mxu0
  %v642 = vadd.f32 %v160, %v641
  %v643 = vpop.f32.mrf.mxu0
  %644 = vdwg.mxu0
  %645 = vmatpush.bf16.msra.mxu0 0
  %646 = vmatpush.bf16.msra.mxu0 0
  %647 = vmatpush.bf16.msra.mxu0 0
  %648 = vmatpush.bf16.msra.mxu0 0
  %649 = vmatpush.bf16.msra.mxu0 0
  %650 = vmatpush.bf16.msra.mxu0 %v437
  %651 = vmatpush.bf16.msra.mxu0 %v416
  %652 = vmatpush.bf16.msra.mxu0 %v395
  %653 = vmatmul.bf16.gmra.mxu0 %v513
  %v654 = vpop.f32.mrf.mxu0
  %v655 = vadd.f32 %v161, %v654
  %v656 = vpop.f32.mrf.mxu0
  %657 = vdwg.mxu0
  %658 = vmatpush.bf16.msra.mxu0 0
  %659 = vmatpush.bf16.msra.mxu0 0
  %660 = vmatpush.bf16.msra.mxu0 0
  %661 = vmatpush.bf16.msra.mxu0 0
  %662 = vmatpush.bf16.msra.mxu0 0
  %663 = vmatpush.bf16.msra.mxu0 %v438
  %664 = vmatpush.bf16.msra.mxu0 %v417
  %665 = vmatpush.bf16.msra.mxu0 %v396
  %666 = vmatmul.bf16.gmra.mxu0 %v513
  %v667 = vpop.f32.mrf.mxu0
  %v668 = vadd.f32 %v162, %v667
  %v669 = vpop.f32.mrf.mxu0
  %670 = vdwg.mxu0
  %671 = vmatpush.bf16.msra.mxu0 0
  %672 = vmatpush.bf16.msra.mxu0 0
  %673 = vmatpush.bf16.msra.mxu0 0
  %674 = vmatpush.bf16.msra.mxu0 0
  %675 = vmatpush.bf16.msra.mxu0 0
  %676 = vmatpush.bf16.msra.mxu0 %v439
  %677 = vmatpush.bf16.msra.mxu0 %v418
  %678 = vmatpush.bf16.msra.mxu0 %v397
  %679 = vmatmul.bf16.gmra.mxu0 %v513
  %v680 = vpop.f32.mrf.mxu0
  %v681 = vadd.f32 %v163, %v680
  %v682 = vpop.f32.mrf.mxu0
  %683 = vdwg.mxu0
  %684 = vmatpush.bf16.msra.mxu0 0
  %685 = vmatpush.bf16.msra.mxu0 0
  %686 = vmatpush.bf16.msra.mxu0 0
  %687 = vmatpush.bf16.msra.mxu0 0
  %688 = vmatpush.bf16.msra.mxu0 0
  %689 = vmatpush.bf16.msra.mxu0 %v440
  %690 = vmatpush.bf16.msra.mxu0 %v419
  %691 = vmatpush.bf16.msra.mxu0 %v398
  %692 = vmatmul.bf16.gmra.mxu0 %v513
  %v693 = vpop.f32.mrf.mxu0
  %v694 = vadd.f32 %v164, %v693
  %v695 = vpop.f32.mrf.mxu0
  %696 = vdwg.mxu0
  %697 = vmatpush.bf16.msra.mxu0 0
  %698 = vmatpush.bf16.msra.mxu0 0
  %699 = vmatpush.bf16.msra.mxu0 0
  %700 = vmatpush.bf16.msra.mxu0 0
  %701 = vmatpush.bf16.msra.mxu0 0
  %702 = vmatpush.bf16.msra.mxu0 %v441
  %703 = vmatpush.bf16.msra.mxu0 %v420
  %704 = vmatpush.bf16.msra.mxu0 %v399
  %705 = vmatmul.bf16.gmra.mxu0 %v513
  %v706 = vpop.f32.mrf.mxu0
  %v707 = vadd.f32 %v165, %v706
  %v708 = vpop.f32.mrf.mxu0
  %709 = vdwg.mxu0
  %710 = vmatpush.bf16.msra.mxu0 0
  %711 = vmatpush.bf16.msra.mxu0 0
  %712 = vmatpush.bf16.msra.mxu0 0
  %713 = vmatpush.bf16.msra.mxu0 0
  %714 = vmatpush.bf16.msra.mxu0 0
  %715 = vmatpush.bf16.msra.mxu0 %v442
  %716 = vmatpush.bf16.msra.mxu0 %v421
  %717 = vmatpush.bf16.msra.mxu0 %v400
  %718 = vmatmul.bf16.gmra.mxu0 %v513
  %v719 = vpop.f32.mrf.mxu0
  %v720 = vadd.f32 %v166, %v719
  %v721 = vpop.f32.mrf.mxu0
  %722 = vdwg.mxu0
  %723 = vmatpush.bf16.msra.mxu0 0
  %724 = vmatpush.bf16.msra.mxu0 0
  %725 = vmatpush.bf16.msra.mxu0 0
  %726 = vmatpush.bf16.msra.mxu0 0
  %727 = vmatpush.bf16.msra.mxu0 0
  %728 = vmatpush.bf16.msra.mxu0 %v443
  %729 = vmatpush.bf16.msra.mxu0 %v422
  %730 = vmatpush.bf16.msra.mxu0 %v401
  %731 = vmatmul.bf16.gmra.mxu0 %v513
  %v732 = vpop.f32.mrf.mxu0
  %v733 = vadd.f32 %v167, %v732
  %v734 = vpop.f32.mrf.mxu0
  %735 = vdwg.mxu0
  %736 = vmatpush.bf16.msra.mxu0 0
  %737 = vmatpush.bf16.msra.mxu0 0
  %738 = vmatpush.bf16.msra.mxu0 0
  %739 = vmatpush.bf16.msra.mxu0 0
  %740 = vmatpush.bf16.msra.mxu0 0
  %741 = vmatpush.bf16.msra.mxu0 %v444
  %742 = vmatpush.bf16.msra.mxu0 %v423
  %743 = vmatpush.bf16.msra.mxu0 %v402
  %744 = vmatmul.bf16.gmra.mxu0 %v513
  %v745 = vpop.f32.mrf.mxu0
  %v746 = vadd.f32 %v168, %v745
  %v747 = vpop.f32.mrf.mxu0
  %748 = vdwg.mxu0
  %749 = vmatpush.bf16.msra.mxu0 0
  %750 = vmatpush.bf16.msra.mxu0 0
  %751 = vmatpush.bf16.msra.mxu0 0
  %752 = vmatpush.bf16.msra.mxu0 0
  %753 = vmatpush.bf16.msra.mxu0 0
  %754 = vmatpush.bf16.msra.mxu0 %v445
  %755 = vmatpush.bf16.msra.mxu0 %v424
  %756 = vmatpush.bf16.msra.mxu0 %v403
  %757 = vmatmul.bf16.gmra.mxu0 %v513
  %v758 = vpop.f32.mrf.mxu0
  %v759 = vadd.f32 %v169, %v758
  %v760 = vpop.f32.mrf.mxu0
  %761 = vdwg.mxu0
  %762 = vmatpush.bf16.msra.mxu0 0
  %763 = vmatpush.bf16.msra.mxu0 0
  %764 = vmatpush.bf16.msra.mxu0 0
  %765 = vmatpush.bf16.msra.mxu0 0
  %766 = vmatpush.bf16.msra.mxu0 0
  %767 = vmatpush.bf16.msra.mxu0 %v446
  %768 = vmatpush.bf16.msra.mxu0 %v425
  %769 = vmatpush.bf16.msra.mxu0 %v404
  %770 = vmatmul.bf16.gmra.mxu0 %v513
  %v771 = vpop.f32.mrf.mxu0
  %v772 = vadd.f32 %v170, %v771
  %v773 = vpop.f32.mrf.mxu0
  %774 = vdwg.mxu0
  %775 = vmatpush.bf16.msra.mxu0 0
  %776 = vmatpush.bf16.msra.mxu0 0
  %777 = vmatpush.bf16.msra.mxu0 0
  %778 = vmatpush.bf16.msra.mxu0 0
  %779 = vmatpush.bf16.msra.mxu0 0
  %780 = vmatpush.bf16.msra.mxu0 %v447
  %781 = vmatpush.bf16.msra.mxu0 %v426
  %782 = vmatpush.bf16.msra.mxu0 %v405
  %783 = vmatmul.bf16.gmra.mxu0 %v513
  %v784 = vpop.f32.mrf.mxu0
  %v785 = vadd.f32 %v171, %v784
  %v786 = vpop.f32.mrf.mxu0
  %787 = vdwg.mxu0
  %v788 = vpack.c.bf16 %v538, %v525
  %v789 = vpack.c.bf16 %v564, %v551
  %v790 = vpack.c.bf16 %v590, %v577
  %v791 = vpack.c.bf16 %v616, %v603
  %v792 = vpack.c.bf16 %v642, %v629
  %v793 = vpack.c.bf16 %v668, %v655
  %v794 = vpack.c.bf16 %v694, %v681
  %v795 = vpack.c.bf16 %v720, %v707
  %v796 = vpack.c.bf16 %v746, %v733
  %v797 = vpack.c.bf16 %v772, %v759
  %v798 = vpack.c.bf16 %v785, %v785
  %v799 = vld [vmem:[%s12] sm:$0xf]
  %v800 = vld [vmem:[%s12 + $0x4] sm:$0xf]
  %v801 = vld [vmem:[%s12 + $0x8] sm:$0xf]
  %v802 = vld [vmem:[%s12 + $0xc] sm:$0xf]
  %v803 = vld [vmem:[%s12 + $0x10] sm:$0xf]
  %v804 = vld [vmem:[%s12 + $0x14] sm:$0xf]
  %v805 = vld [vmem:[%s12 + $0x18] sm:$0xf]
  %v806 = vld [vmem:[%s12 + $0x1c] sm:$0xf]
  %v807 = vld [vmem:[%s12 + $0x20] sm:$0xf]
  %v808 = vld [vmem:[%s12 + $0x24] sm:$0xf]
  %v809 = vld [vmem:[%s12 + $0x28] sm:$0xf]
  %v810 = vld [vmem:[%s12 + $0x2c] sm:$0xf]
  %v811 = vld [vmem:[%s12 + $0x30] sm:$0xf]
  %v812 = vld [vmem:[%s12 + $0x34] sm:$0xf]
  %v813 = vld [vmem:[%s12 + $0x38] sm:$0xf]
  %v814 = vld [vmem:[%s12 + $0x3c] sm:$0xf]
  %v815 = vld [vmem:[%s12 + $0x40] sm:$0xf]
  %v816 = vld [vmem:[%s12 + $0x44] sm:$0xf]
  %v817 = vld [vmem:[%s12 + $0x48] sm:$0xf]
  %v818 = vld [vmem:[%s12 + $0x4c] sm:$0xf]
  %v819 = vld [vmem:[%s12 + $0x50] sm:$0xf]
  %v820 = vld [vmem:[%s12 + $0x54] sm:$0xf]
  %v821 = vld [vmem:[%s12 + $0x58] sm:$0xf]
  %v822 = vld [vmem:[%s12 + $0x5c] sm:$0xf]
  %v823 = vld [vmem:[%s12 + $0x60] sm:$0xf]
  %v824 = vld [vmem:[%s12 + $0x64] sm:$0xf]
  %v825 = vld [vmem:[%s12 + $0x68] sm:$0xf]
  %v826 = vld [vmem:[%s12 + $0x6c] sm:$0xf]
  %v827 = vld [vmem:[%s12 + $0x70] sm:$0xf]
  %v828 = vld [vmem:[%s12 + $0x74] sm:$0xf]
  %v829 = vld [vmem:[%s12 + $0x78] sm:$0xf]
  %v830 = vld [vmem:[%s12 + $0x7c] sm:$0xf]
  %v831 = vld [vmem:[%s12 + $0x80] sm:$0xf]
  %v832 = vld [vmem:[%s12 + $0x84] sm:$0xf]
  %v833 = vld [vmem:[%s12 + $0x88] sm:$0xf]
  %v834 = vld [vmem:[%s12 + $0x8c] sm:$0xf]
  %v835 = vld [vmem:[%s12 + $0x90] sm:$0xf]
  %v836 = vld [vmem:[%s12 + $0x94] sm:$0xf]
  %v837 = vld [vmem:[%s12 + $0x98] sm:$0xf]
  %v838 = vld [vmem:[%s12 + $0x9c] sm:$0xf]
  %v839 = vld [vmem:[%s12 + $0xa0] sm:$0xf]
  %v840 = vld [vmem:[%s12 + $0xa4] sm:$0xf]
  %v841 = vld [vmem:[%s12 + $0xa8] sm:$0xf]
  %v842 = vld [vmem:[%s12 + $0xac] sm:$0xf]
  %v843 = vld [vmem:[%s12 + $0xb0] sm:$0xf]
  %v844 = vld [vmem:[%s12 + $0xb4] sm:$0xf]
  %v845 = vld [vmem:[%s12 + $0xb8] sm:$0xf]
  %v846 = vld [vmem:[%s12 + $0xbc] sm:$0xf]
  %v847 = vld [vmem:[%s12 + $0xc0] sm:$0xf]
  %v848 = vld [vmem:[%s12 + $0xc4] sm:$0xf]
  %v849 = vld [vmem:[%s12 + $0xc8] sm:$0xf]
  %v850 = vld [vmem:[%s12 + $0xcc] sm:$0xf]
  %v851 = vld [vmem:[%s12 + $0xd0] sm:$0xf]
  %v852 = vld [vmem:[%s12 + $0xd4] sm:$0xf]
  %v853 = vld [vmem:[%s12 + $0xd8] sm:$0xf]
  %v854 = vld [vmem:[%s12 + $0xdc] sm:$0xf]
  %v855 = vld [vmem:[%s12 + $0xe0] sm:$0xf]
  %v856 = vld [vmem:[%s12 + $0xe4] sm:$0xf]
  %v857 = vld [vmem:[%s12 + $0xe8] sm:$0xf]
  %v858 = vld [vmem:[%s12 + $0xec] sm:$0xf]
  %v859 = vld [vmem:[%s12 + $0xf0] sm:$0xf]
  %v860 = vld [vmem:[%s12 + $0xf4] sm:$0xf]
  %v861 = vld [vmem:[%s12 + $0xf8] sm:$0xf]
  %v862 = vld [vmem:[%s12 + $0xfc] sm:$0xf]
  %v863 = vld [vmem:[%s12 + $0x100] sm:$0xf]
  %v864 = vld [vmem:[%s12 + $0x104] sm:$0xf]
  %v865 = vld [vmem:[%s12 + $0x108] sm:$0xf]
  %v866 = vld [vmem:[%s12 + $0x10c] sm:$0xf]
  %v867 = vld [vmem:[%s12 + $0x110] sm:$0xf]
  %v868 = vld [vmem:[%s12 + $0x114] sm:$0xf]
  %v869 = vld [vmem:[%s12 + $0x118] sm:$0xf]
  %v870 = vld [vmem:[%s12 + $0x11c] sm:$0xf]
  %v871 = vld [vmem:[%s12 + $0x120] sm:$0xf]
  %v872 = vld [vmem:[%s12 + $0x124] sm:$0xf]
  %v873 = vld [vmem:[%s12 + $0x128] sm:$0xf]
  %v874 = vld [vmem:[%s12 + $0x12c] sm:$0xf]
  %v875 = vld [vmem:[%s12 + $0x130] sm:$0xf]
  %v876 = vld [vmem:[%s12 + $0x134] sm:$0xf]
  %v877 = vld [vmem:[%s12 + $0x138] sm:$0xf]
  %v878 = vld [vmem:[%s12 + $0x13c] sm:$0xf]
  %v879 = vld [vmem:[%s13] sm:$0x1]
  %v881 = vperm.slane %v879, 0
  %v886 = vunpack.c.l.b16 %v788
  %v887 = vunpack.c.h.b16 %v788
  %v888 = vunpack.c.l.b16 %v789
  %v889 = vunpack.c.h.b16 %v789
  %v890 = vunpack.c.l.b16 %v790
  %v891 = vpack.c.b16 %v886, %v886
  %v892 = vpack.c.b16 %v887, %v887
  %v893 = vpack.c.b16 %v888, %v888
  %v894 = vpack.c.b16 %v889, %v889
  %v895 = vpack.c.b16 %v890, %v890
  %v981 = vunpack.c.l.b16 %v799
  %v982 = vunpack.c.l.b16 %v800
  %v983 = vunpack.c.l.b16 %v801
  %v984 = vunpack.c.l.b16 %v802
  %v985 = vunpack.c.l.b16 %v803
  %v986 = vunpack.c.l.b16 %v804
  %v987 = vunpack.c.l.b16 %v805
  %v988 = vunpack.c.l.b16 %v806
  %v989 = vunpack.c.l.b16 %v807
  %v990 = vunpack.c.l.b16 %v808
  %v991 = vunpack.c.l.b16 %v809
  %v992 = vunpack.c.l.b16 %v810
  %v993 = vunpack.c.l.b16 %v811
  %v994 = vunpack.c.l.b16 %v812
  %v995 = vunpack.c.l.b16 %v813
  %v996 = vunpack.c.l.b16 %v814
  %v997 = vunpack.c.l.b16 %v815
  %v998 = vunpack.c.l.b16 %v816
  %v999 = vunpack.c.l.b16 %v817
  %v1000 = vunpack.c.l.b16 %v818
  %v1001 = vunpack.c.l.b16 %v819
  %v1002 = vunpack.c.l.b16 %v820
  %v1003 = vunpack.c.l.b16 %v821
  %v1004 = vunpack.c.l.b16 %v822
  %v1005 = vunpack.c.l.b16 %v823
  %v1006 = vunpack.c.l.b16 %v824
  %v1007 = vunpack.c.l.b16 %v825
  %v1008 = vunpack.c.l.b16 %v826
  %v1009 = vunpack.c.l.b16 %v827
  %v1010 = vunpack.c.l.b16 %v828
  %v1011 = vunpack.c.l.b16 %v829
  %v1012 = vunpack.c.l.b16 %v830
  %v1013 = vunpack.c.l.b16 %v831
  %v1014 = vunpack.c.l.b16 %v832
  %v1015 = vunpack.c.l.b16 %v833
  %v1016 = vunpack.c.l.b16 %v834
  %v1017 = vunpack.c.l.b16 %v835
  %v1018 = vunpack.c.l.b16 %v836
  %v1019 = vunpack.c.l.b16 %v837
  %v1020 = vunpack.c.l.b16 %v838
  %v1021 = vunpack.c.l.b16 %v839
  %v1022 = vunpack.c.l.b16 %v840
  %v1023 = vunpack.c.l.b16 %v841
  %v1024 = vunpack.c.l.b16 %v842
  %v1025 = vunpack.c.l.b16 %v843
  %v1026 = vunpack.c.l.b16 %v844
  %v1027 = vunpack.c.l.b16 %v845
  %v1028 = vunpack.c.l.b16 %v846
  %v1029 = vunpack.c.l.b16 %v847
  %v1030 = vunpack.c.l.b16 %v848
  %v1031 = vunpack.c.l.b16 %v849
  %v1032 = vunpack.c.l.b16 %v850
  %v1033 = vunpack.c.l.b16 %v851
  %v1034 = vunpack.c.l.b16 %v852
  %v1035 = vunpack.c.l.b16 %v853
  %v1036 = vunpack.c.l.b16 %v854
  %v1037 = vunpack.c.l.b16 %v855
  %v1038 = vunpack.c.l.b16 %v856
  %v1039 = vunpack.c.l.b16 %v857
  %v1040 = vunpack.c.l.b16 %v858
  %v1041 = vunpack.c.l.b16 %v859
  %v1042 = vunpack.c.l.b16 %v860
  %v1043 = vunpack.c.l.b16 %v861
  %v1044 = vunpack.c.l.b16 %v862
  %v1045 = vunpack.c.l.b16 %v863
  %v1046 = vunpack.c.l.b16 %v864
  %v1047 = vunpack.c.l.b16 %v865
  %v1048 = vunpack.c.l.b16 %v866
  %v1049 = vunpack.c.l.b16 %v867
  %v1050 = vunpack.c.l.b16 %v868
  %v1051 = vunpack.c.l.b16 %v869
  %v1052 = vunpack.c.l.b16 %v870
  %v1053 = vunpack.c.l.b16 %v871
  %v1054 = vunpack.c.l.b16 %v872
  %v1055 = vunpack.c.l.b16 %v873
  %v1056 = vunpack.c.l.b16 %v874
  %v1057 = vunpack.c.l.b16 %v875
  %v1058 = vunpack.c.l.b16 %v876
  %v1059 = vunpack.c.l.b16 %v877
  %v1060 = vunpack.c.l.b16 %v878
  %v1061 = vpack.c.b16 %v982, %v981
  %v1062 = vpack.c.b16 %v984, %v983
  %v1063 = vpack.c.b16 %v986, %v985
  %v1064 = vpack.c.b16 %v988, %v987
  %v1065 = vpack.c.b16 %v990, %v989
  %v1066 = vpack.c.b16 %v992, %v991
  %v1067 = vpack.c.b16 %v994, %v993
  %v1068 = vpack.c.b16 %v996, %v995
  %v1069 = vpack.c.b16 %v998, %v997
  %v1070 = vpack.c.b16 %v1000, %v999
  %v1071 = vpack.c.b16 %v1002, %v1001
  %v1072 = vpack.c.b16 %v1004, %v1003
  %v1073 = vpack.c.b16 %v1006, %v1005
  %v1074 = vpack.c.b16 %v1008, %v1007
  %v1075 = vpack.c.b16 %v1010, %v1009
  %v1076 = vpack.c.b16 %v1012, %v1011
  %v1077 = vpack.c.b16 %v1014, %v1013
  %v1078 = vpack.c.b16 %v1016, %v1015
  %v1079 = vpack.c.b16 %v1018, %v1017
  %v1080 = vpack.c.b16 %v1020, %v1019
  %v1081 = vpack.c.b16 %v1022, %v1021
  %v1082 = vpack.c.b16 %v1024, %v1023
  %v1083 = vpack.c.b16 %v1026, %v1025
  %v1084 = vpack.c.b16 %v1028, %v1027
  %v1085 = vpack.c.b16 %v1030, %v1029
  %v1086 = vpack.c.b16 %v1032, %v1031
  %v1087 = vpack.c.b16 %v1034, %v1033
  %v1088 = vpack.c.b16 %v1036, %v1035
  %v1089 = vpack.c.b16 %v1038, %v1037
  %v1090 = vpack.c.b16 %v1040, %v1039
  %v1091 = vpack.c.b16 %v1042, %v1041
  %v1092 = vpack.c.b16 %v1044, %v1043
  %v1093 = vpack.c.b16 %v1046, %v1045
  %v1094 = vpack.c.b16 %v1048, %v1047
  %v1095 = vpack.c.b16 %v1050, %v1049
  %v1096 = vpack.c.b16 %v1052, %v1051
  %v1097 = vpack.c.b16 %v1054, %v1053
  %v1098 = vpack.c.b16 %v1056, %v1055
  %v1099 = vpack.c.b16 %v1058, %v1057
  %v1100 = vpack.c.b16 %v1060, %v1059
  %1141 = vmatpush.bf16.msra.mxu0 %v1068
  %1142 = vmatpush.bf16.msra.mxu0 %v1067
  %1143 = vmatpush.bf16.msra.mxu0 %v1066
  %1144 = vmatpush.bf16.msra.mxu0 %v1065
  %1145 = vmatpush.bf16.msra.mxu0 %v1064
  %1146 = vmatpush.bf16.msra.mxu0 %v1063
  %1147 = vmatpush.bf16.msra.mxu0 %v1062
  %1148 = vmatpush.bf16.msra.mxu0 %v1061
  %1149 = vmatmul.bf16.gmra.mxu0 %v891
  %v1150 = vpop.f32.mrf.mxu0
  %v1151 = vadd.f32 %v881, %v1150
  %v1152 = vpop.f32.mrf.mxu0
  %1153 = vdwg.mxu0
  %1154 = vmatpush.bf16.msra.mxu0 %v1076
  %1155 = vmatpush.bf16.msra.mxu0 %v1075
  %1156 = vmatpush.bf16.msra.mxu0 %v1074
  %1157 = vmatpush.bf16.msra.mxu0 %v1073
  %1158 = vmatpush.bf16.msra.mxu0 %v1072
  %1159 = vmatpush.bf16.msra.mxu0 %v1071
  %1160 = vmatpush.bf16.msra.mxu0 %v1070
  %1161 = vmatpush.bf16.msra.mxu0 %v1069
  %1162 = vmatmul.bf16.gmra.mxu0 %v892
  %v1163 = vpop.f32.mrf.mxu0
  %v1164 = vadd.f32 %v1151, %v1163
  %v1165 = vpop.f32.mrf.mxu0
  %1166 = vdwg.mxu0
  %1167 = vmatpush.bf16.msra.mxu0 %v1084
  %1168 = vmatpush.bf16.msra.mxu0 %v1083
  %1169 = vmatpush.bf16.msra.mxu0 %v1082
  %1170 = vmatpush.bf16.msra.mxu0 %v1081
  %1171 = vmatpush.bf16.msra.mxu0 %v1080
  %1172 = vmatpush.bf16.msra.mxu0 %v1079
  %1173 = vmatpush.bf16.msra.mxu0 %v1078
  %1174 = vmatpush.bf16.msra.mxu0 %v1077
  %1175 = vmatmul.bf16.gmra.mxu0 %v893
  %v1176 = vpop.f32.mrf.mxu0
  %v1177 = vadd.f32 %v1164, %v1176
  %v1178 = vpop.f32.mrf.mxu0
  %1179 = vdwg.mxu0
  %1180 = vmatpush.bf16.msra.mxu0 %v1092
  %1181 = vmatpush.bf16.msra.mxu0 %v1091
  %1182 = vmatpush.bf16.msra.mxu0 %v1090
  %1183 = vmatpush.bf16.msra.mxu0 %v1089
  %1184 = vmatpush.bf16.msra.mxu0 %v1088
  %1185 = vmatpush.bf16.msra.mxu0 %v1087
  %1186 = vmatpush.bf16.msra.mxu0 %v1086
  %1187 = vmatpush.bf16.msra.mxu0 %v1085
  %1188 = vmatmul.bf16.gmra.mxu0 %v894
  %v1189 = vpop.f32.mrf.mxu0
  %v1190 = vadd.f32 %v1177, %v1189
  %v1191 = vpop.f32.mrf.mxu0
  %1192 = vdwg.mxu0
  %1193 = vmatpush.bf16.msra.mxu0 %v1100
  %1194 = vmatpush.bf16.msra.mxu0 %v1099
  %1195 = vmatpush.bf16.msra.mxu0 %v1098
  %1196 = vmatpush.bf16.msra.mxu0 %v1097
  %1197 = vmatpush.bf16.msra.mxu0 %v1096
  %1198 = vmatpush.bf16.msra.mxu0 %v1095
  %1199 = vmatpush.bf16.msra.mxu0 %v1094
  %1200 = vmatpush.bf16.msra.mxu0 %v1093
  %1201 = vmatmul.bf16.gmra.mxu0 %v895
  %v1202 = vpop.f32.mrf.mxu0
  %v1203 = vadd.f32 %v1190, %v1202
  %v1204 = vpop.f32.mrf.mxu0
  %1205 = vdwg.mxu0
  %v1206 = vld [vmem:[%s14] sm:$0xff]
  %v1207 = vld [vmem:[%s14 + $0x8] sm:$0xf]
  %v1208 = vld [vmem:[%s14 + $0xc] sm:$0xff]
  %v1209 = vld [vmem:[%s14 + $0x14] sm:$0xf]
  %v1210 = vld [vmem:[%s14 + $0x18] sm:$0xff]
  %v1211 = vld [vmem:[%s14 + $0x20] sm:$0xf]
  %v1212 = vld [vmem:[%s14 + $0x24] sm:$0xff]
  %v1213 = vld [vmem:[%s14 + $0x2c] sm:$0xf]
  %v1214 = vld [vmem:[%s14 + $0x30] sm:$0xff]
  %v1215 = vld [vmem:[%s14 + $0x38] sm:$0xf]
  %v1216 = vld [vmem:[%s14 + $0x3c] sm:$0xff]
  %v1217 = vld [vmem:[%s14 + $0x44] sm:$0xf]
  %v1218 = vld [vmem:[%s14 + $0x48] sm:$0xff]
  %v1219 = vld [vmem:[%s14 + $0x50] sm:$0xf]
  %v1220 = vld [vmem:[%s14 + $0x54] sm:$0xff]
  %v1221 = vld [vmem:[%s14 + $0x5c] sm:$0xf]
  %v1222 = vld [vmem:[%s14 + $0x60] sm:$0xff]
  %v1223 = vld [vmem:[%s14 + $0x68] sm:$0xf]
  %v1224 = vld [vmem:[%s14 + $0x6c] sm:$0xff]
  %v1225 = vld [vmem:[%s14 + $0x74] sm:$0xf]
  %v1226 = vld [vmem:[%s14 + $0x78] sm:$0xff]
  %v1227 = vld [vmem:[%s14 + $0x80] sm:$0xf]
  %v1228 = vld [vmem:[%s14 + $0x84] sm:$0xff]
  %v1229 = vld [vmem:[%s14 + $0x8c] sm:$0xf]
  %v1230 = vld [vmem:[%s14 + $0x90] sm:$0xff]
  %v1231 = vld [vmem:[%s14 + $0x98] sm:$0xf]
  %v1232 = vld [vmem:[%s14 + $0x9c] sm:$0xff]
  %v1233 = vld [vmem:[%s14 + $0xa4] sm:$0xf]
  %v1234 = vld [vmem:[%s14 + $0xa8] sm:$0xff]
  %v1235 = vld [vmem:[%s14 + $0xb0] sm:$0xf]
  %v1236 = vld [vmem:[%s14 + $0xb4] sm:$0xff]
  %v1237 = vld [vmem:[%s14 + $0xbc] sm:$0xf]
  %v1238 = vld [vmem:[%s14 + $0xc0] sm:$0xff]
  %v1239 = vld [vmem:[%s14 + $0xc8] sm:$0xf]
  %v1240 = vld [vmem:[%s14 + $0xcc] sm:$0xff]
  %v1241 = vld [vmem:[%s14 + $0xd4] sm:$0xf]
  %v1242 = vld [vmem:[%s14 + $0xd8] sm:$0xff]
  %v1243 = vld [vmem:[%s14 + $0xe0] sm:$0xf]
  %v1244 = vld [vmem:[%s14 + $0xe4] sm:$0xff]
  %v1245 = vld [vmem:[%s14 + $0xec] sm:$0xf]
  %v1246 = vld [vmem:[%s14 + $0xf0] sm:$0xff]
  %v1247 = vld [vmem:[%s14 + $0xf8] sm:$0xf]
  %v1248 = vld [vmem:[%s14 + $0xfc] sm:$0xff]
  %v1249 = vld [vmem:[%s14 + $0x104] sm:$0xf]
  %v1250 = vld [vmem:[%s14 + $0x108] sm:$0xff]
  %v1251 = vld [vmem:[%s14 + $0x110] sm:$0xf]
  %v1252 = vld [vmem:[%s14 + $0x114] sm:$0xff]
  %v1253 = vld [vmem:[%s14 + $0x11c] sm:$0xf]
  %v1254 = vld [vmem:[%s14 + $0x120] sm:$0xff]
  %v1255 = vld [vmem:[%s14 + $0x128] sm:$0xf]
  %v1256 = vld [vmem:[%s14 + $0x12c] sm:$0xff]
  %v1257 = vld [vmem:[%s14 + $0x134] sm:$0xf]
  %v1258 = vld [vmem:[%s14 + $0x138] sm:$0xff]
  %v1259 = vld [vmem:[%s14 + $0x140] sm:$0xf]
  %v1260 = vld [vmem:[%s14 + $0x144] sm:$0xff]
  %v1261 = vld [vmem:[%s14 + $0x14c] sm:$0xf]
  %v1262 = vld [vmem:[%s14 + $0x150] sm:$0xff]
  %v1263 = vld [vmem:[%s14 + $0x158] sm:$0xf]
  %v1264 = vld [vmem:[%s14 + $0x15c] sm:$0xff]
  %v1265 = vld [vmem:[%s14 + $0x164] sm:$0xf]
  %v1266 = vld [vmem:[%s14 + $0x168] sm:$0xff]
  %v1267 = vld [vmem:[%s14 + $0x170] sm:$0xf]
  %v1268 = vld [vmem:[%s14 + $0x174] sm:$0xff]
  %v1269 = vld [vmem:[%s14 + $0x17c] sm:$0xf]
  %v1270 = vld [vmem:[%s14 + $0x180] sm:$0xff]
  %v1271 = vld [vmem:[%s14 + $0x188] sm:$0xf]
  %v1272 = vld [vmem:[%s14 + $0x18c] sm:$0xff]
  %v1273 = vld [vmem:[%s14 + $0x194] sm:$0xf]
  %v1274 = vld [vmem:[%s14 + $0x198] sm:$0xff]
  %v1275 = vld [vmem:[%s14 + $0x1a0] sm:$0xf]
  %v1276 = vld [vmem:[%s14 + $0x1a4] sm:$0xff]
  %v1277 = vld [vmem:[%s14 + $0x1ac] sm:$0xf]
  %v1278 = vld [vmem:[%s14 + $0x1b0] sm:$0xff]
  %v1279 = vld [vmem:[%s14 + $0x1b8] sm:$0xf]
  %v1280 = vld [vmem:[%s14 + $0x1bc] sm:$0xff]
  %v1281 = vld [vmem:[%s14 + $0x1c4] sm:$0xf]
  %v1282 = vld [vmem:[%s14 + $0x1c8] sm:$0xff]
  %v1283 = vld [vmem:[%s14 + $0x1d0] sm:$0xf]
  %v1284 = vld [vmem:[%s14 + $0x1d4] sm:$0xff]
  %v1285 = vld [vmem:[%s14 + $0x1dc] sm:$0xf]
  %v1286 = vld [vmem:[%s14 + $0x1e0] sm:$0xff]
  %v1287 = vld [vmem:[%s14 + $0x1e8] sm:$0xf]
  %v1288 = vld [vmem:[%s14 + $0x1ec] sm:$0xff]
  %v1289 = vld [vmem:[%s14 + $0x1f4] sm:$0xf]
  %v1290 = vld [vmem:[%s14 + $0x1f8] sm:$0xff]
  %v1291 = vld [vmem:[%s14 + $0x200] sm:$0xf]
  %v1292 = vld [vmem:[%s14 + $0x204] sm:$0xff]
  %v1293 = vld [vmem:[%s14 + $0x20c] sm:$0xf]
  %v1294 = vld [vmem:[%s14 + $0x210] sm:$0xff]
  %v1295 = vld [vmem:[%s14 + $0x218] sm:$0xf]
  %v1296 = vld [vmem:[%s14 + $0x21c] sm:$0xff]
  %v1297 = vld [vmem:[%s14 + $0x224] sm:$0xf]
  %v1298 = vld [vmem:[%s14 + $0x228] sm:$0xff]
  %v1299 = vld [vmem:[%s14 + $0x230] sm:$0xf]
  %v1300 = vld [vmem:[%s14 + $0x234] sm:$0xff]
  %v1301 = vld [vmem:[%s14 + $0x23c] sm:$0xf]
  %v1302 = vld [vmem:[%s14 + $0x240] sm:$0xff]
  %v1303 = vld [vmem:[%s14 + $0x248] sm:$0xf]
  %v1304 = vld [vmem:[%s14 + $0x24c] sm:$0xff]
  %v1305 = vld [vmem:[%s14 + $0x254] sm:$0xf]
  %v1306 = vld [vmem:[%s14 + $0x258] sm:$0xff]
  %v1307 = vld [vmem:[%s14 + $0x260] sm:$0xf]
  %v1308 = vld [vmem:[%s14 + $0x264] sm:$0xff]
  %v1309 = vld [vmem:[%s14 + $0x26c] sm:$0xf]
  %v1310 = vld [vmem:[%s14 + $0x270] sm:$0xff]
  %v1311 = vld [vmem:[%s14 + $0x278] sm:$0xf]
  %v1312 = vld [vmem:[%s14 + $0x27c] sm:$0xff]
  %v1313 = vld [vmem:[%s14 + $0x284] sm:$0xf]
  %v1314 = vld [vmem:[%s14 + $0x288] sm:$0xff]
  %v1315 = vld [vmem:[%s14 + $0x290] sm:$0xf]
  %v1316 = vld [vmem:[%s14 + $0x294] sm:$0xff]
  %v1317 = vld [vmem:[%s14 + $0x29c] sm:$0xf]
  %v1318 = vld [vmem:[%s14 + $0x2a0] sm:$0xff]
  %v1319 = vld [vmem:[%s14 + $0x2a8] sm:$0xf]
  %v1320 = vld [vmem:[%s14 + $0x2ac] sm:$0xff]
  %v1321 = vld [vmem:[%s14 + $0x2b4] sm:$0xf]
  %v1322 = vld [vmem:[%s14 + $0x2b8] sm:$0xff]
  %v1323 = vld [vmem:[%s14 + $0x2c0] sm:$0xf]
  %v1324 = vld [vmem:[%s14 + $0x2c4] sm:$0xff]
  %v1325 = vld [vmem:[%s14 + $0x2cc] sm:$0xf]
  %v1326 = vld [vmem:[%s14 + $0x2d0] sm:$0xff]
  %v1327 = vld [vmem:[%s14 + $0x2d8] sm:$0xf]
  %v1328 = vld [vmem:[%s14 + $0x2dc] sm:$0xff]
  %v1329 = vld [vmem:[%s14 + $0x2e4] sm:$0xf]
  %v1330 = vld [vmem:[%s14 + $0x2e8] sm:$0xff]
  %v1331 = vld [vmem:[%s14 + $0x2f0] sm:$0xf]
  %v1332 = vld [vmem:[%s14 + $0x2f4] sm:$0xff]
  %v1333 = vld [vmem:[%s14 + $0x2fc] sm:$0xf]
  %v1334 = vld [vmem:[%s14 + $0x300] sm:$0xff]
  %v1335 = vld [vmem:[%s14 + $0x308] sm:$0xf]
  %v1336 = vld [vmem:[%s14 + $0x30c] sm:$0xff]
  %v1337 = vld [vmem:[%s14 + $0x314] sm:$0xf]
  %v1338 = vld [vmem:[%s14 + $0x318] sm:$0xff]
  %v1339 = vld [vmem:[%s14 + $0x320] sm:$0xf]
  %v1340 = vld [vmem:[%s14 + $0x324] sm:$0xff]
  %v1341 = vld [vmem:[%s14 + $0x32c] sm:$0xf]
  %v1342 = vld [vmem:[%s14 + $0x330] sm:$0xff]
  %v1343 = vld [vmem:[%s14 + $0x338] sm:$0xf]
  %v1344 = vld [vmem:[%s14 + $0x33c] sm:$0xff]
  %v1345 = vld [vmem:[%s14 + $0x344] sm:$0xf]
  %v1346 = vld [vmem:[%s14 + $0x348] sm:$0xff]
  %v1347 = vld [vmem:[%s14 + $0x350] sm:$0xf]
  %v1348 = vld [vmem:[%s14 + $0x354] sm:$0xff]
  %v1349 = vld [vmem:[%s14 + $0x35c] sm:$0xf]
  %v1350 = vld [vmem:[%s14 + $0x360] sm:$0xff]
  %v1351 = vld [vmem:[%s14 + $0x368] sm:$0xf]
  %v1352 = vld [vmem:[%s14 + $0x36c] sm:$0xff]
  %v1353 = vld [vmem:[%s14 + $0x374] sm:$0xf]
  %v1354 = vld [vmem:[%s14 + $0x378] sm:$0xff]
  %v1355 = vld [vmem:[%s14 + $0x380] sm:$0xf]
  %v1356 = vld [vmem:[%s14 + $0x384] sm:$0xff]
  %v1357 = vld [vmem:[%s14 + $0x38c] sm:$0xf]
  %v1358 = vld [vmem:[%s14 + $0x390] sm:$0xff]
  %v1359 = vld [vmem:[%s14 + $0x398] sm:$0xf]
  %v1360 = vld [vmem:[%s14 + $0x39c] sm:$0xff]
  %v1361 = vld [vmem:[%s14 + $0x3a4] sm:$0xf]
  %v1362 = vld [vmem:[%s14 + $0x3a8] sm:$0xff]
  %v1363 = vld [vmem:[%s14 + $0x3b0] sm:$0xf]
  %v1364 = vld [vmem:[%s14 + $0x3b4] sm:$0xff]
  %v1365 = vld [vmem:[%s14 + $0x3bc] sm:$0xf]
  %v1366 = vld [vmem:[%s14 + $0x3c0] sm:$0xff]
  %v1367 = vld [vmem:[%s14 + $0x3c8] sm:$0xf]
  %v1368 = vld [vmem:[%s14 + $0x3cc] sm:$0xff]
  %v1369 = vld [vmem:[%s14 + $0x3d4] sm:$0xf]
  %v1370 = vld [vmem:[%s14 + $0x3d8] sm:$0xff]
  %v1371 = vld [vmem:[%s14 + $0x3e0] sm:$0xf]
  %v1372 = vld [vmem:[%s14 + $0x3e4] sm:$0xff]
  %v1373 = vld [vmem:[%s14 + $0x3ec] sm:$0xf]
  %v1374 = vld [vmem:[%s14 + $0x3f0] sm:$0xff]
  %v1375 = vld [vmem:[%s14 + $0x3f8] sm:$0xf]
  %v1376 = vld [vmem:[%s14 + $0x3fc] sm:$0xff]
  %v1377 = vld [vmem:[%s14 + $0x404] sm:$0xf]
  %v1378 = vld [vmem:[%s14 + $0x408] sm:$0xff]
  %v1379 = vld [vmem:[%s14 + $0x410] sm:$0xf]
  %v1380 = vld [vmem:[%s14 + $0x414] sm:$0xff]
  %v1381 = vld [vmem:[%s14 + $0x41c] sm:$0xf]
  %v1382 = vld [vmem:[%s14 + $0x420] sm:$0xff]
  %v1383 = vld [vmem:[%s14 + $0x428] sm:$0xf]
  %v1384 = vld [vmem:[%s14 + $0x42c] sm:$0xff]
  %v1385 = vld [vmem:[%s14 + $0x434] sm:$0xf]
  %v1386 = vld [vmem:[%s14 + $0x438] sm:$0xff]
  %v1387 = vld [vmem:[%s14 + $0x440] sm:$0xf]
  %v1388 = vld [vmem:[%s14 + $0x444] sm:$0xff]
  %v1389 = vld [vmem:[%s14 + $0x44c] sm:$0xf]
  %v1390 = vld [vmem:[%s14 + $0x450] sm:$0xff]
  %v1391 = vld [vmem:[%s14 + $0x458] sm:$0xf]
  %v1392 = vld [vmem:[%s14 + $0x45c] sm:$0xff]
  %v1393 = vld [vmem:[%s14 + $0x464] sm:$0xf]
  %v1394 = vld [vmem:[%s14 + $0x468] sm:$0xff]
  %v1395 = vld [vmem:[%s14 + $0x470] sm:$0xf]
  %v1396 = vld [vmem:[%s14 + $0x474] sm:$0xff]
  %v1397 = vld [vmem:[%s14 + $0x47c] sm:$0xf]
  %v1398 = vld [vmem:[%s14 + $0x480] sm:$0xff]
  %v1399 = vld [vmem:[%s14 + $0x488] sm:$0xf]
  %v1400 = vld [vmem:[%s14 + $0x48c] sm:$0xff]
  %v1401 = vld [vmem:[%s14 + $0x494] sm:$0xf]
  %v1402 = vld [vmem:[%s14 + $0x498] sm:$0xff]
  %v1403 = vld [vmem:[%s14 + $0x4a0] sm:$0xf]
  %v1404 = vld [vmem:[%s14 + $0x4a4] sm:$0xff]
  %v1405 = vld [vmem:[%s14 + $0x4ac] sm:$0xf]
  %v1406 = vld [vmem:[%s14 + $0x4b0] sm:$0xff]
  %v1407 = vld [vmem:[%s14 + $0x4b8] sm:$0xf]
  %v1408 = vld [vmem:[%s14 + $0x4bc] sm:$0xff]
  %v1409 = vld [vmem:[%s14 + $0x4c4] sm:$0xf]
  %v1410 = vld [vmem:[%s14 + $0x4c8] sm:$0xff]
  %v1411 = vld [vmem:[%s14 + $0x4d0] sm:$0xf]
  %v1412 = vld [vmem:[%s14 + $0x4d4] sm:$0xff]
  %v1413 = vld [vmem:[%s14 + $0x4dc] sm:$0xf]
  %v1414 = vld [vmem:[%s14 + $0x4e0] sm:$0xff]
  %v1415 = vld [vmem:[%s14 + $0x4e8] sm:$0xf]
  %v1416 = vld [vmem:[%s14 + $0x4ec] sm:$0xff]
  %v1417 = vld [vmem:[%s14 + $0x4f4] sm:$0xf]
  %v1418 = vld [vmem:[%s14 + $0x4f8] sm:$0xff]
  %v1419 = vld [vmem:[%s14 + $0x500] sm:$0xf]
  %v1420 = vld [vmem:[%s14 + $0x504] sm:$0xff]
  %v1421 = vld [vmem:[%s14 + $0x50c] sm:$0xf]
  %v1422 = vld [vmem:[%s14 + $0x510] sm:$0xff]
  %v1423 = vld [vmem:[%s14 + $0x518] sm:$0xf]
  %v1424 = vld [vmem:[%s14 + $0x51c] sm:$0xff]
  %v1425 = vld [vmem:[%s14 + $0x524] sm:$0xf]
  %v1426 = vld [vmem:[%s14 + $0x528] sm:$0xff]
  %v1427 = vld [vmem:[%s14 + $0x530] sm:$0xf]
  %v1428 = vld [vmem:[%s14 + $0x534] sm:$0xff]
  %v1429 = vld [vmem:[%s14 + $0x53c] sm:$0xf]
  %v1430 = vld [vmem:[%s14 + $0x540] sm:$0xff]
  %v1431 = vld [vmem:[%s14 + $0x548] sm:$0xf]
  %v1432 = vld [vmem:[%s14 + $0x54c] sm:$0xff]
  %v1433 = vld [vmem:[%s14 + $0x554] sm:$0xf]
  %v1434 = vld [vmem:[%s14 + $0x558] sm:$0xff]
  %v1435 = vld [vmem:[%s14 + $0x560] sm:$0xf]
  %v1436 = vld [vmem:[%s14 + $0x564] sm:$0xff]
  %v1437 = vld [vmem:[%s14 + $0x56c] sm:$0xf]
  %v1438 = vld [vmem:[%s14 + $0x570] sm:$0xff]
  %v1439 = vld [vmem:[%s14 + $0x578] sm:$0xf]
  %v1440 = vld [vmem:[%s14 + $0x57c] sm:$0xff]
  %v1441 = vld [vmem:[%s14 + $0x584] sm:$0xf]
  %v1442 = vld [vmem:[%s14 + $0x588] sm:$0xff]
  %v1443 = vld [vmem:[%s14 + $0x590] sm:$0xf]
  %v1444 = vld [vmem:[%s14 + $0x594] sm:$0xff]
  %v1445 = vld [vmem:[%s14 + $0x59c] sm:$0xf]
  %v1446 = vld [vmem:[%s14 + $0x5a0] sm:$0xff]
  %v1447 = vld [vmem:[%s14 + $0x5a8] sm:$0xf]
  %v1448 = vld [vmem:[%s14 + $0x5ac] sm:$0xff]
  %v1449 = vld [vmem:[%s14 + $0x5b4] sm:$0xf]
  %v1450 = vld [vmem:[%s14 + $0x5b8] sm:$0xff]
  %v1451 = vld [vmem:[%s14 + $0x5c0] sm:$0xf]
  %v1452 = vld [vmem:[%s14 + $0x5c4] sm:$0xff]
  %v1453 = vld [vmem:[%s14 + $0x5cc] sm:$0xf]
  %v1454 = vld [vmem:[%s14 + $0x5d0] sm:$0xff]
  %v1455 = vld [vmem:[%s14 + $0x5d8] sm:$0xf]
  %v1456 = vld [vmem:[%s14 + $0x5dc] sm:$0xff]
  %v1457 = vld [vmem:[%s14 + $0x5e4] sm:$0xf]
  %v1458 = vld [vmem:[%s14 + $0x5e8] sm:$0xff]
  %v1459 = vld [vmem:[%s14 + $0x5f0] sm:$0xf]
  %v1460 = vld [vmem:[%s14 + $0x5f4] sm:$0xff]
  %v1461 = vld [vmem:[%s14 + $0x5fc] sm:$0xf]
  %v1462 = vld [vmem:[%s15] sm:$0x7]
  %v1464 = vperm.slane %v1462, 0
  %v1465 = vperm.slane %v1462, 1
  %v1466 = vperm.slane %v1462, 2
  %v1474 = vunpack.c.h.b16 %v790
  %v1475 = vunpack.c.l.b16 %v791
  %v1476 = vunpack.c.h.b16 %v791
  %v1477 = vunpack.c.l.b16 %v792
  %v1478 = vunpack.c.h.b16 %v792
  %v1479 = vunpack.c.l.b16 %v793
  %v1480 = vunpack.c.h.b16 %v793
  %v1481 = vunpack.c.l.b16 %v794
  %v1482 = vpack.c.b16 %v1474, %v1474
  %v1483 = vpack.c.b16 %v1475, %v1475
  %v1484 = vpack.c.b16 %v1476, %v1476
  %v1485 = vpack.c.b16 %v1477, %v1477
  %v1486 = vpack.c.b16 %v1478, %v1478
  %v1487 = vpack.c.b16 %v1479, %v1479
  %v1488 = vpack.c.b16 %v1480, %v1480
  %v1489 = vpack.c.b16 %v1481, %v1481
  %v1754 = vunpack.c.l.b16 %v1206
  %v1755 = vunpack.c.h.b16 %v1206
  %v1756 = vunpack.c.l.b16 %v1207
  %v1757 = vunpack.c.l.b16 %v1208
  %v1758 = vunpack.c.h.b16 %v1208
  %v1759 = vunpack.c.l.b16 %v1209
  %v1760 = vunpack.c.l.b16 %v1210
  %v1761 = vunpack.c.h.b16 %v1210
  %v1762 = vunpack.c.l.b16 %v1211
  %v1763 = vunpack.c.l.b16 %v1212
  %v1764 = vunpack.c.h.b16 %v1212
  %v1765 = vunpack.c.l.b16 %v1213
  %v1766 = vunpack.c.l.b16 %v1214
  %v1767 = vunpack.c.h.b16 %v1214
  %v1768 = vunpack.c.l.b16 %v1215
  %v1769 = vunpack.c.l.b16 %v1216
  %v1770 = vunpack.c.h.b16 %v1216
  %v1771 = vunpack.c.l.b16 %v1217
  %v1772 = vunpack.c.l.b16 %v1218
  %v1773 = vunpack.c.h.b16 %v1218
  %v1774 = vunpack.c.l.b16 %v1219
  %v1775 = vunpack.c.l.b16 %v1220
  %v1776 = vunpack.c.h.b16 %v1220
  %v1777 = vunpack.c.l.b16 %v1221
  %v1778 = vunpack.c.l.b16 %v1222
  %v1779 = vunpack.c.h.b16 %v1222
  %v1780 = vunpack.c.l.b16 %v1223
  %v1781 = vunpack.c.l.b16 %v1224
  %v1782 = vunpack.c.h.b16 %v1224
  %v1783 = vunpack.c.l.b16 %v1225
  %v1784 = vunpack.c.l.b16 %v1226
  %v1785 = vunpack.c.h.b16 %v1226
  %v1786 = vunpack.c.l.b16 %v1227
  %v1787 = vunpack.c.l.b16 %v1228
  %v1788 = vunpack.c.h.b16 %v1228
  %v1789 = vunpack.c.l.b16 %v1229
  %v1790 = vunpack.c.l.b16 %v1230
  %v1791 = vunpack.c.h.b16 %v1230
  %v1792 = vunpack.c.l.b16 %v1231
  %v1793 = vunpack.c.l.b16 %v1232
  %v1794 = vunpack.c.h.b16 %v1232
  %v1795 = vunpack.c.l.b16 %v1233
  %v1796 = vunpack.c.l.b16 %v1234
  %v1797 = vunpack.c.h.b16 %v1234
  %v1798 = vunpack.c.l.b16 %v1235
  %v1799 = vunpack.c.l.b16 %v1236
  %v1800 = vunpack.c.h.b16 %v1236
  %v1801 = vunpack.c.l.b16 %v1237
  %v1802 = vunpack.c.l.b16 %v1238
  %v1803 = vunpack.c.h.b16 %v1238
  %v1804 = vunpack.c.l.b16 %v1239
  %v1805 = vunpack.c.l.b16 %v1240
  %v1806 = vunpack.c.h.b16 %v1240
  %v1807 = vunpack.c.l.b16 %v1241
  %v1808 = vunpack.c.l.b16 %v1242
  %v1809 = vunpack.c.h.b16 %v1242
  %v1810 = vunpack.c.l.b16 %v1243
  %v1811 = vunpack.c.l.b16 %v1244
  %v1812 = vunpack.c.h.b16 %v1244
  %v1813 = vunpack.c.l.b16 %v1245
  %v1814 = vunpack.c.l.b16 %v1246
  %v1815 = vunpack.c.h.b16 %v1246
  %v1816 = vunpack.c.l.b16 %v1247
  %v1817 = vunpack.c.l.b16 %v1248
  %v1818 = vunpack.c.h.b16 %v1248
  %v1819 = vunpack.c.l.b16 %v1249
  %v1820 = vunpack.c.l.b16 %v1250
  %v1821 = vunpack.c.h.b16 %v1250
  %v1822 = vunpack.c.l.b16 %v1251
  %v1823 = vunpack.c.l.b16 %v1252
  %v1824 = vunpack.c.h.b16 %v1252
  %v1825 = vunpack.c.l.b16 %v1253
  %v1826 = vunpack.c.l.b16 %v1254
  %v1827 = vunpack.c.h.b16 %v1254
  %v1828 = vunpack.c.l.b16 %v1255
  %v1829 = vunpack.c.l.b16 %v1256
  %v1830 = vunpack.c.h.b16 %v1256
  %v1831 = vunpack.c.l.b16 %v1257
  %v1832 = vunpack.c.l.b16 %v1258
  %v1833 = vunpack.c.h.b16 %v1258
  %v1834 = vunpack.c.l.b16 %v1259
  %v1835 = vunpack.c.l.b16 %v1260
  %v1836 = vunpack.c.h.b16 %v1260
  %v1837 = vunpack.c.l.b16 %v1261
  %v1838 = vunpack.c.l.b16 %v1262
  %v1839 = vunpack.c.h.b16 %v1262
  %v1840 = vunpack.c.l.b16 %v1263
  %v1841 = vunpack.c.l.b16 %v1264
  %v1842 = vunpack.c.h.b16 %v1264
  %v1843 = vunpack.c.l.b16 %v1265
  %v1844 = vunpack.c.l.b16 %v1266
  %v1845 = vunpack.c.h.b16 %v1266
  %v1846 = vunpack.c.l.b16 %v1267
  %v1847 = vunpack.c.l.b16 %v1268
  %v1848 = vunpack.c.h.b16 %v1268
  %v1849 = vunpack.c.l.b16 %v1269
  %v1850 = vunpack.c.l.b16 %v1270
  %v1851 = vunpack.c.h.b16 %v1270
  %v1852 = vunpack.c.l.b16 %v1271
  %v1853 = vunpack.c.l.b16 %v1272
  %v1854 = vunpack.c.h.b16 %v1272
  %v1855 = vunpack.c.l.b16 %v1273
  %v1856 = vunpack.c.l.b16 %v1274
  %v1857 = vunpack.c.h.b16 %v1274
  %v1858 = vunpack.c.l.b16 %v1275
  %v1859 = vunpack.c.l.b16 %v1276
  %v1860 = vunpack.c.h.b16 %v1276
  %v1861 = vunpack.c.l.b16 %v1277
  %v1862 = vunpack.c.l.b16 %v1278
  %v1863 = vunpack.c.h.b16 %v1278
  %v1864 = vunpack.c.l.b16 %v1279
  %v1865 = vunpack.c.l.b16 %v1280
  %v1866 = vunpack.c.h.b16 %v1280
  %v1867 = vunpack.c.l.b16 %v1281
  %v1868 = vunpack.c.l.b16 %v1282
  %v1869 = vunpack.c.h.b16 %v1282
  %v1870 = vunpack.c.l.b16 %v1283
  %v1871 = vunpack.c.l.b16 %v1284
  %v1872 = vunpack.c.h.b16 %v1284
  %v1873 = vunpack.c.l.b16 %v1285
  %v1874 = vunpack.c.l.b16 %v1286
  %v1875 = vunpack.c.h.b16 %v1286
  %v1876 = vunpack.c.l.b16 %v1287
  %v1877 = vunpack.c.l.b16 %v1288
  %v1878 = vunpack.c.h.b16 %v1288
  %v1879 = vunpack.c.l.b16 %v1289
  %v1880 = vunpack.c.l.b16 %v1290
  %v1881 = vunpack.c.h.b16 %v1290
  %v1882 = vunpack.c.l.b16 %v1291
  %v1883 = vunpack.c.l.b16 %v1292
  %v1884 = vunpack.c.h.b16 %v1292
  %v1885 = vunpack.c.l.b16 %v1293
  %v1886 = vunpack.c.l.b16 %v1294
  %v1887 = vunpack.c.h.b16 %v1294
  %v1888 = vunpack.c.l.b16 %v1295
  %v1889 = vunpack.c.l.b16 %v1296
  %v1890 = vunpack.c.h.b16 %v1296
  %v1891 = vunpack.c.l.b16 %v1297
  %v1892 = vunpack.c.l.b16 %v1298
  %v1893 = vunpack.c.h.b16 %v1298
  %v1894 = vunpack.c.l.b16 %v1299
  %v1895 = vunpack.c.l.b16 %v1300
  %v1896 = vunpack.c.h.b16 %v1300
  %v1897 = vunpack.c.l.b16 %v1301
  %v1898 = vunpack.c.l.b16 %v1302
  %v1899 = vunpack.c.h.b16 %v1302
  %v1900 = vunpack.c.l.b16 %v1303
  %v1901 = vunpack.c.l.b16 %v1304
  %v1902 = vunpack.c.h.b16 %v1304
  %v1903 = vunpack.c.l.b16 %v1305
  %v1904 = vunpack.c.l.b16 %v1306
  %v1905 = vunpack.c.h.b16 %v1306
  %v1906 = vunpack.c.l.b16 %v1307
  %v1907 = vunpack.c.l.b16 %v1308
  %v1908 = vunpack.c.h.b16 %v1308
  %v1909 = vunpack.c.l.b16 %v1309
  %v1910 = vunpack.c.l.b16 %v1310
  %v1911 = vunpack.c.h.b16 %v1310
  %v1912 = vunpack.c.l.b16 %v1311
  %v1913 = vunpack.c.l.b16 %v1312
  %v1914 = vunpack.c.h.b16 %v1312
  %v1915 = vunpack.c.l.b16 %v1313
  %v1916 = vunpack.c.l.b16 %v1314
  %v1917 = vunpack.c.h.b16 %v1314
  %v1918 = vunpack.c.l.b16 %v1315
  %v1919 = vunpack.c.l.b16 %v1316
  %v1920 = vunpack.c.h.b16 %v1316
  %v1921 = vunpack.c.l.b16 %v1317
  %v1922 = vunpack.c.l.b16 %v1318
  %v1923 = vunpack.c.h.b16 %v1318
  %v1924 = vunpack.c.l.b16 %v1319
  %v1925 = vunpack.c.l.b16 %v1320
  %v1926 = vunpack.c.h.b16 %v1320
  %v1927 = vunpack.c.l.b16 %v1321
  %v1928 = vunpack.c.l.b16 %v1322
  %v1929 = vunpack.c.h.b16 %v1322
  %v1930 = vunpack.c.l.b16 %v1323
  %v1931 = vunpack.c.l.b16 %v1324
  %v1932 = vunpack.c.h.b16 %v1324
  %v1933 = vunpack.c.l.b16 %v1325
  %v1934 = vunpack.c.l.b16 %v1326
  %v1935 = vunpack.c.h.b16 %v1326
  %v1936 = vunpack.c.l.b16 %v1327
  %v1937 = vunpack.c.l.b16 %v1328
  %v1938 = vunpack.c.h.b16 %v1328
  %v1939 = vunpack.c.l.b16 %v1329
  %v1940 = vunpack.c.l.b16 %v1330
  %v1941 = vunpack.c.h.b16 %v1330
  %v1942 = vunpack.c.l.b16 %v1331
  %v1943 = vunpack.c.l.b16 %v1332
  %v1944 = vunpack.c.h.b16 %v1332
  %v1945 = vunpack.c.l.b16 %v1333
  %v1946 = vunpack.c.l.b16 %v1334
  %v1947 = vunpack.c.h.b16 %v1334
  %v1948 = vunpack.c.l.b16 %v1335
  %v1949 = vunpack.c.l.b16 %v1336
  %v1950 = vunpack.c.h.b16 %v1336
  %v1951 = vunpack.c.l.b16 %v1337
  %v1952 = vunpack.c.l.b16 %v1338
  %v1953 = vunpack.c.h.b16 %v1338
  %v1954 = vunpack.c.l.b16 %v1339
  %v1955 = vunpack.c.l.b16 %v1340
  %v1956 = vunpack.c.h.b16 %v1340
  %v1957 = vunpack.c.l.b16 %v1341
  %v1958 = vunpack.c.l.b16 %v1342
  %v1959 = vunpack.c.h.b16 %v1342
  %v1960 = vunpack.c.l.b16 %v1343
  %v1961 = vunpack.c.l.b16 %v1344
  %v1962 = vunpack.c.h.b16 %v1344
  %v1963 = vunpack.c.l.b16 %v1345
  %v1964 = vunpack.c.l.b16 %v1346
  %v1965 = vunpack.c.h.b16 %v1346
  %v1966 = vunpack.c.l.b16 %v1347
  %v1967 = vunpack.c.l.b16 %v1348
  %v1968 = vunpack.c.h.b16 %v1348
  %v1969 = vunpack.c.l.b16 %v1349
  %v1970 = vunpack.c.l.b16 %v1350
  %v1971 = vunpack.c.h.b16 %v1350
  %v1972 = vunpack.c.l.b16 %v1351
  %v1973 = vunpack.c.l.b16 %v1352
  %v1974 = vunpack.c.h.b16 %v1352
  %v1975 = vunpack.c.l.b16 %v1353
  %v1976 = vunpack.c.l.b16 %v1354
  %v1977 = vunpack.c.h.b16 %v1354
  %v1978 = vunpack.c.l.b16 %v1355
  %v1979 = vunpack.c.l.b16 %v1356
  %v1980 = vunpack.c.h.b16 %v1356
  %v1981 = vunpack.c.l.b16 %v1357
  %v1982 = vunpack.c.l.b16 %v1358
  %v1983 = vunpack.c.h.b16 %v1358
  %v1984 = vunpack.c.l.b16 %v1359
  %v1985 = vunpack.c.l.b16 %v1360
  %v1986 = vunpack.c.h.b16 %v1360
  %v1987 = vunpack.c.l.b16 %v1361
  %v1988 = vunpack.c.l.b16 %v1362
  %v1989 = vunpack.c.h.b16 %v1362
  %v1990 = vunpack.c.l.b16 %v1363
  %v1991 = vunpack.c.l.b16 %v1364
  %v1992 = vunpack.c.h.b16 %v1364
  %v1993 = vunpack.c.l.b16 %v1365
  %v1994 = vunpack.c.l.b16 %v1366
  %v1995 = vunpack.c.h.b16 %v1366
  %v1996 = vunpack.c.l.b16 %v1367
  %v1997 = vunpack.c.l.b16 %v1368
  %v1998 = vunpack.c.h.b16 %v1368
  %v1999 = vunpack.c.l.b16 %v1369
  %v2000 = vunpack.c.l.b16 %v1370
  %v2001 = vunpack.c.h.b16 %v1370
  %v2002 = vunpack.c.l.b16 %v1371
  %v2003 = vunpack.c.l.b16 %v1372
  %v2004 = vunpack.c.h.b16 %v1372
  %v2005 = vunpack.c.l.b16 %v1373
  %v2006 = vunpack.c.l.b16 %v1374
  %v2007 = vunpack.c.h.b16 %v1374
  %v2008 = vunpack.c.l.b16 %v1375
  %v2009 = vunpack.c.l.b16 %v1376
  %v2010 = vunpack.c.h.b16 %v1376
  %v2011 = vunpack.c.l.b16 %v1377
  %v2012 = vunpack.c.l.b16 %v1378
  %v2013 = vunpack.c.h.b16 %v1378
  %v2014 = vunpack.c.l.b16 %v1379
  %v2015 = vunpack.c.l.b16 %v1380
  %v2016 = vunpack.c.h.b16 %v1380
  %v2017 = vunpack.c.l.b16 %v1381
  %v2018 = vunpack.c.l.b16 %v1382
  %v2019 = vunpack.c.h.b16 %v1382
  %v2020 = vunpack.c.l.b16 %v1383
  %v2021 = vunpack.c.l.b16 %v1384
  %v2022 = vunpack.c.h.b16 %v1384
  %v2023 = vunpack.c.l.b16 %v1385
  %v2024 = vunpack.c.l.b16 %v1386
  %v2025 = vunpack.c.h.b16 %v1386
  %v2026 = vunpack.c.l.b16 %v1387
  %v2027 = vunpack.c.l.b16 %v1388
  %v2028 = vunpack.c.h.b16 %v1388
  %v2029 = vunpack.c.l.b16 %v1389
  %v2030 = vunpack.c.l.b16 %v1390
  %v2031 = vunpack.c.h.b16 %v1390
  %v2032 = vunpack.c.l.b16 %v1391
  %v2033 = vunpack.c.l.b16 %v1392
  %v2034 = vunpack.c.h.b16 %v1392
  %v2035 = vunpack.c.l.b16 %v1393
  %v2036 = vunpack.c.l.b16 %v1394
  %v2037 = vunpack.c.h.b16 %v1394
  %v2038 = vunpack.c.l.b16 %v1395
  %v2039 = vunpack.c.l.b16 %v1396
  %v2040 = vunpack.c.h.b16 %v1396
  %v2041 = vunpack.c.l.b16 %v1397
  %v2042 = vunpack.c.l.b16 %v1398
  %v2043 = vunpack.c.h.b16 %v1398
  %v2044 = vunpack.c.l.b16 %v1399
  %v2045 = vunpack.c.l.b16 %v1400
  %v2046 = vunpack.c.h.b16 %v1400
  %v2047 = vunpack.c.l.b16 %v1401
  %v2048 = vunpack.c.l.b16 %v1402
  %v2049 = vunpack.c.h.b16 %v1402
  %v2050 = vunpack.c.l.b16 %v1403
  %v2051 = vunpack.c.l.b16 %v1404
  %v2052 = vunpack.c.h.b16 %v1404
  %v2053 = vunpack.c.l.b16 %v1405
  %v2054 = vunpack.c.l.b16 %v1406
  %v2055 = vunpack.c.h.b16 %v1406
  %v2056 = vunpack.c.l.b16 %v1407
  %v2057 = vunpack.c.l.b16 %v1408
  %v2058 = vunpack.c.h.b16 %v1408
  %v2059 = vunpack.c.l.b16 %v1409
  %v2060 = vunpack.c.l.b16 %v1410
  %v2061 = vunpack.c.h.b16 %v1410
  %v2062 = vunpack.c.l.b16 %v1411
  %v2063 = vunpack.c.l.b16 %v1412
  %v2064 = vunpack.c.h.b16 %v1412
  %v2065 = vunpack.c.l.b16 %v1413
  %v2066 = vunpack.c.l.b16 %v1414
  %v2067 = vunpack.c.h.b16 %v1414
  %v2068 = vunpack.c.l.b16 %v1415
  %v2069 = vunpack.c.l.b16 %v1416
  %v2070 = vunpack.c.h.b16 %v1416
  %v2071 = vunpack.c.l.b16 %v1417
  %v2072 = vunpack.c.l.b16 %v1418
  %v2073 = vunpack.c.h.b16 %v1418
  %v2074 = vunpack.c.l.b16 %v1419
  %v2075 = vunpack.c.l.b16 %v1420
  %v2076 = vunpack.c.h.b16 %v1420
  %v2077 = vunpack.c.l.b16 %v1421
  %v2078 = vunpack.c.l.b16 %v1422
  %v2079 = vunpack.c.h.b16 %v1422
  %v2080 = vunpack.c.l.b16 %v1423
  %v2081 = vunpack.c.l.b16 %v1424
  %v2082 = vunpack.c.h.b16 %v1424
  %v2083 = vunpack.c.l.b16 %v1425
  %v2084 = vunpack.c.l.b16 %v1426
  %v2085 = vunpack.c.h.b16 %v1426
  %v2086 = vunpack.c.l.b16 %v1427
  %v2087 = vunpack.c.l.b16 %v1428
  %v2088 = vunpack.c.h.b16 %v1428
  %v2089 = vunpack.c.l.b16 %v1429
  %v2090 = vunpack.c.l.b16 %v1430
  %v2091 = vunpack.c.h.b16 %v1430
  %v2092 = vunpack.c.l.b16 %v1431
  %v2093 = vunpack.c.l.b16 %v1432
  %v2094 = vunpack.c.h.b16 %v1432
  %v2095 = vunpack.c.l.b16 %v1433
  %v2096 = vunpack.c.l.b16 %v1434
  %v2097 = vunpack.c.h.b16 %v1434
  %v2098 = vunpack.c.l.b16 %v1435
  %v2099 = vunpack.c.l.b16 %v1436
  %v2100 = vunpack.c.h.b16 %v1436
  %v2101 = vunpack.c.l.b16 %v1437
  %v2102 = vunpack.c.l.b16 %v1438
  %v2103 = vunpack.c.h.b16 %v1438
  %v2104 = vunpack.c.l.b16 %v1439
  %v2105 = vunpack.c.l.b16 %v1440
  %v2106 = vunpack.c.h.b16 %v1440
  %v2107 = vunpack.c.l.b16 %v1441
  %v2108 = vunpack.c.l.b16 %v1442
  %v2109 = vunpack.c.h.b16 %v1442
  %v2110 = vunpack.c.l.b16 %v1443
  %v2111 = vunpack.c.l.b16 %v1444
  %v2112 = vunpack.c.h.b16 %v1444
  %v2113 = vunpack.c.l.b16 %v1445
  %v2114 = vunpack.c.l.b16 %v1446
  %v2115 = vunpack.c.h.b16 %v1446
  %v2116 = vunpack.c.l.b16 %v1447
  %v2117 = vunpack.c.l.b16 %v1448
  %v2118 = vunpack.c.h.b16 %v1448
  %v2119 = vunpack.c.l.b16 %v1449
  %v2120 = vunpack.c.l.b16 %v1450
  %v2121 = vunpack.c.h.b16 %v1450
  %v2122 = vunpack.c.l.b16 %v1451
  %v2123 = vunpack.c.l.b16 %v1452
  %v2124 = vunpack.c.h.b16 %v1452
  %v2125 = vunpack.c.l.b16 %v1453
  %v2126 = vunpack.c.l.b16 %v1454
  %v2127 = vunpack.c.h.b16 %v1454
  %v2128 = vunpack.c.l.b16 %v1455
  %v2129 = vunpack.c.l.b16 %v1456
  %v2130 = vunpack.c.h.b16 %v1456
  %v2131 = vunpack.c.l.b16 %v1457
  %v2132 = vunpack.c.l.b16 %v1458
  %v2133 = vunpack.c.h.b16 %v1458
  %v2134 = vunpack.c.l.b16 %v1459
  %v2135 = vunpack.c.l.b16 %v1460
  %v2136 = vunpack.c.h.b16 %v1460
  %v2137 = vunpack.c.l.b16 %v1461
  %v2138 = vpack.c.b16 %v1757, %v1754
  %v2139 = vpack.c.b16 %v1758, %v1755
  %v2140 = vpack.c.b16 %v1759, %v1756
  %v2141 = vpack.c.b16 %v1763, %v1760
  %v2142 = vpack.c.b16 %v1764, %v1761
  %v2143 = vpack.c.b16 %v1765, %v1762
  %v2144 = vpack.c.b16 %v1769, %v1766
  %v2145 = vpack.c.b16 %v1770, %v1767
  %v2146 = vpack.c.b16 %v1771, %v1768
  %v2147 = vpack.c.b16 %v1775, %v1772
  %v2148 = vpack.c.b16 %v1776, %v1773
  %v2149 = vpack.c.b16 %v1777, %v1774
  %v2150 = vpack.c.b16 %v1781, %v1778
  %v2151 = vpack.c.b16 %v1782, %v1779
  %v2152 = vpack.c.b16 %v1783, %v1780
  %v2153 = vpack.c.b16 %v1787, %v1784
  %v2154 = vpack.c.b16 %v1788, %v1785
  %v2155 = vpack.c.b16 %v1789, %v1786
  %v2156 = vpack.c.b16 %v1793, %v1790
  %v2157 = vpack.c.b16 %v1794, %v1791
  %v2158 = vpack.c.b16 %v1795, %v1792
  %v2159 = vpack.c.b16 %v1799, %v1796
  %v2160 = vpack.c.b16 %v1800, %v1797
  %v2161 = vpack.c.b16 %v1801, %v1798
  %v2162 = vpack.c.b16 %v1805, %v1802
  %v2163 = vpack.c.b16 %v1806, %v1803
  %v2164 = vpack.c.b16 %v1807, %v1804
  %v2165 = vpack.c.b16 %v1811, %v1808
  %v2166 = vpack.c.b16 %v1812, %v1809
  %v2167 = vpack.c.b16 %v1813, %v1810
  %v2168 = vpack.c.b16 %v1817, %v1814
  %v2169 = vpack.c.b16 %v1818, %v1815
  %v2170 = vpack.c.b16 %v1819, %v1816
  %v2171 = vpack.c.b16 %v1823, %v1820
  %v2172 = vpack.c.b16 %v1824, %v1821
  %v2173 = vpack.c.b16 %v1825, %v1822
  %v2174 = vpack.c.b16 %v1829, %v1826
  %v2175 = vpack.c.b16 %v1830, %v1827
  %v2176 = vpack.c.b16 %v1831, %v1828
  %v2177 = vpack.c.b16 %v1835, %v1832
  %v2178 = vpack.c.b16 %v1836, %v1833
  %v2179 = vpack.c.b16 %v1837, %v1834
  %v2180 = vpack.c.b16 %v1841, %v1838
  %v2181 = vpack.c.b16 %v1842, %v1839
  %v2182 = vpack.c.b16 %v1843, %v1840
  %v2183 = vpack.c.b16 %v1847, %v1844
  %v2184 = vpack.c.b16 %v1848, %v1845
  %v2185 = vpack.c.b16 %v1849, %v1846
  %v2186 = vpack.c.b16 %v1853, %v1850
  %v2187 = vpack.c.b16 %v1854, %v1851
  %v2188 = vpack.c.b16 %v1855, %v1852
  %v2189 = vpack.c.b16 %v1859, %v1856
  %v2190 = vpack.c.b16 %v1860, %v1857
  %v2191 = vpack.c.b16 %v1861, %v1858
  %v2192 = vpack.c.b16 %v1865, %v1862
  %v2193 = vpack.c.b16 %v1866, %v1863
  %v2194 = vpack.c.b16 %v1867, %v1864
  %v2195 = vpack.c.b16 %v1871, %v1868
  %v2196 = vpack.c.b16 %v1872, %v1869
  %v2197 = vpack.c.b16 %v1873, %v1870
  %v2198 = vpack.c.b16 %v1877, %v1874
  %v2199 = vpack.c.b16 %v1878, %v1875
  %v2200 = vpack.c.b16 %v1879, %v1876
  %v2201 = vpack.c.b16 %v1883, %v1880
  %v2202 = vpack.c.b16 %v1884, %v1881
  %v2203 = vpack.c.b16 %v1885, %v1882
  %v2204 = vpack.c.b16 %v1889, %v1886
  %v2205 = vpack.c.b16 %v1890, %v1887
  %v2206 = vpack.c.b16 %v1891, %v1888
  %v2207 = vpack.c.b16 %v1895, %v1892
  %v2208 = vpack.c.b16 %v1896, %v1893
  %v2209 = vpack.c.b16 %v1897, %v1894
  %v2210 = vpack.c.b16 %v1901, %v1898
  %v2211 = vpack.c.b16 %v1902, %v1899
  %v2212 = vpack.c.b16 %v1903, %v1900
  %v2213 = vpack.c.b16 %v1907, %v1904
  %v2214 = vpack.c.b16 %v1908, %v1905
  %v2215 = vpack.c.b16 %v1909, %v1906
  %v2216 = vpack.c.b16 %v1913, %v1910
  %v2217 = vpack.c.b16 %v1914, %v1911
  %v2218 = vpack.c.b16 %v1915, %v1912
  %v2219 = vpack.c.b16 %v1919, %v1916
  %v2220 = vpack.c.b16 %v1920, %v1917
  %v2221 = vpack.c.b16 %v1921, %v1918
  %v2222 = vpack.c.b16 %v1925, %v1922
  %v2223 = vpack.c.b16 %v1926, %v1923
  %v2224 = vpack.c.b16 %v1927, %v1924
  %v2225 = vpack.c.b16 %v1931, %v1928
  %v2226 = vpack.c.b16 %v1932, %v1929
  %v2227 = vpack.c.b16 %v1933, %v1930
  %v2228 = vpack.c.b16 %v1937, %v1934
  %v2229 = vpack.c.b16 %v1938, %v1935
  %v2230 = vpack.c.b16 %v1939, %v1936
  %v2231 = vpack.c.b16 %v1943, %v1940
  %v2232 = vpack.c.b16 %v1944, %v1941
  %v2233 = vpack.c.b16 %v1945, %v1942
  %v2234 = vpack.c.b16 %v1949, %v1946
  %v2235 = vpack.c.b16 %v1950, %v1947
  %v2236 = vpack.c.b16 %v1951, %v1948
  %v2237 = vpack.c.b16 %v1955, %v1952
  %v2238 = vpack.c.b16 %v1956, %v1953
  %v2239 = vpack.c.b16 %v1957, %v1954
  %v2240 = vpack.c.b16 %v1961, %v1958
  %v2241 = vpack.c.b16 %v1962, %v1959
  %v2242 = vpack.c.b16 %v1963, %v1960
  %v2243 = vpack.c.b16 %v1967, %v1964
  %v2244 = vpack.c.b16 %v1968, %v1965
  %v2245 = vpack.c.b16 %v1969, %v1966
  %v2246 = vpack.c.b16 %v1973, %v1970
  %v2247 = vpack.c.b16 %v1974, %v1971
  %v2248 = vpack.c.b16 %v1975, %v1972
  %v2249 = vpack.c.b16 %v1979, %v1976
  %v2250 = vpack.c.b16 %v1980, %v1977
  %v2251 = vpack.c.b16 %v1981, %v1978
  %v2252 = vpack.c.b16 %v1985, %v1982
  %v2253 = vpack.c.b16 %v1986, %v1983
  %v2254 = vpack.c.b16 %v1987, %v1984
  %v2255 = vpack.c.b16 %v1991, %v1988
  %v2256 = vpack.c.b16 %v1992, %v1989
  %v2257 = vpack.c.b16 %v1993, %v1990
  %v2258 = vpack.c.b16 %v1997, %v1994
  %v2259 = vpack.c.b16 %v1998, %v1995
  %v2260 = vpack.c.b16 %v1999, %v1996
  %v2261 = vpack.c.b16 %v2003, %v2000
  %v2262 = vpack.c.b16 %v2004, %v2001
  %v2263 = vpack.c.b16 %v2005, %v2002
  %v2264 = vpack.c.b16 %v2009, %v2006
  %v2265 = vpack.c.b16 %v2010, %v2007
  %v2266 = vpack.c.b16 %v2011, %v2008
  %v2267 = vpack.c.b16 %v2015, %v2012
  %v2268 = vpack.c.b16 %v2016, %v2013
  %v2269 = vpack.c.b16 %v2017, %v2014
  %v2270 = vpack.c.b16 %v2021, %v2018
  %v2271 = vpack.c.b16 %v2022, %v2019
  %v2272 = vpack.c.b16 %v2023, %v2020
  %v2273 = vpack.c.b16 %v2027, %v2024
  %v2274 = vpack.c.b16 %v2028, %v2025
  %v2275 = vpack.c.b16 %v2029, %v2026
  %v2276 = vpack.c.b16 %v2033, %v2030
  %v2277 = vpack.c.b16 %v2034, %v2031
  %v2278 = vpack.c.b16 %v2035, %v2032
  %v2279 = vpack.c.b16 %v2039, %v2036
  %v2280 = vpack.c.b16 %v2040, %v2037
  %v2281 = vpack.c.b16 %v2041, %v2038
  %v2282 = vpack.c.b16 %v2045, %v2042
  %v2283 = vpack.c.b16 %v2046, %v2043
  %v2284 = vpack.c.b16 %v2047, %v2044
  %v2285 = vpack.c.b16 %v2051, %v2048
  %v2286 = vpack.c.b16 %v2052, %v2049
  %v2287 = vpack.c.b16 %v2053, %v2050
  %v2288 = vpack.c.b16 %v2057, %v2054
  %v2289 = vpack.c.b16 %v2058, %v2055
  %v2290 = vpack.c.b16 %v2059, %v2056
  %v2291 = vpack.c.b16 %v2063, %v2060
  %v2292 = vpack.c.b16 %v2064, %v2061
  %v2293 = vpack.c.b16 %v2065, %v2062
  %v2294 = vpack.c.b16 %v2069, %v2066
  %v2295 = vpack.c.b16 %v2070, %v2067
  %v2296 = vpack.c.b16 %v2071, %v2068
  %v2297 = vpack.c.b16 %v2075, %v2072
  %v2298 = vpack.c.b16 %v2076, %v2073
  %v2299 = vpack.c.b16 %v2077, %v2074
  %v2300 = vpack.c.b16 %v2081, %v2078
  %v2301 = vpack.c.b16 %v2082, %v2079
  %v2302 = vpack.c.b16 %v2083, %v2080
  %v2303 = vpack.c.b16 %v2087, %v2084
  %v2304 = vpack.c.b16 %v2088, %v2085
  %v2305 = vpack.c.b16 %v2089, %v2086
  %v2306 = vpack.c.b16 %v2093, %v2090
  %v2307 = vpack.c.b16 %v2094, %v2091
  %v2308 = vpack.c.b16 %v2095, %v2092
  %v2309 = vpack.c.b16 %v2099, %v2096
  %v2310 = vpack.c.b16 %v2100, %v2097
  %v2311 = vpack.c.b16 %v2101, %v2098
  %v2312 = vpack.c.b16 %v2105, %v2102
  %v2313 = vpack.c.b16 %v2106, %v2103
  %v2314 = vpack.c.b16 %v2107, %v2104
  %v2315 = vpack.c.b16 %v2111, %v2108
  %v2316 = vpack.c.b16 %v2112, %v2109
  %v2317 = vpack.c.b16 %v2113, %v2110
  %v2318 = vpack.c.b16 %v2117, %v2114
  %v2319 = vpack.c.b16 %v2118, %v2115
  %v2320 = vpack.c.b16 %v2119, %v2116
  %v2321 = vpack.c.b16 %v2123, %v2120
  %v2322 = vpack.c.b16 %v2124, %v2121
  %v2323 = vpack.c.b16 %v2125, %v2122
  %v2324 = vpack.c.b16 %v2129, %v2126
  %v2325 = vpack.c.b16 %v2130, %v2127
  %v2326 = vpack.c.b16 %v2131, %v2128
  %v2327 = vpack.c.b16 %v2135, %v2132
  %v2328 = vpack.c.b16 %v2136, %v2133
  %v2329 = vpack.c.b16 %v2137, %v2134
  %2522 = vmatpush.bf16.msra.mxu0 %v2159
  %2523 = vmatpush.bf16.msra.mxu0 %v2156
  %2524 = vmatpush.bf16.msra.mxu0 %v2153
  %2525 = vmatpush.bf16.msra.mxu0 %v2150
  %2526 = vmatpush.bf16.msra.mxu0 %v2147
  %2527 = vmatpush.bf16.msra.mxu0 %v2144
  %2528 = vmatpush.bf16.msra.mxu0 %v2141
  %2529 = vmatpush.bf16.msra.mxu0 %v2138
  %2530 = vmatmul.bf16.gmra.mxu0 %v1482
  %v2531 = vpop.f32.mrf.mxu0
  %v2532 = vadd.f32 %v1464, %v2531
  %v2533 = vpop.f32.mrf.mxu0
  %2534 = vdwg.mxu0
  %2535 = vmatpush.bf16.msra.mxu0 %v2183
  %2536 = vmatpush.bf16.msra.mxu0 %v2180
  %2537 = vmatpush.bf16.msra.mxu0 %v2177
  %2538 = vmatpush.bf16.msra.mxu0 %v2174
  %2539 = vmatpush.bf16.msra.mxu0 %v2171
  %2540 = vmatpush.bf16.msra.mxu0 %v2168
  %2541 = vmatpush.bf16.msra.mxu0 %v2165
  %2542 = vmatpush.bf16.msra.mxu0 %v2162
  %2543 = vmatmul.bf16.gmra.mxu0 %v1483
  %v2544 = vpop.f32.mrf.mxu0
  %v2545 = vadd.f32 %v2532, %v2544
  %v2546 = vpop.f32.mrf.mxu0
  %2547 = vdwg.mxu0
  %2548 = vmatpush.bf16.msra.mxu0 %v2207
  %2549 = vmatpush.bf16.msra.mxu0 %v2204
  %2550 = vmatpush.bf16.msra.mxu0 %v2201
  %2551 = vmatpush.bf16.msra.mxu0 %v2198
  %2552 = vmatpush.bf16.msra.mxu0 %v2195
  %2553 = vmatpush.bf16.msra.mxu0 %v2192
  %2554 = vmatpush.bf16.msra.mxu0 %v2189
  %2555 = vmatpush.bf16.msra.mxu0 %v2186
  %2556 = vmatmul.bf16.gmra.mxu0 %v1484
  %v2557 = vpop.f32.mrf.mxu0
  %v2558 = vadd.f32 %v2545, %v2557
  %v2559 = vpop.f32.mrf.mxu0
  %2560 = vdwg.mxu0
  %2561 = vmatpush.bf16.msra.mxu0 %v2231
  %2562 = vmatpush.bf16.msra.mxu0 %v2228
  %2563 = vmatpush.bf16.msra.mxu0 %v2225
  %2564 = vmatpush.bf16.msra.mxu0 %v2222
  %2565 = vmatpush.bf16.msra.mxu0 %v2219
  %2566 = vmatpush.bf16.msra.mxu0 %v2216
  %2567 = vmatpush.bf16.msra.mxu0 %v2213
  %2568 = vmatpush.bf16.msra.mxu0 %v2210
  %2569 = vmatmul.bf16.gmra.mxu0 %v1485
  %v2570 = vpop.f32.mrf.mxu0
  %v2571 = vadd.f32 %v2558, %v2570
  %v2572 = vpop.f32.mrf.mxu0
  %2573 = vdwg.mxu0
  %2574 = vmatpush.bf16.msra.mxu0 %v2255
  %2575 = vmatpush.bf16.msra.mxu0 %v2252
  %2576 = vmatpush.bf16.msra.mxu0 %v2249
  %2577 = vmatpush.bf16.msra.mxu0 %v2246
  %2578 = vmatpush.bf16.msra.mxu0 %v2243
  %2579 = vmatpush.bf16.msra.mxu0 %v2240
  %2580 = vmatpush.bf16.msra.mxu0 %v2237
  %2581 = vmatpush.bf16.msra.mxu0 %v2234
  %2582 = vmatmul.bf16.gmra.mxu0 %v1486
  %v2583 = vpop.f32.mrf.mxu0
  %v2584 = vadd.f32 %v2571, %v2583
  %v2585 = vpop.f32.mrf.mxu0
  %2586 = vdwg.mxu0
  %2587 = vmatpush.bf16.msra.mxu0 %v2279
  %2588 = vmatpush.bf16.msra.mxu0 %v2276
  %2589 = vmatpush.bf16.msra.mxu0 %v2273
  %2590 = vmatpush.bf16.msra.mxu0 %v2270
  %2591 = vmatpush.bf16.msra.mxu0 %v2267
  %2592 = vmatpush.bf16.msra.mxu0 %v2264
  %2593 = vmatpush.bf16.msra.mxu0 %v2261
  %2594 = vmatpush.bf16.msra.mxu0 %v2258
  %2595 = vmatmul.bf16.gmra.mxu0 %v1487
  %v2596 = vpop.f32.mrf.mxu0
  %v2597 = vadd.f32 %v2584, %v2596
  %v2598 = vpop.f32.mrf.mxu0
  %2599 = vdwg.mxu0
  %2600 = vmatpush.bf16.msra.mxu0 %v2303
  %2601 = vmatpush.bf16.msra.mxu0 %v2300
  %2602 = vmatpush.bf16.msra.mxu0 %v2297
  %2603 = vmatpush.bf16.msra.mxu0 %v2294
  %2604 = vmatpush.bf16.msra.mxu0 %v2291
  %2605 = vmatpush.bf16.msra.mxu0 %v2288
  %2606 = vmatpush.bf16.msra.mxu0 %v2285
  %2607 = vmatpush.bf16.msra.mxu0 %v2282
  %2608 = vmatmul.bf16.gmra.mxu0 %v1488
  %v2609 = vpop.f32.mrf.mxu0
  %v2610 = vadd.f32 %v2597, %v2609
  %v2611 = vpop.f32.mrf.mxu0
  %2612 = vdwg.mxu0
  %2613 = vmatpush.bf16.msra.mxu0 %v2327
  %2614 = vmatpush.bf16.msra.mxu0 %v2324
  %2615 = vmatpush.bf16.msra.mxu0 %v2321
  %2616 = vmatpush.bf16.msra.mxu0 %v2318
  %2617 = vmatpush.bf16.msra.mxu0 %v2315
  %2618 = vmatpush.bf16.msra.mxu0 %v2312
  %2619 = vmatpush.bf16.msra.mxu0 %v2309
  %2620 = vmatpush.bf16.msra.mxu0 %v2306
  %2621 = vmatmul.bf16.gmra.mxu0 %v1489
  %v2622 = vpop.f32.mrf.mxu0
  %v2623 = vadd.f32 %v2610, %v2622
  %v2624 = vpop.f32.mrf.mxu0
  %2625 = vdwg.mxu0
  %2626 = vmatpush.bf16.msra.mxu0 %v2160
  %2627 = vmatpush.bf16.msra.mxu0 %v2157
  %2628 = vmatpush.bf16.msra.mxu0 %v2154
  %2629 = vmatpush.bf16.msra.mxu0 %v2151
  %2630 = vmatpush.bf16.msra.mxu0 %v2148
  %2631 = vmatpush.bf16.msra.mxu0 %v2145
  %2632 = vmatpush.bf16.msra.mxu0 %v2142
  %2633 = vmatpush.bf16.msra.mxu0 %v2139
  %2634 = vmatmul.bf16.gmra.mxu0 %v1482
  %v2635 = vpop.f32.mrf.mxu0
  %v2636 = vadd.f32 %v1465, %v2635
  %v2637 = vpop.f32.mrf.mxu0
  %2638 = vdwg.mxu0
  %2639 = vmatpush.bf16.msra.mxu0 %v2184
  %2640 = vmatpush.bf16.msra.mxu0 %v2181
  %2641 = vmatpush.bf16.msra.mxu0 %v2178
  %2642 = vmatpush.bf16.msra.mxu0 %v2175
  %2643 = vmatpush.bf16.msra.mxu0 %v2172
  %2644 = vmatpush.bf16.msra.mxu0 %v2169
  %2645 = vmatpush.bf16.msra.mxu0 %v2166
  %2646 = vmatpush.bf16.msra.mxu0 %v2163
  %2647 = vmatmul.bf16.gmra.mxu0 %v1483
  %v2648 = vpop.f32.mrf.mxu0
  %v2649 = vadd.f32 %v2636, %v2648
  %v2650 = vpop.f32.mrf.mxu0
  %2651 = vdwg.mxu0
  %2652 = vmatpush.bf16.msra.mxu0 %v2208
  %2653 = vmatpush.bf16.msra.mxu0 %v2205
  %2654 = vmatpush.bf16.msra.mxu0 %v2202
  %2655 = vmatpush.bf16.msra.mxu0 %v2199
  %2656 = vmatpush.bf16.msra.mxu0 %v2196
  %2657 = vmatpush.bf16.msra.mxu0 %v2193
  %2658 = vmatpush.bf16.msra.mxu0 %v2190
  %2659 = vmatpush.bf16.msra.mxu0 %v2187
  %2660 = vmatmul.bf16.gmra.mxu0 %v1484
  %v2661 = vpop.f32.mrf.mxu0
  %v2662 = vadd.f32 %v2649, %v2661
  %v2663 = vpop.f32.mrf.mxu0
  %2664 = vdwg.mxu0
  %2665 = vmatpush.bf16.msra.mxu0 %v2232
  %2666 = vmatpush.bf16.msra.mxu0 %v2229
  %2667 = vmatpush.bf16.msra.mxu0 %v2226
  %2668 = vmatpush.bf16.msra.mxu0 %v2223
  %2669 = vmatpush.bf16.msra.mxu0 %v2220
  %2670 = vmatpush.bf16.msra.mxu0 %v2217
  %2671 = vmatpush.bf16.msra.mxu0 %v2214
  %2672 = vmatpush.bf16.msra.mxu0 %v2211
  %2673 = vmatmul.bf16.gmra.mxu0 %v1485
  %v2674 = vpop.f32.mrf.mxu0
  %v2675 = vadd.f32 %v2662, %v2674
  %v2676 = vpop.f32.mrf.mxu0
  %2677 = vdwg.mxu0
  %2678 = vmatpush.bf16.msra.mxu0 %v2256
  %2679 = vmatpush.bf16.msra.mxu0 %v2253
  %2680 = vmatpush.bf16.msra.mxu0 %v2250
  %2681 = vmatpush.bf16.msra.mxu0 %v2247
  %2682 = vmatpush.bf16.msra.mxu0 %v2244
  %2683 = vmatpush.bf16.msra.mxu0 %v2241
  %2684 = vmatpush.bf16.msra.mxu0 %v2238
  %2685 = vmatpush.bf16.msra.mxu0 %v2235
  %2686 = vmatmul.bf16.gmra.mxu0 %v1486
  %v2687 = vpop.f32.mrf.mxu0
  %v2688 = vadd.f32 %v2675, %v2687
  %v2689 = vpop.f32.mrf.mxu0
  %2690 = vdwg.mxu0
  %2691 = vmatpush.bf16.msra.mxu0 %v2280
  %2692 = vmatpush.bf16.msra.mxu0 %v2277
  %2693 = vmatpush.bf16.msra.mxu0 %v2274
  %2694 = vmatpush.bf16.msra.mxu0 %v2271
  %2695 = vmatpush.bf16.msra.mxu0 %v2268
  %2696 = vmatpush.bf16.msra.mxu0 %v2265
  %2697 = vmatpush.bf16.msra.mxu0 %v2262
  %2698 = vmatpush.bf16.msra.mxu0 %v2259
  %2699 = vmatmul.bf16.gmra.mxu0 %v1487
  %v2700 = vpop.f32.mrf.mxu0
  %v2701 = vadd.f32 %v2688, %v2700
  %v2702 = vpop.f32.mrf.mxu0
  %2703 = vdwg.mxu0
  %2704 = vmatpush.bf16.msra.mxu0 %v2304
  %2705 = vmatpush.bf16.msra.mxu0 %v2301
  %2706 = vmatpush.bf16.msra.mxu0 %v2298
  %2707 = vmatpush.bf16.msra.mxu0 %v2295
  %2708 = vmatpush.bf16.msra.mxu0 %v2292
  %2709 = vmatpush.bf16.msra.mxu0 %v2289
  %2710 = vmatpush.bf16.msra.mxu0 %v2286
  %2711 = vmatpush.bf16.msra.mxu0 %v2283
  %2712 = vmatmul.bf16.gmra.mxu0 %v1488
  %v2713 = vpop.f32.mrf.mxu0
  %v2714 = vadd.f32 %v2701, %v2713
  %v2715 = vpop.f32.mrf.mxu0
  %2716 = vdwg.mxu0
  %2717 = vmatpush.bf16.msra.mxu0 %v2328
  %2718 = vmatpush.bf16.msra.mxu0 %v2325
  %2719 = vmatpush.bf16.msra.mxu0 %v2322
  %2720 = vmatpush.bf16.msra.mxu0 %v2319
  %2721 = vmatpush.bf16.msra.mxu0 %v2316
  %2722 = vmatpush.bf16.msra.mxu0 %v2313
  %2723 = vmatpush.bf16.msra.mxu0 %v2310
  %2724 = vmatpush.bf16.msra.mxu0 %v2307
  %2725 = vmatmul.bf16.gmra.mxu0 %v1489
  %v2726 = vpop.f32.mrf.mxu0
  %v2727 = vadd.f32 %v2714, %v2726
  %v2728 = vpop.f32.mrf.mxu0
  %2729 = vdwg.mxu0
  %2730 = vmatpush.bf16.msra.mxu0 %v2161
  %2731 = vmatpush.bf16.msra.mxu0 %v2158
  %2732 = vmatpush.bf16.msra.mxu0 %v2155
  %2733 = vmatpush.bf16.msra.mxu0 %v2152
  %2734 = vmatpush.bf16.msra.mxu0 %v2149
  %2735 = vmatpush.bf16.msra.mxu0 %v2146
  %2736 = vmatpush.bf16.msra.mxu0 %v2143
  %2737 = vmatpush.bf16.msra.mxu0 %v2140
  %2738 = vmatmul.bf16.gmra.mxu0 %v1482
  %v2739 = vpop.f32.mrf.mxu0
  %v2740 = vadd.f32 %v1466, %v2739
  %v2741 = vpop.f32.mrf.mxu0
  %2742 = vdwg.mxu0
  %2743 = vmatpush.bf16.msra.mxu0 %v2185
  %2744 = vmatpush.bf16.msra.mxu0 %v2182
  %2745 = vmatpush.bf16.msra.mxu0 %v2179
  %2746 = vmatpush.bf16.msra.mxu0 %v2176
  %2747 = vmatpush.bf16.msra.mxu0 %v2173
  %2748 = vmatpush.bf16.msra.mxu0 %v2170
  %2749 = vmatpush.bf16.msra.mxu0 %v2167
  %2750 = vmatpush.bf16.msra.mxu0 %v2164
  %2751 = vmatmul.bf16.gmra.mxu0 %v1483
  %v2752 = vpop.f32.mrf.mxu0
  %v2753 = vadd.f32 %v2740, %v2752
  %v2754 = vpop.f32.mrf.mxu0
  %2755 = vdwg.mxu0
  %2756 = vmatpush.bf16.msra.mxu0 %v2209
  %2757 = vmatpush.bf16.msra.mxu0 %v2206
  %2758 = vmatpush.bf16.msra.mxu0 %v2203
  %2759 = vmatpush.bf16.msra.mxu0 %v2200
  %2760 = vmatpush.bf16.msra.mxu0 %v2197
  %2761 = vmatpush.bf16.msra.mxu0 %v2194
  %2762 = vmatpush.bf16.msra.mxu0 %v2191
  %2763 = vmatpush.bf16.msra.mxu0 %v2188
  %2764 = vmatmul.bf16.gmra.mxu0 %v1484
  %v2765 = vpop.f32.mrf.mxu0
  %v2766 = vadd.f32 %v2753, %v2765
  %v2767 = vpop.f32.mrf.mxu0
  %2768 = vdwg.mxu0
  %2769 = vmatpush.bf16.msra.mxu0 %v2233
  %2770 = vmatpush.bf16.msra.mxu0 %v2230
  %2771 = vmatpush.bf16.msra.mxu0 %v2227
  %2772 = vmatpush.bf16.msra.mxu0 %v2224
  %2773 = vmatpush.bf16.msra.mxu0 %v2221
  %2774 = vmatpush.bf16.msra.mxu0 %v2218
  %2775 = vmatpush.bf16.msra.mxu0 %v2215
  %2776 = vmatpush.bf16.msra.mxu0 %v2212
  %2777 = vmatmul.bf16.gmra.mxu0 %v1485
  %v2778 = vpop.f32.mrf.mxu0
  %v2779 = vadd.f32 %v2766, %v2778
  %v2780 = vpop.f32.mrf.mxu0
  %2781 = vdwg.mxu0
  %2782 = vmatpush.bf16.msra.mxu0 %v2257
  %2783 = vmatpush.bf16.msra.mxu0 %v2254
  %2784 = vmatpush.bf16.msra.mxu0 %v2251
  %2785 = vmatpush.bf16.msra.mxu0 %v2248
  %2786 = vmatpush.bf16.msra.mxu0 %v2245
  %2787 = vmatpush.bf16.msra.mxu0 %v2242
  %2788 = vmatpush.bf16.msra.mxu0 %v2239
  %2789 = vmatpush.bf16.msra.mxu0 %v2236
  %2790 = vmatmul.bf16.gmra.mxu0 %v1486
  %v2791 = vpop.f32.mrf.mxu0
  %v2792 = vadd.f32 %v2779, %v2791
  %v2793 = vpop.f32.mrf.mxu0
  %2794 = vdwg.mxu0
  %2795 = vmatpush.bf16.msra.mxu0 %v2281
  %2796 = vmatpush.bf16.msra.mxu0 %v2278
  %2797 = vmatpush.bf16.msra.mxu0 %v2275
  %2798 = vmatpush.bf16.msra.mxu0 %v2272
  %2799 = vmatpush.bf16.msra.mxu0 %v2269
  %2800 = vmatpush.bf16.msra.mxu0 %v2266
  %2801 = vmatpush.bf16.msra.mxu0 %v2263
  %2802 = vmatpush.bf16.msra.mxu0 %v2260
  %2803 = vmatmul.bf16.gmra.mxu0 %v1487
  %v2804 = vpop.f32.mrf.mxu0
  %v2805 = vadd.f32 %v2792, %v2804
  %v2806 = vpop.f32.mrf.mxu0
  %2807 = vdwg.mxu0
  %2808 = vmatpush.bf16.msra.mxu0 %v2305
  %2809 = vmatpush.bf16.msra.mxu0 %v2302
  %2810 = vmatpush.bf16.msra.mxu0 %v2299
  %2811 = vmatpush.bf16.msra.mxu0 %v2296
  %2812 = vmatpush.bf16.msra.mxu0 %v2293
  %2813 = vmatpush.bf16.msra.mxu0 %v2290
  %2814 = vmatpush.bf16.msra.mxu0 %v2287
  %2815 = vmatpush.bf16.msra.mxu0 %v2284
  %2816 = vmatmul.bf16.gmra.mxu0 %v1488
  %v2817 = vpop.f32.mrf.mxu0
  %v2818 = vadd.f32 %v2805, %v2817
  %v2819 = vpop.f32.mrf.mxu0
  %2820 = vdwg.mxu0
  %2821 = vmatpush.bf16.msra.mxu0 %v2329
  %2822 = vmatpush.bf16.msra.mxu0 %v2326
  %2823 = vmatpush.bf16.msra.mxu0 %v2323
  %2824 = vmatpush.bf16.msra.mxu0 %v2320
  %2825 = vmatpush.bf16.msra.mxu0 %v2317
  %2826 = vmatpush.bf16.msra.mxu0 %v2314
  %2827 = vmatpush.bf16.msra.mxu0 %v2311
  %2828 = vmatpush.bf16.msra.mxu0 %v2308
  %2829 = vmatmul.bf16.gmra.mxu0 %v1489
  %v2830 = vpop.f32.mrf.mxu0
  %v2831 = vadd.f32 %v2818, %v2830
  %v2832 = vpop.f32.mrf.mxu0
  %2833 = vdwg.mxu0
  %v2834 = vld [vmem:[%s16] sm:$0xf]
  %v2835 = vld [vmem:[%s16 + $0x4] sm:$0xf]
  %v2836 = vld [vmem:[%s16 + $0x8] sm:$0xf]
  %v2837 = vld [vmem:[%s16 + $0xc] sm:$0xf]
  %v2838 = vld [vmem:[%s16 + $0x10] sm:$0xf]
  %v2839 = vld [vmem:[%s16 + $0x14] sm:$0xf]
  %v2840 = vld [vmem:[%s16 + $0x18] sm:$0xf]
  %v2841 = vld [vmem:[%s16 + $0x1c] sm:$0xf]
  %v2842 = vld [vmem:[%s16 + $0x20] sm:$0xf]
  %v2843 = vld [vmem:[%s16 + $0x24] sm:$0xf]
  %v2844 = vld [vmem:[%s16 + $0x28] sm:$0xf]
  %v2845 = vld [vmem:[%s16 + $0x2c] sm:$0xf]
  %v2846 = vld [vmem:[%s16 + $0x30] sm:$0xf]
  %v2847 = vld [vmem:[%s16 + $0x34] sm:$0xf]
  %v2848 = vld [vmem:[%s16 + $0x38] sm:$0xf]
  %v2849 = vld [vmem:[%s16 + $0x3c] sm:$0xf]
  %v2850 = vld [vmem:[%s16 + $0x40] sm:$0xf]
  %v2851 = vld [vmem:[%s16 + $0x44] sm:$0xf]
  %v2852 = vld [vmem:[%s16 + $0x48] sm:$0xf]
  %v2853 = vld [vmem:[%s16 + $0x4c] sm:$0xf]
  %v2854 = vld [vmem:[%s16 + $0x50] sm:$0xf]
  %v2855 = vld [vmem:[%s16 + $0x54] sm:$0xf]
  %v2856 = vld [vmem:[%s16 + $0x58] sm:$0xf]
  %v2857 = vld [vmem:[%s16 + $0x5c] sm:$0xf]
  %v2858 = vld [vmem:[%s16 + $0x60] sm:$0xf]
  %v2859 = vld [vmem:[%s16 + $0x64] sm:$0xf]
  %v2860 = vld [vmem:[%s16 + $0x68] sm:$0xf]
  %v2861 = vld [vmem:[%s16 + $0x6c] sm:$0xf]
  %v2862 = vld [vmem:[%s16 + $0x70] sm:$0xf]
  %v2863 = vld [vmem:[%s16 + $0x74] sm:$0xf]
  %v2864 = vld [vmem:[%s16 + $0x78] sm:$0xf]
  %v2865 = vld [vmem:[%s16 + $0x7c] sm:$0xf]
  %v2866 = vld [vmem:[%s16 + $0x80] sm:$0xf]
  %v2867 = vld [vmem:[%s16 + $0x84] sm:$0xf]
  %v2868 = vld [vmem:[%s16 + $0x88] sm:$0xf]
  %v2869 = vld [vmem:[%s16 + $0x8c] sm:$0xf]
  %v2870 = vld [vmem:[%s16 + $0x90] sm:$0xf]
  %v2871 = vld [vmem:[%s16 + $0x94] sm:$0xf]
  %v2872 = vld [vmem:[%s16 + $0x98] sm:$0xf]
  %v2873 = vld [vmem:[%s16 + $0x9c] sm:$0xf]
  %v2874 = vld [vmem:[%s16 + $0xa0] sm:$0xf]
  %v2875 = vld [vmem:[%s16 + $0xa4] sm:$0xf]
  %v2876 = vld [vmem:[%s16 + $0xa8] sm:$0xf]
  %v2877 = vld [vmem:[%s16 + $0xac] sm:$0xf]
  %v2878 = vld [vmem:[%s16 + $0xb0] sm:$0xf]
  %v2879 = vld [vmem:[%s16 + $0xb4] sm:$0xf]
  %v2880 = vld [vmem:[%s16 + $0xb8] sm:$0xf]
  %v2881 = vld [vmem:[%s16 + $0xbc] sm:$0xf]
  %v2882 = vld [vmem:[%s16 + $0xc0] sm:$0xf]
  %v2883 = vld [vmem:[%s16 + $0xc4] sm:$0xf]
  %v2884 = vld [vmem:[%s16 + $0xc8] sm:$0xf]
  %v2885 = vld [vmem:[%s16 + $0xcc] sm:$0xf]
  %v2886 = vld [vmem:[%s16 + $0xd0] sm:$0xf]
  %v2887 = vld [vmem:[%s16 + $0xd4] sm:$0xf]
  %v2888 = vld [vmem:[%s16 + $0xd8] sm:$0xf]
  %v2889 = vld [vmem:[%s16 + $0xdc] sm:$0xf]
  %v2890 = vld [vmem:[%s16 + $0xe0] sm:$0xf]
  %v2891 = vld [vmem:[%s16 + $0xe4] sm:$0xf]
  %v2892 = vld [vmem:[%s16 + $0xe8] sm:$0xf]
  %v2893 = vld [vmem:[%s16 + $0xec] sm:$0xf]
  %v2894 = vld [vmem:[%s16 + $0xf0] sm:$0xf]
  %v2895 = vld [vmem:[%s16 + $0xf4] sm:$0xf]
  %v2896 = vld [vmem:[%s16 + $0xf8] sm:$0xf]
  %v2897 = vld [vmem:[%s16 + $0xfc] sm:$0xf]
  %v2898 = vld [vmem:[%s16 + $0x100] sm:$0xf]
  %v2899 = vld [vmem:[%s16 + $0x104] sm:$0xf]
  %v2900 = vld [vmem:[%s16 + $0x108] sm:$0xf]
  %v2901 = vld [vmem:[%s16 + $0x10c] sm:$0xf]
  %v2902 = vld [vmem:[%s16 + $0x110] sm:$0xf]
  %v2903 = vld [vmem:[%s16 + $0x114] sm:$0xf]
  %v2904 = vld [vmem:[%s16 + $0x118] sm:$0xf]
  %v2905 = vld [vmem:[%s16 + $0x11c] sm:$0xf]
  %v2906 = vld [vmem:[%s16 + $0x120] sm:$0xf]
  %v2907 = vld [vmem:[%s16 + $0x124] sm:$0xf]
  %v2908 = vld [vmem:[%s16 + $0x128] sm:$0xf]
  %v2909 = vld [vmem:[%s16 + $0x12c] sm:$0xf]
  %v2910 = vld [vmem:[%s16 + $0x130] sm:$0xf]
  %v2911 = vld [vmem:[%s16 + $0x134] sm:$0xf]
  %v2912 = vld [vmem:[%s16 + $0x138] sm:$0xf]
  %v2913 = vld [vmem:[%s16 + $0x13c] sm:$0xf]
  %v2914 = vld [vmem:[%s16 + $0x140] sm:$0xf]
  %v2915 = vld [vmem:[%s16 + $0x144] sm:$0xf]
  %v2916 = vld [vmem:[%s16 + $0x148] sm:$0xf]
  %v2917 = vld [vmem:[%s16 + $0x14c] sm:$0xf]
  %v2918 = vld [vmem:[%s16 + $0x150] sm:$0xf]
  %v2919 = vld [vmem:[%s16 + $0x154] sm:$0xf]
  %v2920 = vld [vmem:[%s16 + $0x158] sm:$0xf]
  %v2921 = vld [vmem:[%s16 + $0x15c] sm:$0xf]
  %v2922 = vld [vmem:[%s16 + $0x160] sm:$0xf]
  %v2923 = vld [vmem:[%s16 + $0x164] sm:$0xf]
  %v2924 = vld [vmem:[%s16 + $0x168] sm:$0xf]
  %v2925 = vld [vmem:[%s16 + $0x16c] sm:$0xf]
  %v2926 = vld [vmem:[%s16 + $0x170] sm:$0xf]
  %v2927 = vld [vmem:[%s16 + $0x174] sm:$0xf]
  %v2928 = vld [vmem:[%s16 + $0x178] sm:$0xf]
  %v2929 = vld [vmem:[%s16 + $0x17c] sm:$0xf]
  %v2930 = vld [vmem:[%s16 + $0x180] sm:$0xf]
  %v2931 = vld [vmem:[%s16 + $0x184] sm:$0xf]
  %v2932 = vld [vmem:[%s16 + $0x188] sm:$0xf]
  %v2933 = vld [vmem:[%s16 + $0x18c] sm:$0xf]
  %v2934 = vld [vmem:[%s16 + $0x190] sm:$0xf]
  %v2935 = vld [vmem:[%s16 + $0x194] sm:$0xf]
  %v2936 = vld [vmem:[%s16 + $0x198] sm:$0xf]
  %v2937 = vld [vmem:[%s16 + $0x19c] sm:$0xf]
  %v2938 = vld [vmem:[%s16 + $0x1a0] sm:$0xf]
  %v2939 = vld [vmem:[%s16 + $0x1a4] sm:$0xf]
  %v2940 = vld [vmem:[%s16 + $0x1a8] sm:$0xf]
  %v2941 = vld [vmem:[%s16 + $0x1ac] sm:$0xf]
  %v2942 = vld [vmem:[%s16 + $0x1b0] sm:$0xf]
  %v2943 = vld [vmem:[%s16 + $0x1b4] sm:$0xf]
  %v2944 = vld [vmem:[%s16 + $0x1b8] sm:$0xf]
  %v2945 = vld [vmem:[%s16 + $0x1bc] sm:$0xf]
  %v2946 = vld [vmem:[%s16 + $0x1c0] sm:$0xf]
  %v2947 = vld [vmem:[%s16 + $0x1c4] sm:$0xf]
  %v2948 = vld [vmem:[%s16 + $0x1c8] sm:$0xf]
  %v2949 = vld [vmem:[%s16 + $0x1cc] sm:$0xf]
  %v2950 = vld [vmem:[%s16 + $0x1d0] sm:$0xf]
  %v2951 = vld [vmem:[%s16 + $0x1d4] sm:$0xf]
  %v2952 = vld [vmem:[%s16 + $0x1d8] sm:$0xf]
  %v2953 = vld [vmem:[%s16 + $0x1dc] sm:$0xf]
  %v2954 = vld [vmem:[%s16 + $0x1e0] sm:$0xf]
  %v2955 = vld [vmem:[%s16 + $0x1e4] sm:$0xf]
  %v2956 = vld [vmem:[%s16 + $0x1e8] sm:$0xf]
  %v2957 = vld [vmem:[%s16 + $0x1ec] sm:$0xf]
  %v2958 = vld [vmem:[%s16 + $0x1f0] sm:$0xf]
  %v2959 = vld [vmem:[%s16 + $0x1f4] sm:$0xf]
  %v2960 = vld [vmem:[%s16 + $0x1f8] sm:$0xf]
  %v2961 = vld [vmem:[%s16 + $0x1fc] sm:$0xf]
  %v2962 = vld [vmem:[%s17] sm:$0x1]
  %v2964 = vperm.slane %v2962, 0
  %v2970 = vunpack.c.h.b16 %v794
  %v2971 = vunpack.c.l.b16 %v795
  %v2972 = vunpack.c.h.b16 %v795
  %v2973 = vunpack.c.l.b16 %v796
  %v2974 = vunpack.c.h.b16 %v796
  %v2975 = vunpack.c.l.b16 %v797
  %v2976 = vunpack.c.h.b16 %v797
  %v2977 = vunpack.c.l.b16 %v798
  %v2978 = vpack.c.b16 %v2970, %v2970
  %v2979 = vpack.c.b16 %v2971, %v2971
  %v2980 = vpack.c.b16 %v2972, %v2972
  %v2981 = vpack.c.b16 %v2973, %v2973
  %v2982 = vpack.c.b16 %v2974, %v2974
  %v2983 = vpack.c.b16 %v2975, %v2975
  %v2984 = vpack.c.b16 %v2976, %v2976
  %v2985 = vpack.c.b16 %v2977, %v2977
  %v3122 = vunpack.c.l.b16 %v2834
  %v3123 = vunpack.c.l.b16 %v2835
  %v3124 = vunpack.c.l.b16 %v2836
  %v3125 = vunpack.c.l.b16 %v2837
  %v3126 = vunpack.c.l.b16 %v2838
  %v3127 = vunpack.c.l.b16 %v2839
  %v3128 = vunpack.c.l.b16 %v2840
  %v3129 = vunpack.c.l.b16 %v2841
  %v3130 = vunpack.c.l.b16 %v2842
  %v3131 = vunpack.c.l.b16 %v2843
  %v3132 = vunpack.c.l.b16 %v2844
  %v3133 = vunpack.c.l.b16 %v2845
  %v3134 = vunpack.c.l.b16 %v2846
  %v3135 = vunpack.c.l.b16 %v2847
  %v3136 = vunpack.c.l.b16 %v2848
  %v3137 = vunpack.c.l.b16 %v2849
  %v3138 = vunpack.c.l.b16 %v2850
  %v3139 = vunpack.c.l.b16 %v2851
  %v3140 = vunpack.c.l.b16 %v2852
  %v3141 = vunpack.c.l.b16 %v2853
  %v3142 = vunpack.c.l.b16 %v2854
  %v3143 = vunpack.c.l.b16 %v2855
  %v3144 = vunpack.c.l.b16 %v2856
  %v3145 = vunpack.c.l.b16 %v2857
  %v3146 = vunpack.c.l.b16 %v2858
  %v3147 = vunpack.c.l.b16 %v2859
  %v3148 = vunpack.c.l.b16 %v2860
  %v3149 = vunpack.c.l.b16 %v2861
  %v3150 = vunpack.c.l.b16 %v2862
  %v3151 = vunpack.c.l.b16 %v2863
  %v3152 = vunpack.c.l.b16 %v2864
  %v3153 = vunpack.c.l.b16 %v2865
  %v3154 = vunpack.c.l.b16 %v2866
  %v3155 = vunpack.c.l.b16 %v2867
  %v3156 = vunpack.c.l.b16 %v2868
  %v3157 = vunpack.c.l.b16 %v2869
  %v3158 = vunpack.c.l.b16 %v2870
  %v3159 = vunpack.c.l.b16 %v2871
  %v3160 = vunpack.c.l.b16 %v2872
  %v3161 = vunpack.c.l.b16 %v2873
  %v3162 = vunpack.c.l.b16 %v2874
  %v3163 = vunpack.c.l.b16 %v2875
  %v3164 = vunpack.c.l.b16 %v2876
  %v3165 = vunpack.c.l.b16 %v2877
  %v3166 = vunpack.c.l.b16 %v2878
  %v3167 = vunpack.c.l.b16 %v2879
  %v3168 = vunpack.c.l.b16 %v2880
  %v3169 = vunpack.c.l.b16 %v2881
  %v3170 = vunpack.c.l.b16 %v2882
  %v3171 = vunpack.c.l.b16 %v2883
  %v3172 = vunpack.c.l.b16 %v2884
  %v3173 = vunpack.c.l.b16 %v2885
  %v3174 = vunpack.c.l.b16 %v2886
  %v3175 = vunpack.c.l.b16 %v2887
  %v3176 = vunpack.c.l.b16 %v2888
  %v3177 = vunpack.c.l.b16 %v2889
  %v3178 = vunpack.c.l.b16 %v2890
  %v3179 = vunpack.c.l.b16 %v2891
  %v3180 = vunpack.c.l.b16 %v2892
  %v3181 = vunpack.c.l.b16 %v2893
  %v3182 = vunpack.c.l.b16 %v2894
  %v3183 = vunpack.c.l.b16 %v2895
  %v3184 = vunpack.c.l.b16 %v2896
  %v3185 = vunpack.c.l.b16 %v2897
  %v3186 = vunpack.c.l.b16 %v2898
  %v3187 = vunpack.c.l.b16 %v2899
  %v3188 = vunpack.c.l.b16 %v2900
  %v3189 = vunpack.c.l.b16 %v2901
  %v3190 = vunpack.c.l.b16 %v2902
  %v3191 = vunpack.c.l.b16 %v2903
  %v3192 = vunpack.c.l.b16 %v2904
  %v3193 = vunpack.c.l.b16 %v2905
  %v3194 = vunpack.c.l.b16 %v2906
  %v3195 = vunpack.c.l.b16 %v2907
  %v3196 = vunpack.c.l.b16 %v2908
  %v3197 = vunpack.c.l.b16 %v2909
  %v3198 = vunpack.c.l.b16 %v2910
  %v3199 = vunpack.c.l.b16 %v2911
  %v3200 = vunpack.c.l.b16 %v2912
  %v3201 = vunpack.c.l.b16 %v2913
  %v3202 = vunpack.c.l.b16 %v2914
  %v3203 = vunpack.c.l.b16 %v2915
  %v3204 = vunpack.c.l.b16 %v2916
  %v3205 = vunpack.c.l.b16 %v2917
  %v3206 = vunpack.c.l.b16 %v2918
  %v3207 = vunpack.c.l.b16 %v2919
  %v3208 = vunpack.c.l.b16 %v2920
  %v3209 = vunpack.c.l.b16 %v2921
  %v3210 = vunpack.c.l.b16 %v2922
  %v3211 = vunpack.c.l.b16 %v2923
  %v3212 = vunpack.c.l.b16 %v2924
  %v3213 = vunpack.c.l.b16 %v2925
  %v3214 = vunpack.c.l.b16 %v2926
  %v3215 = vunpack.c.l.b16 %v2927
  %v3216 = vunpack.c.l.b16 %v2928
  %v3217 = vunpack.c.l.b16 %v2929
  %v3218 = vunpack.c.l.b16 %v2930
  %v3219 = vunpack.c.l.b16 %v2931
  %v3220 = vunpack.c.l.b16 %v2932
  %v3221 = vunpack.c.l.b16 %v2933
  %v3222 = vunpack.c.l.b16 %v2934
  %v3223 = vunpack.c.l.b16 %v2935
  %v3224 = vunpack.c.l.b16 %v2936
  %v3225 = vunpack.c.l.b16 %v2937
  %v3226 = vunpack.c.l.b16 %v2938
  %v3227 = vunpack.c.l.b16 %v2939
  %v3228 = vunpack.c.l.b16 %v2940
  %v3229 = vunpack.c.l.b16 %v2941
  %v3230 = vunpack.c.l.b16 %v2942
  %v3231 = vunpack.c.l.b16 %v2943
  %v3232 = vunpack.c.l.b16 %v2944
  %v3233 = vunpack.c.l.b16 %v2945
  %v3234 = vunpack.c.l.b16 %v2946
  %v3235 = vunpack.c.l.b16 %v2947
  %v3236 = vunpack.c.l.b16 %v2948
  %v3237 = vunpack.c.l.b16 %v2949
  %v3238 = vunpack.c.l.b16 %v2950
  %v3239 = vunpack.c.l.b16 %v2951
  %v3240 = vunpack.c.l.b16 %v2952
  %v3241 = vunpack.c.l.b16 %v2953
  %v3242 = vunpack.c.l.b16 %v2954
  %v3243 = vunpack.c.l.b16 %v2955
  %v3244 = vunpack.c.l.b16 %v2956
  %v3245 = vunpack.c.l.b16 %v2957
  %v3246 = vunpack.c.l.b16 %v2958
  %v3247 = vunpack.c.l.b16 %v2959
  %v3248 = vunpack.c.l.b16 %v2960
  %v3249 = vunpack.c.l.b16 %v2961
  %v3250 = vpack.c.b16 %v3123, %v3122
  %v3251 = vpack.c.b16 %v3125, %v3124
  %v3252 = vpack.c.b16 %v3127, %v3126
  %v3253 = vpack.c.b16 %v3129, %v3128
  %v3254 = vpack.c.b16 %v3131, %v3130
  %v3255 = vpack.c.b16 %v3133, %v3132
  %v3256 = vpack.c.b16 %v3135, %v3134
  %v3257 = vpack.c.b16 %v3137, %v3136
  %v3258 = vpack.c.b16 %v3139, %v3138
  %v3259 = vpack.c.b16 %v3141, %v3140
  %v3260 = vpack.c.b16 %v3143, %v3142
  %v3261 = vpack.c.b16 %v3145, %v3144
  %v3262 = vpack.c.b16 %v3147, %v3146
  %v3263 = vpack.c.b16 %v3149, %v3148
  %v3264 = vpack.c.b16 %v3151, %v3150
  %v3265 = vpack.c.b16 %v3153, %v3152
  %v3266 = vpack.c.b16 %v3155, %v3154
  %v3267 = vpack.c.b16 %v3157, %v3156
  %v3268 = vpack.c.b16 %v3159, %v3158
  %v3269 = vpack.c.b16 %v3161, %v3160
  %v3270 = vpack.c.b16 %v3163, %v3162
  %v3271 = vpack.c.b16 %v3165, %v3164
  %v3272 = vpack.c.b16 %v3167, %v3166
  %v3273 = vpack.c.b16 %v3169, %v3168
  %v3274 = vpack.c.b16 %v3171, %v3170
  %v3275 = vpack.c.b16 %v3173, %v3172
  %v3276 = vpack.c.b16 %v3175, %v3174
  %v3277 = vpack.c.b16 %v3177, %v3176
  %v3278 = vpack.c.b16 %v3179, %v3178
  %v3279 = vpack.c.b16 %v3181, %v3180
  %v3280 = vpack.c.b16 %v3183, %v3182
  %v3281 = vpack.c.b16 %v3185, %v3184
  %v3282 = vpack.c.b16 %v3187, %v3186
  %v3283 = vpack.c.b16 %v3189, %v3188
  %v3284 = vpack.c.b16 %v3191, %v3190
  %v3285 = vpack.c.b16 %v3193, %v3192
  %v3286 = vpack.c.b16 %v3195, %v3194
  %v3287 = vpack.c.b16 %v3197, %v3196
  %v3288 = vpack.c.b16 %v3199, %v3198
  %v3289 = vpack.c.b16 %v3201, %v3200
  %v3290 = vpack.c.b16 %v3203, %v3202
  %v3291 = vpack.c.b16 %v3205, %v3204
  %v3292 = vpack.c.b16 %v3207, %v3206
  %v3293 = vpack.c.b16 %v3209, %v3208
  %v3294 = vpack.c.b16 %v3211, %v3210
  %v3295 = vpack.c.b16 %v3213, %v3212
  %v3296 = vpack.c.b16 %v3215, %v3214
  %v3297 = vpack.c.b16 %v3217, %v3216
  %v3298 = vpack.c.b16 %v3219, %v3218
  %v3299 = vpack.c.b16 %v3221, %v3220
  %v3300 = vpack.c.b16 %v3223, %v3222
  %v3301 = vpack.c.b16 %v3225, %v3224
  %v3302 = vpack.c.b16 %v3227, %v3226
  %v3303 = vpack.c.b16 %v3229, %v3228
  %v3304 = vpack.c.b16 %v3231, %v3230
  %v3305 = vpack.c.b16 %v3233, %v3232
  %v3306 = vpack.c.b16 %v3235, %v3234
  %v3307 = vpack.c.b16 %v3237, %v3236
  %v3308 = vpack.c.b16 %v3239, %v3238
  %v3309 = vpack.c.b16 %v3241, %v3240
  %v3310 = vpack.c.b16 %v3243, %v3242
  %v3311 = vpack.c.b16 %v3245, %v3244
  %v3312 = vpack.c.b16 %v3247, %v3246
  %v3313 = vpack.c.b16 %v3249, %v3248
  %3378 = vmatpush.bf16.msra.mxu0 %v3257
  %3379 = vmatpush.bf16.msra.mxu0 %v3256
  %3380 = vmatpush.bf16.msra.mxu0 %v3255
  %3381 = vmatpush.bf16.msra.mxu0 %v3254
  %3382 = vmatpush.bf16.msra.mxu0 %v3253
  %3383 = vmatpush.bf16.msra.mxu0 %v3252
  %3384 = vmatpush.bf16.msra.mxu0 %v3251
  %3385 = vmatpush.bf16.msra.mxu0 %v3250
  %3386 = vmatmul.bf16.gmra.mxu0 %v2978
  %v3387 = vpop.f32.mrf.mxu0
  %v3388 = vadd.f32 %v2964, %v3387
  %v3389 = vpop.f32.mrf.mxu0
  %3390 = vdwg.mxu0
  %3391 = vmatpush.bf16.msra.mxu0 %v3265
  %3392 = vmatpush.bf16.msra.mxu0 %v3264
  %3393 = vmatpush.bf16.msra.mxu0 %v3263
  %3394 = vmatpush.bf16.msra.mxu0 %v3262
  %3395 = vmatpush.bf16.msra.mxu0 %v3261
  %3396 = vmatpush.bf16.msra.mxu0 %v3260
  %3397 = vmatpush.bf16.msra.mxu0 %v3259
  %3398 = vmatpush.bf16.msra.mxu0 %v3258
  %3399 = vmatmul.bf16.gmra.mxu0 %v2979
  %v3400 = vpop.f32.mrf.mxu0
  %v3401 = vadd.f32 %v3388, %v3400
  %v3402 = vpop.f32.mrf.mxu0
  %3403 = vdwg.mxu0
  %3404 = vmatpush.bf16.msra.mxu0 %v3273
  %3405 = vmatpush.bf16.msra.mxu0 %v3272
  %3406 = vmatpush.bf16.msra.mxu0 %v3271
  %3407 = vmatpush.bf16.msra.mxu0 %v3270
  %3408 = vmatpush.bf16.msra.mxu0 %v3269
  %3409 = vmatpush.bf16.msra.mxu0 %v3268
  %3410 = vmatpush.bf16.msra.mxu0 %v3267
  %3411 = vmatpush.bf16.msra.mxu0 %v3266
  %3412 = vmatmul.bf16.gmra.mxu0 %v2980
  %v3413 = vpop.f32.mrf.mxu0
  %v3414 = vadd.f32 %v3401, %v3413
  %v3415 = vpop.f32.mrf.mxu0
  %3416 = vdwg.mxu0
  %3417 = vmatpush.bf16.msra.mxu0 %v3281
  %3418 = vmatpush.bf16.msra.mxu0 %v3280
  %3419 = vmatpush.bf16.msra.mxu0 %v3279
  %3420 = vmatpush.bf16.msra.mxu0 %v3278
  %3421 = vmatpush.bf16.msra.mxu0 %v3277
  %3422 = vmatpush.bf16.msra.mxu0 %v3276
  %3423 = vmatpush.bf16.msra.mxu0 %v3275
  %3424 = vmatpush.bf16.msra.mxu0 %v3274
  %3425 = vmatmul.bf16.gmra.mxu0 %v2981
  %v3426 = vpop.f32.mrf.mxu0
  %v3427 = vadd.f32 %v3414, %v3426
  %v3428 = vpop.f32.mrf.mxu0
  %3429 = vdwg.mxu0
  %3430 = vmatpush.bf16.msra.mxu0 %v3289
  %3431 = vmatpush.bf16.msra.mxu0 %v3288
  %3432 = vmatpush.bf16.msra.mxu0 %v3287
  %3433 = vmatpush.bf16.msra.mxu0 %v3286
  %3434 = vmatpush.bf16.msra.mxu0 %v3285
  %3435 = vmatpush.bf16.msra.mxu0 %v3284
  %3436 = vmatpush.bf16.msra.mxu0 %v3283
  %3437 = vmatpush.bf16.msra.mxu0 %v3282
  %3438 = vmatmul.bf16.gmra.mxu0 %v2982
  %v3439 = vpop.f32.mrf.mxu0
  %v3440 = vadd.f32 %v3427, %v3439
  %v3441 = vpop.f32.mrf.mxu0
  %3442 = vdwg.mxu0
  %3443 = vmatpush.bf16.msra.mxu0 %v3297
  %3444 = vmatpush.bf16.msra.mxu0 %v3296
  %3445 = vmatpush.bf16.msra.mxu0 %v3295
  %3446 = vmatpush.bf16.msra.mxu0 %v3294
  %3447 = vmatpush.bf16.msra.mxu0 %v3293
  %3448 = vmatpush.bf16.msra.mxu0 %v3292
  %3449 = vmatpush.bf16.msra.mxu0 %v3291
  %3450 = vmatpush.bf16.msra.mxu0 %v3290
  %3451 = vmatmul.bf16.gmra.mxu0 %v2983
  %v3452 = vpop.f32.mrf.mxu0
  %v3453 = vadd.f32 %v3440, %v3452
  %v3454 = vpop.f32.mrf.mxu0
  %3455 = vdwg.mxu0
  %3456 = vmatpush.bf16.msra.mxu0 %v3305
  %3457 = vmatpush.bf16.msra.mxu0 %v3304
  %3458 = vmatpush.bf16.msra.mxu0 %v3303
  %3459 = vmatpush.bf16.msra.mxu0 %v3302
  %3460 = vmatpush.bf16.msra.mxu0 %v3301
  %3461 = vmatpush.bf16.msra.mxu0 %v3300
  %3462 = vmatpush.bf16.msra.mxu0 %v3299
  %3463 = vmatpush.bf16.msra.mxu0 %v3298
  %3464 = vmatmul.bf16.gmra.mxu0 %v2984
  %v3465 = vpop.f32.mrf.mxu0
  %v3466 = vadd.f32 %v3453, %v3465
  %v3467 = vpop.f32.mrf.mxu0
  %3468 = vdwg.mxu0
  %3469 = vmatpush.bf16.msra.mxu0 %v3313
  %3470 = vmatpush.bf16.msra.mxu0 %v3312
  %3471 = vmatpush.bf16.msra.mxu0 %v3311
  %3472 = vmatpush.bf16.msra.mxu0 %v3310
  %3473 = vmatpush.bf16.msra.mxu0 %v3309
  %3474 = vmatpush.bf16.msra.mxu0 %v3308
  %3475 = vmatpush.bf16.msra.mxu0 %v3307
  %3476 = vmatpush.bf16.msra.mxu0 %v3306
  %3477 = vmatmul.bf16.gmra.mxu0 %v2985
  %v3478 = vpop.f32.mrf.mxu0
  %v3479 = vadd.f32 %v3466, %v3478
  %v3480 = vpop.f32.mrf.mxu0
  %3481 = vdwg.mxu0
  %v3482 = vlaneseq
  %v3483 = vand.u32 %v3482, 127
  %vm3484 = vcmp.lt.s32.totalorder %v3483, 50
  %vm3485 = vcmp.lt.s32.totalorder %v3483, 52
  %v3486 = vmax.f32 %v3479, 0.0
  %v3487 = vmin.f32 %v3486, 1.0
  %vm3488 = vcmp.eq.s32.totalorder %v3483, 52
  %v3489 = vmax.f32 %v3479, -0.2
  %v3490 = vmin.f32 %v3489, 0.2
  %v3491 = vsel %vm3488, %v3486, %v3490
  %v3492 = vsel %vm3485, %v3487, %v3491
  %v3493 = vsel %vm3484, %v3479, %v3492
  %v3494 = vld [vmem:[%s1] sm:$0x3]
  %v3495 = vld [vmem:[%s6] sm:$0xff]
  %v3496 = vld [vmem:[%s6 + $0x8] sm:$0xff]
  %v3497 = vld [vmem:[%s6 + $0x10] sm:$0xff]
  %v3498 = vld [vmem:[%s6 + $0x18] sm:$0xff]
  %v3499 = vld [vmem:[%s6 + $0x20] sm:$0xff]
  %v3500 = vld [vmem:[%s6 + $0x28] sm:$0xff]
  %v3501 = vld [vmem:[%s6 + $0x30] sm:$0xff]
  %v3502 = vld [vmem:[%s6 + $0x38] sm:$0xff]
  %v3503 = vld [vmem:[%s6 + $0x40] sm:$0xff]
  %v3504 = vld [vmem:[%s6 + $0x48] sm:$0xff]
  %v3505 = vld [vmem:[%s6 + $0x50] sm:$0xff]
  %v3506 = vld [vmem:[%s6 + $0x58] sm:$0xff]
  %v3507 = vld [vmem:[%s6 + $0x60] sm:$0xff]
  %v3508 = vld [vmem:[%s6 + $0x68] sm:$0xff]
  %v3509 = vld [vmem:[%s6 + $0x70] sm:$0xff]
  %v3510 = vld [vmem:[%s6 + $0x78] sm:$0xff]
  %v3511 = vld [vmem:[%s6 + $0x80] sm:$0xff]
  %v3512 = vld [vmem:[%s6 + $0x88] sm:$0xff]
  %v3513 = vld [vmem:[%s6 + $0x90] sm:$0xff]
  %v3514 = vld [vmem:[%s6 + $0x98] sm:$0xff]
  %v3515 = vld [vmem:[%s6 + $0xa0] sm:$0xff]
  %v3516 = vld [vmem:[%s6 + $0xa8] sm:$0xff]
  %v3517 = vld [vmem:[%s6 + $0xb0] sm:$0xff]
  %v3518 = vld [vmem:[%s6 + $0xb8] sm:$0xff]
  %v3519 = vld [vmem:[%s6 + $0xc0] sm:$0xff]
  %v3520 = vld [vmem:[%s6 + $0xc8] sm:$0xff]
  %v3521 = vld [vmem:[%s6 + $0xd0] sm:$0xff]
  %v3522 = vld [vmem:[%s6 + $0xd8] sm:$0xff]
  %v3523 = vld [vmem:[%s6 + $0xe0] sm:$0xff]
  %v3524 = vld [vmem:[%s6 + $0xe8] sm:$0xff]
  %v3525 = vld [vmem:[%s6 + $0xf0] sm:$0xff]
  %v3526 = vld [vmem:[%s6 + $0xf8] sm:$0xff]
  %v3527 = vld [vmem:[%s6 + $0x100] sm:$0xff]
  %v3528 = vld [vmem:[%s6 + $0x108] sm:$0xff]
  %v3529 = vld [vmem:[%s6 + $0x110] sm:$0xff]
  %v3530 = vld [vmem:[%s6 + $0x118] sm:$0xff]
  %v3531 = vld [vmem:[%s6 + $0x120] sm:$0xff]
  %v3532 = vld [vmem:[%s6 + $0x128] sm:$0xff]
  %v3533 = vld [vmem:[%s6 + $0x130] sm:$0xff]
  %v3534 = vld [vmem:[%s6 + $0x138] sm:$0xff]
  %v3535 = vld [vmem:[%s6 + $0x140] sm:$0xff]
  %v3536 = vld [vmem:[%s6 + $0x148] sm:$0xff]
  %v3537 = vld [vmem:[%s6 + $0x150] sm:$0xff]
  %v3538 = vld [vmem:[%s6 + $0x158] sm:$0xff]
  %v3539 = vld [vmem:[%s6 + $0x160] sm:$0xff]
  %v3540 = vld [vmem:[%s6 + $0x168] sm:$0xff]
  %v3541 = vld [vmem:[%s6 + $0x170] sm:$0xff]
  %v3542 = vld [vmem:[%s6 + $0x178] sm:$0xff]
  %v3543 = vld [vmem:[%s6 + $0x180] sm:$0xff]
  %v3544 = vld [vmem:[%s6 + $0x188] sm:$0xff]
  %v3545 = vld [vmem:[%s6 + $0x190] sm:$0xff]
  %v3546 = vld [vmem:[%s6 + $0x198] sm:$0xff]
  %v3547 = vld [vmem:[%s6 + $0x1a0] sm:$0xff]
  %v3548 = vld [vmem:[%s6 + $0x1a8] sm:$0xff]
  %v3549 = vld [vmem:[%s6 + $0x1b0] sm:$0xff]
  %v3550 = vld [vmem:[%s6 + $0x1b8] sm:$0xff]
  %v3551 = vld [vmem:[%s6 + $0x1c0] sm:$0xff]
  %v3552 = vld [vmem:[%s6 + $0x1c8] sm:$0xff]
  %v3553 = vld [vmem:[%s6 + $0x1d0] sm:$0xff]
  %v3554 = vld [vmem:[%s6 + $0x1d8] sm:$0xff]
  %v3555 = vld [vmem:[%s6 + $0x1e0] sm:$0xff]
  %v3556 = vld [vmem:[%s6 + $0x1e8] sm:$0xff]
  %v3557 = vld [vmem:[%s6 + $0x1f0] sm:$0xff]
  %v3558 = vld [vmem:[%s6 + $0x1f8] sm:$0xff]
  %v3559 = vld [vmem:[%s6 + $0x200] sm:$0xff]
  %v3560 = vld [vmem:[%s6 + $0x208] sm:$0xff]
  %v3561 = vld [vmem:[%s6 + $0x210] sm:$0xff]
  %v3562 = vld [vmem:[%s6 + $0x218] sm:$0xff]
  %v3563 = vld [vmem:[%s6 + $0x220] sm:$0xff]
  %v3564 = vld [vmem:[%s6 + $0x228] sm:$0xff]
  %v3565 = vld [vmem:[%s6 + $0x230] sm:$0xff]
  %v3566 = vld [vmem:[%s6 + $0x238] sm:$0xff]
  %v3567 = vld [vmem:[%s6 + $0x240] sm:$0xff]
  %v3568 = vld [vmem:[%s6 + $0x248] sm:$0xff]
  %v3569 = vld [vmem:[%s6 + $0x250] sm:$0xff]
  %v3570 = vld [vmem:[%s6 + $0x258] sm:$0xff]
  %v3571 = vld [vmem:[%s6 + $0x260] sm:$0xff]
  %v3572 = vld [vmem:[%s6 + $0x268] sm:$0xff]
  %v3573 = vld [vmem:[%s6 + $0x270] sm:$0xff]
  %v3574 = vld [vmem:[%s6 + $0x278] sm:$0xff]
  %v3575 = vld [vmem:[%s6 + $0x280] sm:$0xff]
  %v3576 = vld [vmem:[%s6 + $0x288] sm:$0xff]
  %v3577 = vld [vmem:[%s6 + $0x290] sm:$0xff]
  %v3578 = vld [vmem:[%s6 + $0x298] sm:$0xff]
  %v3579 = vld [vmem:[%s6 + $0x2a0] sm:$0xff]
  %v3580 = vld [vmem:[%s6 + $0x2a8] sm:$0xff]
  %v3581 = vld [vmem:[%s6 + $0x2b0] sm:$0xff]
  %v3582 = vld [vmem:[%s6 + $0x2b8] sm:$0xff]
  %v3583 = vld [vmem:[%s6 + $0x2c0] sm:$0xff]
  %v3584 = vld [vmem:[%s6 + $0x2c8] sm:$0xff]
  %v3585 = vld [vmem:[%s6 + $0x2d0] sm:$0xff]
  %v3586 = vld [vmem:[%s6 + $0x2d8] sm:$0xff]
  %v3587 = vld [vmem:[%s6 + $0x2e0] sm:$0xff]
  %v3588 = vld [vmem:[%s6 + $0x2e8] sm:$0xff]
  %v3589 = vld [vmem:[%s6 + $0x2f0] sm:$0xff]
  %v3590 = vld [vmem:[%s6 + $0x2f8] sm:$0xff]
  %v3591 = vld [vmem:[%s6 + $0x300] sm:$0xff]
  %v3592 = vld [vmem:[%s6 + $0x308] sm:$0xff]
  %v3593 = vld [vmem:[%s6 + $0x310] sm:$0xff]
  %v3594 = vld [vmem:[%s6 + $0x318] sm:$0xff]
  %v3595 = vld [vmem:[%s6 + $0x320] sm:$0xff]
  %v3596 = vld [vmem:[%s6 + $0x328] sm:$0xff]
  %v3597 = vld [vmem:[%s6 + $0x330] sm:$0xff]
  %v3598 = vld [vmem:[%s6 + $0x338] sm:$0xff]
  %v3599 = vld [vmem:[%s6 + $0x340] sm:$0xff]
  %v3600 = vld [vmem:[%s6 + $0x348] sm:$0xff]
  %v3601 = vld [vmem:[%s6 + $0x350] sm:$0xff]
  %v3602 = vld [vmem:[%s6 + $0x358] sm:$0xff]
  %v3603 = vld [vmem:[%s6 + $0x360] sm:$0xff]
  %v3604 = vld [vmem:[%s6 + $0x368] sm:$0xff]
  %v3605 = vld [vmem:[%s6 + $0x370] sm:$0xff]
  %v3606 = vld [vmem:[%s6 + $0x378] sm:$0xff]
  %v3607 = vld [vmem:[%s6 + $0x380] sm:$0xff]
  %v3608 = vld [vmem:[%s6 + $0x388] sm:$0xff]
  %v3609 = vld [vmem:[%s6 + $0x390] sm:$0xff]
  %v3610 = vld [vmem:[%s6 + $0x398] sm:$0xff]
  %v3611 = vld [vmem:[%s6 + $0x3a0] sm:$0xff]
  %v3612 = vld [vmem:[%s6 + $0x3a8] sm:$0xff]
  %v3613 = vld [vmem:[%s6 + $0x3b0] sm:$0xff]
  %v3614 = vld [vmem:[%s6 + $0x3b8] sm:$0xff]
  %v3615 = vld [vmem:[%s6 + $0x3c0] sm:$0xff]
  %v3616 = vld [vmem:[%s6 + $0x3c8] sm:$0xff]
  %v3617 = vld [vmem:[%s6 + $0x3d0] sm:$0xff]
  %v3618 = vld [vmem:[%s6 + $0x3d8] sm:$0xff]
  %v3619 = vld [vmem:[%s6 + $0x3e0] sm:$0xff]
  %v3620 = vld [vmem:[%s6 + $0x3e8] sm:$0xff]
  %v3621 = vld [vmem:[%s6 + $0x3f0] sm:$0xff]
  %v3622 = vld [vmem:[%s6 + $0x3f8] sm:$0xff]
  %v3623 = vld [vmem:[%s6 + $0x400] sm:$0xff]
  %v3624 = vld [vmem:[%s6 + $0x408] sm:$0xff]
  %v3625 = vld [vmem:[%s6 + $0x410] sm:$0xff]
  %v3626 = vld [vmem:[%s6 + $0x418] sm:$0xff]
  %v3627 = vld [vmem:[%s6 + $0x420] sm:$0xff]
  %v3628 = vld [vmem:[%s6 + $0x428] sm:$0xff]
  %v3629 = vld [vmem:[%s6 + $0x430] sm:$0xff]
  %v3630 = vld [vmem:[%s6 + $0x438] sm:$0xff]
  %v3631 = vld [vmem:[%s6 + $0x440] sm:$0xff]
  %v3632 = vld [vmem:[%s6 + $0x448] sm:$0xff]
  %v3633 = vld [vmem:[%s6 + $0x450] sm:$0xff]
  %v3634 = vld [vmem:[%s6 + $0x458] sm:$0xff]
  %v3635 = vld [vmem:[%s6 + $0x460] sm:$0xff]
  %v3636 = vld [vmem:[%s6 + $0x468] sm:$0xff]
  %v3637 = vld [vmem:[%s6 + $0x470] sm:$0xff]
  %v3638 = vld [vmem:[%s6 + $0x478] sm:$0xff]
  %v3639 = vld [vmem:[%s7] sm:$0xff]
  %v3640 = vld [vmem:[%s7 + $0x8] sm:$0xf]
  %v3643 = vperm.slane %v3639, 0
  %v3644 = vperm.slane %v3639, 1
  %v3645 = vperm.slane %v3639, 2
  %v3646 = vperm.slane %v3639, 3
  %v3647 = vperm.slane %v3639, 4
  %v3648 = vperm.slane %v3639, 5
  %v3649 = vperm.slane %v3639, 6
  %v3650 = vperm.slane %v3639, 7
  %v3651 = vperm.slane %v3640, 0
  %v3652 = vperm.slane %v3640, 1
  %v3653 = vperm.slane %v3640, 2
  %v3654 = vperm.slane %v3640, 3
  %3668 = vst [vmem:[#allocation1] ss:$9 sm:$0xff] %v3494
  %v3669 = vld [vmem:[#allocation1] sm:$0xff]
  %v3670 = vld [vmem:[#allocation1 + $0x9] sm:$0xff]
  %v3816 = vunpack.c.l.b16 %v3495
  %v3817 = vunpack.c.h.b16 %v3495
  %v3818 = vunpack.c.l.b16 %v3496
  %v3819 = vunpack.c.h.b16 %v3496
  %v3820 = vunpack.c.l.b16 %v3497
  %v3821 = vunpack.c.h.b16 %v3497
  %v3822 = vunpack.c.l.b16 %v3498
  %v3823 = vunpack.c.h.b16 %v3498
  %v3824 = vunpack.c.l.b16 %v3499
  %v3825 = vunpack.c.h.b16 %v3499
  %v3826 = vunpack.c.l.b16 %v3500
  %v3827 = vunpack.c.h.b16 %v3500
  %v3828 = vunpack.c.l.b16 %v3501
  %v3829 = vunpack.c.h.b16 %v3501
  %v3830 = vunpack.c.l.b16 %v3502
  %v3831 = vunpack.c.h.b16 %v3502
  %v3832 = vunpack.c.l.b16 %v3503
  %v3833 = vunpack.c.h.b16 %v3503
  %v3834 = vunpack.c.l.b16 %v3504
  %v3835 = vunpack.c.h.b16 %v3504
  %v3836 = vunpack.c.l.b16 %v3505
  %v3837 = vunpack.c.h.b16 %v3505
  %v3838 = vunpack.c.l.b16 %v3506
  %v3839 = vunpack.c.h.b16 %v3506
  %v3840 = vunpack.c.l.b16 %v3507
  %v3841 = vunpack.c.h.b16 %v3507
  %v3842 = vunpack.c.l.b16 %v3508
  %v3843 = vunpack.c.h.b16 %v3508
  %v3844 = vunpack.c.l.b16 %v3509
  %v3845 = vunpack.c.h.b16 %v3509
  %v3846 = vunpack.c.l.b16 %v3510
  %v3847 = vunpack.c.h.b16 %v3510
  %v3848 = vunpack.c.l.b16 %v3511
  %v3849 = vunpack.c.h.b16 %v3511
  %v3850 = vunpack.c.l.b16 %v3512
  %v3851 = vunpack.c.h.b16 %v3512
  %v3852 = vunpack.c.l.b16 %v3513
  %v3853 = vunpack.c.h.b16 %v3513
  %v3854 = vunpack.c.l.b16 %v3514
  %v3855 = vunpack.c.h.b16 %v3514
  %v3856 = vunpack.c.l.b16 %v3515
  %v3857 = vunpack.c.h.b16 %v3515
  %v3858 = vunpack.c.l.b16 %v3516
  %v3859 = vunpack.c.h.b16 %v3516
  %v3860 = vunpack.c.l.b16 %v3517
  %v3861 = vunpack.c.h.b16 %v3517
  %v3862 = vunpack.c.l.b16 %v3518
  %v3863 = vunpack.c.h.b16 %v3518
  %v3864 = vunpack.c.l.b16 %v3519
  %v3865 = vunpack.c.h.b16 %v3519
  %v3866 = vunpack.c.l.b16 %v3520
  %v3867 = vunpack.c.h.b16 %v3520
  %v3868 = vunpack.c.l.b16 %v3521
  %v3869 = vunpack.c.h.b16 %v3521
  %v3870 = vunpack.c.l.b16 %v3522
  %v3871 = vunpack.c.h.b16 %v3522
  %v3872 = vunpack.c.l.b16 %v3523
  %v3873 = vunpack.c.h.b16 %v3523
  %v3874 = vunpack.c.l.b16 %v3524
  %v3875 = vunpack.c.h.b16 %v3524
  %v3876 = vunpack.c.l.b16 %v3525
  %v3877 = vunpack.c.h.b16 %v3525
  %v3878 = vunpack.c.l.b16 %v3526
  %v3879 = vunpack.c.h.b16 %v3526
  %v3880 = vunpack.c.l.b16 %v3527
  %v3881 = vunpack.c.h.b16 %v3527
  %v3882 = vunpack.c.l.b16 %v3528
  %v3883 = vunpack.c.h.b16 %v3528
  %v3884 = vunpack.c.l.b16 %v3529
  %v3885 = vunpack.c.h.b16 %v3529
  %v3886 = vunpack.c.l.b16 %v3530
  %v3887 = vunpack.c.h.b16 %v3530
  %v3888 = vunpack.c.l.b16 %v3531
  %v3889 = vunpack.c.h.b16 %v3531
  %v3890 = vunpack.c.l.b16 %v3532
  %v3891 = vunpack.c.h.b16 %v3532
  %v3892 = vunpack.c.l.b16 %v3533
  %v3893 = vunpack.c.h.b16 %v3533
  %v3894 = vunpack.c.l.b16 %v3534
  %v3895 = vunpack.c.h.b16 %v3534
  %v3896 = vunpack.c.l.b16 %v3535
  %v3897 = vunpack.c.h.b16 %v3535
  %v3898 = vunpack.c.l.b16 %v3536
  %v3899 = vunpack.c.h.b16 %v3536
  %v3900 = vunpack.c.l.b16 %v3537
  %v3901 = vunpack.c.h.b16 %v3537
  %v3902 = vunpack.c.l.b16 %v3538
  %v3903 = vunpack.c.h.b16 %v3538
  %v3904 = vunpack.c.l.b16 %v3539
  %v3905 = vunpack.c.h.b16 %v3539
  %v3906 = vunpack.c.l.b16 %v3540
  %v3907 = vunpack.c.h.b16 %v3540
  %v3908 = vunpack.c.l.b16 %v3541
  %v3909 = vunpack.c.h.b16 %v3541
  %v3910 = vunpack.c.l.b16 %v3542
  %v3911 = vunpack.c.h.b16 %v3542
  %v3912 = vunpack.c.l.b16 %v3543
  %v3913 = vunpack.c.h.b16 %v3543
  %v3914 = vunpack.c.l.b16 %v3544
  %v3915 = vunpack.c.h.b16 %v3544
  %v3916 = vunpack.c.l.b16 %v3545
  %v3917 = vunpack.c.h.b16 %v3545
  %v3918 = vunpack.c.l.b16 %v3546
  %v3919 = vunpack.c.h.b16 %v3546
  %v3920 = vunpack.c.l.b16 %v3547
  %v3921 = vunpack.c.h.b16 %v3547
  %v3922 = vunpack.c.l.b16 %v3548
  %v3923 = vunpack.c.h.b16 %v3548
  %v3924 = vunpack.c.l.b16 %v3549
  %v3925 = vunpack.c.h.b16 %v3549
  %v3926 = vunpack.c.l.b16 %v3550
  %v3927 = vunpack.c.h.b16 %v3550
  %v3928 = vunpack.c.l.b16 %v3551
  %v3929 = vunpack.c.h.b16 %v3551
  %v3930 = vunpack.c.l.b16 %v3552
  %v3931 = vunpack.c.h.b16 %v3552
  %v3932 = vunpack.c.l.b16 %v3553
  %v3933 = vunpack.c.h.b16 %v3553
  %v3934 = vunpack.c.l.b16 %v3554
  %v3935 = vunpack.c.h.b16 %v3554
  %v3936 = vunpack.c.l.b16 %v3555
  %v3937 = vunpack.c.h.b16 %v3555
  %v3938 = vunpack.c.l.b16 %v3556
  %v3939 = vunpack.c.h.b16 %v3556
  %v3940 = vunpack.c.l.b16 %v3557
  %v3941 = vunpack.c.h.b16 %v3557
  %v3942 = vunpack.c.l.b16 %v3558
  %v3943 = vunpack.c.h.b16 %v3558
  %v3944 = vunpack.c.l.b16 %v3559
  %v3945 = vunpack.c.h.b16 %v3559
  %v3946 = vunpack.c.l.b16 %v3560
  %v3947 = vunpack.c.h.b16 %v3560
  %v3948 = vunpack.c.l.b16 %v3561
  %v3949 = vunpack.c.h.b16 %v3561
  %v3950 = vunpack.c.l.b16 %v3562
  %v3951 = vunpack.c.h.b16 %v3562
  %v3952 = vunpack.c.l.b16 %v3563
  %v3953 = vunpack.c.h.b16 %v3563
  %v3954 = vunpack.c.l.b16 %v3564
  %v3955 = vunpack.c.h.b16 %v3564
  %v3956 = vunpack.c.l.b16 %v3565
  %v3957 = vunpack.c.h.b16 %v3565
  %v3958 = vunpack.c.l.b16 %v3566
  %v3959 = vunpack.c.h.b16 %v3566
  %v3960 = vunpack.c.l.b16 %v3567
  %v3961 = vunpack.c.h.b16 %v3567
  %v3962 = vunpack.c.l.b16 %v3568
  %v3963 = vunpack.c.h.b16 %v3568
  %v3964 = vunpack.c.l.b16 %v3569
  %v3965 = vunpack.c.h.b16 %v3569
  %v3966 = vunpack.c.l.b16 %v3570
  %v3967 = vunpack.c.h.b16 %v3570
  %v3968 = vunpack.c.l.b16 %v3571
  %v3969 = vunpack.c.h.b16 %v3571
  %v3970 = vunpack.c.l.b16 %v3572
  %v3971 = vunpack.c.h.b16 %v3572
  %v3972 = vunpack.c.l.b16 %v3573
  %v3973 = vunpack.c.h.b16 %v3573
  %v3974 = vunpack.c.l.b16 %v3574
  %v3975 = vunpack.c.h.b16 %v3574
  %v3976 = vunpack.c.l.b16 %v3575
  %v3977 = vunpack.c.h.b16 %v3575
  %v3978 = vunpack.c.l.b16 %v3576
  %v3979 = vunpack.c.h.b16 %v3576
  %v3980 = vunpack.c.l.b16 %v3577
  %v3981 = vunpack.c.h.b16 %v3577
  %v3982 = vunpack.c.l.b16 %v3578
  %v3983 = vunpack.c.h.b16 %v3578
  %v3984 = vunpack.c.l.b16 %v3579
  %v3985 = vunpack.c.h.b16 %v3579
  %v3986 = vunpack.c.l.b16 %v3580
  %v3987 = vunpack.c.h.b16 %v3580
  %v3988 = vunpack.c.l.b16 %v3581
  %v3989 = vunpack.c.h.b16 %v3581
  %v3990 = vunpack.c.l.b16 %v3582
  %v3991 = vunpack.c.h.b16 %v3582
  %v3992 = vunpack.c.l.b16 %v3583
  %v3993 = vunpack.c.h.b16 %v3583
  %v3994 = vunpack.c.l.b16 %v3584
  %v3995 = vunpack.c.h.b16 %v3584
  %v3996 = vunpack.c.l.b16 %v3585
  %v3997 = vunpack.c.h.b16 %v3585
  %v3998 = vunpack.c.l.b16 %v3586
  %v3999 = vunpack.c.h.b16 %v3586
  %v4000 = vunpack.c.l.b16 %v3587
  %v4001 = vunpack.c.h.b16 %v3587
  %v4002 = vunpack.c.l.b16 %v3588
  %v4003 = vunpack.c.h.b16 %v3588
  %v4004 = vunpack.c.l.b16 %v3589
  %v4005 = vunpack.c.h.b16 %v3589
  %v4006 = vunpack.c.l.b16 %v3590
  %v4007 = vunpack.c.h.b16 %v3590
  %v4008 = vunpack.c.l.b16 %v3591
  %v4009 = vunpack.c.h.b16 %v3591
  %v4010 = vunpack.c.l.b16 %v3592
  %v4011 = vunpack.c.h.b16 %v3592
  %v4012 = vunpack.c.l.b16 %v3593
  %v4013 = vunpack.c.h.b16 %v3593
  %v4014 = vunpack.c.l.b16 %v3594
  %v4015 = vunpack.c.h.b16 %v3594
  %v4016 = vunpack.c.l.b16 %v3595
  %v4017 = vunpack.c.h.b16 %v3595
  %v4018 = vunpack.c.l.b16 %v3596
  %v4019 = vunpack.c.h.b16 %v3596
  %v4020 = vunpack.c.l.b16 %v3597
  %v4021 = vunpack.c.h.b16 %v3597
  %v4022 = vunpack.c.l.b16 %v3598
  %v4023 = vunpack.c.h.b16 %v3598
  %v4024 = vunpack.c.l.b16 %v3599
  %v4025 = vunpack.c.h.b16 %v3599
  %v4026 = vunpack.c.l.b16 %v3600
  %v4027 = vunpack.c.h.b16 %v3600
  %v4028 = vunpack.c.l.b16 %v3601
  %v4029 = vunpack.c.h.b16 %v3601
  %v4030 = vunpack.c.l.b16 %v3602
  %v4031 = vunpack.c.h.b16 %v3602
  %v4032 = vunpack.c.l.b16 %v3603
  %v4033 = vunpack.c.h.b16 %v3603
  %v4034 = vunpack.c.l.b16 %v3604
  %v4035 = vunpack.c.h.b16 %v3604
  %v4036 = vunpack.c.l.b16 %v3605
  %v4037 = vunpack.c.h.b16 %v3605
  %v4038 = vunpack.c.l.b16 %v3606
  %v4039 = vunpack.c.h.b16 %v3606
  %v4040 = vunpack.c.l.b16 %v3607
  %v4041 = vunpack.c.h.b16 %v3607
  %v4042 = vunpack.c.l.b16 %v3608
  %v4043 = vunpack.c.h.b16 %v3608
  %v4044 = vunpack.c.l.b16 %v3609
  %v4045 = vunpack.c.h.b16 %v3609
  %v4046 = vunpack.c.l.b16 %v3610
  %v4047 = vunpack.c.h.b16 %v3610
  %v4048 = vunpack.c.l.b16 %v3611
  %v4049 = vunpack.c.h.b16 %v3611
  %v4050 = vunpack.c.l.b16 %v3612
  %v4051 = vunpack.c.h.b16 %v3612
  %v4052 = vunpack.c.l.b16 %v3613
  %v4053 = vunpack.c.h.b16 %v3613
  %v4054 = vunpack.c.l.b16 %v3614
  %v4055 = vunpack.c.h.b16 %v3614
  %v4056 = vunpack.c.l.b16 %v3615
  %v4057 = vunpack.c.h.b16 %v3615
  %v4058 = vunpack.c.l.b16 %v3616
  %v4059 = vunpack.c.h.b16 %v3616
  %v4060 = vunpack.c.l.b16 %v3617
  %v4061 = vunpack.c.h.b16 %v3617
  %v4062 = vunpack.c.l.b16 %v3618
  %v4063 = vunpack.c.h.b16 %v3618
  %v4064 = vunpack.c.l.b16 %v3619
  %v4065 = vunpack.c.h.b16 %v3619
  %v4066 = vunpack.c.l.b16 %v3620
  %v4067 = vunpack.c.h.b16 %v3620
  %v4068 = vunpack.c.l.b16 %v3621
  %v4069 = vunpack.c.h.b16 %v3621
  %v4070 = vunpack.c.l.b16 %v3622
  %v4071 = vunpack.c.h.b16 %v3622
  %v4072 = vunpack.c.l.b16 %v3623
  %v4073 = vunpack.c.h.b16 %v3623
  %v4074 = vunpack.c.l.b16 %v3624
  %v4075 = vunpack.c.h.b16 %v3624
  %v4076 = vunpack.c.l.b16 %v3625
  %v4077 = vunpack.c.h.b16 %v3625
  %v4078 = vunpack.c.l.b16 %v3626
  %v4079 = vunpack.c.h.b16 %v3626
  %v4080 = vunpack.c.l.b16 %v3627
  %v4081 = vunpack.c.h.b16 %v3627
  %v4082 = vunpack.c.l.b16 %v3628
  %v4083 = vunpack.c.h.b16 %v3628
  %v4084 = vunpack.c.l.b16 %v3629
  %v4085 = vunpack.c.h.b16 %v3629
  %v4086 = vunpack.c.l.b16 %v3630
  %v4087 = vunpack.c.h.b16 %v3630
  %v4088 = vunpack.c.l.b16 %v3631
  %v4089 = vunpack.c.h.b16 %v3631
  %v4090 = vunpack.c.l.b16 %v3632
  %v4091 = vunpack.c.h.b16 %v3632
  %v4092 = vunpack.c.l.b16 %v3633
  %v4093 = vunpack.c.h.b16 %v3633
  %v4094 = vunpack.c.l.b16 %v3634
  %v4095 = vunpack.c.h.b16 %v3634
  %v4096 = vunpack.c.l.b16 %v3635
  %v4097 = vunpack.c.h.b16 %v3635
  %v4098 = vunpack.c.l.b16 %v3636
  %v4099 = vunpack.c.h.b16 %v3636
  %v4100 = vunpack.c.l.b16 %v3637
  %v4101 = vunpack.c.h.b16 %v3637
  %v4102 = vunpack.c.l.b16 %v3638
  %v4103 = vunpack.c.h.b16 %v3638
  %v4104 = vpack.c.b16 %v3828, %v3816
  %v4105 = vpack.c.b16 %v3829, %v3817
  %v4106 = vpack.c.b16 %v3830, %v3818
  %v4107 = vpack.c.b16 %v3831, %v3819
  %v4108 = vpack.c.b16 %v3832, %v3820
  %v4109 = vpack.c.b16 %v3833, %v3821
  %v4110 = vpack.c.b16 %v3834, %v3822
  %v4111 = vpack.c.b16 %v3835, %v3823
  %v4112 = vpack.c.b16 %v3836, %v3824
  %v4113 = vpack.c.b16 %v3837, %v3825
  %v4114 = vpack.c.b16 %v3838, %v3826
  %v4115 = vpack.c.b16 %v3839, %v3827
  %v4116 = vpack.c.b16 %v3852, %v3840
  %v4117 = vpack.c.b16 %v3853, %v3841
  %v4118 = vpack.c.b16 %v3854, %v3842
  %v4119 = vpack.c.b16 %v3855, %v3843
  %v4120 = vpack.c.b16 %v3856, %v3844
  %v4121 = vpack.c.b16 %v3857, %v3845
  %v4122 = vpack.c.b16 %v3858, %v3846
  %v4123 = vpack.c.b16 %v3859, %v3847
  %v4124 = vpack.c.b16 %v3860, %v3848
  %v4125 = vpack.c.b16 %v3861, %v3849
  %v4126 = vpack.c.b16 %v3862, %v3850
  %v4127 = vpack.c.b16 %v3863, %v3851
  %v4128 = vpack.c.b16 %v3876, %v3864
  %v4129 = vpack.c.b16 %v3877, %v3865
  %v4130 = vpack.c.b16 %v3878, %v3866
  %v4131 = vpack.c.b16 %v3879, %v3867
  %v4132 = vpack.c.b16 %v3880, %v3868
  %v4133 = vpack.c.b16 %v3881, %v3869
  %v4134 = vpack.c.b16 %v3882, %v3870
  %v4135 = vpack.c.b16 %v3883, %v3871
  %v4136 = vpack.c.b16 %v3884, %v3872
  %v4137 = vpack.c.b16 %v3885, %v3873
  %v4138 = vpack.c.b16 %v3886, %v3874
  %v4139 = vpack.c.b16 %v3887, %v3875
  %v4140 = vpack.c.b16 %v3900, %v3888
  %v4141 = vpack.c.b16 %v3901, %v3889
  %v4142 = vpack.c.b16 %v3902, %v3890
  %v4143 = vpack.c.b16 %v3903, %v3891
  %v4144 = vpack.c.b16 %v3904, %v3892
  %v4145 = vpack.c.b16 %v3905, %v3893
  %v4146 = vpack.c.b16 %v3906, %v3894
  %v4147 = vpack.c.b16 %v3907, %v3895
  %v4148 = vpack.c.b16 %v3908, %v3896
  %v4149 = vpack.c.b16 %v3909, %v3897
  %v4150 = vpack.c.b16 %v3910, %v3898
  %v4151 = vpack.c.b16 %v3911, %v3899
  %v4152 = vpack.c.b16 %v3924, %v3912
  %v4153 = vpack.c.b16 %v3925, %v3913
  %v4154 = vpack.c.b16 %v3926, %v3914
  %v4155 = vpack.c.b16 %v3927, %v3915
  %v4156 = vpack.c.b16 %v3928, %v3916
  %v4157 = vpack.c.b16 %v3929, %v3917
  %v4158 = vpack.c.b16 %v3930, %v3918
  %v4159 = vpack.c.b16 %v3931, %v3919
  %v4160 = vpack.c.b16 %v3932, %v3920
  %v4161 = vpack.c.b16 %v3933, %v3921
  %v4162 = vpack.c.b16 %v3934, %v3922
  %v4163 = vpack.c.b16 %v3935, %v3923
  %v4164 = vpack.c.b16 %v3948, %v3936
  %v4165 = vpack.c.b16 %v3949, %v3937
  %v4166 = vpack.c.b16 %v3950, %v3938
  %v4167 = vpack.c.b16 %v3951, %v3939
  %v4168 = vpack.c.b16 %v3952, %v3940
  %v4169 = vpack.c.b16 %v3953, %v3941
  %v4170 = vpack.c.b16 %v3954, %v3942
  %v4171 = vpack.c.b16 %v3955, %v3943
  %v4172 = vpack.c.b16 %v3956, %v3944
  %v4173 = vpack.c.b16 %v3957, %v3945
  %v4174 = vpack.c.b16 %v3958, %v3946
  %v4175 = vpack.c.b16 %v3959, %v3947
  %v4176 = vpack.c.b16 %v3972, %v3960
  %v4177 = vpack.c.b16 %v3973, %v3961
  %v4178 = vpack.c.b16 %v3974, %v3962
  %v4179 = vpack.c.b16 %v3975, %v3963
  %v4180 = vpack.c.b16 %v3976, %v3964
  %v4181 = vpack.c.b16 %v3977, %v3965
  %v4182 = vpack.c.b16 %v3978, %v3966
  %v4183 = vpack.c.b16 %v3979, %v3967
  %v4184 = vpack.c.b16 %v3980, %v3968
  %v4185 = vpack.c.b16 %v3981, %v3969
  %v4186 = vpack.c.b16 %v3982, %v3970
  %v4187 = vpack.c.b16 %v3983, %v3971
  %v4188 = vpack.c.b16 %v3996, %v3984
  %v4189 = vpack.c.b16 %v3997, %v3985
  %v4190 = vpack.c.b16 %v3998, %v3986
  %v4191 = vpack.c.b16 %v3999, %v3987
  %v4192 = vpack.c.b16 %v4000, %v3988
  %v4193 = vpack.c.b16 %v4001, %v3989
  %v4194 = vpack.c.b16 %v4002, %v3990
  %v4195 = vpack.c.b16 %v4003, %v3991
  %v4196 = vpack.c.b16 %v4004, %v3992
  %v4197 = vpack.c.b16 %v4005, %v3993
  %v4198 = vpack.c.b16 %v4006, %v3994
  %v4199 = vpack.c.b16 %v4007, %v3995
  %v4200 = vpack.c.b16 %v4020, %v4008
  %v4201 = vpack.c.b16 %v4021, %v4009
  %v4202 = vpack.c.b16 %v4022, %v4010
  %v4203 = vpack.c.b16 %v4023, %v4011
  %v4204 = vpack.c.b16 %v4024, %v4012
  %v4205 = vpack.c.b16 %v4025, %v4013
  %v4206 = vpack.c.b16 %v4026, %v4014
  %v4207 = vpack.c.b16 %v4027, %v4015
  %v4208 = vpack.c.b16 %v4028, %v4016
  %v4209 = vpack.c.b16 %v4029, %v4017
  %v4210 = vpack.c.b16 %v4030, %v4018
  %v4211 = vpack.c.b16 %v4031, %v4019
  %v4212 = vpack.c.b16 %v4044, %v4032
  %v4213 = vpack.c.b16 %v4045, %v4033
  %v4214 = vpack.c.b16 %v4046, %v4034
  %v4215 = vpack.c.b16 %v4047, %v4035
  %v4216 = vpack.c.b16 %v4048, %v4036
  %v4217 = vpack.c.b16 %v4049, %v4037
  %v4218 = vpack.c.b16 %v4050, %v4038
  %v4219 = vpack.c.b16 %v4051, %v4039
  %v4220 = vpack.c.b16 %v4052, %v4040
  %v4221 = vpack.c.b16 %v4053, %v4041
  %v4222 = vpack.c.b16 %v4054, %v4042
  %v4223 = vpack.c.b16 %v4055, %v4043
  %v4224 = vpack.c.b16 %v4068, %v4056
  %v4225 = vpack.c.b16 %v4069, %v4057
  %v4226 = vpack.c.b16 %v4070, %v4058
  %v4227 = vpack.c.b16 %v4071, %v4059
  %v4228 = vpack.c.b16 %v4072, %v4060
  %v4229 = vpack.c.b16 %v4073, %v4061
  %v4230 = vpack.c.b16 %v4074, %v4062
  %v4231 = vpack.c.b16 %v4075, %v4063
  %v4232 = vpack.c.b16 %v4076, %v4064
  %v4233 = vpack.c.b16 %v4077, %v4065
  %v4234 = vpack.c.b16 %v4078, %v4066
  %v4235 = vpack.c.b16 %v4079, %v4067
  %v4236 = vpack.c.b16 %v4092, %v4080
  %v4237 = vpack.c.b16 %v4093, %v4081
  %v4238 = vpack.c.b16 %v4094, %v4082
  %v4239 = vpack.c.b16 %v4095, %v4083
  %v4240 = vpack.c.b16 %v4096, %v4084
  %v4241 = vpack.c.b16 %v4097, %v4085
  %v4242 = vpack.c.b16 %v4098, %v4086
  %v4243 = vpack.c.b16 %v4099, %v4087
  %v4244 = vpack.c.b16 %v4100, %v4088
  %v4245 = vpack.c.b16 %v4101, %v4089
  %v4246 = vpack.c.b16 %v4102, %v4090
  %v4247 = vpack.c.b16 %v4103, %v4091
  %vm4392 = vcmask 523264
  %v4393 = vsel %vm4392, %v3670, 0
  %4395 = vmatpush.bf16.msra.mxu0 %v4188
  %4396 = vmatpush.bf16.msra.mxu0 %v4176
  %4397 = vmatpush.bf16.msra.mxu0 %v4164
  %4398 = vmatpush.bf16.msra.mxu0 %v4152
  %4399 = vmatpush.bf16.msra.mxu0 %v4140
  %4400 = vmatpush.bf16.msra.mxu0 %v4128
  %4401 = vmatpush.bf16.msra.mxu0 %v4116
  %4402 = vmatpush.bf16.msra.mxu0 %v4104
  %4403 = vmatmul.bf16.gmra.mxu0 %v3669
  %v4404 = vpop.f32.mrf.mxu0
  %v4405 = vadd.f32 %v3643, %v4404
  %v4406 = vpop.f32.mrf.mxu0
  %4407 = vdwg.mxu0
  %4408 = vmatpush.bf16.msra.mxu0 0
  %4409 = vmatpush.bf16.msra.mxu0 0
  %4410 = vmatpush.bf16.msra.mxu0 0
  %4411 = vmatpush.bf16.msra.mxu0 0
  %4412 = vmatpush.bf16.msra.mxu0 %v4236
  %4413 = vmatpush.bf16.msra.mxu0 %v4224
  %4414 = vmatpush.bf16.msra.mxu0 %v4212
  %4415 = vmatpush.bf16.msra.mxu0 %v4200
  %4416 = vmatmul.bf16.gmra.mxu0 %v4393
  %v4417 = vpop.f32.mrf.mxu0
  %v4418 = vadd.f32 %v4405, %v4417
  %v4419 = vpop.f32.mrf.mxu0
  %4420 = vdwg.mxu0
  %4421 = vmatpush.bf16.msra.mxu0 %v4189
  %4422 = vmatpush.bf16.msra.mxu0 %v4177
  %4423 = vmatpush.bf16.msra.mxu0 %v4165
  %4424 = vmatpush.bf16.msra.mxu0 %v4153
  %4425 = vmatpush.bf16.msra.mxu0 %v4141
  %4426 = vmatpush.bf16.msra.mxu0 %v4129
  %4427 = vmatpush.bf16.msra.mxu0 %v4117
  %4428 = vmatpush.bf16.msra.mxu0 %v4105
  %4429 = vmatmul.bf16.gmra.mxu0 %v3669
  %v4430 = vpop.f32.mrf.mxu0
  %v4431 = vadd.f32 %v3644, %v4430
  %v4432 = vpop.f32.mrf.mxu0
  %4433 = vdwg.mxu0
  %4434 = vmatpush.bf16.msra.mxu0 0
  %4435 = vmatpush.bf16.msra.mxu0 0
  %4436 = vmatpush.bf16.msra.mxu0 0
  %4437 = vmatpush.bf16.msra.mxu0 0
  %4438 = vmatpush.bf16.msra.mxu0 %v4237
  %4439 = vmatpush.bf16.msra.mxu0 %v4225
  %4440 = vmatpush.bf16.msra.mxu0 %v4213
  %4441 = vmatpush.bf16.msra.mxu0 %v4201
  %4442 = vmatmul.bf16.gmra.mxu0 %v4393
  %v4443 = vpop.f32.mrf.mxu0
  %v4444 = vadd.f32 %v4431, %v4443
  %v4445 = vpop.f32.mrf.mxu0
  %4446 = vdwg.mxu0
  %4447 = vmatpush.bf16.msra.mxu0 %v4190
  %4448 = vmatpush.bf16.msra.mxu0 %v4178
  %4449 = vmatpush.bf16.msra.mxu0 %v4166
  %4450 = vmatpush.bf16.msra.mxu0 %v4154
  %4451 = vmatpush.bf16.msra.mxu0 %v4142
  %4452 = vmatpush.bf16.msra.mxu0 %v4130
  %4453 = vmatpush.bf16.msra.mxu0 %v4118
  %4454 = vmatpush.bf16.msra.mxu0 %v4106
  %4455 = vmatmul.bf16.gmra.mxu0 %v3669
  %v4456 = vpop.f32.mrf.mxu0
  %v4457 = vadd.f32 %v3645, %v4456
  %v4458 = vpop.f32.mrf.mxu0
  %4459 = vdwg.mxu0
  %4460 = vmatpush.bf16.msra.mxu0 0
  %4461 = vmatpush.bf16.msra.mxu0 0
  %4462 = vmatpush.bf16.msra.mxu0 0
  %4463 = vmatpush.bf16.msra.mxu0 0
  %4464 = vmatpush.bf16.msra.mxu0 %v4238
  %4465 = vmatpush.bf16.msra.mxu0 %v4226
  %4466 = vmatpush.bf16.msra.mxu0 %v4214
  %4467 = vmatpush.bf16.msra.mxu0 %v4202
  %4468 = vmatmul.bf16.gmra.mxu0 %v4393
  %v4469 = vpop.f32.mrf.mxu0
  %v4470 = vadd.f32 %v4457, %v4469
  %v4471 = vpop.f32.mrf.mxu0
  %4472 = vdwg.mxu0
  %4473 = vmatpush.bf16.msra.mxu0 %v4191
  %4474 = vmatpush.bf16.msra.mxu0 %v4179
  %4475 = vmatpush.bf16.msra.mxu0 %v4167
  %4476 = vmatpush.bf16.msra.mxu0 %v4155
  %4477 = vmatpush.bf16.msra.mxu0 %v4143
  %4478 = vmatpush.bf16.msra.mxu0 %v4131
  %4479 = vmatpush.bf16.msra.mxu0 %v4119
  %4480 = vmatpush.bf16.msra.mxu0 %v4107
  %4481 = vmatmul.bf16.gmra.mxu0 %v3669
  %v4482 = vpop.f32.mrf.mxu0
  %v4483 = vadd.f32 %v3646, %v4482
  %v4484 = vpop.f32.mrf.mxu0
  %4485 = vdwg.mxu0
  %4486 = vmatpush.bf16.msra.mxu0 0
  %4487 = vmatpush.bf16.msra.mxu0 0
  %4488 = vmatpush.bf16.msra.mxu0 0
  %4489 = vmatpush.bf16.msra.mxu0 0
  %4490 = vmatpush.bf16.msra.mxu0 %v4239
  %4491 = vmatpush.bf16.msra.mxu0 %v4227
  %4492 = vmatpush.bf16.msra.mxu0 %v4215
  %4493 = vmatpush.bf16.msra.mxu0 %v4203
  %4494 = vmatmul.bf16.gmra.mxu0 %v4393
  %v4495 = vpop.f32.mrf.mxu0
  %v4496 = vadd.f32 %v4483, %v4495
  %v4497 = vpop.f32.mrf.mxu0
  %4498 = vdwg.mxu0
  %4499 = vmatpush.bf16.msra.mxu0 %v4192
  %4500 = vmatpush.bf16.msra.mxu0 %v4180
  %4501 = vmatpush.bf16.msra.mxu0 %v4168
  %4502 = vmatpush.bf16.msra.mxu0 %v4156
  %4503 = vmatpush.bf16.msra.mxu0 %v4144
  %4504 = vmatpush.bf16.msra.mxu0 %v4132
  %4505 = vmatpush.bf16.msra.mxu0 %v4120
  %4506 = vmatpush.bf16.msra.mxu0 %v4108
  %4507 = vmatmul.bf16.gmra.mxu0 %v3669
  %v4508 = vpop.f32.mrf.mxu0
  %v4509 = vadd.f32 %v3647, %v4508
  %v4510 = vpop.f32.mrf.mxu0
  %4511 = vdwg.mxu0
  %4512 = vmatpush.bf16.msra.mxu0 0
  %4513 = vmatpush.bf16.msra.mxu0 0
  %4514 = vmatpush.bf16.msra.mxu0 0
  %4515 = vmatpush.bf16.msra.mxu0 0
  %4516 = vmatpush.bf16.msra.mxu0 %v4240
  %4517 = vmatpush.bf16.msra.mxu0 %v4228
  %4518 = vmatpush.bf16.msra.mxu0 %v4216
  %4519 = vmatpush.bf16.msra.mxu0 %v4204
  %4520 = vmatmul.bf16.gmra.mxu0 %v4393
  %v4521 = vpop.f32.mrf.mxu0
  %v4522 = vadd.f32 %v4509, %v4521
  %v4523 = vpop.f32.mrf.mxu0
  %4524 = vdwg.mxu0
  %4525 = vmatpush.bf16.msra.mxu0 %v4193
  %4526 = vmatpush.bf16.msra.mxu0 %v4181
  %4527 = vmatpush.bf16.msra.mxu0 %v4169
  %4528 = vmatpush.bf16.msra.mxu0 %v4157
  %4529 = vmatpush.bf16.msra.mxu0 %v4145
  %4530 = vmatpush.bf16.msra.mxu0 %v4133
  %4531 = vmatpush.bf16.msra.mxu0 %v4121
  %4532 = vmatpush.bf16.msra.mxu0 %v4109
  %4533 = vmatmul.bf16.gmra.mxu0 %v3669
  %v4534 = vpop.f32.mrf.mxu0
  %v4535 = vadd.f32 %v3648, %v4534
  %v4536 = vpop.f32.mrf.mxu0
  %4537 = vdwg.mxu0
  %4538 = vmatpush.bf16.msra.mxu0 0
  %4539 = vmatpush.bf16.msra.mxu0 0
  %4540 = vmatpush.bf16.msra.mxu0 0
  %4541 = vmatpush.bf16.msra.mxu0 0
  %4542 = vmatpush.bf16.msra.mxu0 %v4241
  %4543 = vmatpush.bf16.msra.mxu0 %v4229
  %4544 = vmatpush.bf16.msra.mxu0 %v4217
  %4545 = vmatpush.bf16.msra.mxu0 %v4205
  %4546 = vmatmul.bf16.gmra.mxu0 %v4393
  %v4547 = vpop.f32.mrf.mxu0
  %v4548 = vadd.f32 %v4535, %v4547
  %v4549 = vpop.f32.mrf.mxu0
  %4550 = vdwg.mxu0
  %4551 = vmatpush.bf16.msra.mxu0 %v4194
  %4552 = vmatpush.bf16.msra.mxu0 %v4182
  %4553 = vmatpush.bf16.msra.mxu0 %v4170
  %4554 = vmatpush.bf16.msra.mxu0 %v4158
  %4555 = vmatpush.bf16.msra.mxu0 %v4146
  %4556 = vmatpush.bf16.msra.mxu0 %v4134
  %4557 = vmatpush.bf16.msra.mxu0 %v4122
  %4558 = vmatpush.bf16.msra.mxu0 %v4110
  %4559 = vmatmul.bf16.gmra.mxu0 %v3669
  %v4560 = vpop.f32.mrf.mxu0
  %v4561 = vadd.f32 %v3649, %v4560
  %v4562 = vpop.f32.mrf.mxu0
  %4563 = vdwg.mxu0
  %4564 = vmatpush.bf16.msra.mxu0 0
  %4565 = vmatpush.bf16.msra.mxu0 0
  %4566 = vmatpush.bf16.msra.mxu0 0
  %4567 = vmatpush.bf16.msra.mxu0 0
  %4568 = vmatpush.bf16.msra.mxu0 %v4242
  %4569 = vmatpush.bf16.msra.mxu0 %v4230
  %4570 = vmatpush.bf16.msra.mxu0 %v4218
  %4571 = vmatpush.bf16.msra.mxu0 %v4206
  %4572 = vmatmul.bf16.gmra.mxu0 %v4393
  %v4573 = vpop.f32.mrf.mxu0
  %v4574 = vadd.f32 %v4561, %v4573
  %v4575 = vpop.f32.mrf.mxu0
  %4576 = vdwg.mxu0
  %4577 = vmatpush.bf16.msra.mxu0 %v4195
  %4578 = vmatpush.bf16.msra.mxu0 %v4183
  %4579 = vmatpush.bf16.msra.mxu0 %v4171
  %4580 = vmatpush.bf16.msra.mxu0 %v4159
  %4581 = vmatpush.bf16.msra.mxu0 %v4147
  %4582 = vmatpush.bf16.msra.mxu0 %v4135
  %4583 = vmatpush.bf16.msra.mxu0 %v4123
  %4584 = vmatpush.bf16.msra.mxu0 %v4111
  %4585 = vmatmul.bf16.gmra.mxu0 %v3669
  %v4586 = vpop.f32.mrf.mxu0
  %v4587 = vadd.f32 %v3650, %v4586
  %v4588 = vpop.f32.mrf.mxu0
  %4589 = vdwg.mxu0
  %4590 = vmatpush.bf16.msra.mxu0 0
  %4591 = vmatpush.bf16.msra.mxu0 0
  %4592 = vmatpush.bf16.msra.mxu0 0
  %4593 = vmatpush.bf16.msra.mxu0 0
  %4594 = vmatpush.bf16.msra.mxu0 %v4243
  %4595 = vmatpush.bf16.msra.mxu0 %v4231
  %4596 = vmatpush.bf16.msra.mxu0 %v4219
  %4597 = vmatpush.bf16.msra.mxu0 %v4207
  %4598 = vmatmul.bf16.gmra.mxu0 %v4393
  %v4599 = vpop.f32.mrf.mxu0
  %v4600 = vadd.f32 %v4587, %v4599
  %v4601 = vpop.f32.mrf.mxu0
  %4602 = vdwg.mxu0
  %4603 = vmatpush.bf16.msra.mxu0 %v4196
  %4604 = vmatpush.bf16.msra.mxu0 %v4184
  %4605 = vmatpush.bf16.msra.mxu0 %v4172
  %4606 = vmatpush.bf16.msra.mxu0 %v4160
  %4607 = vmatpush.bf16.msra.mxu0 %v4148
  %4608 = vmatpush.bf16.msra.mxu0 %v4136
  %4609 = vmatpush.bf16.msra.mxu0 %v4124
  %4610 = vmatpush.bf16.msra.mxu0 %v4112
  %4611 = vmatmul.bf16.gmra.mxu0 %v3669
  %v4612 = vpop.f32.mrf.mxu0
  %v4613 = vadd.f32 %v3651, %v4612
  %v4614 = vpop.f32.mrf.mxu0
  %4615 = vdwg.mxu0
  %4616 = vmatpush.bf16.msra.mxu0 0
  %4617 = vmatpush.bf16.msra.mxu0 0
  %4618 = vmatpush.bf16.msra.mxu0 0
  %4619 = vmatpush.bf16.msra.mxu0 0
  %4620 = vmatpush.bf16.msra.mxu0 %v4244
  %4621 = vmatpush.bf16.msra.mxu0 %v4232
  %4622 = vmatpush.bf16.msra.mxu0 %v4220
  %4623 = vmatpush.bf16.msra.mxu0 %v4208
  %4624 = vmatmul.bf16.gmra.mxu0 %v4393
  %v4625 = vpop.f32.mrf.mxu0
  %v4626 = vadd.f32 %v4613, %v4625
  %v4627 = vpop.f32.mrf.mxu0
  %4628 = vdwg.mxu0
  %4629 = vmatpush.bf16.msra.mxu0 %v4197
  %4630 = vmatpush.bf16.msra.mxu0 %v4185
  %4631 = vmatpush.bf16.msra.mxu0 %v4173
  %4632 = vmatpush.bf16.msra.mxu0 %v4161
  %4633 = vmatpush.bf16.msra.mxu0 %v4149
  %4634 = vmatpush.bf16.msra.mxu0 %v4137
  %4635 = vmatpush.bf16.msra.mxu0 %v4125
  %4636 = vmatpush.bf16.msra.mxu0 %v4113
  %4637 = vmatmul.bf16.gmra.mxu0 %v3669
  %v4638 = vpop.f32.mrf.mxu0
  %v4639 = vadd.f32 %v3652, %v4638
  %v4640 = vpop.f32.mrf.mxu0
  %4641 = vdwg.mxu0
  %4642 = vmatpush.bf16.msra.mxu0 0
  %4643 = vmatpush.bf16.msra.mxu0 0
  %4644 = vmatpush.bf16.msra.mxu0 0
  %4645 = vmatpush.bf16.msra.mxu0 0
  %4646 = vmatpush.bf16.msra.mxu0 %v4245
  %4647 = vmatpush.bf16.msra.mxu0 %v4233
  %4648 = vmatpush.bf16.msra.mxu0 %v4221
  %4649 = vmatpush.bf16.msra.mxu0 %v4209
  %4650 = vmatmul.bf16.gmra.mxu0 %v4393
  %v4651 = vpop.f32.mrf.mxu0
  %v4652 = vadd.f32 %v4639, %v4651
  %v4653 = vpop.f32.mrf.mxu0
  %4654 = vdwg.mxu0
  %4655 = vmatpush.bf16.msra.mxu0 %v4198
  %4656 = vmatpush.bf16.msra.mxu0 %v4186
  %4657 = vmatpush.bf16.msra.mxu0 %v4174
  %4658 = vmatpush.bf16.msra.mxu0 %v4162
  %4659 = vmatpush.bf16.msra.mxu0 %v4150
  %4660 = vmatpush.bf16.msra.mxu0 %v4138
  %4661 = vmatpush.bf16.msra.mxu0 %v4126
  %4662 = vmatpush.bf16.msra.mxu0 %v4114
  %4663 = vmatmul.bf16.gmra.mxu0 %v3669
  %v4664 = vpop.f32.mrf.mxu0
  %v4665 = vadd.f32 %v3653, %v4664
  %v4666 = vpop.f32.mrf.mxu0
  %4667 = vdwg.mxu0
  %4668 = vmatpush.bf16.msra.mxu0 0
  %4669 = vmatpush.bf16.msra.mxu0 0
  %4670 = vmatpush.bf16.msra.mxu0 0
  %4671 = vmatpush.bf16.msra.mxu0 0
  %4672 = vmatpush.bf16.msra.mxu0 %v4246
  %4673 = vmatpush.bf16.msra.mxu0 %v4234
  %4674 = vmatpush.bf16.msra.mxu0 %v4222
  %4675 = vmatpush.bf16.msra.mxu0 %v4210
  %4676 = vmatmul.bf16.gmra.mxu0 %v4393
  %v4677 = vpop.f32.mrf.mxu0
  %v4678 = vadd.f32 %v4665, %v4677
  %v4679 = vpop.f32.mrf.mxu0
  %4680 = vdwg.mxu0
  %4681 = vmatpush.bf16.msra.mxu0 %v4199
  %4682 = vmatpush.bf16.msra.mxu0 %v4187
  %4683 = vmatpush.bf16.msra.mxu0 %v4175
  %4684 = vmatpush.bf16.msra.mxu0 %v4163
  %4685 = vmatpush.bf16.msra.mxu0 %v4151
  %4686 = vmatpush.bf16.msra.mxu0 %v4139
  %4687 = vmatpush.bf16.msra.mxu0 %v4127
  %4688 = vmatpush.bf16.msra.mxu0 %v4115
  %4689 = vmatmul.bf16.gmra.mxu0 %v3669
  %v4690 = vpop.f32.mrf.mxu0
  %v4691 = vadd.f32 %v3654, %v4690
  %v4692 = vpop.f32.mrf.mxu0
  %4693 = vdwg.mxu0
  %4694 = vmatpush.bf16.msra.mxu0 0
  %4695 = vmatpush.bf16.msra.mxu0 0
  %4696 = vmatpush.bf16.msra.mxu0 0
  %4697 = vmatpush.bf16.msra.mxu0 0
  %4698 = vmatpush.bf16.msra.mxu0 %v4247
  %4699 = vmatpush.bf16.msra.mxu0 %v4235
  %4700 = vmatpush.bf16.msra.mxu0 %v4223
  %4701 = vmatpush.bf16.msra.mxu0 %v4211
  %4702 = vmatmul.bf16.gmra.mxu0 %v4393
  %v4703 = vpop.f32.mrf.mxu0
  %v4704 = vadd.f32 %v4691, %v4703
  %v4705 = vpop.f32.mrf.mxu0
  %4706 = vdwg.mxu0
  %v4707 = vpack.c.bf16 %v4444, %v4418
  %v4708 = vpack.c.bf16 %v4496, %v4470
  %v4709 = vpack.c.bf16 %v4548, %v4522
  %v4710 = vpack.c.bf16 %v4600, %v4574
  %v4711 = vpack.c.bf16 %v4652, %v4626
  %v4712 = vpack.c.bf16 %v4704, %v4678
  %v4713 = vld [vmem:[%s18] sm:$0xff]
  %v4714 = vld [vmem:[%s18 + $0x8] sm:$0xff]
  %v4715 = vld [vmem:[%s18 + $0x10] sm:$0xff]
  %v4716 = vld [vmem:[%s18 + $0x18] sm:$0xff]
  %v4717 = vld [vmem:[%s18 + $0x20] sm:$0xff]
  %v4718 = vld [vmem:[%s18 + $0x28] sm:$0xff]
  %v4719 = vld [vmem:[%s18 + $0x30] sm:$0xff]
  %v4720 = vld [vmem:[%s18 + $0x38] sm:$0xff]
  %v4721 = vld [vmem:[%s18 + $0x40] sm:$0xff]
  %v4722 = vld [vmem:[%s18 + $0x48] sm:$0xff]
  %v4723 = vld [vmem:[%s18 + $0x50] sm:$0xff]
  %v4724 = vld [vmem:[%s18 + $0x58] sm:$0xff]
  %v4725 = vld [vmem:[%s18 + $0x60] sm:$0xff]
  %v4726 = vld [vmem:[%s18 + $0x68] sm:$0xff]
  %v4727 = vld [vmem:[%s18 + $0x70] sm:$0xff]
  %v4728 = vld [vmem:[%s18 + $0x78] sm:$0xff]
  %v4729 = vld [vmem:[%s18 + $0x80] sm:$0xff]
  %v4730 = vld [vmem:[%s18 + $0x88] sm:$0xff]
  %v4731 = vld [vmem:[%s18 + $0x90] sm:$0xff]
  %v4732 = vld [vmem:[%s18 + $0x98] sm:$0xff]
  %v4733 = vld [vmem:[%s18 + $0xa0] sm:$0xff]
  %v4734 = vld [vmem:[%s18 + $0xa8] sm:$0xff]
  %v4735 = vld [vmem:[%s18 + $0xb0] sm:$0xff]
  %v4736 = vld [vmem:[%s18 + $0xb8] sm:$0xff]
  %v4737 = vld [vmem:[%s18 + $0xc0] sm:$0xff]
  %v4738 = vld [vmem:[%s18 + $0xc8] sm:$0xff]
  %v4739 = vld [vmem:[%s18 + $0xd0] sm:$0xff]
  %v4740 = vld [vmem:[%s18 + $0xd8] sm:$0xff]
  %v4741 = vld [vmem:[%s18 + $0xe0] sm:$0xff]
  %v4742 = vld [vmem:[%s18 + $0xe8] sm:$0xff]
  %v4743 = vld [vmem:[%s18 + $0xf0] sm:$0xff]
  %v4744 = vld [vmem:[%s18 + $0xf8] sm:$0xff]
  %v4745 = vld [vmem:[%s18 + $0x100] sm:$0xff]
  %v4746 = vld [vmem:[%s18 + $0x108] sm:$0xff]
  %v4747 = vld [vmem:[%s18 + $0x110] sm:$0xff]
  %v4748 = vld [vmem:[%s18 + $0x118] sm:$0xff]
  %v4749 = vld [vmem:[%s18 + $0x120] sm:$0xff]
  %v4750 = vld [vmem:[%s18 + $0x128] sm:$0xff]
  %v4751 = vld [vmem:[%s18 + $0x130] sm:$0xff]
  %v4752 = vld [vmem:[%s18 + $0x138] sm:$0xff]
  %v4753 = vld [vmem:[%s18 + $0x140] sm:$0xff]
  %v4754 = vld [vmem:[%s18 + $0x148] sm:$0xff]
  %v4755 = vld [vmem:[%s18 + $0x150] sm:$0xff]
  %v4756 = vld [vmem:[%s18 + $0x158] sm:$0xff]
  %v4757 = vld [vmem:[%s18 + $0x160] sm:$0xff]
  %v4758 = vld [vmem:[%s18 + $0x168] sm:$0xff]
  %v4759 = vld [vmem:[%s18 + $0x170] sm:$0xff]
  %v4760 = vld [vmem:[%s18 + $0x178] sm:$0xff]
  %v4761 = vld [vmem:[%s18 + $0x180] sm:$0xff]
  %v4762 = vld [vmem:[%s18 + $0x188] sm:$0xff]
  %v4763 = vld [vmem:[%s18 + $0x190] sm:$0xff]
  %v4764 = vld [vmem:[%s18 + $0x198] sm:$0xff]
  %v4765 = vld [vmem:[%s18 + $0x1a0] sm:$0xff]
  %v4766 = vld [vmem:[%s18 + $0x1a8] sm:$0xff]
  %v4767 = vld [vmem:[%s18 + $0x1b0] sm:$0xff]
  %v4768 = vld [vmem:[%s18 + $0x1b8] sm:$0xff]
  %v4769 = vld [vmem:[%s18 + $0x1c0] sm:$0xff]
  %v4770 = vld [vmem:[%s18 + $0x1c8] sm:$0xff]
  %v4771 = vld [vmem:[%s18 + $0x1d0] sm:$0xff]
  %v4772 = vld [vmem:[%s18 + $0x1d8] sm:$0xff]
  %v4773 = vld [vmem:[%s18 + $0x1e0] sm:$0xff]
  %v4774 = vld [vmem:[%s18 + $0x1e8] sm:$0xff]
  %v4775 = vld [vmem:[%s18 + $0x1f0] sm:$0xff]
  %v4776 = vld [vmem:[%s18 + $0x1f8] sm:$0xff]
  %v4777 = vld [vmem:[%s18 + $0x200] sm:$0xff]
  %v4778 = vld [vmem:[%s18 + $0x208] sm:$0xff]
  %v4779 = vld [vmem:[%s18 + $0x210] sm:$0xff]
  %v4780 = vld [vmem:[%s18 + $0x218] sm:$0xff]
  %v4781 = vld [vmem:[%s18 + $0x220] sm:$0xff]
  %v4782 = vld [vmem:[%s18 + $0x228] sm:$0xff]
  %v4783 = vld [vmem:[%s18 + $0x230] sm:$0xff]
  %v4784 = vld [vmem:[%s18 + $0x238] sm:$0xff]
  %v4785 = vld [vmem:[%s18 + $0x240] sm:$0xff]
  %v4786 = vld [vmem:[%s18 + $0x248] sm:$0xff]
  %v4787 = vld [vmem:[%s18 + $0x250] sm:$0xff]
  %v4788 = vld [vmem:[%s18 + $0x258] sm:$0xff]
  %v4789 = vld [vmem:[%s18 + $0x260] sm:$0xff]
  %v4790 = vld [vmem:[%s18 + $0x268] sm:$0xff]
  %v4791 = vld [vmem:[%s18 + $0x270] sm:$0xff]
  %v4792 = vld [vmem:[%s18 + $0x278] sm:$0xff]
  %v4793 = vld [vmem:[%s18 + $0x280] sm:$0xff]
  %v4794 = vld [vmem:[%s18 + $0x288] sm:$0xff]
  %v4795 = vld [vmem:[%s18 + $0x290] sm:$0xff]
  %v4796 = vld [vmem:[%s18 + $0x298] sm:$0xff]
  %v4797 = vld [vmem:[%s18 + $0x2a0] sm:$0xff]
  %v4798 = vld [vmem:[%s18 + $0x2a8] sm:$0xff]
  %v4799 = vld [vmem:[%s18 + $0x2b0] sm:$0xff]
  %v4800 = vld [vmem:[%s18 + $0x2b8] sm:$0xff]
  %v4801 = vld [vmem:[%s18 + $0x2c0] sm:$0xff]
  %v4802 = vld [vmem:[%s18 + $0x2c8] sm:$0xff]
  %v4803 = vld [vmem:[%s18 + $0x2d0] sm:$0xff]
  %v4804 = vld [vmem:[%s18 + $0x2d8] sm:$0xff]
  %v4805 = vld [vmem:[%s18 + $0x2e0] sm:$0xff]
  %v4806 = vld [vmem:[%s18 + $0x2e8] sm:$0xff]
  %v4807 = vld [vmem:[%s18 + $0x2f0] sm:$0xff]
  %v4808 = vld [vmem:[%s18 + $0x2f8] sm:$0xff]
  %v4809 = vld [vmem:[%s18 + $0x300] sm:$0xff]
  %v4810 = vld [vmem:[%s18 + $0x308] sm:$0xff]
  %v4811 = vld [vmem:[%s18 + $0x310] sm:$0xff]
  %v4812 = vld [vmem:[%s18 + $0x318] sm:$0xff]
  %v4813 = vld [vmem:[%s18 + $0x320] sm:$0xff]
  %v4814 = vld [vmem:[%s18 + $0x328] sm:$0xff]
  %v4815 = vld [vmem:[%s18 + $0x330] sm:$0xff]
  %v4816 = vld [vmem:[%s18 + $0x338] sm:$0xff]
  %v4817 = vld [vmem:[%s18 + $0x340] sm:$0xff]
  %v4818 = vld [vmem:[%s18 + $0x348] sm:$0xff]
  %v4819 = vld [vmem:[%s18 + $0x350] sm:$0xff]
  %v4820 = vld [vmem:[%s18 + $0x358] sm:$0xff]
  %v4821 = vld [vmem:[%s18 + $0x360] sm:$0xff]
  %v4822 = vld [vmem:[%s18 + $0x368] sm:$0xff]
  %v4823 = vld [vmem:[%s18 + $0x370] sm:$0xff]
  %v4824 = vld [vmem:[%s18 + $0x378] sm:$0xff]
  %v4825 = vld [vmem:[%s18 + $0x380] sm:$0xff]
  %v4826 = vld [vmem:[%s18 + $0x388] sm:$0xff]
  %v4827 = vld [vmem:[%s18 + $0x390] sm:$0xff]
  %v4828 = vld [vmem:[%s18 + $0x398] sm:$0xff]
  %v4829 = vld [vmem:[%s18 + $0x3a0] sm:$0xff]
  %v4830 = vld [vmem:[%s18 + $0x3a8] sm:$0xff]
  %v4831 = vld [vmem:[%s18 + $0x3b0] sm:$0xff]
  %v4832 = vld [vmem:[%s18 + $0x3b8] sm:$0xff]
  %v4833 = vld [vmem:[%s18 + $0x3c0] sm:$0xff]
  %v4834 = vld [vmem:[%s18 + $0x3c8] sm:$0xff]
  %v4835 = vld [vmem:[%s18 + $0x3d0] sm:$0xff]
  %v4836 = vld [vmem:[%s18 + $0x3d8] sm:$0xff]
  %v4837 = vld [vmem:[%s18 + $0x3e0] sm:$0xff]
  %v4838 = vld [vmem:[%s18 + $0x3e8] sm:$0xff]
  %v4839 = vld [vmem:[%s18 + $0x3f0] sm:$0xff]
  %v4840 = vld [vmem:[%s18 + $0x3f8] sm:$0xff]
  %v4841 = vld [vmem:[%s18 + $0x400] sm:$0xff]
  %v4842 = vld [vmem:[%s18 + $0x408] sm:$0xff]
  %v4843 = vld [vmem:[%s18 + $0x410] sm:$0xff]
  %v4844 = vld [vmem:[%s18 + $0x418] sm:$0xff]
  %v4845 = vld [vmem:[%s18 + $0x420] sm:$0xff]
  %v4846 = vld [vmem:[%s18 + $0x428] sm:$0xff]
  %v4847 = vld [vmem:[%s18 + $0x430] sm:$0xff]
  %v4848 = vld [vmem:[%s18 + $0x438] sm:$0xff]
  %v4849 = vld [vmem:[%s18 + $0x440] sm:$0xff]
  %v4850 = vld [vmem:[%s18 + $0x448] sm:$0xff]
  %v4851 = vld [vmem:[%s18 + $0x450] sm:$0xff]
  %v4852 = vld [vmem:[%s18 + $0x458] sm:$0xff]
  %v4853 = vld [vmem:[%s18 + $0x460] sm:$0xff]
  %v4854 = vld [vmem:[%s18 + $0x468] sm:$0xff]
  %v4855 = vld [vmem:[%s18 + $0x470] sm:$0xff]
  %v4856 = vld [vmem:[%s18 + $0x478] sm:$0xff]
  %v4857 = vld [vmem:[%s18 + $0x480] sm:$0xff]
  %v4858 = vld [vmem:[%s18 + $0x488] sm:$0xff]
  %v4859 = vld [vmem:[%s18 + $0x490] sm:$0xff]
  %v4860 = vld [vmem:[%s18 + $0x498] sm:$0xff]
  %v4861 = vld [vmem:[%s18 + $0x4a0] sm:$0xff]
  %v4862 = vld [vmem:[%s18 + $0x4a8] sm:$0xff]
  %v4863 = vld [vmem:[%s18 + $0x4b0] sm:$0xff]
  %v4864 = vld [vmem:[%s18 + $0x4b8] sm:$0xff]
  %v4865 = vld [vmem:[%s18 + $0x4c0] sm:$0xff]
  %v4866 = vld [vmem:[%s18 + $0x4c8] sm:$0xff]
  %v4867 = vld [vmem:[%s18 + $0x4d0] sm:$0xff]
  %v4868 = vld [vmem:[%s18 + $0x4d8] sm:$0xff]
  %v4869 = vld [vmem:[%s18 + $0x4e0] sm:$0xff]
  %v4870 = vld [vmem:[%s18 + $0x4e8] sm:$0xff]
  %v4871 = vld [vmem:[%s18 + $0x4f0] sm:$0xff]
  %v4872 = vld [vmem:[%s18 + $0x4f8] sm:$0xff]
  %v4873 = vld [vmem:[%s18 + $0x500] sm:$0xff]
  %v4874 = vld [vmem:[%s18 + $0x508] sm:$0xff]
  %v4875 = vld [vmem:[%s18 + $0x510] sm:$0xff]
  %v4876 = vld [vmem:[%s18 + $0x518] sm:$0xff]
  %v4877 = vld [vmem:[%s18 + $0x520] sm:$0xff]
  %v4878 = vld [vmem:[%s18 + $0x528] sm:$0xff]
  %v4879 = vld [vmem:[%s18 + $0x530] sm:$0xff]
  %v4880 = vld [vmem:[%s18 + $0x538] sm:$0xff]
  %v4881 = vld [vmem:[%s18 + $0x540] sm:$0xff]
  %v4882 = vld [vmem:[%s18 + $0x548] sm:$0xff]
  %v4883 = vld [vmem:[%s18 + $0x550] sm:$0xff]
  %v4884 = vld [vmem:[%s18 + $0x558] sm:$0xff]
  %v4885 = vld [vmem:[%s18 + $0x560] sm:$0xff]
  %v4886 = vld [vmem:[%s18 + $0x568] sm:$0xff]
  %v4887 = vld [vmem:[%s18 + $0x570] sm:$0xff]
  %v4888 = vld [vmem:[%s18 + $0x578] sm:$0xff]
  %v4889 = vld [vmem:[%s18 + $0x580] sm:$0xff]
  %v4890 = vld [vmem:[%s18 + $0x588] sm:$0xff]
  %v4891 = vld [vmem:[%s18 + $0x590] sm:$0xff]
  %v4892 = vld [vmem:[%s18 + $0x598] sm:$0xff]
  %v4893 = vld [vmem:[%s18 + $0x5a0] sm:$0xff]
  %v4894 = vld [vmem:[%s18 + $0x5a8] sm:$0xff]
  %v4895 = vld [vmem:[%s18 + $0x5b0] sm:$0xff]
  %v4896 = vld [vmem:[%s18 + $0x5b8] sm:$0xff]
  %v4897 = vld [vmem:[%s18 + $0x5c0] sm:$0xff]
  %v4898 = vld [vmem:[%s18 + $0x5c8] sm:$0xff]
  %v4899 = vld [vmem:[%s18 + $0x5d0] sm:$0xff]
  %v4900 = vld [vmem:[%s18 + $0x5d8] sm:$0xff]
  %v4901 = vld [vmem:[%s18 + $0x5e0] sm:$0xff]
  %v4902 = vld [vmem:[%s18 + $0x5e8] sm:$0xff]
  %v4903 = vld [vmem:[%s18 + $0x5f0] sm:$0xff]
  %v4904 = vld [vmem:[%s18 + $0x5f8] sm:$0xff]
  %v4905 = vld [vmem:[%s18 + $0x600] sm:$0xff]
  %v4906 = vld [vmem:[%s18 + $0x608] sm:$0xff]
  %v4907 = vld [vmem:[%s18 + $0x610] sm:$0xff]
  %v4908 = vld [vmem:[%s18 + $0x618] sm:$0xff]
  %v4909 = vld [vmem:[%s18 + $0x620] sm:$0xff]
  %v4910 = vld [vmem:[%s18 + $0x628] sm:$0xff]
  %v4911 = vld [vmem:[%s18 + $0x630] sm:$0xff]
  %v4912 = vld [vmem:[%s18 + $0x638] sm:$0xff]
  %v4913 = vld [vmem:[%s18 + $0x640] sm:$0xff]
  %v4914 = vld [vmem:[%s18 + $0x648] sm:$0xff]
  %v4915 = vld [vmem:[%s18 + $0x650] sm:$0xff]
  %v4916 = vld [vmem:[%s18 + $0x658] sm:$0xff]
  %v4917 = vld [vmem:[%s18 + $0x660] sm:$0xff]
  %v4918 = vld [vmem:[%s18 + $0x668] sm:$0xff]
  %v4919 = vld [vmem:[%s18 + $0x670] sm:$0xff]
  %v4920 = vld [vmem:[%s18 + $0x678] sm:$0xff]
  %v4921 = vld [vmem:[%s18 + $0x680] sm:$0xff]
  %v4922 = vld [vmem:[%s18 + $0x688] sm:$0xff]
  %v4923 = vld [vmem:[%s18 + $0x690] sm:$0xff]
  %v4924 = vld [vmem:[%s18 + $0x698] sm:$0xff]
  %v4925 = vld [vmem:[%s18 + $0x6a0] sm:$0xff]
  %v4926 = vld [vmem:[%s18 + $0x6a8] sm:$0xff]
  %v4927 = vld [vmem:[%s18 + $0x6b0] sm:$0xff]
  %v4928 = vld [vmem:[%s18 + $0x6b8] sm:$0xff]
  %v4929 = vld [vmem:[%s18 + $0x6c0] sm:$0xff]
  %v4930 = vld [vmem:[%s18 + $0x6c8] sm:$0xff]
  %v4931 = vld [vmem:[%s18 + $0x6d0] sm:$0xff]
  %v4932 = vld [vmem:[%s18 + $0x6d8] sm:$0xff]
  %v4933 = vld [vmem:[%s18 + $0x6e0] sm:$0xff]
  %v4934 = vld [vmem:[%s18 + $0x6e8] sm:$0xff]
  %v4935 = vld [vmem:[%s18 + $0x6f0] sm:$0xff]
  %v4936 = vld [vmem:[%s18 + $0x6f8] sm:$0xff]
  %v4937 = vld [vmem:[%s18 + $0x700] sm:$0xff]
  %v4938 = vld [vmem:[%s18 + $0x708] sm:$0xff]
  %v4939 = vld [vmem:[%s18 + $0x710] sm:$0xff]
  %v4940 = vld [vmem:[%s18 + $0x718] sm:$0xff]
  %v4941 = vld [vmem:[%s18 + $0x720] sm:$0xff]
  %v4942 = vld [vmem:[%s18 + $0x728] sm:$0xff]
  %v4943 = vld [vmem:[%s18 + $0x730] sm:$0xff]
  %v4944 = vld [vmem:[%s18 + $0x738] sm:$0xff]
  %v4945 = vld [vmem:[%s18 + $0x740] sm:$0xff]
  %v4946 = vld [vmem:[%s18 + $0x748] sm:$0xff]
  %v4947 = vld [vmem:[%s18 + $0x750] sm:$0xff]
  %v4948 = vld [vmem:[%s18 + $0x758] sm:$0xff]
  %v4949 = vld [vmem:[%s18 + $0x760] sm:$0xff]
  %v4950 = vld [vmem:[%s18 + $0x768] sm:$0xff]
  %v4951 = vld [vmem:[%s18 + $0x770] sm:$0xff]
  %v4952 = vld [vmem:[%s18 + $0x778] sm:$0xff]
  %v4953 = vld [vmem:[%s18 + $0x780] sm:$0xff]
  %v4954 = vld [vmem:[%s18 + $0x788] sm:$0xff]
  %v4955 = vld [vmem:[%s18 + $0x790] sm:$0xff]
  %v4956 = vld [vmem:[%s18 + $0x798] sm:$0xff]
  %v4957 = vld [vmem:[%s18 + $0x7a0] sm:$0xff]
  %v4958 = vld [vmem:[%s18 + $0x7a8] sm:$0xff]
  %v4959 = vld [vmem:[%s18 + $0x7b0] sm:$0xff]
  %v4960 = vld [vmem:[%s18 + $0x7b8] sm:$0xff]
  %v4961 = vld [vmem:[%s18 + $0x7c0] sm:$0xff]
  %v4962 = vld [vmem:[%s18 + $0x7c8] sm:$0xff]
  %v4963 = vld [vmem:[%s18 + $0x7d0] sm:$0xff]
  %v4964 = vld [vmem:[%s18 + $0x7d8] sm:$0xff]
  %v4965 = vld [vmem:[%s18 + $0x7e0] sm:$0xff]
  %v4966 = vld [vmem:[%s18 + $0x7e8] sm:$0xff]
  %v4967 = vld [vmem:[%s18 + $0x7f0] sm:$0xff]
  %v4968 = vld [vmem:[%s18 + $0x7f8] sm:$0xff]
  %v4969 = vld [vmem:[%s19] sm:$0xff]
  %v4970 = vld [vmem:[%s19 + $0x8] sm:$0xff]
  %v4971 = vld [vmem:[%s19 + $0x10] sm:$0xff]
  %v4972 = vld [vmem:[%s19 + $0x18] sm:$0xff]
  %v4973 = vld [vmem:[%s19 + $0x20] sm:$0xff]
  %v4974 = vld [vmem:[%s19 + $0x28] sm:$0xff]
  %v4975 = vld [vmem:[%s19 + $0x30] sm:$0xff]
  %v4976 = vld [vmem:[%s19 + $0x38] sm:$0xff]
  %v4977 = vld [vmem:[%s19 + $0x40] sm:$0xff]
  %v4978 = vld [vmem:[%s19 + $0x48] sm:$0xff]
  %v4979 = vld [vmem:[%s19 + $0x50] sm:$0xff]
  %v4980 = vld [vmem:[%s19 + $0x58] sm:$0xff]
  %v4981 = vld [vmem:[%s19 + $0x60] sm:$0xff]
  %v4982 = vld [vmem:[%s19 + $0x68] sm:$0xff]
  %v4983 = vld [vmem:[%s19 + $0x70] sm:$0xff]
  %v4984 = vld [vmem:[%s19 + $0x78] sm:$0xff]
  %v4985 = vld [vmem:[%s19 + $0x80] sm:$0xff]
  %v4986 = vld [vmem:[%s19 + $0x88] sm:$0xff]
  %v4987 = vld [vmem:[%s19 + $0x90] sm:$0xff]
  %v4988 = vld [vmem:[%s19 + $0x98] sm:$0xff]
  %v4989 = vld [vmem:[%s19 + $0xa0] sm:$0xff]
  %v4990 = vld [vmem:[%s19 + $0xa8] sm:$0xff]
  %v4991 = vld [vmem:[%s19 + $0xb0] sm:$0xff]
  %v4992 = vld [vmem:[%s19 + $0xb8] sm:$0xff]
  %v4993 = vld [vmem:[%s19 + $0xc0] sm:$0xff]
  %v4994 = vld [vmem:[%s19 + $0xc8] sm:$0xff]
  %v4995 = vld [vmem:[%s19 + $0xd0] sm:$0xff]
  %v4996 = vld [vmem:[%s19 + $0xd8] sm:$0xff]
  %v4997 = vld [vmem:[%s19 + $0xe0] sm:$0xff]
  %v4998 = vld [vmem:[%s19 + $0xe8] sm:$0xff]
  %v4999 = vld [vmem:[%s19 + $0xf0] sm:$0xff]
  %v5000 = vld [vmem:[%s19 + $0xf8] sm:$0xff]
  %v5001 = vld [vmem:[%s19 + $0x100] sm:$0xff]
  %v5002 = vld [vmem:[%s19 + $0x108] sm:$0xff]
  %v5003 = vld [vmem:[%s19 + $0x110] sm:$0xff]
  %v5004 = vld [vmem:[%s19 + $0x118] sm:$0xff]
  %v5005 = vld [vmem:[%s19 + $0x120] sm:$0xff]
  %v5006 = vld [vmem:[%s19 + $0x128] sm:$0xff]
  %v5007 = vld [vmem:[%s19 + $0x130] sm:$0xff]
  %v5008 = vld [vmem:[%s19 + $0x138] sm:$0xff]
  %v5009 = vld [vmem:[%s19 + $0x140] sm:$0xff]
  %v5010 = vld [vmem:[%s19 + $0x148] sm:$0xff]
  %v5011 = vld [vmem:[%s19 + $0x150] sm:$0xff]
  %v5012 = vld [vmem:[%s19 + $0x158] sm:$0xff]
  %v5013 = vld [vmem:[%s19 + $0x160] sm:$0xff]
  %v5014 = vld [vmem:[%s19 + $0x168] sm:$0xff]
  %v5015 = vld [vmem:[%s19 + $0x170] sm:$0xff]
  %v5016 = vld [vmem:[%s19 + $0x178] sm:$0xff]
  %v5017 = vld [vmem:[%s19 + $0x180] sm:$0xff]
  %v5018 = vld [vmem:[%s19 + $0x188] sm:$0xff]
  %v5019 = vld [vmem:[%s19 + $0x190] sm:$0xff]
  %v5020 = vld [vmem:[%s19 + $0x198] sm:$0xff]
  %v5021 = vld [vmem:[%s19 + $0x1a0] sm:$0xff]
  %v5022 = vld [vmem:[%s19 + $0x1a8] sm:$0xff]
  %v5023 = vld [vmem:[%s19 + $0x1b0] sm:$0xff]
  %v5024 = vld [vmem:[%s19 + $0x1b8] sm:$0xff]
  %v5025 = vld [vmem:[%s19 + $0x1c0] sm:$0xff]
  %v5026 = vld [vmem:[%s19 + $0x1c8] sm:$0xff]
  %v5027 = vld [vmem:[%s19 + $0x1d0] sm:$0xff]
  %v5028 = vld [vmem:[%s19 + $0x1d8] sm:$0xff]
  %v5029 = vld [vmem:[%s19 + $0x1e0] sm:$0xff]
  %v5030 = vld [vmem:[%s19 + $0x1e8] sm:$0xff]
  %v5031 = vld [vmem:[%s19 + $0x1f0] sm:$0xff]
  %v5032 = vld [vmem:[%s19 + $0x1f8] sm:$0xff]
  %v5033 = vld [vmem:[%s19 + $0x200] sm:$0xff]
  %v5034 = vld [vmem:[%s19 + $0x208] sm:$0xff]
  %v5035 = vld [vmem:[%s19 + $0x210] sm:$0xff]
  %v5036 = vld [vmem:[%s19 + $0x218] sm:$0xff]
  %v5037 = vld [vmem:[%s19 + $0x220] sm:$0xff]
  %v5038 = vld [vmem:[%s19 + $0x228] sm:$0xff]
  %v5039 = vld [vmem:[%s19 + $0x230] sm:$0xff]
  %v5040 = vld [vmem:[%s19 + $0x238] sm:$0xff]
  %v5041 = vld [vmem:[%s19 + $0x240] sm:$0xff]
  %v5042 = vld [vmem:[%s19 + $0x248] sm:$0xff]
  %v5043 = vld [vmem:[%s19 + $0x250] sm:$0xff]
  %v5044 = vld [vmem:[%s19 + $0x258] sm:$0xff]
  %v5045 = vld [vmem:[%s19 + $0x260] sm:$0xff]
  %v5046 = vld [vmem:[%s19 + $0x268] sm:$0xff]
  %v5047 = vld [vmem:[%s19 + $0x270] sm:$0xff]
  %v5048 = vld [vmem:[%s19 + $0x278] sm:$0xff]
  %v5049 = vld [vmem:[%s19 + $0x280] sm:$0xff]
  %v5050 = vld [vmem:[%s19 + $0x288] sm:$0xff]
  %v5051 = vld [vmem:[%s19 + $0x290] sm:$0xff]
  %v5052 = vld [vmem:[%s19 + $0x298] sm:$0xff]
  %v5053 = vld [vmem:[%s19 + $0x2a0] sm:$0xff]
  %v5054 = vld [vmem:[%s19 + $0x2a8] sm:$0xff]
  %v5055 = vld [vmem:[%s19 + $0x2b0] sm:$0xff]
  %v5056 = vld [vmem:[%s19 + $0x2b8] sm:$0xff]
  %v5057 = vld [vmem:[%s19 + $0x2c0] sm:$0xff]
  %v5058 = vld [vmem:[%s19 + $0x2c8] sm:$0xff]
  %v5059 = vld [vmem:[%s19 + $0x2d0] sm:$0xff]
  %v5060 = vld [vmem:[%s19 + $0x2d8] sm:$0xff]
  %v5061 = vld [vmem:[%s19 + $0x2e0] sm:$0xff]
  %v5062 = vld [vmem:[%s19 + $0x2e8] sm:$0xff]
  %v5063 = vld [vmem:[%s19 + $0x2f0] sm:$0xff]
  %v5064 = vld [vmem:[%s19 + $0x2f8] sm:$0xff]
  %v5065 = vld [vmem:[%s19 + $0x300] sm:$0xff]
  %v5066 = vld [vmem:[%s19 + $0x308] sm:$0xff]
  %v5067 = vld [vmem:[%s19 + $0x310] sm:$0xff]
  %v5068 = vld [vmem:[%s19 + $0x318] sm:$0xff]
  %v5069 = vld [vmem:[%s19 + $0x320] sm:$0xff]
  %v5070 = vld [vmem:[%s19 + $0x328] sm:$0xff]
  %v5071 = vld [vmem:[%s19 + $0x330] sm:$0xff]
  %v5072 = vld [vmem:[%s19 + $0x338] sm:$0xff]
  %v5073 = vld [vmem:[%s19 + $0x340] sm:$0xff]
  %v5074 = vld [vmem:[%s19 + $0x348] sm:$0xff]
  %v5075 = vld [vmem:[%s19 + $0x350] sm:$0xff]
  %v5076 = vld [vmem:[%s19 + $0x358] sm:$0xff]
  %v5077 = vld [vmem:[%s19 + $0x360] sm:$0xff]
  %v5078 = vld [vmem:[%s19 + $0x368] sm:$0xff]
  %v5079 = vld [vmem:[%s19 + $0x370] sm:$0xff]
  %v5080 = vld [vmem:[%s19 + $0x378] sm:$0xff]
  %v5081 = vld [vmem:[%s19 + $0x380] sm:$0xff]
  %v5082 = vld [vmem:[%s19 + $0x388] sm:$0xff]
  %v5083 = vld [vmem:[%s19 + $0x390] sm:$0xff]
  %v5084 = vld [vmem:[%s19 + $0x398] sm:$0xff]
  %v5085 = vld [vmem:[%s19 + $0x3a0] sm:$0xff]
  %v5086 = vld [vmem:[%s19 + $0x3a8] sm:$0xff]
  %v5087 = vld [vmem:[%s19 + $0x3b0] sm:$0xff]
  %v5088 = vld [vmem:[%s19 + $0x3b8] sm:$0xff]
  %v5089 = vld [vmem:[%s19 + $0x3c0] sm:$0xff]
  %v5090 = vld [vmem:[%s19 + $0x3c8] sm:$0xff]
  %v5091 = vld [vmem:[%s19 + $0x3d0] sm:$0xff]
  %v5092 = vld [vmem:[%s19 + $0x3d8] sm:$0xff]
  %v5093 = vld [vmem:[%s19 + $0x3e0] sm:$0xff]
  %v5094 = vld [vmem:[%s19 + $0x3e8] sm:$0xff]
  %v5095 = vld [vmem:[%s19 + $0x3f0] sm:$0xff]
  %v5096 = vld [vmem:[%s19 + $0x3f8] sm:$0xff]
  %v5097 = vld [vmem:[%s2] sm:$0x3]
  %v5098 = vld [vmem:[%s8] sm:$0xff]
  %v5099 = vld [vmem:[%s8 + $0x8] sm:$0xf]
  %v5100 = vld [vmem:[%s8 + $0xc] sm:$0xff]
  %v5101 = vld [vmem:[%s8 + $0x14] sm:$0xf]
  %v5102 = vld [vmem:[%s8 + $0x18] sm:$0xff]
  %v5103 = vld [vmem:[%s8 + $0x20] sm:$0xf]
  %v5104 = vld [vmem:[%s8 + $0x24] sm:$0xff]
  %v5105 = vld [vmem:[%s8 + $0x2c] sm:$0xf]
  %v5106 = vld [vmem:[%s8 + $0x30] sm:$0xff]
  %v5107 = vld [vmem:[%s8 + $0x38] sm:$0xf]
  %v5108 = vld [vmem:[%s8 + $0x3c] sm:$0xff]
  %v5109 = vld [vmem:[%s8 + $0x44] sm:$0xf]
  %v5110 = vld [vmem:[%s8 + $0x48] sm:$0xff]
  %v5111 = vld [vmem:[%s8 + $0x50] sm:$0xf]
  %v5112 = vld [vmem:[%s8 + $0x54] sm:$0xff]
  %v5113 = vld [vmem:[%s8 + $0x5c] sm:$0xf]
  %v5114 = vld [vmem:[%s8 + $0x60] sm:$0xff]
  %v5115 = vld [vmem:[%s8 + $0x68] sm:$0xf]
  %v5116 = vld [vmem:[%s8 + $0x6c] sm:$0xff]
  %v5117 = vld [vmem:[%s8 + $0x74] sm:$0xf]
  %v5118 = vld [vmem:[%s8 + $0x78] sm:$0xff]
  %v5119 = vld [vmem:[%s8 + $0x80] sm:$0xf]
  %v5120 = vld [vmem:[%s8 + $0x84] sm:$0xff]
  %v5121 = vld [vmem:[%s8 + $0x8c] sm:$0xf]
  %v5122 = vld [vmem:[%s8 + $0x90] sm:$0xff]
  %v5123 = vld [vmem:[%s8 + $0x98] sm:$0xf]
  %v5124 = vld [vmem:[%s8 + $0x9c] sm:$0xff]
  %v5125 = vld [vmem:[%s8 + $0xa4] sm:$0xf]
  %v5126 = vld [vmem:[%s8 + $0xa8] sm:$0xff]
  %v5127 = vld [vmem:[%s8 + $0xb0] sm:$0xf]
  %v5128 = vld [vmem:[%s8 + $0xb4] sm:$0xff]
  %v5129 = vld [vmem:[%s8 + $0xbc] sm:$0xf]
  %v5130 = vld [vmem:[%s8 + $0xc0] sm:$0xff]
  %v5131 = vld [vmem:[%s8 + $0xc8] sm:$0xf]
  %v5132 = vld [vmem:[%s8 + $0xcc] sm:$0xff]
  %v5133 = vld [vmem:[%s8 + $0xd4] sm:$0xf]
  %v5134 = vld [vmem:[%s8 + $0xd8] sm:$0xff]
  %v5135 = vld [vmem:[%s8 + $0xe0] sm:$0xf]
  %v5136 = vld [vmem:[%s8 + $0xe4] sm:$0xff]
  %v5137 = vld [vmem:[%s8 + $0xec] sm:$0xf]
  %v5138 = vld [vmem:[%s8 + $0xf0] sm:$0xff]
  %v5139 = vld [vmem:[%s8 + $0xf8] sm:$0xf]
  %v5140 = vld [vmem:[%s8 + $0xfc] sm:$0xff]
  %v5141 = vld [vmem:[%s8 + $0x104] sm:$0xf]
  %v5142 = vld [vmem:[%s8 + $0x108] sm:$0xff]
  %v5143 = vld [vmem:[%s8 + $0x110] sm:$0xf]
  %v5144 = vld [vmem:[%s8 + $0x114] sm:$0xff]
  %v5145 = vld [vmem:[%s8 + $0x11c] sm:$0xf]
  %v5146 = vld [vmem:[%s9] sm:$0x7]
  %v5148 = vperm.slane %v5146, 0
  %v5149 = vperm.slane %v5146, 1
  %v5150 = vperm.slane %v5146, 2
  %5155 = vst [vmem:[#allocation1] ss:$9 sm:$0xff] %v5097
  %v5156 = vld [vmem:[#allocation1] sm:$0xff]
  %v5157 = vld [vmem:[#allocation1 + $0x9] sm:$0xff]
  %v5207 = vunpack.c.l.b16 %v5098
  %v5208 = vunpack.c.h.b16 %v5098
  %v5209 = vunpack.c.l.b16 %v5099
  %v5210 = vunpack.c.l.b16 %v5100
  %v5211 = vunpack.c.h.b16 %v5100
  %v5212 = vunpack.c.l.b16 %v5101
  %v5213 = vunpack.c.l.b16 %v5102
  %v5214 = vunpack.c.h.b16 %v5102
  %v5215 = vunpack.c.l.b16 %v5103
  %v5216 = vunpack.c.l.b16 %v5104
  %v5217 = vunpack.c.h.b16 %v5104
  %v5218 = vunpack.c.l.b16 %v5105
  %v5219 = vunpack.c.l.b16 %v5106
  %v5220 = vunpack.c.h.b16 %v5106
  %v5221 = vunpack.c.l.b16 %v5107
  %v5222 = vunpack.c.l.b16 %v5108
  %v5223 = vunpack.c.h.b16 %v5108
  %v5224 = vunpack.c.l.b16 %v5109
  %v5225 = vunpack.c.l.b16 %v5110
  %v5226 = vunpack.c.h.b16 %v5110
  %v5227 = vunpack.c.l.b16 %v5111
  %v5228 = vunpack.c.l.b16 %v5112
  %v5229 = vunpack.c.h.b16 %v5112
  %v5230 = vunpack.c.l.b16 %v5113
  %v5231 = vunpack.c.l.b16 %v5114
  %v5232 = vunpack.c.h.b16 %v5114
  %v5233 = vunpack.c.l.b16 %v5115
  %v5234 = vunpack.c.l.b16 %v5116
  %v5235 = vunpack.c.h.b16 %v5116
  %v5236 = vunpack.c.l.b16 %v5117
  %v5237 = vunpack.c.l.b16 %v5118
  %v5238 = vunpack.c.h.b16 %v5118
  %v5239 = vunpack.c.l.b16 %v5119
  %v5240 = vunpack.c.l.b16 %v5120
  %v5241 = vunpack.c.h.b16 %v5120
  %v5242 = vunpack.c.l.b16 %v5121
  %v5243 = vunpack.c.l.b16 %v5122
  %v5244 = vunpack.c.h.b16 %v5122
  %v5245 = vunpack.c.l.b16 %v5123
  %v5246 = vunpack.c.l.b16 %v5124
  %v5247 = vunpack.c.h.b16 %v5124
  %v5248 = vunpack.c.l.b16 %v5125
  %v5249 = vunpack.c.l.b16 %v5126
  %v5250 = vunpack.c.h.b16 %v5126
  %v5251 = vunpack.c.l.b16 %v5127
  %v5252 = vunpack.c.l.b16 %v5128
  %v5253 = vunpack.c.h.b16 %v5128
  %v5254 = vunpack.c.l.b16 %v5129
  %v5255 = vunpack.c.l.b16 %v5130
  %v5256 = vunpack.c.h.b16 %v5130
  %v5257 = vunpack.c.l.b16 %v5131
  %v5258 = vunpack.c.l.b16 %v5132
  %v5259 = vunpack.c.h.b16 %v5132
  %v5260 = vunpack.c.l.b16 %v5133
  %v5261 = vunpack.c.l.b16 %v5134
  %v5262 = vunpack.c.h.b16 %v5134
  %v5263 = vunpack.c.l.b16 %v5135
  %v5264 = vunpack.c.l.b16 %v5136
  %v5265 = vunpack.c.h.b16 %v5136
  %v5266 = vunpack.c.l.b16 %v5137
  %v5267 = vunpack.c.l.b16 %v5138
  %v5268 = vunpack.c.h.b16 %v5138
  %v5269 = vunpack.c.l.b16 %v5139
  %v5270 = vunpack.c.l.b16 %v5140
  %v5271 = vunpack.c.h.b16 %v5140
  %v5272 = vunpack.c.l.b16 %v5141
  %v5273 = vunpack.c.l.b16 %v5142
  %v5274 = vunpack.c.h.b16 %v5142
  %v5275 = vunpack.c.l.b16 %v5143
  %v5276 = vunpack.c.l.b16 %v5144
  %v5277 = vunpack.c.h.b16 %v5144
  %v5278 = vunpack.c.l.b16 %v5145
  %v5279 = vpack.c.b16 %v5210, %v5207
  %v5280 = vpack.c.b16 %v5211, %v5208
  %v5281 = vpack.c.b16 %v5212, %v5209
  %v5282 = vpack.c.b16 %v5216, %v5213
  %v5283 = vpack.c.b16 %v5217, %v5214
  %v5284 = vpack.c.b16 %v5218, %v5215
  %v5285 = vpack.c.b16 %v5222, %v5219
  %v5286 = vpack.c.b16 %v5223, %v5220
  %v5287 = vpack.c.b16 %v5224, %v5221
  %v5288 = vpack.c.b16 %v5228, %v5225
  %v5289 = vpack.c.b16 %v5229, %v5226
  %v5290 = vpack.c.b16 %v5230, %v5227
  %v5291 = vpack.c.b16 %v5234, %v5231
  %v5292 = vpack.c.b16 %v5235, %v5232
  %v5293 = vpack.c.b16 %v5236, %v5233
  %v5294 = vpack.c.b16 %v5240, %v5237
  %v5295 = vpack.c.b16 %v5241, %v5238
  %v5296 = vpack.c.b16 %v5242, %v5239
  %v5297 = vpack.c.b16 %v5246, %v5243
  %v5298 = vpack.c.b16 %v5247, %v5244
  %v5299 = vpack.c.b16 %v5248, %v5245
  %v5300 = vpack.c.b16 %v5252, %v5249
  %v5301 = vpack.c.b16 %v5253, %v5250
  %v5302 = vpack.c.b16 %v5254, %v5251
  %v5303 = vpack.c.b16 %v5258, %v5255
  %v5304 = vpack.c.b16 %v5259, %v5256
  %v5305 = vpack.c.b16 %v5260, %v5257
  %v5306 = vpack.c.b16 %v5264, %v5261
  %v5307 = vpack.c.b16 %v5265, %v5262
  %v5308 = vpack.c.b16 %v5266, %v5263
  %v5309 = vpack.c.b16 %v5270, %v5267
  %v5310 = vpack.c.b16 %v5271, %v5268
  %v5311 = vpack.c.b16 %v5272, %v5269
  %v5312 = vpack.c.b16 %v5276, %v5273
  %v5313 = vpack.c.b16 %v5277, %v5274
  %v5314 = vpack.c.b16 %v5278, %v5275
  %v5351 = vsel %vm4392, %v5157, 0
  %5353 = vmatpush.bf16.msra.mxu0 %v5300
  %5354 = vmatpush.bf16.msra.mxu0 %v5297
  %5355 = vmatpush.bf16.msra.mxu0 %v5294
  %5356 = vmatpush.bf16.msra.mxu0 %v5291
  %5357 = vmatpush.bf16.msra.mxu0 %v5288
  %5358 = vmatpush.bf16.msra.mxu0 %v5285
  %5359 = vmatpush.bf16.msra.mxu0 %v5282
  %5360 = vmatpush.bf16.msra.mxu0 %v5279
  %5361 = vmatmul.bf16.gmra.mxu0 %v5156
  %v5362 = vpop.f32.mrf.mxu0
  %v5363 = vadd.f32 %v5148, %v5362
  %v5364 = vpop.f32.mrf.mxu0
  %5365 = vdwg.mxu0
  %5366 = vmatpush.bf16.msra.mxu0 0
  %5367 = vmatpush.bf16.msra.mxu0 0
  %5368 = vmatpush.bf16.msra.mxu0 0
  %5369 = vmatpush.bf16.msra.mxu0 0
  %5370 = vmatpush.bf16.msra.mxu0 %v5312
  %5371 = vmatpush.bf16.msra.mxu0 %v5309
  %5372 = vmatpush.bf16.msra.mxu0 %v5306
  %5373 = vmatpush.bf16.msra.mxu0 %v5303
  %5374 = vmatmul.bf16.gmra.mxu0 %v5351
  %v5375 = vpop.f32.mrf.mxu0
  %v5376 = vadd.f32 %v5363, %v5375
  %v5377 = vpop.f32.mrf.mxu0
  %5378 = vdwg.mxu0
  %5379 = vmatpush.bf16.msra.mxu0 %v5301
  %5380 = vmatpush.bf16.msra.mxu0 %v5298
  %5381 = vmatpush.bf16.msra.mxu0 %v5295
  %5382 = vmatpush.bf16.msra.mxu0 %v5292
  %5383 = vmatpush.bf16.msra.mxu0 %v5289
  %5384 = vmatpush.bf16.msra.mxu0 %v5286
  %5385 = vmatpush.bf16.msra.mxu0 %v5283
  %5386 = vmatpush.bf16.msra.mxu0 %v5280
  %5387 = vmatmul.bf16.gmra.mxu0 %v5156
  %v5388 = vpop.f32.mrf.mxu0
  %v5389 = vadd.f32 %v5149, %v5388
  %v5390 = vpop.f32.mrf.mxu0
  %5391 = vdwg.mxu0
  %5392 = vmatpush.bf16.msra.mxu0 0
  %5393 = vmatpush.bf16.msra.mxu0 0
  %5394 = vmatpush.bf16.msra.mxu0 0
  %5395 = vmatpush.bf16.msra.mxu0 0
  %5396 = vmatpush.bf16.msra.mxu0 %v5313
  %5397 = vmatpush.bf16.msra.mxu0 %v5310
  %5398 = vmatpush.bf16.msra.mxu0 %v5307
  %5399 = vmatpush.bf16.msra.mxu0 %v5304
  %5400 = vmatmul.bf16.gmra.mxu0 %v5351
  %v5401 = vpop.f32.mrf.mxu0
  %v5402 = vadd.f32 %v5389, %v5401
  %v5403 = vpop.f32.mrf.mxu0
  %5404 = vdwg.mxu0
  %5405 = vmatpush.bf16.msra.mxu0 %v5302
  %5406 = vmatpush.bf16.msra.mxu0 %v5299
  %5407 = vmatpush.bf16.msra.mxu0 %v5296
  %5408 = vmatpush.bf16.msra.mxu0 %v5293
  %5409 = vmatpush.bf16.msra.mxu0 %v5290
  %5410 = vmatpush.bf16.msra.mxu0 %v5287
  %5411 = vmatpush.bf16.msra.mxu0 %v5284
  %5412 = vmatpush.bf16.msra.mxu0 %v5281
  %5413 = vmatmul.bf16.gmra.mxu0 %v5156
  %v5414 = vpop.f32.mrf.mxu0
  %v5415 = vadd.f32 %v5150, %v5414
  %v5416 = vpop.f32.mrf.mxu0
  %5417 = vdwg.mxu0
  %5418 = vmatpush.bf16.msra.mxu0 0
  %5419 = vmatpush.bf16.msra.mxu0 0
  %5420 = vmatpush.bf16.msra.mxu0 0
  %5421 = vmatpush.bf16.msra.mxu0 0
  %5422 = vmatpush.bf16.msra.mxu0 %v5314
  %5423 = vmatpush.bf16.msra.mxu0 %v5311
  %5424 = vmatpush.bf16.msra.mxu0 %v5308
  %5425 = vmatpush.bf16.msra.mxu0 %v5305
  %5426 = vmatmul.bf16.gmra.mxu0 %v5351
  %v5427 = vpop.f32.mrf.mxu0
  %v5428 = vadd.f32 %v5415, %v5427
  %v5429 = vpop.f32.mrf.mxu0
  %5430 = vdwg.mxu0
  %v5431 = vpack.c.bf16 %v5402, %v5376
  %v5432 = vpack.c.bf16 %v5428, %v5428
  %v5433 = vld [vmem:[%s20] sm:$0xff]
  %v5434 = vld [vmem:[%s20 + $0x8] sm:$0xff]
  %v5435 = vld [vmem:[%s20 + $0x10] sm:$0xff]
  %v5436 = vld [vmem:[%s20 + $0x18] sm:$0xff]
  %v5437 = vld [vmem:[%s20 + $0x20] sm:$0xff]
  %v5438 = vld [vmem:[%s20 + $0x28] sm:$0xff]
  %v5439 = vld [vmem:[%s20 + $0x30] sm:$0xff]
  %v5440 = vld [vmem:[%s20 + $0x38] sm:$0xff]
  %v5441 = vld [vmem:[%s20 + $0x40] sm:$0xff]
  %v5442 = vld [vmem:[%s20 + $0x48] sm:$0xff]
  %v5443 = vld [vmem:[%s20 + $0x50] sm:$0xff]
  %v5444 = vld [vmem:[%s20 + $0x58] sm:$0xff]
  %v5445 = vld [vmem:[%s20 + $0x60] sm:$0xff]
  %v5446 = vld [vmem:[%s20 + $0x68] sm:$0xff]
  %v5447 = vld [vmem:[%s20 + $0x70] sm:$0xff]
  %v5448 = vld [vmem:[%s20 + $0x78] sm:$0xff]
  %v5449 = vld [vmem:[%s20 + $0x80] sm:$0xff]
  %v5450 = vld [vmem:[%s20 + $0x88] sm:$0xff]
  %v5451 = vld [vmem:[%s20 + $0x90] sm:$0xff]
  %v5452 = vld [vmem:[%s20 + $0x98] sm:$0xff]
  %v5453 = vld [vmem:[%s20 + $0xa0] sm:$0xff]
  %v5454 = vld [vmem:[%s20 + $0xa8] sm:$0xff]
  %v5455 = vld [vmem:[%s20 + $0xb0] sm:$0xff]
  %v5456 = vld [vmem:[%s20 + $0xb8] sm:$0xff]
  %v5457 = vld [vmem:[%s20 + $0xc0] sm:$0xff]
  %v5458 = vld [vmem:[%s20 + $0xc8] sm:$0xff]
  %v5459 = vld [vmem:[%s20 + $0xd0] sm:$0xff]
  %v5460 = vld [vmem:[%s20 + $0xd8] sm:$0xff]
  %v5461 = vld [vmem:[%s20 + $0xe0] sm:$0xff]
  %v5462 = vld [vmem:[%s20 + $0xe8] sm:$0xff]
  %v5463 = vld [vmem:[%s20 + $0xf0] sm:$0xff]
  %v5464 = vld [vmem:[%s20 + $0xf8] sm:$0xff]
  %v5465 = vld [vmem:[%s20 + $0x100] sm:$0xff]
  %v5466 = vld [vmem:[%s20 + $0x108] sm:$0xff]
  %v5467 = vld [vmem:[%s20 + $0x110] sm:$0xff]
  %v5468 = vld [vmem:[%s20 + $0x118] sm:$0xff]
  %v5469 = vld [vmem:[%s20 + $0x120] sm:$0xff]
  %v5470 = vld [vmem:[%s20 + $0x128] sm:$0xff]
  %v5471 = vld [vmem:[%s20 + $0x130] sm:$0xff]
  %v5472 = vld [vmem:[%s20 + $0x138] sm:$0xff]
  %v5473 = vld [vmem:[%s20 + $0x140] sm:$0xff]
  %v5474 = vld [vmem:[%s20 + $0x148] sm:$0xff]
  %v5475 = vld [vmem:[%s20 + $0x150] sm:$0xff]
  %v5476 = vld [vmem:[%s20 + $0x158] sm:$0xff]
  %v5477 = vld [vmem:[%s20 + $0x160] sm:$0xff]
  %v5478 = vld [vmem:[%s20 + $0x168] sm:$0xff]
  %v5479 = vld [vmem:[%s20 + $0x170] sm:$0xff]
  %v5480 = vld [vmem:[%s20 + $0x178] sm:$0xff]
  %v5481 = vld [vmem:[%s20 + $0x180] sm:$0xff]
  %v5482 = vld [vmem:[%s20 + $0x188] sm:$0xff]
  %v5483 = vld [vmem:[%s20 + $0x190] sm:$0xff]
  %v5484 = vld [vmem:[%s20 + $0x198] sm:$0xff]
  %v5485 = vld [vmem:[%s20 + $0x1a0] sm:$0xff]
  %v5486 = vld [vmem:[%s20 + $0x1a8] sm:$0xff]
  %v5487 = vld [vmem:[%s20 + $0x1b0] sm:$0xff]
  %v5488 = vld [vmem:[%s20 + $0x1b8] sm:$0xff]
  %v5489 = vld [vmem:[%s20 + $0x1c0] sm:$0xff]
  %v5490 = vld [vmem:[%s20 + $0x1c8] sm:$0xff]
  %v5491 = vld [vmem:[%s20 + $0x1d0] sm:$0xff]
  %v5492 = vld [vmem:[%s20 + $0x1d8] sm:$0xff]
  %v5493 = vld [vmem:[%s20 + $0x1e0] sm:$0xff]
  %v5494 = vld [vmem:[%s20 + $0x1e8] sm:$0xff]
  %v5495 = vld [vmem:[%s20 + $0x1f0] sm:$0xff]
  %v5496 = vld [vmem:[%s20 + $0x1f8] sm:$0xff]
  %v5497 = vld [vmem:[%s21] sm:$0xff]
  %v5498 = vld [vmem:[%s21 + $0x8] sm:$0xff]
  %v5499 = vld [vmem:[%s21 + $0x10] sm:$0xff]
  %v5500 = vld [vmem:[%s21 + $0x18] sm:$0xff]
  %v5501 = vld [vmem:[%s21 + $0x20] sm:$0xff]
  %v5502 = vld [vmem:[%s21 + $0x28] sm:$0xff]
  %v5503 = vld [vmem:[%s21 + $0x30] sm:$0xff]
  %v5504 = vld [vmem:[%s21 + $0x38] sm:$0xff]
  %v5505 = vld [vmem:[%s21 + $0x40] sm:$0xff]
  %v5506 = vld [vmem:[%s21 + $0x48] sm:$0xff]
  %v5507 = vld [vmem:[%s21 + $0x50] sm:$0xff]
  %v5508 = vld [vmem:[%s21 + $0x58] sm:$0xff]
  %v5509 = vld [vmem:[%s21 + $0x60] sm:$0xff]
  %v5510 = vld [vmem:[%s21 + $0x68] sm:$0xff]
  %v5511 = vld [vmem:[%s21 + $0x70] sm:$0xff]
  %v5512 = vld [vmem:[%s21 + $0x78] sm:$0xff]
  %v5513 = vld [vmem:[%s21 + $0x80] sm:$0xff]
  %v5514 = vld [vmem:[%s21 + $0x88] sm:$0xff]
  %v5515 = vld [vmem:[%s21 + $0x90] sm:$0xff]
  %v5516 = vld [vmem:[%s21 + $0x98] sm:$0xff]
  %v5517 = vld [vmem:[%s21 + $0xa0] sm:$0xff]
  %v5518 = vld [vmem:[%s21 + $0xa8] sm:$0xff]
  %v5519 = vld [vmem:[%s21 + $0xb0] sm:$0xff]
  %v5520 = vld [vmem:[%s21 + $0xb8] sm:$0xff]
  %v5521 = vld [vmem:[%s21 + $0xc0] sm:$0xff]
  %v5522 = vld [vmem:[%s21 + $0xc8] sm:$0xff]
  %v5523 = vld [vmem:[%s21 + $0xd0] sm:$0xff]
  %v5524 = vld [vmem:[%s21 + $0xd8] sm:$0xff]
  %v5525 = vld [vmem:[%s21 + $0xe0] sm:$0xff]
  %v5526 = vld [vmem:[%s21 + $0xe8] sm:$0xff]
  %v5527 = vld [vmem:[%s21 + $0xf0] sm:$0xff]
  %v5528 = vld [vmem:[%s21 + $0xf8] sm:$0xff]
  %s5529 = scalar_lea.vmem %s2, 2
  %v5530 = vld [vmem:[%s5529] sm:$0x3]
  %5532 = vst [vmem:[#allocation1] ss:$9 sm:$0xff] %v5530
  %v5533 = vld [vmem:[#allocation1] sm:$0xff]
  %v5534 = vld [vmem:[#allocation1 + $0x9] sm:$0xff]
  %v5536 = vsel %vm4392, %v5534, 0
  %5538 = vmatpush.bf16.msra.mxu0 %v5300
  %5539 = vmatpush.bf16.msra.mxu0 %v5297
  %5540 = vmatpush.bf16.msra.mxu0 %v5294
  %5541 = vmatpush.bf16.msra.mxu0 %v5291
  %5542 = vmatpush.bf16.msra.mxu0 %v5288
  %5543 = vmatpush.bf16.msra.mxu0 %v5285
  %5544 = vmatpush.bf16.msra.mxu0 %v5282
  %5545 = vmatpush.bf16.msra.mxu0 %v5279
  %5546 = vmatmul.bf16.gmra.mxu0 %v5533
  %v5547 = vpop.f32.mrf.mxu0
  %v5548 = vadd.f32 %v5148, %v5547
  %v5549 = vpop.f32.mrf.mxu0
  %5550 = vdwg.mxu0
  %5551 = vmatpush.bf16.msra.mxu0 0
  %5552 = vmatpush.bf16.msra.mxu0 0
  %5553 = vmatpush.bf16.msra.mxu0 0
  %5554 = vmatpush.bf16.msra.mxu0 0
  %5555 = vmatpush.bf16.msra.mxu0 %v5312
  %5556 = vmatpush.bf16.msra.mxu0 %v5309
  %5557 = vmatpush.bf16.msra.mxu0 %v5306
  %5558 = vmatpush.bf16.msra.mxu0 %v5303
  %5559 = vmatmul.bf16.gmra.mxu0 %v5536
  %v5560 = vpop.f32.mrf.mxu0
  %v5561 = vadd.f32 %v5548, %v5560
  %v5562 = vpop.f32.mrf.mxu0
  %5563 = vdwg.mxu0
  %5564 = vmatpush.bf16.msra.mxu0 %v5301
  %5565 = vmatpush.bf16.msra.mxu0 %v5298
  %5566 = vmatpush.bf16.msra.mxu0 %v5295
  %5567 = vmatpush.bf16.msra.mxu0 %v5292
  %5568 = vmatpush.bf16.msra.mxu0 %v5289
  %5569 = vmatpush.bf16.msra.mxu0 %v5286
  %5570 = vmatpush.bf16.msra.mxu0 %v5283
  %5571 = vmatpush.bf16.msra.mxu0 %v5280
  %5572 = vmatmul.bf16.gmra.mxu0 %v5533
  %v5573 = vpop.f32.mrf.mxu0
  %v5574 = vadd.f32 %v5149, %v5573
  %v5575 = vpop.f32.mrf.mxu0
  %5576 = vdwg.mxu0
  %5577 = vmatpush.bf16.msra.mxu0 0
  %5578 = vmatpush.bf16.msra.mxu0 0
  %5579 = vmatpush.bf16.msra.mxu0 0
  %5580 = vmatpush.bf16.msra.mxu0 0
  %5581 = vmatpush.bf16.msra.mxu0 %v5313
  %5582 = vmatpush.bf16.msra.mxu0 %v5310
  %5583 = vmatpush.bf16.msra.mxu0 %v5307
  %5584 = vmatpush.bf16.msra.mxu0 %v5304
  %5585 = vmatmul.bf16.gmra.mxu0 %v5536
  %v5586 = vpop.f32.mrf.mxu0
  %v5587 = vadd.f32 %v5574, %v5586
  %v5588 = vpop.f32.mrf.mxu0
  %5589 = vdwg.mxu0
  %5590 = vmatpush.bf16.msra.mxu0 %v5302
  %5591 = vmatpush.bf16.msra.mxu0 %v5299
  %5592 = vmatpush.bf16.msra.mxu0 %v5296
  %5593 = vmatpush.bf16.msra.mxu0 %v5293
  %5594 = vmatpush.bf16.msra.mxu0 %v5290
  %5595 = vmatpush.bf16.msra.mxu0 %v5287
  %5596 = vmatpush.bf16.msra.mxu0 %v5284
  %5597 = vmatpush.bf16.msra.mxu0 %v5281
  %5598 = vmatmul.bf16.gmra.mxu0 %v5533
  %v5599 = vpop.f32.mrf.mxu0
  %v5600 = vadd.f32 %v5150, %v5599
  %v5601 = vpop.f32.mrf.mxu0
  %5602 = vdwg.mxu0
  %5603 = vmatpush.bf16.msra.mxu0 0
  %5604 = vmatpush.bf16.msra.mxu0 0
  %5605 = vmatpush.bf16.msra.mxu0 0
  %5606 = vmatpush.bf16.msra.mxu0 0
  %5607 = vmatpush.bf16.msra.mxu0 %v5314
  %5608 = vmatpush.bf16.msra.mxu0 %v5311
  %5609 = vmatpush.bf16.msra.mxu0 %v5308
  %5610 = vmatpush.bf16.msra.mxu0 %v5305
  %5611 = vmatmul.bf16.gmra.mxu0 %v5536
  %v5612 = vpop.f32.mrf.mxu0
  %v5613 = vadd.f32 %v5600, %v5612
  %v5614 = vpop.f32.mrf.mxu0
  %5615 = vdwg.mxu0
  %v5616 = vpack.c.bf16 %v5587, %v5561
  %v5617 = vpack.c.bf16 %v5613, %v5613
  %s5618 = scalar_lea.vmem %s20, 512
  %v5619 = vld [vmem:[%s5618] sm:$0xff]
  %v5620 = vld [vmem:[%s5618 + $0x8] sm:$0xff]
  %v5621 = vld [vmem:[%s5618 + $0x10] sm:$0xff]
  %v5622 = vld [vmem:[%s5618 + $0x18] sm:$0xff]
  %v5623 = vld [vmem:[%s5618 + $0x20] sm:$0xff]
  %v5624 = vld [vmem:[%s5618 + $0x28] sm:$0xff]
  %v5625 = vld [vmem:[%s5618 + $0x30] sm:$0xff]
  %v5626 = vld [vmem:[%s5618 + $0x38] sm:$0xff]
  %v5627 = vld [vmem:[%s5618 + $0x40] sm:$0xff]
  %v5628 = vld [vmem:[%s5618 + $0x48] sm:$0xff]
  %v5629 = vld [vmem:[%s5618 + $0x50] sm:$0xff]
  %v5630 = vld [vmem:[%s5618 + $0x58] sm:$0xff]
  %v5631 = vld [vmem:[%s5618 + $0x60] sm:$0xff]
  %v5632 = vld [vmem:[%s5618 + $0x68] sm:$0xff]
  %v5633 = vld [vmem:[%s5618 + $0x70] sm:$0xff]
  %v5634 = vld [vmem:[%s5618 + $0x78] sm:$0xff]
  %v5635 = vld [vmem:[%s5618 + $0x80] sm:$0xff]
  %v5636 = vld [vmem:[%s5618 + $0x88] sm:$0xff]
  %v5637 = vld [vmem:[%s5618 + $0x90] sm:$0xff]
  %v5638 = vld [vmem:[%s5618 + $0x98] sm:$0xff]
  %v5639 = vld [vmem:[%s5618 + $0xa0] sm:$0xff]
  %v5640 = vld [vmem:[%s5618 + $0xa8] sm:$0xff]
  %v5641 = vld [vmem:[%s5618 + $0xb0] sm:$0xff]
  %v5642 = vld [vmem:[%s5618 + $0xb8] sm:$0xff]
  %v5643 = vld [vmem:[%s5618 + $0xc0] sm:$0xff]
  %v5644 = vld [vmem:[%s5618 + $0xc8] sm:$0xff]
  %v5645 = vld [vmem:[%s5618 + $0xd0] sm:$0xff]
  %v5646 = vld [vmem:[%s5618 + $0xd8] sm:$0xff]
  %v5647 = vld [vmem:[%s5618 + $0xe0] sm:$0xff]
  %v5648 = vld [vmem:[%s5618 + $0xe8] sm:$0xff]
  %v5649 = vld [vmem:[%s5618 + $0xf0] sm:$0xff]
  %v5650 = vld [vmem:[%s5618 + $0xf8] sm:$0xff]
  %v5651 = vld [vmem:[%s5618 + $0x100] sm:$0xff]
  %v5652 = vld [vmem:[%s5618 + $0x108] sm:$0xff]
  %v5653 = vld [vmem:[%s5618 + $0x110] sm:$0xff]
  %v5654 = vld [vmem:[%s5618 + $0x118] sm:$0xff]
  %v5655 = vld [vmem:[%s5618 + $0x120] sm:$0xff]
  %v5656 = vld [vmem:[%s5618 + $0x128] sm:$0xff]
  %v5657 = vld [vmem:[%s5618 + $0x130] sm:$0xff]
  %v5658 = vld [vmem:[%s5618 + $0x138] sm:$0xff]
  %v5659 = vld [vmem:[%s5618 + $0x140] sm:$0xff]
  %v5660 = vld [vmem:[%s5618 + $0x148] sm:$0xff]
  %v5661 = vld [vmem:[%s5618 + $0x150] sm:$0xff]
  %v5662 = vld [vmem:[%s5618 + $0x158] sm:$0xff]
  %v5663 = vld [vmem:[%s5618 + $0x160] sm:$0xff]
  %v5664 = vld [vmem:[%s5618 + $0x168] sm:$0xff]
  %v5665 = vld [vmem:[%s5618 + $0x170] sm:$0xff]
  %v5666 = vld [vmem:[%s5618 + $0x178] sm:$0xff]
  %v5667 = vld [vmem:[%s5618 + $0x180] sm:$0xff]
  %v5668 = vld [vmem:[%s5618 + $0x188] sm:$0xff]
  %v5669 = vld [vmem:[%s5618 + $0x190] sm:$0xff]
  %v5670 = vld [vmem:[%s5618 + $0x198] sm:$0xff]
  %v5671 = vld [vmem:[%s5618 + $0x1a0] sm:$0xff]
  %v5672 = vld [vmem:[%s5618 + $0x1a8] sm:$0xff]
  %v5673 = vld [vmem:[%s5618 + $0x1b0] sm:$0xff]
  %v5674 = vld [vmem:[%s5618 + $0x1b8] sm:$0xff]
  %v5675 = vld [vmem:[%s5618 + $0x1c0] sm:$0xff]
  %v5676 = vld [vmem:[%s5618 + $0x1c8] sm:$0xff]
  %v5677 = vld [vmem:[%s5618 + $0x1d0] sm:$0xff]
  %v5678 = vld [vmem:[%s5618 + $0x1d8] sm:$0xff]
  %v5679 = vld [vmem:[%s5618 + $0x1e0] sm:$0xff]
  %v5680 = vld [vmem:[%s5618 + $0x1e8] sm:$0xff]
  %v5681 = vld [vmem:[%s5618 + $0x1f0] sm:$0xff]
  %v5682 = vld [vmem:[%s5618 + $0x1f8] sm:$0xff]
  %v5684 = vunpack.c.l.b16 %v5616
  %v5685 = vunpack.c.h.b16 %v5616
  %v5686 = vpack.c.b16 %v5684, %v5684
  %v5687 = vpack.c.b16 %v5685, %v5685
  %v5754 = vunpack.c.l.b16 %v5619
  %v5755 = vunpack.c.h.b16 %v5619
  %v5756 = vunpack.c.l.b16 %v5620
  %v5757 = vunpack.c.h.b16 %v5620
  %v5758 = vunpack.c.l.b16 %v5621
  %v5759 = vunpack.c.h.b16 %v5621
  %v5760 = vunpack.c.l.b16 %v5622
  %v5761 = vunpack.c.h.b16 %v5622
  %v5762 = vunpack.c.l.b16 %v5623
  %v5763 = vunpack.c.h.b16 %v5623
  %v5764 = vunpack.c.l.b16 %v5624
  %v5765 = vunpack.c.h.b16 %v5624
  %v5766 = vunpack.c.l.b16 %v5625
  %v5767 = vunpack.c.h.b16 %v5625
  %v5768 = vunpack.c.l.b16 %v5626
  %v5769 = vunpack.c.h.b16 %v5626
  %v5770 = vunpack.c.l.b16 %v5627
  %v5771 = vunpack.c.h.b16 %v5627
  %v5772 = vunpack.c.l.b16 %v5628
  %v5773 = vunpack.c.h.b16 %v5628
  %v5774 = vunpack.c.l.b16 %v5629
  %v5775 = vunpack.c.h.b16 %v5629
  %v5776 = vunpack.c.l.b16 %v5630
  %v5777 = vunpack.c.h.b16 %v5630
  %v5778 = vunpack.c.l.b16 %v5631
  %v5779 = vunpack.c.h.b16 %v5631
  %v5780 = vunpack.c.l.b16 %v5632
  %v5781 = vunpack.c.h.b16 %v5632
  %v5782 = vunpack.c.l.b16 %v5633
  %v5783 = vunpack.c.h.b16 %v5633
  %v5784 = vunpack.c.l.b16 %v5634
  %v5785 = vunpack.c.h.b16 %v5634
  %v5786 = vunpack.c.l.b16 %v5635
  %v5787 = vunpack.c.h.b16 %v5635
  %v5788 = vunpack.c.l.b16 %v5636
  %v5789 = vunpack.c.h.b16 %v5636
  %v5790 = vunpack.c.l.b16 %v5637
  %v5791 = vunpack.c.h.b16 %v5637
  %v5792 = vunpack.c.l.b16 %v5638
  %v5793 = vunpack.c.h.b16 %v5638
  %v5794 = vunpack.c.l.b16 %v5639
  %v5795 = vunpack.c.h.b16 %v5639
  %v5796 = vunpack.c.l.b16 %v5640
  %v5797 = vunpack.c.h.b16 %v5640
  %v5798 = vunpack.c.l.b16 %v5641
  %v5799 = vunpack.c.h.b16 %v5641
  %v5800 = vunpack.c.l.b16 %v5642
  %v5801 = vunpack.c.h.b16 %v5642
  %v5802 = vunpack.c.l.b16 %v5643
  %v5803 = vunpack.c.h.b16 %v5643
  %v5804 = vunpack.c.l.b16 %v5644
  %v5805 = vunpack.c.h.b16 %v5644
  %v5806 = vunpack.c.l.b16 %v5645
  %v5807 = vunpack.c.h.b16 %v5645
  %v5808 = vunpack.c.l.b16 %v5646
  %v5809 = vunpack.c.h.b16 %v5646
  %v5810 = vunpack.c.l.b16 %v5647
  %v5811 = vunpack.c.h.b16 %v5647
  %v5812 = vunpack.c.l.b16 %v5648
  %v5813 = vunpack.c.h.b16 %v5648
  %v5814 = vunpack.c.l.b16 %v5649
  %v5815 = vunpack.c.h.b16 %v5649
  %v5816 = vunpack.c.l.b16 %v5650
  %v5817 = vunpack.c.h.b16 %v5650
  %v5818 = vunpack.c.l.b16 %v5651
  %v5819 = vunpack.c.h.b16 %v5651
  %v5820 = vunpack.c.l.b16 %v5652
  %v5821 = vunpack.c.h.b16 %v5652
  %v5822 = vunpack.c.l.b16 %v5653
  %v5823 = vunpack.c.h.b16 %v5653
  %v5824 = vunpack.c.l.b16 %v5654
  %v5825 = vunpack.c.h.b16 %v5654
  %v5826 = vunpack.c.l.b16 %v5655
  %v5827 = vunpack.c.h.b16 %v5655
  %v5828 = vunpack.c.l.b16 %v5656
  %v5829 = vunpack.c.h.b16 %v5656
  %v5830 = vunpack.c.l.b16 %v5657
  %v5831 = vunpack.c.h.b16 %v5657
  %v5832 = vunpack.c.l.b16 %v5658
  %v5833 = vunpack.c.h.b16 %v5658
  %v5834 = vunpack.c.l.b16 %v5659
  %v5835 = vunpack.c.h.b16 %v5659
  %v5836 = vunpack.c.l.b16 %v5660
  %v5837 = vunpack.c.h.b16 %v5660
  %v5838 = vunpack.c.l.b16 %v5661
  %v5839 = vunpack.c.h.b16 %v5661
  %v5840 = vunpack.c.l.b16 %v5662
  %v5841 = vunpack.c.h.b16 %v5662
  %v5842 = vunpack.c.l.b16 %v5663
  %v5843 = vunpack.c.h.b16 %v5663
  %v5844 = vunpack.c.l.b16 %v5664
  %v5845 = vunpack.c.h.b16 %v5664
  %v5846 = vunpack.c.l.b16 %v5665
  %v5847 = vunpack.c.h.b16 %v5665
  %v5848 = vunpack.c.l.b16 %v5666
  %v5849 = vunpack.c.h.b16 %v5666
  %v5850 = vunpack.c.l.b16 %v5667
  %v5851 = vunpack.c.h.b16 %v5667
  %v5852 = vunpack.c.l.b16 %v5668
  %v5853 = vunpack.c.h.b16 %v5668
  %v5854 = vunpack.c.l.b16 %v5669
  %v5855 = vunpack.c.h.b16 %v5669
  %v5856 = vunpack.c.l.b16 %v5670
  %v5857 = vunpack.c.h.b16 %v5670
  %v5858 = vunpack.c.l.b16 %v5671
  %v5859 = vunpack.c.h.b16 %v5671
  %v5860 = vunpack.c.l.b16 %v5672
  %v5861 = vunpack.c.h.b16 %v5672
  %v5862 = vunpack.c.l.b16 %v5673
  %v5863 = vunpack.c.h.b16 %v5673
  %v5864 = vunpack.c.l.b16 %v5674
  %v5865 = vunpack.c.h.b16 %v5674
  %v5866 = vunpack.c.l.b16 %v5675
  %v5867 = vunpack.c.h.b16 %v5675
  %v5868 = vunpack.c.l.b16 %v5676
  %v5869 = vunpack.c.h.b16 %v5676
  %v5870 = vunpack.c.l.b16 %v5677
  %v5871 = vunpack.c.h.b16 %v5677
  %v5872 = vunpack.c.l.b16 %v5678
  %v5873 = vunpack.c.h.b16 %v5678
  %v5874 = vunpack.c.l.b16 %v5679
  %v5875 = vunpack.c.h.b16 %v5679
  %v5876 = vunpack.c.l.b16 %v5680
  %v5877 = vunpack.c.h.b16 %v5680
  %v5878 = vunpack.c.l.b16 %v5681
  %v5879 = vunpack.c.h.b16 %v5681
  %v5880 = vunpack.c.l.b16 %v5682
  %v5881 = vunpack.c.h.b16 %v5682
  %v5882 = vpack.c.b16 %v5758, %v5754
  %v5883 = vpack.c.b16 %v5759, %v5755
  %v5884 = vpack.c.b16 %v5760, %v5756
  %v5885 = vpack.c.b16 %v5761, %v5757
  %v5886 = vpack.c.b16 %v5766, %v5762
  %v5887 = vpack.c.b16 %v5767, %v5763
  %v5888 = vpack.c.b16 %v5768, %v5764
  %v5889 = vpack.c.b16 %v5769, %v5765
  %v5890 = vpack.c.b16 %v5774, %v5770
  %v5891 = vpack.c.b16 %v5775, %v5771
  %v5892 = vpack.c.b16 %v5776, %v5772
  %v5893 = vpack.c.b16 %v5777, %v5773
  %v5894 = vpack.c.b16 %v5782, %v5778
  %v5895 = vpack.c.b16 %v5783, %v5779
  %v5896 = vpack.c.b16 %v5784, %v5780
  %v5897 = vpack.c.b16 %v5785, %v5781
  %v5898 = vpack.c.b16 %v5790, %v5786
  %v5899 = vpack.c.b16 %v5791, %v5787
  %v5900 = vpack.c.b16 %v5792, %v5788
  %v5901 = vpack.c.b16 %v5793, %v5789
  %v5902 = vpack.c.b16 %v5798, %v5794
  %v5903 = vpack.c.b16 %v5799, %v5795
  %v5904 = vpack.c.b16 %v5800, %v5796
  %v5905 = vpack.c.b16 %v5801, %v5797
  %v5906 = vpack.c.b16 %v5806, %v5802
  %v5907 = vpack.c.b16 %v5807, %v5803
  %v5908 = vpack.c.b16 %v5808, %v5804
  %v5909 = vpack.c.b16 %v5809, %v5805
  %v5910 = vpack.c.b16 %v5814, %v5810
  %v5911 = vpack.c.b16 %v5815, %v5811
  %v5912 = vpack.c.b16 %v5816, %v5812
  %v5913 = vpack.c.b16 %v5817, %v5813
  %v5914 = vpack.c.b16 %v5822, %v5818
  %v5915 = vpack.c.b16 %v5823, %v5819
  %v5916 = vpack.c.b16 %v5824, %v5820
  %v5917 = vpack.c.b16 %v5825, %v5821
  %v5918 = vpack.c.b16 %v5830, %v5826
  %v5919 = vpack.c.b16 %v5831, %v5827
  %v5920 = vpack.c.b16 %v5832, %v5828
  %v5921 = vpack.c.b16 %v5833, %v5829
  %v5922 = vpack.c.b16 %v5838, %v5834
  %v5923 = vpack.c.b16 %v5839, %v5835
  %v5924 = vpack.c.b16 %v5840, %v5836
  %v5925 = vpack.c.b16 %v5841, %v5837
  %v5926 = vpack.c.b16 %v5846, %v5842
  %v5927 = vpack.c.b16 %v5847, %v5843
  %v5928 = vpack.c.b16 %v5848, %v5844
  %v5929 = vpack.c.b16 %v5849, %v5845
  %v5930 = vpack.c.b16 %v5854, %v5850
  %v5931 = vpack.c.b16 %v5855, %v5851
  %v5932 = vpack.c.b16 %v5856, %v5852
  %v5933 = vpack.c.b16 %v5857, %v5853
  %v5934 = vpack.c.b16 %v5862, %v5858
  %v5935 = vpack.c.b16 %v5863, %v5859
  %v5936 = vpack.c.b16 %v5864, %v5860
  %v5937 = vpack.c.b16 %v5865, %v5861
  %v5938 = vpack.c.b16 %v5870, %v5866
  %v5939 = vpack.c.b16 %v5871, %v5867
  %v5940 = vpack.c.b16 %v5872, %v5868
  %v5941 = vpack.c.b16 %v5873, %v5869
  %v5942 = vpack.c.b16 %v5878, %v5874
  %v5943 = vpack.c.b16 %v5879, %v5875
  %v5944 = vpack.c.b16 %v5880, %v5876
  %v5945 = vpack.c.b16 %v5881, %v5877
  %6010 = vmatpush.bf16.msra.mxu0 %v5910
  %6011 = vmatpush.bf16.msra.mxu0 %v5906
  %6012 = vmatpush.bf16.msra.mxu0 %v5902
  %6013 = vmatpush.bf16.msra.mxu0 %v5898
  %6014 = vmatpush.bf16.msra.mxu0 %v5894
  %6015 = vmatpush.bf16.msra.mxu0 %v5890
  %6016 = vmatpush.bf16.msra.mxu0 %v5886
  %6017 = vmatpush.bf16.msra.mxu0 %v5882
  %6018 = vmatmul.bf16.gmra.mxu0 %v5686
  %v6019 = vpop.f32.mrf.mxu0
  %v6020 = vadd.f32 0.0, %v6019
  %v6021 = vpop.f32.mrf.mxu0
  %6022 = vdwg.mxu0
  %6023 = vmatpush.bf16.msra.mxu0 %v5942
  %6024 = vmatpush.bf16.msra.mxu0 %v5938
  %6025 = vmatpush.bf16.msra.mxu0 %v5934
  %6026 = vmatpush.bf16.msra.mxu0 %v5930
  %6027 = vmatpush.bf16.msra.mxu0 %v5926
  %6028 = vmatpush.bf16.msra.mxu0 %v5922
  %6029 = vmatpush.bf16.msra.mxu0 %v5918
  %6030 = vmatpush.bf16.msra.mxu0 %v5914
  %6031 = vmatmul.bf16.gmra.mxu0 %v5687
  %v6032 = vpop.f32.mrf.mxu0
  %v6033 = vadd.f32 %v6020, %v6032
  %v6034 = vpop.f32.mrf.mxu0
  %6035 = vdwg.mxu0
  %6036 = vmatpush.bf16.msra.mxu0 %v5911
  %6037 = vmatpush.bf16.msra.mxu0 %v5907
  %6038 = vmatpush.bf16.msra.mxu0 %v5903
  %6039 = vmatpush.bf16.msra.mxu0 %v5899
  %6040 = vmatpush.bf16.msra.mxu0 %v5895
  %6041 = vmatpush.bf16.msra.mxu0 %v5891
  %6042 = vmatpush.bf16.msra.mxu0 %v5887
  %6043 = vmatpush.bf16.msra.mxu0 %v5883
  %6044 = vmatmul.bf16.gmra.mxu0 %v5686
  %v6045 = vpop.f32.mrf.mxu0
  %v6046 = vadd.f32 0.0, %v6045
  %v6047 = vpop.f32.mrf.mxu0
  %6048 = vdwg.mxu0
  %6049 = vmatpush.bf16.msra.mxu0 %v5943
  %6050 = vmatpush.bf16.msra.mxu0 %v5939
  %6051 = vmatpush.bf16.msra.mxu0 %v5935
  %6052 = vmatpush.bf16.msra.mxu0 %v5931
  %6053 = vmatpush.bf16.msra.mxu0 %v5927
  %6054 = vmatpush.bf16.msra.mxu0 %v5923
  %6055 = vmatpush.bf16.msra.mxu0 %v5919
  %6056 = vmatpush.bf16.msra.mxu0 %v5915
  %6057 = vmatmul.bf16.gmra.mxu0 %v5687
  %v6058 = vpop.f32.mrf.mxu0
  %v6059 = vadd.f32 %v6046, %v6058
  %v6060 = vpop.f32.mrf.mxu0
  %6061 = vdwg.mxu0
  %6062 = vmatpush.bf16.msra.mxu0 %v5912
  %6063 = vmatpush.bf16.msra.mxu0 %v5908
  %6064 = vmatpush.bf16.msra.mxu0 %v5904
  %6065 = vmatpush.bf16.msra.mxu0 %v5900
  %6066 = vmatpush.bf16.msra.mxu0 %v5896
  %6067 = vmatpush.bf16.msra.mxu0 %v5892
  %6068 = vmatpush.bf16.msra.mxu0 %v5888
  %6069 = vmatpush.bf16.msra.mxu0 %v5884
  %6070 = vmatmul.bf16.gmra.mxu0 %v5686
  %v6071 = vpop.f32.mrf.mxu0
  %v6072 = vadd.f32 0.0, %v6071
  %v6073 = vpop.f32.mrf.mxu0
  %6074 = vdwg.mxu0
  %6075 = vmatpush.bf16.msra.mxu0 %v5944
  %6076 = vmatpush.bf16.msra.mxu0 %v5940
  %6077 = vmatpush.bf16.msra.mxu0 %v5936
  %6078 = vmatpush.bf16.msra.mxu0 %v5932
  %6079 = vmatpush.bf16.msra.mxu0 %v5928
  %6080 = vmatpush.bf16.msra.mxu0 %v5924
  %6081 = vmatpush.bf16.msra.mxu0 %v5920
  %6082 = vmatpush.bf16.msra.mxu0 %v5916
  %6083 = vmatmul.bf16.gmra.mxu0 %v5687
  %v6084 = vpop.f32.mrf.mxu0
  %v6085 = vadd.f32 %v6072, %v6084
  %v6086 = vpop.f32.mrf.mxu0
  %6087 = vdwg.mxu0
  %6088 = vmatpush.bf16.msra.mxu0 %v5913
  %6089 = vmatpush.bf16.msra.mxu0 %v5909
  %6090 = vmatpush.bf16.msra.mxu0 %v5905
  %6091 = vmatpush.bf16.msra.mxu0 %v5901
  %6092 = vmatpush.bf16.msra.mxu0 %v5897
  %6093 = vmatpush.bf16.msra.mxu0 %v5893
  %6094 = vmatpush.bf16.msra.mxu0 %v5889
  %6095 = vmatpush.bf16.msra.mxu0 %v5885
  %6096 = vmatmul.bf16.gmra.mxu0 %v5686
  %v6097 = vpop.f32.mrf.mxu0
  %v6098 = vadd.f32 0.0, %v6097
  %v6099 = vpop.f32.mrf.mxu0
  %6100 = vdwg.mxu0
  %6101 = vmatpush.bf16.msra.mxu0 %v5945
  %6102 = vmatpush.bf16.msra.mxu0 %v5941
  %6103 = vmatpush.bf16.msra.mxu0 %v5937
  %6104 = vmatpush.bf16.msra.mxu0 %v5933
  %6105 = vmatpush.bf16.msra.mxu0 %v5929
  %6106 = vmatpush.bf16.msra.mxu0 %v5925
  %6107 = vmatpush.bf16.msra.mxu0 %v5921
  %6108 = vmatpush.bf16.msra.mxu0 %v5917
  %6109 = vmatmul.bf16.gmra.mxu0 %v5687
  %v6110 = vpop.f32.mrf.mxu0
  %v6111 = vadd.f32 %v6098, %v6110
  %v6112 = vpop.f32.mrf.mxu0
  %6113 = vdwg.mxu0
  %v6115 = vunpack.c.l.b16 %v5431
  %v6116 = vunpack.c.h.b16 %v5431
  %v6117 = vpack.c.b16 %v6115, %v6115
  %v6118 = vpack.c.b16 %v6116, %v6116
  %v6185 = vunpack.c.l.b16 %v5433
  %v6186 = vunpack.c.h.b16 %v5433
  %v6187 = vunpack.c.l.b16 %v5434
  %v6188 = vunpack.c.h.b16 %v5434
  %v6189 = vunpack.c.l.b16 %v5435
  %v6190 = vunpack.c.h.b16 %v5435
  %v6191 = vunpack.c.l.b16 %v5436
  %v6192 = vunpack.c.h.b16 %v5436
  %v6193 = vunpack.c.l.b16 %v5437
  %v6194 = vunpack.c.h.b16 %v5437
  %v6195 = vunpack.c.l.b16 %v5438
  %v6196 = vunpack.c.h.b16 %v5438
  %v6197 = vunpack.c.l.b16 %v5439
  %v6198 = vunpack.c.h.b16 %v5439
  %v6199 = vunpack.c.l.b16 %v5440
  %v6200 = vunpack.c.h.b16 %v5440
  %v6201 = vunpack.c.l.b16 %v5441
  %v6202 = vunpack.c.h.b16 %v5441
  %v6203 = vunpack.c.l.b16 %v5442
  %v6204 = vunpack.c.h.b16 %v5442
  %v6205 = vunpack.c.l.b16 %v5443
  %v6206 = vunpack.c.h.b16 %v5443
  %v6207 = vunpack.c.l.b16 %v5444
  %v6208 = vunpack.c.h.b16 %v5444
  %v6209 = vunpack.c.l.b16 %v5445
  %v6210 = vunpack.c.h.b16 %v5445
  %v6211 = vunpack.c.l.b16 %v5446
  %v6212 = vunpack.c.h.b16 %v5446
  %v6213 = vunpack.c.l.b16 %v5447
  %v6214 = vunpack.c.h.b16 %v5447
  %v6215 = vunpack.c.l.b16 %v5448
  %v6216 = vunpack.c.h.b16 %v5448
  %v6217 = vunpack.c.l.b16 %v5449
  %v6218 = vunpack.c.h.b16 %v5449
  %v6219 = vunpack.c.l.b16 %v5450
  %v6220 = vunpack.c.h.b16 %v5450
  %v6221 = vunpack.c.l.b16 %v5451
  %v6222 = vunpack.c.h.b16 %v5451
  %v6223 = vunpack.c.l.b16 %v5452
  %v6224 = vunpack.c.h.b16 %v5452
  %v6225 = vunpack.c.l.b16 %v5453
  %v6226 = vunpack.c.h.b16 %v5453
  %v6227 = vunpack.c.l.b16 %v5454
  %v6228 = vunpack.c.h.b16 %v5454
  %v6229 = vunpack.c.l.b16 %v5455
  %v6230 = vunpack.c.h.b16 %v5455
  %v6231 = vunpack.c.l.b16 %v5456
  %v6232 = vunpack.c.h.b16 %v5456
  %v6233 = vunpack.c.l.b16 %v5457
  %v6234 = vunpack.c.h.b16 %v5457
  %v6235 = vunpack.c.l.b16 %v5458
  %v6236 = vunpack.c.h.b16 %v5458
  %v6237 = vunpack.c.l.b16 %v5459
  %v6238 = vunpack.c.h.b16 %v5459
  %v6239 = vunpack.c.l.b16 %v5460
  %v6240 = vunpack.c.h.b16 %v5460
  %v6241 = vunpack.c.l.b16 %v5461
  %v6242 = vunpack.c.h.b16 %v5461
  %v6243 = vunpack.c.l.b16 %v5462
  %v6244 = vunpack.c.h.b16 %v5462
  %v6245 = vunpack.c.l.b16 %v5463
  %v6246 = vunpack.c.h.b16 %v5463
  %v6247 = vunpack.c.l.b16 %v5464
  %v6248 = vunpack.c.h.b16 %v5464
  %v6249 = vunpack.c.l.b16 %v5465
  %v6250 = vunpack.c.h.b16 %v5465
  %v6251 = vunpack.c.l.b16 %v5466
  %v6252 = vunpack.c.h.b16 %v5466
  %v6253 = vunpack.c.l.b16 %v5467
  %v6254 = vunpack.c.h.b16 %v5467
  %v6255 = vunpack.c.l.b16 %v5468
  %v6256 = vunpack.c.h.b16 %v5468
  %v6257 = vunpack.c.l.b16 %v5469
  %v6258 = vunpack.c.h.b16 %v5469
  %v6259 = vunpack.c.l.b16 %v5470
  %v6260 = vunpack.c.h.b16 %v5470
  %v6261 = vunpack.c.l.b16 %v5471
  %v6262 = vunpack.c.h.b16 %v5471
  %v6263 = vunpack.c.l.b16 %v5472
  %v6264 = vunpack.c.h.b16 %v5472
  %v6265 = vunpack.c.l.b16 %v5473
  %v6266 = vunpack.c.h.b16 %v5473
  %v6267 = vunpack.c.l.b16 %v5474
  %v6268 = vunpack.c.h.b16 %v5474
  %v6269 = vunpack.c.l.b16 %v5475
  %v6270 = vunpack.c.h.b16 %v5475
  %v6271 = vunpack.c.l.b16 %v5476
  %v6272 = vunpack.c.h.b16 %v5476
  %v6273 = vunpack.c.l.b16 %v5477
  %v6274 = vunpack.c.h.b16 %v5477
  %v6275 = vunpack.c.l.b16 %v5478
  %v6276 = vunpack.c.h.b16 %v5478
  %v6277 = vunpack.c.l.b16 %v5479
  %v6278 = vunpack.c.h.b16 %v5479
  %v6279 = vunpack.c.l.b16 %v5480
  %v6280 = vunpack.c.h.b16 %v5480
  %v6281 = vunpack.c.l.b16 %v5481
  %v6282 = vunpack.c.h.b16 %v5481
  %v6283 = vunpack.c.l.b16 %v5482
  %v6284 = vunpack.c.h.b16 %v5482
  %v6285 = vunpack.c.l.b16 %v5483
  %v6286 = vunpack.c.h.b16 %v5483
  %v6287 = vunpack.c.l.b16 %v5484
  %v6288 = vunpack.c.h.b16 %v5484
  %v6289 = vunpack.c.l.b16 %v5485
  %v6290 = vunpack.c.h.b16 %v5485
  %v6291 = vunpack.c.l.b16 %v5486
  %v6292 = vunpack.c.h.b16 %v5486
  %v6293 = vunpack.c.l.b16 %v5487
  %v6294 = vunpack.c.h.b16 %v5487
  %v6295 = vunpack.c.l.b16 %v5488
  %v6296 = vunpack.c.h.b16 %v5488
  %v6297 = vunpack.c.l.b16 %v5489
  %v6298 = vunpack.c.h.b16 %v5489
  %v6299 = vunpack.c.l.b16 %v5490
  %v6300 = vunpack.c.h.b16 %v5490
  %v6301 = vunpack.c.l.b16 %v5491
  %v6302 = vunpack.c.h.b16 %v5491
  %v6303 = vunpack.c.l.b16 %v5492
  %v6304 = vunpack.c.h.b16 %v5492
  %v6305 = vunpack.c.l.b16 %v5493
  %v6306 = vunpack.c.h.b16 %v5493
  %v6307 = vunpack.c.l.b16 %v5494
  %v6308 = vunpack.c.h.b16 %v5494
  %v6309 = vunpack.c.l.b16 %v5495
  %v6310 = vunpack.c.h.b16 %v5495
  %v6311 = vunpack.c.l.b16 %v5496
  %v6312 = vunpack.c.h.b16 %v5496
  %v6313 = vpack.c.b16 %v6189, %v6185
  %v6314 = vpack.c.b16 %v6190, %v6186
  %v6315 = vpack.c.b16 %v6191, %v6187
  %v6316 = vpack.c.b16 %v6192, %v6188
  %v6317 = vpack.c.b16 %v6197, %v6193
  %v6318 = vpack.c.b16 %v6198, %v6194
  %v6319 = vpack.c.b16 %v6199, %v6195
  %v6320 = vpack.c.b16 %v6200, %v6196
  %v6321 = vpack.c.b16 %v6205, %v6201
  %v6322 = vpack.c.b16 %v6206, %v6202
  %v6323 = vpack.c.b16 %v6207, %v6203
  %v6324 = vpack.c.b16 %v6208, %v6204
  %v6325 = vpack.c.b16 %v6213, %v6209
  %v6326 = vpack.c.b16 %v6214, %v6210
  %v6327 = vpack.c.b16 %v6215, %v6211
  %v6328 = vpack.c.b16 %v6216, %v6212
  %v6329 = vpack.c.b16 %v6221, %v6217
  %v6330 = vpack.c.b16 %v6222, %v6218
  %v6331 = vpack.c.b16 %v6223, %v6219
  %v6332 = vpack.c.b16 %v6224, %v6220
  %v6333 = vpack.c.b16 %v6229, %v6225
  %v6334 = vpack.c.b16 %v6230, %v6226
  %v6335 = vpack.c.b16 %v6231, %v6227
  %v6336 = vpack.c.b16 %v6232, %v6228
  %v6337 = vpack.c.b16 %v6237, %v6233
  %v6338 = vpack.c.b16 %v6238, %v6234
  %v6339 = vpack.c.b16 %v6239, %v6235
  %v6340 = vpack.c.b16 %v6240, %v6236
  %v6341 = vpack.c.b16 %v6245, %v6241
  %v6342 = vpack.c.b16 %v6246, %v6242
  %v6343 = vpack.c.b16 %v6247, %v6243
  %v6344 = vpack.c.b16 %v6248, %v6244
  %v6345 = vpack.c.b16 %v6253, %v6249
  %v6346 = vpack.c.b16 %v6254, %v6250
  %v6347 = vpack.c.b16 %v6255, %v6251
  %v6348 = vpack.c.b16 %v6256, %v6252
  %v6349 = vpack.c.b16 %v6261, %v6257
  %v6350 = vpack.c.b16 %v6262, %v6258
  %v6351 = vpack.c.b16 %v6263, %v6259
  %v6352 = vpack.c.b16 %v6264, %v6260
  %v6353 = vpack.c.b16 %v6269, %v6265
  %v6354 = vpack.c.b16 %v6270, %v6266
  %v6355 = vpack.c.b16 %v6271, %v6267
  %v6356 = vpack.c.b16 %v6272, %v6268
  %v6357 = vpack.c.b16 %v6277, %v6273
  %v6358 = vpack.c.b16 %v6278, %v6274
  %v6359 = vpack.c.b16 %v6279, %v6275
  %v6360 = vpack.c.b16 %v6280, %v6276
  %v6361 = vpack.c.b16 %v6285, %v6281
  %v6362 = vpack.c.b16 %v6286, %v6282
  %v6363 = vpack.c.b16 %v6287, %v6283
  %v6364 = vpack.c.b16 %v6288, %v6284
  %v6365 = vpack.c.b16 %v6293, %v6289
  %v6366 = vpack.c.b16 %v6294, %v6290
  %v6367 = vpack.c.b16 %v6295, %v6291
  %v6368 = vpack.c.b16 %v6296, %v6292
  %v6369 = vpack.c.b16 %v6301, %v6297
  %v6370 = vpack.c.b16 %v6302, %v6298
  %v6371 = vpack.c.b16 %v6303, %v6299
  %v6372 = vpack.c.b16 %v6304, %v6300
  %v6373 = vpack.c.b16 %v6309, %v6305
  %v6374 = vpack.c.b16 %v6310, %v6306
  %v6375 = vpack.c.b16 %v6311, %v6307
  %v6376 = vpack.c.b16 %v6312, %v6308
  %6441 = vmatpush.bf16.msra.mxu0 %v6341
  %6442 = vmatpush.bf16.msra.mxu0 %v6337
  %6443 = vmatpush.bf16.msra.mxu0 %v6333
  %6444 = vmatpush.bf16.msra.mxu0 %v6329
  %6445 = vmatpush.bf16.msra.mxu0 %v6325
  %6446 = vmatpush.bf16.msra.mxu0 %v6321
  %6447 = vmatpush.bf16.msra.mxu0 %v6317
  %6448 = vmatpush.bf16.msra.mxu0 %v6313
  %6449 = vmatmul.bf16.gmra.mxu0 %v6117
  %v6450 = vpop.f32.mrf.mxu0
  %v6451 = vadd.f32 %v6033, %v6450
  %v6452 = vpop.f32.mrf.mxu0
  %6453 = vdwg.mxu0
  %6454 = vmatpush.bf16.msra.mxu0 %v6373
  %6455 = vmatpush.bf16.msra.mxu0 %v6369
  %6456 = vmatpush.bf16.msra.mxu0 %v6365
  %6457 = vmatpush.bf16.msra.mxu0 %v6361
  %6458 = vmatpush.bf16.msra.mxu0 %v6357
  %6459 = vmatpush.bf16.msra.mxu0 %v6353
  %6460 = vmatpush.bf16.msra.mxu0 %v6349
  %6461 = vmatpush.bf16.msra.mxu0 %v6345
  %6462 = vmatmul.bf16.gmra.mxu0 %v6118
  %v6463 = vpop.f32.mrf.mxu0
  %v6464 = vadd.f32 %v6451, %v6463
  %v6465 = vpop.f32.mrf.mxu0
  %6466 = vdwg.mxu0
  %6467 = vmatpush.bf16.msra.mxu0 %v6342
  %6468 = vmatpush.bf16.msra.mxu0 %v6338
  %6469 = vmatpush.bf16.msra.mxu0 %v6334
  %6470 = vmatpush.bf16.msra.mxu0 %v6330
  %6471 = vmatpush.bf16.msra.mxu0 %v6326
  %6472 = vmatpush.bf16.msra.mxu0 %v6322
  %6473 = vmatpush.bf16.msra.mxu0 %v6318
  %6474 = vmatpush.bf16.msra.mxu0 %v6314
  %6475 = vmatmul.bf16.gmra.mxu0 %v6117
  %v6476 = vpop.f32.mrf.mxu0
  %v6477 = vadd.f32 %v6059, %v6476
  %v6478 = vpop.f32.mrf.mxu0
  %6479 = vdwg.mxu0
  %6480 = vmatpush.bf16.msra.mxu0 %v6374
  %6481 = vmatpush.bf16.msra.mxu0 %v6370
  %6482 = vmatpush.bf16.msra.mxu0 %v6366
  %6483 = vmatpush.bf16.msra.mxu0 %v6362
  %6484 = vmatpush.bf16.msra.mxu0 %v6358
  %6485 = vmatpush.bf16.msra.mxu0 %v6354
  %6486 = vmatpush.bf16.msra.mxu0 %v6350
  %6487 = vmatpush.bf16.msra.mxu0 %v6346
  %6488 = vmatmul.bf16.gmra.mxu0 %v6118
  %v6489 = vpop.f32.mrf.mxu0
  %v6490 = vadd.f32 %v6477, %v6489
  %v6491 = vpop.f32.mrf.mxu0
  %6492 = vdwg.mxu0
  %6493 = vmatpush.bf16.msra.mxu0 %v6343
  %6494 = vmatpush.bf16.msra.mxu0 %v6339
  %6495 = vmatpush.bf16.msra.mxu0 %v6335
  %6496 = vmatpush.bf16.msra.mxu0 %v6331
  %6497 = vmatpush.bf16.msra.mxu0 %v6327
  %6498 = vmatpush.bf16.msra.mxu0 %v6323
  %6499 = vmatpush.bf16.msra.mxu0 %v6319
  %6500 = vmatpush.bf16.msra.mxu0 %v6315
  %6501 = vmatmul.bf16.gmra.mxu0 %v6117
  %v6502 = vpop.f32.mrf.mxu0
  %v6503 = vadd.f32 %v6085, %v6502
  %v6504 = vpop.f32.mrf.mxu0
  %6505 = vdwg.mxu0
  %6506 = vmatpush.bf16.msra.mxu0 %v6375
  %6507 = vmatpush.bf16.msra.mxu0 %v6371
  %6508 = vmatpush.bf16.msra.mxu0 %v6367
  %6509 = vmatpush.bf16.msra.mxu0 %v6363
  %6510 = vmatpush.bf16.msra.mxu0 %v6359
  %6511 = vmatpush.bf16.msra.mxu0 %v6355
  %6512 = vmatpush.bf16.msra.mxu0 %v6351
  %6513 = vmatpush.bf16.msra.mxu0 %v6347
  %6514 = vmatmul.bf16.gmra.mxu0 %v6118
  %v6515 = vpop.f32.mrf.mxu0
  %v6516 = vadd.f32 %v6503, %v6515
  %v6517 = vpop.f32.mrf.mxu0
  %6518 = vdwg.mxu0
  %6519 = vmatpush.bf16.msra.mxu0 %v6344
  %6520 = vmatpush.bf16.msra.mxu0 %v6340
  %6521 = vmatpush.bf16.msra.mxu0 %v6336
  %6522 = vmatpush.bf16.msra.mxu0 %v6332
  %6523 = vmatpush.bf16.msra.mxu0 %v6328
  %6524 = vmatpush.bf16.msra.mxu0 %v6324
  %6525 = vmatpush.bf16.msra.mxu0 %v6320
  %6526 = vmatpush.bf16.msra.mxu0 %v6316
  %6527 = vmatmul.bf16.gmra.mxu0 %v6117
  %v6528 = vpop.f32.mrf.mxu0
  %v6529 = vadd.f32 %v6111, %v6528
  %v6530 = vpop.f32.mrf.mxu0
  %6531 = vdwg.mxu0
  %6532 = vmatpush.bf16.msra.mxu0 %v6376
  %6533 = vmatpush.bf16.msra.mxu0 %v6372
  %6534 = vmatpush.bf16.msra.mxu0 %v6368
  %6535 = vmatpush.bf16.msra.mxu0 %v6364
  %6536 = vmatpush.bf16.msra.mxu0 %v6360
  %6537 = vmatpush.bf16.msra.mxu0 %v6356
  %6538 = vmatpush.bf16.msra.mxu0 %v6352
  %6539 = vmatpush.bf16.msra.mxu0 %v6348
  %6540 = vmatmul.bf16.gmra.mxu0 %v6118
  %v6541 = vpop.f32.mrf.mxu0
  %v6542 = vadd.f32 %v6529, %v6541
  %v6543 = vpop.f32.mrf.mxu0
  %6544 = vdwg.mxu0
  %s6545 = scalar_lea.vmem %s21, 256
  %v6546 = vld [vmem:[%s6545] sm:$0xff]
  %v6547 = vld [vmem:[%s6545 + $0x8] sm:$0xff]
  %v6548 = vld [vmem:[%s6545 + $0x10] sm:$0xff]
  %v6549 = vld [vmem:[%s6545 + $0x18] sm:$0xff]
  %v6550 = vld [vmem:[%s6545 + $0x20] sm:$0xff]
  %v6551 = vld [vmem:[%s6545 + $0x28] sm:$0xff]
  %v6552 = vld [vmem:[%s6545 + $0x30] sm:$0xff]
  %v6553 = vld [vmem:[%s6545 + $0x38] sm:$0xff]
  %v6554 = vld [vmem:[%s6545 + $0x40] sm:$0xff]
  %v6555 = vld [vmem:[%s6545 + $0x48] sm:$0xff]
  %v6556 = vld [vmem:[%s6545 + $0x50] sm:$0xff]
  %v6557 = vld [vmem:[%s6545 + $0x58] sm:$0xff]
  %v6558 = vld [vmem:[%s6545 + $0x60] sm:$0xff]
  %v6559 = vld [vmem:[%s6545 + $0x68] sm:$0xff]
  %v6560 = vld [vmem:[%s6545 + $0x70] sm:$0xff]
  %v6561 = vld [vmem:[%s6545 + $0x78] sm:$0xff]
  %v6562 = vld [vmem:[%s6545 + $0x80] sm:$0xff]
  %v6563 = vld [vmem:[%s6545 + $0x88] sm:$0xff]
  %v6564 = vld [vmem:[%s6545 + $0x90] sm:$0xff]
  %v6565 = vld [vmem:[%s6545 + $0x98] sm:$0xff]
  %v6566 = vld [vmem:[%s6545 + $0xa0] sm:$0xff]
  %v6567 = vld [vmem:[%s6545 + $0xa8] sm:$0xff]
  %v6568 = vld [vmem:[%s6545 + $0xb0] sm:$0xff]
  %v6569 = vld [vmem:[%s6545 + $0xb8] sm:$0xff]
  %v6570 = vld [vmem:[%s6545 + $0xc0] sm:$0xff]
  %v6571 = vld [vmem:[%s6545 + $0xc8] sm:$0xff]
  %v6572 = vld [vmem:[%s6545 + $0xd0] sm:$0xff]
  %v6573 = vld [vmem:[%s6545 + $0xd8] sm:$0xff]
  %v6574 = vld [vmem:[%s6545 + $0xe0] sm:$0xff]
  %v6575 = vld [vmem:[%s6545 + $0xe8] sm:$0xff]
  %v6576 = vld [vmem:[%s6545 + $0xf0] sm:$0xff]
  %v6577 = vld [vmem:[%s6545 + $0xf8] sm:$0xff]
  %v6610 = vunpack.c.l.b16 %v6546
  %v6611 = vunpack.c.h.b16 %v6546
  %v6612 = vunpack.c.l.b16 %v6547
  %v6613 = vunpack.c.h.b16 %v6547
  %v6614 = vunpack.c.l.b16 %v6548
  %v6615 = vunpack.c.h.b16 %v6548
  %v6616 = vunpack.c.l.b16 %v6549
  %v6617 = vunpack.c.h.b16 %v6549
  %v6618 = vunpack.c.l.b16 %v6550
  %v6619 = vunpack.c.h.b16 %v6550
  %v6620 = vunpack.c.l.b16 %v6551
  %v6621 = vunpack.c.h.b16 %v6551
  %v6622 = vunpack.c.l.b16 %v6552
  %v6623 = vunpack.c.h.b16 %v6552
  %v6624 = vunpack.c.l.b16 %v6553
  %v6625 = vunpack.c.h.b16 %v6553
  %v6626 = vunpack.c.l.b16 %v6554
  %v6627 = vunpack.c.h.b16 %v6554
  %v6628 = vunpack.c.l.b16 %v6555
  %v6629 = vunpack.c.h.b16 %v6555
  %v6630 = vunpack.c.l.b16 %v6556
  %v6631 = vunpack.c.h.b16 %v6556
  %v6632 = vunpack.c.l.b16 %v6557
  %v6633 = vunpack.c.h.b16 %v6557
  %v6634 = vunpack.c.l.b16 %v6558
  %v6635 = vunpack.c.h.b16 %v6558
  %v6636 = vunpack.c.l.b16 %v6559
  %v6637 = vunpack.c.h.b16 %v6559
  %v6638 = vunpack.c.l.b16 %v6560
  %v6639 = vunpack.c.h.b16 %v6560
  %v6640 = vunpack.c.l.b16 %v6561
  %v6641 = vunpack.c.h.b16 %v6561
  %v6642 = vunpack.c.l.b16 %v6562
  %v6643 = vunpack.c.h.b16 %v6562
  %v6644 = vunpack.c.l.b16 %v6563
  %v6645 = vunpack.c.h.b16 %v6563
  %v6646 = vunpack.c.l.b16 %v6564
  %v6647 = vunpack.c.h.b16 %v6564
  %v6648 = vunpack.c.l.b16 %v6565
  %v6649 = vunpack.c.h.b16 %v6565
  %v6650 = vunpack.c.l.b16 %v6566
  %v6651 = vunpack.c.h.b16 %v6566
  %v6652 = vunpack.c.l.b16 %v6567
  %v6653 = vunpack.c.h.b16 %v6567
  %v6654 = vunpack.c.l.b16 %v6568
  %v6655 = vunpack.c.h.b16 %v6568
  %v6656 = vunpack.c.l.b16 %v6569
  %v6657 = vunpack.c.h.b16 %v6569
  %v6658 = vunpack.c.l.b16 %v6570
  %v6659 = vunpack.c.h.b16 %v6570
  %v6660 = vunpack.c.l.b16 %v6571
  %v6661 = vunpack.c.h.b16 %v6571
  %v6662 = vunpack.c.l.b16 %v6572
  %v6663 = vunpack.c.h.b16 %v6572
  %v6664 = vunpack.c.l.b16 %v6573
  %v6665 = vunpack.c.h.b16 %v6573
  %v6666 = vunpack.c.l.b16 %v6574
  %v6667 = vunpack.c.h.b16 %v6574
  %v6668 = vunpack.c.l.b16 %v6575
  %v6669 = vunpack.c.h.b16 %v6575
  %v6670 = vunpack.c.l.b16 %v6576
  %v6671 = vunpack.c.h.b16 %v6576
  %v6672 = vunpack.c.l.b16 %v6577
  %v6673 = vunpack.c.h.b16 %v6577
  %v6674 = vpack.c.b16 %v6614, %v6610
  %v6675 = vpack.c.b16 %v6615, %v6611
  %v6676 = vpack.c.b16 %v6616, %v6612
  %v6677 = vpack.c.b16 %v6617, %v6613
  %v6678 = vpack.c.b16 %v6622, %v6618
  %v6679 = vpack.c.b16 %v6623, %v6619
  %v6680 = vpack.c.b16 %v6624, %v6620
  %v6681 = vpack.c.b16 %v6625, %v6621
  %v6682 = vpack.c.b16 %v6630, %v6626
  %v6683 = vpack.c.b16 %v6631, %v6627
  %v6684 = vpack.c.b16 %v6632, %v6628
  %v6685 = vpack.c.b16 %v6633, %v6629
  %v6686 = vpack.c.b16 %v6638, %v6634
  %v6687 = vpack.c.b16 %v6639, %v6635
  %v6688 = vpack.c.b16 %v6640, %v6636
  %v6689 = vpack.c.b16 %v6641, %v6637
  %v6690 = vpack.c.b16 %v6646, %v6642
  %v6691 = vpack.c.b16 %v6647, %v6643
  %v6692 = vpack.c.b16 %v6648, %v6644
  %v6693 = vpack.c.b16 %v6649, %v6645
  %v6694 = vpack.c.b16 %v6654, %v6650
  %v6695 = vpack.c.b16 %v6655, %v6651
  %v6696 = vpack.c.b16 %v6656, %v6652
  %v6697 = vpack.c.b16 %v6657, %v6653
  %v6698 = vpack.c.b16 %v6662, %v6658
  %v6699 = vpack.c.b16 %v6663, %v6659
  %v6700 = vpack.c.b16 %v6664, %v6660
  %v6701 = vpack.c.b16 %v6665, %v6661
  %v6702 = vpack.c.b16 %v6670, %v6666
  %v6703 = vpack.c.b16 %v6671, %v6667
  %v6704 = vpack.c.b16 %v6672, %v6668
  %v6705 = vpack.c.b16 %v6673, %v6669
  %6738 = vmatpush.bf16.msra.mxu0 %v6702
  %6739 = vmatpush.bf16.msra.mxu0 %v6698
  %6740 = vmatpush.bf16.msra.mxu0 %v6694
  %6741 = vmatpush.bf16.msra.mxu0 %v6690
  %6742 = vmatpush.bf16.msra.mxu0 %v6686
  %6743 = vmatpush.bf16.msra.mxu0 %v6682
  %6744 = vmatpush.bf16.msra.mxu0 %v6678
  %6745 = vmatpush.bf16.msra.mxu0 %v6674
  %6746 = vmatmul.bf16.gmra.mxu0 %v5617
  %v6747 = vpop.f32.mrf.mxu0
  %v6748 = vadd.f32 0.0, %v6747
  %v6749 = vpop.f32.mrf.mxu0
  %6750 = vdwg.mxu0
  %6751 = vmatpush.bf16.msra.mxu0 %v6703
  %6752 = vmatpush.bf16.msra.mxu0 %v6699
  %6753 = vmatpush.bf16.msra.mxu0 %v6695
  %6754 = vmatpush.bf16.msra.mxu0 %v6691
  %6755 = vmatpush.bf16.msra.mxu0 %v6687
  %6756 = vmatpush.bf16.msra.mxu0 %v6683
  %6757 = vmatpush.bf16.msra.mxu0 %v6679
  %6758 = vmatpush.bf16.msra.mxu0 %v6675
  %6759 = vmatmul.bf16.gmra.mxu0 %v5617
  %v6760 = vpop.f32.mrf.mxu0
  %v6761 = vadd.f32 0.0, %v6760
  %v6762 = vpop.f32.mrf.mxu0
  %6763 = vdwg.mxu0
  %6764 = vmatpush.bf16.msra.mxu0 %v6704
  %6765 = vmatpush.bf16.msra.mxu0 %v6700
  %6766 = vmatpush.bf16.msra.mxu0 %v6696
  %6767 = vmatpush.bf16.msra.mxu0 %v6692
  %6768 = vmatpush.bf16.msra.mxu0 %v6688
  %6769 = vmatpush.bf16.msra.mxu0 %v6684
  %6770 = vmatpush.bf16.msra.mxu0 %v6680
  %6771 = vmatpush.bf16.msra.mxu0 %v6676
  %6772 = vmatmul.bf16.gmra.mxu0 %v5617
  %v6773 = vpop.f32.mrf.mxu0
  %v6774 = vadd.f32 0.0, %v6773
  %v6775 = vpop.f32.mrf.mxu0
  %6776 = vdwg.mxu0
  %6777 = vmatpush.bf16.msra.mxu0 %v6705
  %6778 = vmatpush.bf16.msra.mxu0 %v6701
  %6779 = vmatpush.bf16.msra.mxu0 %v6697
  %6780 = vmatpush.bf16.msra.mxu0 %v6693
  %6781 = vmatpush.bf16.msra.mxu0 %v6689
  %6782 = vmatpush.bf16.msra.mxu0 %v6685
  %6783 = vmatpush.bf16.msra.mxu0 %v6681
  %6784 = vmatpush.bf16.msra.mxu0 %v6677
  %6785 = vmatmul.bf16.gmra.mxu0 %v5617
  %v6786 = vpop.f32.mrf.mxu0
  %v6787 = vadd.f32 0.0, %v6786
  %v6788 = vpop.f32.mrf.mxu0
  %6789 = vdwg.mxu0
  %v6822 = vunpack.c.l.b16 %v5497
  %v6823 = vunpack.c.h.b16 %v5497
  %v6824 = vunpack.c.l.b16 %v5498
  %v6825 = vunpack.c.h.b16 %v5498
  %v6826 = vunpack.c.l.b16 %v5499
  %v6827 = vunpack.c.h.b16 %v5499
  %v6828 = vunpack.c.l.b16 %v5500
  %v6829 = vunpack.c.h.b16 %v5500
  %v6830 = vunpack.c.l.b16 %v5501
  %v6831 = vunpack.c.h.b16 %v5501
  %v6832 = vunpack.c.l.b16 %v5502
  %v6833 = vunpack.c.h.b16 %v5502
  %v6834 = vunpack.c.l.b16 %v5503
  %v6835 = vunpack.c.h.b16 %v5503
  %v6836 = vunpack.c.l.b16 %v5504
  %v6837 = vunpack.c.h.b16 %v5504
  %v6838 = vunpack.c.l.b16 %v5505
  %v6839 = vunpack.c.h.b16 %v5505
  %v6840 = vunpack.c.l.b16 %v5506
  %v6841 = vunpack.c.h.b16 %v5506
  %v6842 = vunpack.c.l.b16 %v5507
  %v6843 = vunpack.c.h.b16 %v5507
  %v6844 = vunpack.c.l.b16 %v5508
  %v6845 = vunpack.c.h.b16 %v5508
  %v6846 = vunpack.c.l.b16 %v5509
  %v6847 = vunpack.c.h.b16 %v5509
  %v6848 = vunpack.c.l.b16 %v5510
  %v6849 = vunpack.c.h.b16 %v5510
  %v6850 = vunpack.c.l.b16 %v5511
  %v6851 = vunpack.c.h.b16 %v5511
  %v6852 = vunpack.c.l.b16 %v5512
  %v6853 = vunpack.c.h.b16 %v5512
  %v6854 = vunpack.c.l.b16 %v5513
  %v6855 = vunpack.c.h.b16 %v5513
  %v6856 = vunpack.c.l.b16 %v5514
  %v6857 = vunpack.c.h.b16 %v5514
  %v6858 = vunpack.c.l.b16 %v5515
  %v6859 = vunpack.c.h.b16 %v5515
  %v6860 = vunpack.c.l.b16 %v5516
  %v6861 = vunpack.c.h.b16 %v5516
  %v6862 = vunpack.c.l.b16 %v5517
  %v6863 = vunpack.c.h.b16 %v5517
  %v6864 = vunpack.c.l.b16 %v5518
  %v6865 = vunpack.c.h.b16 %v5518
  %v6866 = vunpack.c.l.b16 %v5519
  %v6867 = vunpack.c.h.b16 %v5519
  %v6868 = vunpack.c.l.b16 %v5520
  %v6869 = vunpack.c.h.b16 %v5520
  %v6870 = vunpack.c.l.b16 %v5521
  %v6871 = vunpack.c.h.b16 %v5521
  %v6872 = vunpack.c.l.b16 %v5522
  %v6873 = vunpack.c.h.b16 %v5522
  %v6874 = vunpack.c.l.b16 %v5523
  %v6875 = vunpack.c.h.b16 %v5523
  %v6876 = vunpack.c.l.b16 %v5524
  %v6877 = vunpack.c.h.b16 %v5524
  %v6878 = vunpack.c.l.b16 %v5525
  %v6879 = vunpack.c.h.b16 %v5525
  %v6880 = vunpack.c.l.b16 %v5526
  %v6881 = vunpack.c.h.b16 %v5526
  %v6882 = vunpack.c.l.b16 %v5527
  %v6883 = vunpack.c.h.b16 %v5527
  %v6884 = vunpack.c.l.b16 %v5528
  %v6885 = vunpack.c.h.b16 %v5528
  %v6886 = vpack.c.b16 %v6826, %v6822
  %v6887 = vpack.c.b16 %v6827, %v6823
  %v6888 = vpack.c.b16 %v6828, %v6824
  %v6889 = vpack.c.b16 %v6829, %v6825
  %v6890 = vpack.c.b16 %v6834, %v6830
  %v6891 = vpack.c.b16 %v6835, %v6831
  %v6892 = vpack.c.b16 %v6836, %v6832
  %v6893 = vpack.c.b16 %v6837, %v6833
  %v6894 = vpack.c.b16 %v6842, %v6838
  %v6895 = vpack.c.b16 %v6843, %v6839
  %v6896 = vpack.c.b16 %v6844, %v6840
  %v6897 = vpack.c.b16 %v6845, %v6841
  %v6898 = vpack.c.b16 %v6850, %v6846
  %v6899 = vpack.c.b16 %v6851, %v6847
  %v6900 = vpack.c.b16 %v6852, %v6848
  %v6901 = vpack.c.b16 %v6853, %v6849
  %v6902 = vpack.c.b16 %v6858, %v6854
  %v6903 = vpack.c.b16 %v6859, %v6855
  %v6904 = vpack.c.b16 %v6860, %v6856
  %v6905 = vpack.c.b16 %v6861, %v6857
  %v6906 = vpack.c.b16 %v6866, %v6862
  %v6907 = vpack.c.b16 %v6867, %v6863
  %v6908 = vpack.c.b16 %v6868, %v6864
  %v6909 = vpack.c.b16 %v6869, %v6865
  %v6910 = vpack.c.b16 %v6874, %v6870
  %v6911 = vpack.c.b16 %v6875, %v6871
  %v6912 = vpack.c.b16 %v6876, %v6872
  %v6913 = vpack.c.b16 %v6877, %v6873
  %v6914 = vpack.c.b16 %v6882, %v6878
  %v6915 = vpack.c.b16 %v6883, %v6879
  %v6916 = vpack.c.b16 %v6884, %v6880
  %v6917 = vpack.c.b16 %v6885, %v6881
  %6950 = vmatpush.bf16.msra.mxu0 %v6914
  %6951 = vmatpush.bf16.msra.mxu0 %v6910
  %6952 = vmatpush.bf16.msra.mxu0 %v6906
  %6953 = vmatpush.bf16.msra.mxu0 %v6902
  %6954 = vmatpush.bf16.msra.mxu0 %v6898
  %6955 = vmatpush.bf16.msra.mxu0 %v6894
  %6956 = vmatpush.bf16.msra.mxu0 %v6890
  %6957 = vmatpush.bf16.msra.mxu0 %v6886
  %6958 = vmatmul.bf16.gmra.mxu0 %v5432
  %v6959 = vpop.f32.mrf.mxu0
  %v6960 = vadd.f32 %v6748, %v6959
  %v6961 = vpop.f32.mrf.mxu0
  %6962 = vdwg.mxu0
  %6963 = vmatpush.bf16.msra.mxu0 %v6915
  %6964 = vmatpush.bf16.msra.mxu0 %v6911
  %6965 = vmatpush.bf16.msra.mxu0 %v6907
  %6966 = vmatpush.bf16.msra.mxu0 %v6903
  %6967 = vmatpush.bf16.msra.mxu0 %v6899
  %6968 = vmatpush.bf16.msra.mxu0 %v6895
  %6969 = vmatpush.bf16.msra.mxu0 %v6891
  %6970 = vmatpush.bf16.msra.mxu0 %v6887
  %6971 = vmatmul.bf16.gmra.mxu0 %v5432
  %v6972 = vpop.f32.mrf.mxu0
  %v6973 = vadd.f32 %v6761, %v6972
  %v6974 = vpop.f32.mrf.mxu0
  %6975 = vdwg.mxu0
  %6976 = vmatpush.bf16.msra.mxu0 %v6916
  %6977 = vmatpush.bf16.msra.mxu0 %v6912
  %6978 = vmatpush.bf16.msra.mxu0 %v6908
  %6979 = vmatpush.bf16.msra.mxu0 %v6904
  %6980 = vmatpush.bf16.msra.mxu0 %v6900
  %6981 = vmatpush.bf16.msra.mxu0 %v6896
  %6982 = vmatpush.bf16.msra.mxu0 %v6892
  %6983 = vmatpush.bf16.msra.mxu0 %v6888
  %6984 = vmatmul.bf16.gmra.mxu0 %v5432
  %v6985 = vpop.f32.mrf.mxu0
  %v6986 = vadd.f32 %v6774, %v6985
  %v6987 = vpop.f32.mrf.mxu0
  %6988 = vdwg.mxu0
  %6989 = vmatpush.bf16.msra.mxu0 %v6917
  %6990 = vmatpush.bf16.msra.mxu0 %v6913
  %6991 = vmatpush.bf16.msra.mxu0 %v6909
  %6992 = vmatpush.bf16.msra.mxu0 %v6905
  %6993 = vmatpush.bf16.msra.mxu0 %v6901
  %6994 = vmatpush.bf16.msra.mxu0 %v6897
  %6995 = vmatpush.bf16.msra.mxu0 %v6893
  %6996 = vmatpush.bf16.msra.mxu0 %v6889
  %6997 = vmatmul.bf16.gmra.mxu0 %v5432
  %v6998 = vpop.f32.mrf.mxu0
  %v6999 = vadd.f32 %v6787, %v6998
  %v7000 = vpop.f32.mrf.mxu0
  %7001 = vdwg.mxu0
  %s7002 = scalar_lea.vmem %s2, 4
  %v7003 = vld [vmem:[%s7002] sm:$0x3]
  %7005 = vst [vmem:[#allocation1] ss:$9 sm:$0xff] %v7003
  %v7006 = vld [vmem:[#allocation1] sm:$0xff]
  %v7007 = vld [vmem:[#allocation1 + $0x9] sm:$0xff]
  %v7009 = vsel %vm4392, %v7007, 0
  %7011 = vmatpush.bf16.msra.mxu0 %v5300
  %7012 = vmatpush.bf16.msra.mxu0 %v5297
  %7013 = vmatpush.bf16.msra.mxu0 %v5294
  %7014 = vmatpush.bf16.msra.mxu0 %v5291
  %7015 = vmatpush.bf16.msra.mxu0 %v5288
  %7016 = vmatpush.bf16.msra.mxu0 %v5285
  %7017 = vmatpush.bf16.msra.mxu0 %v5282
  %7018 = vmatpush.bf16.msra.mxu0 %v5279
  %7019 = vmatmul.bf16.gmra.mxu0 %v7006
  %v7020 = vpop.f32.mrf.mxu0
  %v7021 = vadd.f32 %v5148, %v7020
  %v7022 = vpop.f32.mrf.mxu0
  %7023 = vdwg.mxu0
  %7024 = vmatpush.bf16.msra.mxu0 0
  %7025 = vmatpush.bf16.msra.mxu0 0
  %7026 = vmatpush.bf16.msra.mxu0 0
  %7027 = vmatpush.bf16.msra.mxu0 0
  %7028 = vmatpush.bf16.msra.mxu0 %v5312
  %7029 = vmatpush.bf16.msra.mxu0 %v5309
  %7030 = vmatpush.bf16.msra.mxu0 %v5306
  %7031 = vmatpush.bf16.msra.mxu0 %v5303
  %7032 = vmatmul.bf16.gmra.mxu0 %v7009
  %v7033 = vpop.f32.mrf.mxu0
  %v7034 = vadd.f32 %v7021, %v7033
  %v7035 = vpop.f32.mrf.mxu0
  %7036 = vdwg.mxu0
  %7037 = vmatpush.bf16.msra.mxu0 %v5301
  %7038 = vmatpush.bf16.msra.mxu0 %v5298
  %7039 = vmatpush.bf16.msra.mxu0 %v5295
  %7040 = vmatpush.bf16.msra.mxu0 %v5292
  %7041 = vmatpush.bf16.msra.mxu0 %v5289
  %7042 = vmatpush.bf16.msra.mxu0 %v5286
  %7043 = vmatpush.bf16.msra.mxu0 %v5283
  %7044 = vmatpush.bf16.msra.mxu0 %v5280
  %7045 = vmatmul.bf16.gmra.mxu0 %v7006
  %v7046 = vpop.f32.mrf.mxu0
  %v7047 = vadd.f32 %v5149, %v7046
  %v7048 = vpop.f32.mrf.mxu0
  %7049 = vdwg.mxu0
  %7050 = vmatpush.bf16.msra.mxu0 0
  %7051 = vmatpush.bf16.msra.mxu0 0
  %7052 = vmatpush.bf16.msra.mxu0 0
  %7053 = vmatpush.bf16.msra.mxu0 0
  %7054 = vmatpush.bf16.msra.mxu0 %v5313
  %7055 = vmatpush.bf16.msra.mxu0 %v5310
  %7056 = vmatpush.bf16.msra.mxu0 %v5307
  %7057 = vmatpush.bf16.msra.mxu0 %v5304
  %7058 = vmatmul.bf16.gmra.mxu0 %v7009
  %v7059 = vpop.f32.mrf.mxu0
  %v7060 = vadd.f32 %v7047, %v7059
  %v7061 = vpop.f32.mrf.mxu0
  %7062 = vdwg.mxu0
  %7063 = vmatpush.bf16.msra.mxu0 %v5302
  %7064 = vmatpush.bf16.msra.mxu0 %v5299
  %7065 = vmatpush.bf16.msra.mxu0 %v5296
  %7066 = vmatpush.bf16.msra.mxu0 %v5293
  %7067 = vmatpush.bf16.msra.mxu0 %v5290
  %7068 = vmatpush.bf16.msra.mxu0 %v5287
  %7069 = vmatpush.bf16.msra.mxu0 %v5284
  %7070 = vmatpush.bf16.msra.mxu0 %v5281
  %7071 = vmatmul.bf16.gmra.mxu0 %v7006
  %v7072 = vpop.f32.mrf.mxu0
  %v7073 = vadd.f32 %v5150, %v7072
  %v7074 = vpop.f32.mrf.mxu0
  %7075 = vdwg.mxu0
  %7076 = vmatpush.bf16.msra.mxu0 0
  %7077 = vmatpush.bf16.msra.mxu0 0
  %7078 = vmatpush.bf16.msra.mxu0 0
  %7079 = vmatpush.bf16.msra.mxu0 0
  %7080 = vmatpush.bf16.msra.mxu0 %v5314
  %7081 = vmatpush.bf16.msra.mxu0 %v5311
  %7082 = vmatpush.bf16.msra.mxu0 %v5308
  %7083 = vmatpush.bf16.msra.mxu0 %v5305
  %7084 = vmatmul.bf16.gmra.mxu0 %v7009
  %v7085 = vpop.f32.mrf.mxu0
  %v7086 = vadd.f32 %v7073, %v7085
  %v7087 = vpop.f32.mrf.mxu0
  %7088 = vdwg.mxu0
  %v7089 = vpack.c.bf16 %v7060, %v7034
  %v7090 = vpack.c.bf16 %v7086, %v7086
  %s7091 = scalar_lea.vmem %s20, 1024
  %v7092 = vld [vmem:[%s7091] sm:$0xff]
  %v7093 = vld [vmem:[%s7091 + $0x8] sm:$0xff]
  %v7094 = vld [vmem:[%s7091 + $0x10] sm:$0xff]
  %v7095 = vld [vmem:[%s7091 + $0x18] sm:$0xff]
  %v7096 = vld [vmem:[%s7091 + $0x20] sm:$0xff]
  %v7097 = vld [vmem:[%s7091 + $0x28] sm:$0xff]
  %v7098 = vld [vmem:[%s7091 + $0x30] sm:$0xff]
  %v7099 = vld [vmem:[%s7091 + $0x38] sm:$0xff]
  %v7100 = vld [vmem:[%s7091 + $0x40] sm:$0xff]
  %v7101 = vld [vmem:[%s7091 + $0x48] sm:$0xff]
  %v7102 = vld [vmem:[%s7091 + $0x50] sm:$0xff]
  %v7103 = vld [vmem:[%s7091 + $0x58] sm:$0xff]
  %v7104 = vld [vmem:[%s7091 + $0x60] sm:$0xff]
  %v7105 = vld [vmem:[%s7091 + $0x68] sm:$0xff]
  %v7106 = vld [vmem:[%s7091 + $0x70] sm:$0xff]
  %v7107 = vld [vmem:[%s7091 + $0x78] sm:$0xff]
  %v7108 = vld [vmem:[%s7091 + $0x80] sm:$0xff]
  %v7109 = vld [vmem:[%s7091 + $0x88] sm:$0xff]
  %v7110 = vld [vmem:[%s7091 + $0x90] sm:$0xff]
  %v7111 = vld [vmem:[%s7091 + $0x98] sm:$0xff]
  %v7112 = vld [vmem:[%s7091 + $0xa0] sm:$0xff]
  %v7113 = vld [vmem:[%s7091 + $0xa8] sm:$0xff]
  %v7114 = vld [vmem:[%s7091 + $0xb0] sm:$0xff]
  %v7115 = vld [vmem:[%s7091 + $0xb8] sm:$0xff]
  %v7116 = vld [vmem:[%s7091 + $0xc0] sm:$0xff]
  %v7117 = vld [vmem:[%s7091 + $0xc8] sm:$0xff]
  %v7118 = vld [vmem:[%s7091 + $0xd0] sm:$0xff]
  %v7119 = vld [vmem:[%s7091 + $0xd8] sm:$0xff]
  %v7120 = vld [vmem:[%s7091 + $0xe0] sm:$0xff]
  %v7121 = vld [vmem:[%s7091 + $0xe8] sm:$0xff]
  %v7122 = vld [vmem:[%s7091 + $0xf0] sm:$0xff]
  %v7123 = vld [vmem:[%s7091 + $0xf8] sm:$0xff]
  %v7124 = vld [vmem:[%s7091 + $0x100] sm:$0xff]
  %v7125 = vld [vmem:[%s7091 + $0x108] sm:$0xff]
  %v7126 = vld [vmem:[%s7091 + $0x110] sm:$0xff]
  %v7127 = vld [vmem:[%s7091 + $0x118] sm:$0xff]
  %v7128 = vld [vmem:[%s7091 + $0x120] sm:$0xff]
  %v7129 = vld [vmem:[%s7091 + $0x128] sm:$0xff]
  %v7130 = vld [vmem:[%s7091 + $0x130] sm:$0xff]
  %v7131 = vld [vmem:[%s7091 + $0x138] sm:$0xff]
  %v7132 = vld [vmem:[%s7091 + $0x140] sm:$0xff]
  %v7133 = vld [vmem:[%s7091 + $0x148] sm:$0xff]
  %v7134 = vld [vmem:[%s7091 + $0x150] sm:$0xff]
  %v7135 = vld [vmem:[%s7091 + $0x158] sm:$0xff]
  %v7136 = vld [vmem:[%s7091 + $0x160] sm:$0xff]
  %v7137 = vld [vmem:[%s7091 + $0x168] sm:$0xff]
  %v7138 = vld [vmem:[%s7091 + $0x170] sm:$0xff]
  %v7139 = vld [vmem:[%s7091 + $0x178] sm:$0xff]
  %v7140 = vld [vmem:[%s7091 + $0x180] sm:$0xff]
  %v7141 = vld [vmem:[%s7091 + $0x188] sm:$0xff]
  %v7142 = vld [vmem:[%s7091 + $0x190] sm:$0xff]
  %v7143 = vld [vmem:[%s7091 + $0x198] sm:$0xff]
  %v7144 = vld [vmem:[%s7091 + $0x1a0] sm:$0xff]
  %v7145 = vld [vmem:[%s7091 + $0x1a8] sm:$0xff]
  %v7146 = vld [vmem:[%s7091 + $0x1b0] sm:$0xff]
  %v7147 = vld [vmem:[%s7091 + $0x1b8] sm:$0xff]
  %v7148 = vld [vmem:[%s7091 + $0x1c0] sm:$0xff]
  %v7149 = vld [vmem:[%s7091 + $0x1c8] sm:$0xff]
  %v7150 = vld [vmem:[%s7091 + $0x1d0] sm:$0xff]
  %v7151 = vld [vmem:[%s7091 + $0x1d8] sm:$0xff]
  %v7152 = vld [vmem:[%s7091 + $0x1e0] sm:$0xff]
  %v7153 = vld [vmem:[%s7091 + $0x1e8] sm:$0xff]
  %v7154 = vld [vmem:[%s7091 + $0x1f0] sm:$0xff]
  %v7155 = vld [vmem:[%s7091 + $0x1f8] sm:$0xff]
  %v7157 = vunpack.c.l.b16 %v7089
  %v7158 = vunpack.c.h.b16 %v7089
  %v7159 = vpack.c.b16 %v7157, %v7157
  %v7160 = vpack.c.b16 %v7158, %v7158
  %v7227 = vunpack.c.l.b16 %v7092
  %v7228 = vunpack.c.h.b16 %v7092
  %v7229 = vunpack.c.l.b16 %v7093
  %v7230 = vunpack.c.h.b16 %v7093
  %v7231 = vunpack.c.l.b16 %v7094
  %v7232 = vunpack.c.h.b16 %v7094
  %v7233 = vunpack.c.l.b16 %v7095
  %v7234 = vunpack.c.h.b16 %v7095
  %v7235 = vunpack.c.l.b16 %v7096
  %v7236 = vunpack.c.h.b16 %v7096
  %v7237 = vunpack.c.l.b16 %v7097
  %v7238 = vunpack.c.h.b16 %v7097
  %v7239 = vunpack.c.l.b16 %v7098
  %v7240 = vunpack.c.h.b16 %v7098
  %v7241 = vunpack.c.l.b16 %v7099
  %v7242 = vunpack.c.h.b16 %v7099
  %v7243 = vunpack.c.l.b16 %v7100
  %v7244 = vunpack.c.h.b16 %v7100
  %v7245 = vunpack.c.l.b16 %v7101
  %v7246 = vunpack.c.h.b16 %v7101
  %v7247 = vunpack.c.l.b16 %v7102
  %v7248 = vunpack.c.h.b16 %v7102
  %v7249 = vunpack.c.l.b16 %v7103
  %v7250 = vunpack.c.h.b16 %v7103
  %v7251 = vunpack.c.l.b16 %v7104
  %v7252 = vunpack.c.h.b16 %v7104
  %v7253 = vunpack.c.l.b16 %v7105
  %v7254 = vunpack.c.h.b16 %v7105
  %v7255 = vunpack.c.l.b16 %v7106
  %v7256 = vunpack.c.h.b16 %v7106
  %v7257 = vunpack.c.l.b16 %v7107
  %v7258 = vunpack.c.h.b16 %v7107
  %v7259 = vunpack.c.l.b16 %v7108
  %v7260 = vunpack.c.h.b16 %v7108
  %v7261 = vunpack.c.l.b16 %v7109
  %v7262 = vunpack.c.h.b16 %v7109
  %v7263 = vunpack.c.l.b16 %v7110
  %v7264 = vunpack.c.h.b16 %v7110
  %v7265 = vunpack.c.l.b16 %v7111
  %v7266 = vunpack.c.h.b16 %v7111
  %v7267 = vunpack.c.l.b16 %v7112
  %v7268 = vunpack.c.h.b16 %v7112
  %v7269 = vunpack.c.l.b16 %v7113
  %v7270 = vunpack.c.h.b16 %v7113
  %v7271 = vunpack.c.l.b16 %v7114
  %v7272 = vunpack.c.h.b16 %v7114
  %v7273 = vunpack.c.l.b16 %v7115
  %v7274 = vunpack.c.h.b16 %v7115
  %v7275 = vunpack.c.l.b16 %v7116
  %v7276 = vunpack.c.h.b16 %v7116
  %v7277 = vunpack.c.l.b16 %v7117
  %v7278 = vunpack.c.h.b16 %v7117
  %v7279 = vunpack.c.l.b16 %v7118
  %v7280 = vunpack.c.h.b16 %v7118
  %v7281 = vunpack.c.l.b16 %v7119
  %v7282 = vunpack.c.h.b16 %v7119
  %v7283 = vunpack.c.l.b16 %v7120
  %v7284 = vunpack.c.h.b16 %v7120
  %v7285 = vunpack.c.l.b16 %v7121
  %v7286 = vunpack.c.h.b16 %v7121
  %v7287 = vunpack.c.l.b16 %v7122
  %v7288 = vunpack.c.h.b16 %v7122
  %v7289 = vunpack.c.l.b16 %v7123
  %v7290 = vunpack.c.h.b16 %v7123
  %v7291 = vunpack.c.l.b16 %v7124
  %v7292 = vunpack.c.h.b16 %v7124
  %v7293 = vunpack.c.l.b16 %v7125
  %v7294 = vunpack.c.h.b16 %v7125
  %v7295 = vunpack.c.l.b16 %v7126
  %v7296 = vunpack.c.h.b16 %v7126
  %v7297 = vunpack.c.l.b16 %v7127
  %v7298 = vunpack.c.h.b16 %v7127
  %v7299 = vunpack.c.l.b16 %v7128
  %v7300 = vunpack.c.h.b16 %v7128
  %v7301 = vunpack.c.l.b16 %v7129
  %v7302 = vunpack.c.h.b16 %v7129
  %v7303 = vunpack.c.l.b16 %v7130
  %v7304 = vunpack.c.h.b16 %v7130
  %v7305 = vunpack.c.l.b16 %v7131
  %v7306 = vunpack.c.h.b16 %v7131
  %v7307 = vunpack.c.l.b16 %v7132
  %v7308 = vunpack.c.h.b16 %v7132
  %v7309 = vunpack.c.l.b16 %v7133
  %v7310 = vunpack.c.h.b16 %v7133
  %v7311 = vunpack.c.l.b16 %v7134
  %v7312 = vunpack.c.h.b16 %v7134
  %v7313 = vunpack.c.l.b16 %v7135
  %v7314 = vunpack.c.h.b16 %v7135
  %v7315 = vunpack.c.l.b16 %v7136
  %v7316 = vunpack.c.h.b16 %v7136
  %v7317 = vunpack.c.l.b16 %v7137
  %v7318 = vunpack.c.h.b16 %v7137
  %v7319 = vunpack.c.l.b16 %v7138
  %v7320 = vunpack.c.h.b16 %v7138
  %v7321 = vunpack.c.l.b16 %v7139
  %v7322 = vunpack.c.h.b16 %v7139
  %v7323 = vunpack.c.l.b16 %v7140
  %v7324 = vunpack.c.h.b16 %v7140
  %v7325 = vunpack.c.l.b16 %v7141
  %v7326 = vunpack.c.h.b16 %v7141
  %v7327 = vunpack.c.l.b16 %v7142
  %v7328 = vunpack.c.h.b16 %v7142
  %v7329 = vunpack.c.l.b16 %v7143
  %v7330 = vunpack.c.h.b16 %v7143
  %v7331 = vunpack.c.l.b16 %v7144
  %v7332 = vunpack.c.h.b16 %v7144
  %v7333 = vunpack.c.l.b16 %v7145
  %v7334 = vunpack.c.h.b16 %v7145
  %v7335 = vunpack.c.l.b16 %v7146
  %v7336 = vunpack.c.h.b16 %v7146
  %v7337 = vunpack.c.l.b16 %v7147
  %v7338 = vunpack.c.h.b16 %v7147
  %v7339 = vunpack.c.l.b16 %v7148
  %v7340 = vunpack.c.h.b16 %v7148
  %v7341 = vunpack.c.l.b16 %v7149
  %v7342 = vunpack.c.h.b16 %v7149
  %v7343 = vunpack.c.l.b16 %v7150
  %v7344 = vunpack.c.h.b16 %v7150
  %v7345 = vunpack.c.l.b16 %v7151
  %v7346 = vunpack.c.h.b16 %v7151
  %v7347 = vunpack.c.l.b16 %v7152
  %v7348 = vunpack.c.h.b16 %v7152
  %v7349 = vunpack.c.l.b16 %v7153
  %v7350 = vunpack.c.h.b16 %v7153
  %v7351 = vunpack.c.l.b16 %v7154
  %v7352 = vunpack.c.h.b16 %v7154
  %v7353 = vunpack.c.l.b16 %v7155
  %v7354 = vunpack.c.h.b16 %v7155
  %v7355 = vpack.c.b16 %v7231, %v7227
  %v7356 = vpack.c.b16 %v7232, %v7228
  %v7357 = vpack.c.b16 %v7233, %v7229
  %v7358 = vpack.c.b16 %v7234, %v7230
  %v7359 = vpack.c.b16 %v7239, %v7235
  %v7360 = vpack.c.b16 %v7240, %v7236
  %v7361 = vpack.c.b16 %v7241, %v7237
  %v7362 = vpack.c.b16 %v7242, %v7238
  %v7363 = vpack.c.b16 %v7247, %v7243
  %v7364 = vpack.c.b16 %v7248, %v7244
  %v7365 = vpack.c.b16 %v7249, %v7245
  %v7366 = vpack.c.b16 %v7250, %v7246
  %v7367 = vpack.c.b16 %v7255, %v7251
  %v7368 = vpack.c.b16 %v7256, %v7252
  %v7369 = vpack.c.b16 %v7257, %v7253
  %v7370 = vpack.c.b16 %v7258, %v7254
  %v7371 = vpack.c.b16 %v7263, %v7259
  %v7372 = vpack.c.b16 %v7264, %v7260
  %v7373 = vpack.c.b16 %v7265, %v7261
  %v7374 = vpack.c.b16 %v7266, %v7262
  %v7375 = vpack.c.b16 %v7271, %v7267
  %v7376 = vpack.c.b16 %v7272, %v7268
  %v7377 = vpack.c.b16 %v7273, %v7269
  %v7378 = vpack.c.b16 %v7274, %v7270
  %v7379 = vpack.c.b16 %v7279, %v7275
  %v7380 = vpack.c.b16 %v7280, %v7276
  %v7381 = vpack.c.b16 %v7281, %v7277
  %v7382 = vpack.c.b16 %v7282, %v7278
  %v7383 = vpack.c.b16 %v7287, %v7283
  %v7384 = vpack.c.b16 %v7288, %v7284
  %v7385 = vpack.c.b16 %v7289, %v7285
  %v7386 = vpack.c.b16 %v7290, %v7286
  %v7387 = vpack.c.b16 %v7295, %v7291
  %v7388 = vpack.c.b16 %v7296, %v7292
  %v7389 = vpack.c.b16 %v7297, %v7293
  %v7390 = vpack.c.b16 %v7298, %v7294
  %v7391 = vpack.c.b16 %v7303, %v7299
  %v7392 = vpack.c.b16 %v7304, %v7300
  %v7393 = vpack.c.b16 %v7305, %v7301
  %v7394 = vpack.c.b16 %v7306, %v7302
  %v7395 = vpack.c.b16 %v7311, %v7307
  %v7396 = vpack.c.b16 %v7312, %v7308
  %v7397 = vpack.c.b16 %v7313, %v7309
  %v7398 = vpack.c.b16 %v7314, %v7310
  %v7399 = vpack.c.b16 %v7319, %v7315
  %v7400 = vpack.c.b16 %v7320, %v7316
  %v7401 = vpack.c.b16 %v7321, %v7317
  %v7402 = vpack.c.b16 %v7322, %v7318
  %v7403 = vpack.c.b16 %v7327, %v7323
  %v7404 = vpack.c.b16 %v7328, %v7324
  %v7405 = vpack.c.b16 %v7329, %v7325
  %v7406 = vpack.c.b16 %v7330, %v7326
  %v7407 = vpack.c.b16 %v7335, %v7331
  %v7408 = vpack.c.b16 %v7336, %v7332
  %v7409 = vpack.c.b16 %v7337, %v7333
  %v7410 = vpack.c.b16 %v7338, %v7334
  %v7411 = vpack.c.b16 %v7343, %v7339
  %v7412 = vpack.c.b16 %v7344, %v7340
  %v7413 = vpack.c.b16 %v7345, %v7341
  %v7414 = vpack.c.b16 %v7346, %v7342
  %v7415 = vpack.c.b16 %v7351, %v7347
  %v7416 = vpack.c.b16 %v7352, %v7348
  %v7417 = vpack.c.b16 %v7353, %v7349
  %v7418 = vpack.c.b16 %v7354, %v7350
  %7483 = vmatpush.bf16.msra.mxu0 %v7383
  %7484 = vmatpush.bf16.msra.mxu0 %v7379
  %7485 = vmatpush.bf16.msra.mxu0 %v7375
  %7486 = vmatpush.bf16.msra.mxu0 %v7371
  %7487 = vmatpush.bf16.msra.mxu0 %v7367
  %7488 = vmatpush.bf16.msra.mxu0 %v7363
  %7489 = vmatpush.bf16.msra.mxu0 %v7359
  %7490 = vmatpush.bf16.msra.mxu0 %v7355
  %7491 = vmatmul.bf16.gmra.mxu0 %v7159
  %v7492 = vpop.f32.mrf.mxu0
  %v7493 = vadd.f32 0.0, %v7492
  %v7494 = vpop.f32.mrf.mxu0
  %7495 = vdwg.mxu0
  %7496 = vmatpush.bf16.msra.mxu0 %v7415
  %7497 = vmatpush.bf16.msra.mxu0 %v7411
  %7498 = vmatpush.bf16.msra.mxu0 %v7407
  %7499 = vmatpush.bf16.msra.mxu0 %v7403
  %7500 = vmatpush.bf16.msra.mxu0 %v7399
  %7501 = vmatpush.bf16.msra.mxu0 %v7395
  %7502 = vmatpush.bf16.msra.mxu0 %v7391
  %7503 = vmatpush.bf16.msra.mxu0 %v7387
  %7504 = vmatmul.bf16.gmra.mxu0 %v7160
  %v7505 = vpop.f32.mrf.mxu0
  %v7506 = vadd.f32 %v7493, %v7505
  %v7507 = vpop.f32.mrf.mxu0
  %7508 = vdwg.mxu0
  %7509 = vmatpush.bf16.msra.mxu0 %v7384
  %7510 = vmatpush.bf16.msra.mxu0 %v7380
  %7511 = vmatpush.bf16.msra.mxu0 %v7376
  %7512 = vmatpush.bf16.msra.mxu0 %v7372
  %7513 = vmatpush.bf16.msra.mxu0 %v7368
  %7514 = vmatpush.bf16.msra.mxu0 %v7364
  %7515 = vmatpush.bf16.msra.mxu0 %v7360
  %7516 = vmatpush.bf16.msra.mxu0 %v7356
  %7517 = vmatmul.bf16.gmra.mxu0 %v7159
  %v7518 = vpop.f32.mrf.mxu0
  %v7519 = vadd.f32 0.0, %v7518
  %v7520 = vpop.f32.mrf.mxu0
  %7521 = vdwg.mxu0
  %7522 = vmatpush.bf16.msra.mxu0 %v7416
  %7523 = vmatpush.bf16.msra.mxu0 %v7412
  %7524 = vmatpush.bf16.msra.mxu0 %v7408
  %7525 = vmatpush.bf16.msra.mxu0 %v7404
  %7526 = vmatpush.bf16.msra.mxu0 %v7400
  %7527 = vmatpush.bf16.msra.mxu0 %v7396
  %7528 = vmatpush.bf16.msra.mxu0 %v7392
  %7529 = vmatpush.bf16.msra.mxu0 %v7388
  %7530 = vmatmul.bf16.gmra.mxu0 %v7160
  %v7531 = vpop.f32.mrf.mxu0
  %v7532 = vadd.f32 %v7519, %v7531
  %v7533 = vpop.f32.mrf.mxu0
  %7534 = vdwg.mxu0
  %7535 = vmatpush.bf16.msra.mxu0 %v7385
  %7536 = vmatpush.bf16.msra.mxu0 %v7381
  %7537 = vmatpush.bf16.msra.mxu0 %v7377
  %7538 = vmatpush.bf16.msra.mxu0 %v7373
  %7539 = vmatpush.bf16.msra.mxu0 %v7369
  %7540 = vmatpush.bf16.msra.mxu0 %v7365
  %7541 = vmatpush.bf16.msra.mxu0 %v7361
  %7542 = vmatpush.bf16.msra.mxu0 %v7357
  %7543 = vmatmul.bf16.gmra.mxu0 %v7159
  %v7544 = vpop.f32.mrf.mxu0
  %v7545 = vadd.f32 0.0, %v7544
  %v7546 = vpop.f32.mrf.mxu0
  %7547 = vdwg.mxu0
  %7548 = vmatpush.bf16.msra.mxu0 %v7417
  %7549 = vmatpush.bf16.msra.mxu0 %v7413
  %7550 = vmatpush.bf16.msra.mxu0 %v7409
  %7551 = vmatpush.bf16.msra.mxu0 %v7405
  %7552 = vmatpush.bf16.msra.mxu0 %v7401
  %7553 = vmatpush.bf16.msra.mxu0 %v7397
  %7554 = vmatpush.bf16.msra.mxu0 %v7393
  %7555 = vmatpush.bf16.msra.mxu0 %v7389
  %7556 = vmatmul.bf16.gmra.mxu0 %v7160
  %v7557 = vpop.f32.mrf.mxu0
  %v7558 = vadd.f32 %v7545, %v7557
  %v7559 = vpop.f32.mrf.mxu0
  %7560 = vdwg.mxu0
  %7561 = vmatpush.bf16.msra.mxu0 %v7386
  %7562 = vmatpush.bf16.msra.mxu0 %v7382
  %7563 = vmatpush.bf16.msra.mxu0 %v7378
  %7564 = vmatpush.bf16.msra.mxu0 %v7374
  %7565 = vmatpush.bf16.msra.mxu0 %v7370
  %7566 = vmatpush.bf16.msra.mxu0 %v7366
  %7567 = vmatpush.bf16.msra.mxu0 %v7362
  %7568 = vmatpush.bf16.msra.mxu0 %v7358
  %7569 = vmatmul.bf16.gmra.mxu0 %v7159
  %v7570 = vpop.f32.mrf.mxu0
  %v7571 = vadd.f32 0.0, %v7570
  %v7572 = vpop.f32.mrf.mxu0
  %7573 = vdwg.mxu0
  %7574 = vmatpush.bf16.msra.mxu0 %v7418
  %7575 = vmatpush.bf16.msra.mxu0 %v7414
  %7576 = vmatpush.bf16.msra.mxu0 %v7410
  %7577 = vmatpush.bf16.msra.mxu0 %v7406
  %7578 = vmatpush.bf16.msra.mxu0 %v7402
  %7579 = vmatpush.bf16.msra.mxu0 %v7398
  %7580 = vmatpush.bf16.msra.mxu0 %v7394
  %7581 = vmatpush.bf16.msra.mxu0 %v7390
  %7582 = vmatmul.bf16.gmra.mxu0 %v7160
  %v7583 = vpop.f32.mrf.mxu0
  %v7584 = vadd.f32 %v7571, %v7583
  %v7585 = vpop.f32.mrf.mxu0
  %7586 = vdwg.mxu0
  %v7587 = vadd.f32 %v6464, %v7506
  %v7588 = vadd.f32 %v6490, %v7532
  %v7589 = vadd.f32 %v6516, %v7558
  %v7590 = vadd.f32 %v6542, %v7584
  %s7591 = scalar_lea.vmem %s21, 512
  %v7592 = vld [vmem:[%s7591] sm:$0xff]
  %v7593 = vld [vmem:[%s7591 + $0x8] sm:$0xff]
  %v7594 = vld [vmem:[%s7591 + $0x10] sm:$0xff]
  %v7595 = vld [vmem:[%s7591 + $0x18] sm:$0xff]
  %v7596 = vld [vmem:[%s7591 + $0x20] sm:$0xff]
  %v7597 = vld [vmem:[%s7591 + $0x28] sm:$0xff]
  %v7598 = vld [vmem:[%s7591 + $0x30] sm:$0xff]
  %v7599 = vld [vmem:[%s7591 + $0x38] sm:$0xff]
  %v7600 = vld [vmem:[%s7591 + $0x40] sm:$0xff]
  %v7601 = vld [vmem:[%s7591 + $0x48] sm:$0xff]
  %v7602 = vld [vmem:[%s7591 + $0x50] sm:$0xff]
  %v7603 = vld [vmem:[%s7591 + $0x58] sm:$0xff]
  %v7604 = vld [vmem:[%s7591 + $0x60] sm:$0xff]
  %v7605 = vld [vmem:[%s7591 + $0x68] sm:$0xff]
  %v7606 = vld [vmem:[%s7591 + $0x70] sm:$0xff]
  %v7607 = vld [vmem:[%s7591 + $0x78] sm:$0xff]
  %v7608 = vld [vmem:[%s7591 + $0x80] sm:$0xff]
  %v7609 = vld [vmem:[%s7591 + $0x88] sm:$0xff]
  %v7610 = vld [vmem:[%s7591 + $0x90] sm:$0xff]
  %v7611 = vld [vmem:[%s7591 + $0x98] sm:$0xff]
  %v7612 = vld [vmem:[%s7591 + $0xa0] sm:$0xff]
  %v7613 = vld [vmem:[%s7591 + $0xa8] sm:$0xff]
  %v7614 = vld [vmem:[%s7591 + $0xb0] sm:$0xff]
  %v7615 = vld [vmem:[%s7591 + $0xb8] sm:$0xff]
  %v7616 = vld [vmem:[%s7591 + $0xc0] sm:$0xff]
  %v7617 = vld [vmem:[%s7591 + $0xc8] sm:$0xff]
  %v7618 = vld [vmem:[%s7591 + $0xd0] sm:$0xff]
  %v7619 = vld [vmem:[%s7591 + $0xd8] sm:$0xff]
  %v7620 = vld [vmem:[%s7591 + $0xe0] sm:$0xff]
  %v7621 = vld [vmem:[%s7591 + $0xe8] sm:$0xff]
  %v7622 = vld [vmem:[%s7591 + $0xf0] sm:$0xff]
  %v7623 = vld [vmem:[%s7591 + $0xf8] sm:$0xff]
  %v7656 = vunpack.c.l.b16 %v7592
  %v7657 = vunpack.c.h.b16 %v7592
  %v7658 = vunpack.c.l.b16 %v7593
  %v7659 = vunpack.c.h.b16 %v7593
  %v7660 = vunpack.c.l.b16 %v7594
  %v7661 = vunpack.c.h.b16 %v7594
  %v7662 = vunpack.c.l.b16 %v7595
  %v7663 = vunpack.c.h.b16 %v7595
  %v7664 = vunpack.c.l.b16 %v7596
  %v7665 = vunpack.c.h.b16 %v7596
  %v7666 = vunpack.c.l.b16 %v7597
  %v7667 = vunpack.c.h.b16 %v7597
  %v7668 = vunpack.c.l.b16 %v7598
  %v7669 = vunpack.c.h.b16 %v7598
  %v7670 = vunpack.c.l.b16 %v7599
  %v7671 = vunpack.c.h.b16 %v7599
  %v7672 = vunpack.c.l.b16 %v7600
  %v7673 = vunpack.c.h.b16 %v7600
  %v7674 = vunpack.c.l.b16 %v7601
  %v7675 = vunpack.c.h.b16 %v7601
  %v7676 = vunpack.c.l.b16 %v7602
  %v7677 = vunpack.c.h.b16 %v7602
  %v7678 = vunpack.c.l.b16 %v7603
  %v7679 = vunpack.c.h.b16 %v7603
  %v7680 = vunpack.c.l.b16 %v7604
  %v7681 = vunpack.c.h.b16 %v7604
  %v7682 = vunpack.c.l.b16 %v7605
  %v7683 = vunpack.c.h.b16 %v7605
  %v7684 = vunpack.c.l.b16 %v7606
  %v7685 = vunpack.c.h.b16 %v7606
  %v7686 = vunpack.c.l.b16 %v7607
  %v7687 = vunpack.c.h.b16 %v7607
  %v7688 = vunpack.c.l.b16 %v7608
  %v7689 = vunpack.c.h.b16 %v7608
  %v7690 = vunpack.c.l.b16 %v7609
  %v7691 = vunpack.c.h.b16 %v7609
  %v7692 = vunpack.c.l.b16 %v7610
  %v7693 = vunpack.c.h.b16 %v7610
  %v7694 = vunpack.c.l.b16 %v7611
  %v7695 = vunpack.c.h.b16 %v7611
  %v7696 = vunpack.c.l.b16 %v7612
  %v7697 = vunpack.c.h.b16 %v7612
  %v7698 = vunpack.c.l.b16 %v7613
  %v7699 = vunpack.c.h.b16 %v7613
  %v7700 = vunpack.c.l.b16 %v7614
  %v7701 = vunpack.c.h.b16 %v7614
  %v7702 = vunpack.c.l.b16 %v7615
  %v7703 = vunpack.c.h.b16 %v7615
  %v7704 = vunpack.c.l.b16 %v7616
  %v7705 = vunpack.c.h.b16 %v7616
  %v7706 = vunpack.c.l.b16 %v7617
  %v7707 = vunpack.c.h.b16 %v7617
  %v7708 = vunpack.c.l.b16 %v7618
  %v7709 = vunpack.c.h.b16 %v7618
  %v7710 = vunpack.c.l.b16 %v7619
  %v7711 = vunpack.c.h.b16 %v7619
  %v7712 = vunpack.c.l.b16 %v7620
  %v7713 = vunpack.c.h.b16 %v7620
  %v7714 = vunpack.c.l.b16 %v7621
  %v7715 = vunpack.c.h.b16 %v7621
  %v7716 = vunpack.c.l.b16 %v7622
  %v7717 = vunpack.c.h.b16 %v7622
  %v7718 = vunpack.c.l.b16 %v7623
  %v7719 = vunpack.c.h.b16 %v7623
  %v7720 = vpack.c.b16 %v7660, %v7656
  %v7721 = vpack.c.b16 %v7661, %v7657
  %v7722 = vpack.c.b16 %v7662, %v7658
  %v7723 = vpack.c.b16 %v7663, %v7659
  %v7724 = vpack.c.b16 %v7668, %v7664
  %v7725 = vpack.c.b16 %v7669, %v7665
  %v7726 = vpack.c.b16 %v7670, %v7666
  %v7727 = vpack.c.b16 %v7671, %v7667
  %v7728 = vpack.c.b16 %v7676, %v7672
  %v7729 = vpack.c.b16 %v7677, %v7673
  %v7730 = vpack.c.b16 %v7678, %v7674
  %v7731 = vpack.c.b16 %v7679, %v7675
  %v7732 = vpack.c.b16 %v7684, %v7680
  %v7733 = vpack.c.b16 %v7685, %v7681
  %v7734 = vpack.c.b16 %v7686, %v7682
  %v7735 = vpack.c.b16 %v7687, %v7683
  %v7736 = vpack.c.b16 %v7692, %v7688
  %v7737 = vpack.c.b16 %v7693, %v7689
  %v7738 = vpack.c.b16 %v7694, %v7690
  %v7739 = vpack.c.b16 %v7695, %v7691
  %v7740 = vpack.c.b16 %v7700, %v7696
  %v7741 = vpack.c.b16 %v7701, %v7697
  %v7742 = vpack.c.b16 %v7702, %v7698
  %v7743 = vpack.c.b16 %v7703, %v7699
  %v7744 = vpack.c.b16 %v7708, %v7704
  %v7745 = vpack.c.b16 %v7709, %v7705
  %v7746 = vpack.c.b16 %v7710, %v7706
  %v7747 = vpack.c.b16 %v7711, %v7707
  %v7748 = vpack.c.b16 %v7716, %v7712
  %v7749 = vpack.c.b16 %v7717, %v7713
  %v7750 = vpack.c.b16 %v7718, %v7714
  %v7751 = vpack.c.b16 %v7719, %v7715
  %7784 = vmatpush.bf16.msra.mxu0 %v7748
  %7785 = vmatpush.bf16.msra.mxu0 %v7744
  %7786 = vmatpush.bf16.msra.mxu0 %v7740
  %7787 = vmatpush.bf16.msra.mxu0 %v7736
  %7788 = vmatpush.bf16.msra.mxu0 %v7732
  %7789 = vmatpush.bf16.msra.mxu0 %v7728
  %7790 = vmatpush.bf16.msra.mxu0 %v7724
  %7791 = vmatpush.bf16.msra.mxu0 %v7720
  %7792 = vmatmul.bf16.gmra.mxu0 %v7090
  %v7793 = vpop.f32.mrf.mxu0
  %v7794 = vadd.f32 0.0, %v7793
  %v7795 = vpop.f32.mrf.mxu0
  %7796 = vdwg.mxu0
  %7797 = vmatpush.bf16.msra.mxu0 %v7749
  %7798 = vmatpush.bf16.msra.mxu0 %v7745
  %7799 = vmatpush.bf16.msra.mxu0 %v7741
  %7800 = vmatpush.bf16.msra.mxu0 %v7737
  %7801 = vmatpush.bf16.msra.mxu0 %v7733
  %7802 = vmatpush.bf16.msra.mxu0 %v7729
  %7803 = vmatpush.bf16.msra.mxu0 %v7725
  %7804 = vmatpush.bf16.msra.mxu0 %v7721
  %7805 = vmatmul.bf16.gmra.mxu0 %v7090
  %v7806 = vpop.f32.mrf.mxu0
  %v7807 = vadd.f32 0.0, %v7806
  %v7808 = vpop.f32.mrf.mxu0
  %7809 = vdwg.mxu0
  %7810 = vmatpush.bf16.msra.mxu0 %v7750
  %7811 = vmatpush.bf16.msra.mxu0 %v7746
  %7812 = vmatpush.bf16.msra.mxu0 %v7742
  %7813 = vmatpush.bf16.msra.mxu0 %v7738
  %7814 = vmatpush.bf16.msra.mxu0 %v7734
  %7815 = vmatpush.bf16.msra.mxu0 %v7730
  %7816 = vmatpush.bf16.msra.mxu0 %v7726
  %7817 = vmatpush.bf16.msra.mxu0 %v7722
  %7818 = vmatmul.bf16.gmra.mxu0 %v7090
  %v7819 = vpop.f32.mrf.mxu0
  %v7820 = vadd.f32 0.0, %v7819
  %v7821 = vpop.f32.mrf.mxu0
  %7822 = vdwg.mxu0
  %7823 = vmatpush.bf16.msra.mxu0 %v7751
  %7824 = vmatpush.bf16.msra.mxu0 %v7747
  %7825 = vmatpush.bf16.msra.mxu0 %v7743
  %7826 = vmatpush.bf16.msra.mxu0 %v7739
  %7827 = vmatpush.bf16.msra.mxu0 %v7735
  %7828 = vmatpush.bf16.msra.mxu0 %v7731
  %7829 = vmatpush.bf16.msra.mxu0 %v7727
  %7830 = vmatpush.bf16.msra.mxu0 %v7723
  %7831 = vmatmul.bf16.gmra.mxu0 %v7090
  %v7832 = vpop.f32.mrf.mxu0
  %v7833 = vadd.f32 0.0, %v7832
  %v7834 = vpop.f32.mrf.mxu0
  %7835 = vdwg.mxu0
  %v7836 = vadd.f32 %v6960, %v7794
  %v7837 = vadd.f32 %v6973, %v7807
  %v7838 = vadd.f32 %v6986, %v7820
  %v7839 = vadd.f32 %v6999, %v7833
  %s7840 = scalar_lea.vmem %s2, 6
  %v7841 = vld [vmem:[%s7840] sm:$0x3]
  %7843 = vst [vmem:[#allocation1] ss:$9 sm:$0xff] %v7841
  %v7844 = vld [vmem:[#allocation1] sm:$0xff]
  %v7845 = vld [vmem:[#allocation1 + $0x9] sm:$0xff]
  %v7847 = vsel %vm4392, %v7845, 0
  %7849 = vmatpush.bf16.msra.mxu0 %v5300
  %7850 = vmatpush.bf16.msra.mxu0 %v5297
  %7851 = vmatpush.bf16.msra.mxu0 %v5294
  %7852 = vmatpush.bf16.msra.mxu0 %v5291
  %7853 = vmatpush.bf16.msra.mxu0 %v5288
  %7854 = vmatpush.bf16.msra.mxu0 %v5285
  %7855 = vmatpush.bf16.msra.mxu0 %v5282
  %7856 = vmatpush.bf16.msra.mxu0 %v5279
  %7857 = vmatmul.bf16.gmra.mxu0 %v7844
  %v7858 = vpop.f32.mrf.mxu0
  %v7859 = vadd.f32 %v5148, %v7858
  %v7860 = vpop.f32.mrf.mxu0
  %7861 = vdwg.mxu0
  %7862 = vmatpush.bf16.msra.mxu0 0
  %7863 = vmatpush.bf16.msra.mxu0 0
  %7864 = vmatpush.bf16.msra.mxu0 0
  %7865 = vmatpush.bf16.msra.mxu0 0
  %7866 = vmatpush.bf16.msra.mxu0 %v5312
  %7867 = vmatpush.bf16.msra.mxu0 %v5309
  %7868 = vmatpush.bf16.msra.mxu0 %v5306
  %7869 = vmatpush.bf16.msra.mxu0 %v5303
  %7870 = vmatmul.bf16.gmra.mxu0 %v7847
  %v7871 = vpop.f32.mrf.mxu0
  %v7872 = vadd.f32 %v7859, %v7871
  %v7873 = vpop.f32.mrf.mxu0
  %7874 = vdwg.mxu0
  %7875 = vmatpush.bf16.msra.mxu0 %v5301
  %7876 = vmatpush.bf16.msra.mxu0 %v5298
  %7877 = vmatpush.bf16.msra.mxu0 %v5295
  %7878 = vmatpush.bf16.msra.mxu0 %v5292
  %7879 = vmatpush.bf16.msra.mxu0 %v5289
  %7880 = vmatpush.bf16.msra.mxu0 %v5286
  %7881 = vmatpush.bf16.msra.mxu0 %v5283
  %7882 = vmatpush.bf16.msra.mxu0 %v5280
  %7883 = vmatmul.bf16.gmra.mxu0 %v7844
  %v7884 = vpop.f32.mrf.mxu0
  %v7885 = vadd.f32 %v5149, %v7884
  %v7886 = vpop.f32.mrf.mxu0
  %7887 = vdwg.mxu0
  %7888 = vmatpush.bf16.msra.mxu0 0
  %7889 = vmatpush.bf16.msra.mxu0 0
  %7890 = vmatpush.bf16.msra.mxu0 0
  %7891 = vmatpush.bf16.msra.mxu0 0
  %7892 = vmatpush.bf16.msra.mxu0 %v5313
  %7893 = vmatpush.bf16.msra.mxu0 %v5310
  %7894 = vmatpush.bf16.msra.mxu0 %v5307
  %7895 = vmatpush.bf16.msra.mxu0 %v5304
  %7896 = vmatmul.bf16.gmra.mxu0 %v7847
  %v7897 = vpop.f32.mrf.mxu0
  %v7898 = vadd.f32 %v7885, %v7897
  %v7899 = vpop.f32.mrf.mxu0
  %7900 = vdwg.mxu0
  %7901 = vmatpush.bf16.msra.mxu0 %v5302
  %7902 = vmatpush.bf16.msra.mxu0 %v5299
  %7903 = vmatpush.bf16.msra.mxu0 %v5296
  %7904 = vmatpush.bf16.msra.mxu0 %v5293
  %7905 = vmatpush.bf16.msra.mxu0 %v5290
  %7906 = vmatpush.bf16.msra.mxu0 %v5287
  %7907 = vmatpush.bf16.msra.mxu0 %v5284
  %7908 = vmatpush.bf16.msra.mxu0 %v5281
  %7909 = vmatmul.bf16.gmra.mxu0 %v7844
  %v7910 = vpop.f32.mrf.mxu0
  %v7911 = vadd.f32 %v5150, %v7910
  %v7912 = vpop.f32.mrf.mxu0
  %7913 = vdwg.mxu0
  %7914 = vmatpush.bf16.msra.mxu0 0
  %7915 = vmatpush.bf16.msra.mxu0 0
  %7916 = vmatpush.bf16.msra.mxu0 0
  %7917 = vmatpush.bf16.msra.mxu0 0
  %7918 = vmatpush.bf16.msra.mxu0 %v5314
  %7919 = vmatpush.bf16.msra.mxu0 %v5311
  %7920 = vmatpush.bf16.msra.mxu0 %v5308
  %7921 = vmatpush.bf16.msra.mxu0 %v5305
  %7922 = vmatmul.bf16.gmra.mxu0 %v7847
  %v7923 = vpop.f32.mrf.mxu0
  %v7924 = vadd.f32 %v7911, %v7923
  %v7925 = vpop.f32.mrf.mxu0
  %7926 = vdwg.mxu0
  %v7927 = vpack.c.bf16 %v7898, %v7872
  %v7928 = vpack.c.bf16 %v7924, %v7924
  %s7929 = scalar_lea.vmem %s20, 1536
  %v7930 = vld [vmem:[%s7929] sm:$0xff]
  %v7931 = vld [vmem:[%s7929 + $0x8] sm:$0xff]
  %v7932 = vld [vmem:[%s7929 + $0x10] sm:$0xff]
  %v7933 = vld [vmem:[%s7929 + $0x18] sm:$0xff]
  %v7934 = vld [vmem:[%s7929 + $0x20] sm:$0xff]
  %v7935 = vld [vmem:[%s7929 + $0x28] sm:$0xff]
  %v7936 = vld [vmem:[%s7929 + $0x30] sm:$0xff]
  %v7937 = vld [vmem:[%s7929 + $0x38] sm:$0xff]
  %v7938 = vld [vmem:[%s7929 + $0x40] sm:$0xff]
  %v7939 = vld [vmem:[%s7929 + $0x48] sm:$0xff]
  %v7940 = vld [vmem:[%s7929 + $0x50] sm:$0xff]
  %v7941 = vld [vmem:[%s7929 + $0x58] sm:$0xff]
  %v7942 = vld [vmem:[%s7929 + $0x60] sm:$0xff]
  %v7943 = vld [vmem:[%s7929 + $0x68] sm:$0xff]
  %v7944 = vld [vmem:[%s7929 + $0x70] sm:$0xff]
  %v7945 = vld [vmem:[%s7929 + $0x78] sm:$0xff]
  %v7946 = vld [vmem:[%s7929 + $0x80] sm:$0xff]
  %v7947 = vld [vmem:[%s7929 + $0x88] sm:$0xff]
  %v7948 = vld [vmem:[%s7929 + $0x90] sm:$0xff]
  %v7949 = vld [vmem:[%s7929 + $0x98] sm:$0xff]
  %v7950 = vld [vmem:[%s7929 + $0xa0] sm:$0xff]
  %v7951 = vld [vmem:[%s7929 + $0xa8] sm:$0xff]
  %v7952 = vld [vmem:[%s7929 + $0xb0] sm:$0xff]
  %v7953 = vld [vmem:[%s7929 + $0xb8] sm:$0xff]
  %v7954 = vld [vmem:[%s7929 + $0xc0] sm:$0xff]
  %v7955 = vld [vmem:[%s7929 + $0xc8] sm:$0xff]
  %v7956 = vld [vmem:[%s7929 + $0xd0] sm:$0xff]
  %v7957 = vld [vmem:[%s7929 + $0xd8] sm:$0xff]
  %v7958 = vld [vmem:[%s7929 + $0xe0] sm:$0xff]
  %v7959 = vld [vmem:[%s7929 + $0xe8] sm:$0xff]
  %v7960 = vld [vmem:[%s7929 + $0xf0] sm:$0xff]
  %v7961 = vld [vmem:[%s7929 + $0xf8] sm:$0xff]
  %v7962 = vld [vmem:[%s7929 + $0x100] sm:$0xff]
  %v7963 = vld [vmem:[%s7929 + $0x108] sm:$0xff]
  %v7964 = vld [vmem:[%s7929 + $0x110] sm:$0xff]
  %v7965 = vld [vmem:[%s7929 + $0x118] sm:$0xff]
  %v7966 = vld [vmem:[%s7929 + $0x120] sm:$0xff]
  %v7967 = vld [vmem:[%s7929 + $0x128] sm:$0xff]
  %v7968 = vld [vmem:[%s7929 + $0x130] sm:$0xff]
  %v7969 = vld [vmem:[%s7929 + $0x138] sm:$0xff]
  %v7970 = vld [vmem:[%s7929 + $0x140] sm:$0xff]
  %v7971 = vld [vmem:[%s7929 + $0x148] sm:$0xff]
  %v7972 = vld [vmem:[%s7929 + $0x150] sm:$0xff]
  %v7973 = vld [vmem:[%s7929 + $0x158] sm:$0xff]
  %v7974 = vld [vmem:[%s7929 + $0x160] sm:$0xff]
  %v7975 = vld [vmem:[%s7929 + $0x168] sm:$0xff]
  %v7976 = vld [vmem:[%s7929 + $0x170] sm:$0xff]
  %v7977 = vld [vmem:[%s7929 + $0x178] sm:$0xff]
  %v7978 = vld [vmem:[%s7929 + $0x180] sm:$0xff]
  %v7979 = vld [vmem:[%s7929 + $0x188] sm:$0xff]
  %v7980 = vld [vmem:[%s7929 + $0x190] sm:$0xff]
  %v7981 = vld [vmem:[%s7929 + $0x198] sm:$0xff]
  %v7982 = vld [vmem:[%s7929 + $0x1a0] sm:$0xff]
  %v7983 = vld [vmem:[%s7929 + $0x1a8] sm:$0xff]
  %v7984 = vld [vmem:[%s7929 + $0x1b0] sm:$0xff]
  %v7985 = vld [vmem:[%s7929 + $0x1b8] sm:$0xff]
  %v7986 = vld [vmem:[%s7929 + $0x1c0] sm:$0xff]
  %v7987 = vld [vmem:[%s7929 + $0x1c8] sm:$0xff]
  %v7988 = vld [vmem:[%s7929 + $0x1d0] sm:$0xff]
  %v7989 = vld [vmem:[%s7929 + $0x1d8] sm:$0xff]
  %v7990 = vld [vmem:[%s7929 + $0x1e0] sm:$0xff]
  %v7991 = vld [vmem:[%s7929 + $0x1e8] sm:$0xff]
  %v7992 = vld [vmem:[%s7929 + $0x1f0] sm:$0xff]
  %v7993 = vld [vmem:[%s7929 + $0x1f8] sm:$0xff]
  %v7995 = vunpack.c.l.b16 %v7927
  %v7996 = vunpack.c.h.b16 %v7927
  %v7997 = vpack.c.b16 %v7995, %v7995
  %v7998 = vpack.c.b16 %v7996, %v7996
  %v8065 = vunpack.c.l.b16 %v7930
  %v8066 = vunpack.c.h.b16 %v7930
  %v8067 = vunpack.c.l.b16 %v7931
  %v8068 = vunpack.c.h.b16 %v7931
  %v8069 = vunpack.c.l.b16 %v7932
  %v8070 = vunpack.c.h.b16 %v7932
  %v8071 = vunpack.c.l.b16 %v7933
  %v8072 = vunpack.c.h.b16 %v7933
  %v8073 = vunpack.c.l.b16 %v7934
  %v8074 = vunpack.c.h.b16 %v7934
  %v8075 = vunpack.c.l.b16 %v7935
  %v8076 = vunpack.c.h.b16 %v7935
  %v8077 = vunpack.c.l.b16 %v7936
  %v8078 = vunpack.c.h.b16 %v7936
  %v8079 = vunpack.c.l.b16 %v7937
  %v8080 = vunpack.c.h.b16 %v7937
  %v8081 = vunpack.c.l.b16 %v7938
  %v8082 = vunpack.c.h.b16 %v7938
  %v8083 = vunpack.c.l.b16 %v7939
  %v8084 = vunpack.c.h.b16 %v7939
  %v8085 = vunpack.c.l.b16 %v7940
  %v8086 = vunpack.c.h.b16 %v7940
  %v8087 = vunpack.c.l.b16 %v7941
  %v8088 = vunpack.c.h.b16 %v7941
  %v8089 = vunpack.c.l.b16 %v7942
  %v8090 = vunpack.c.h.b16 %v7942
  %v8091 = vunpack.c.l.b16 %v7943
  %v8092 = vunpack.c.h.b16 %v7943
  %v8093 = vunpack.c.l.b16 %v7944
  %v8094 = vunpack.c.h.b16 %v7944
  %v8095 = vunpack.c.l.b16 %v7945
  %v8096 = vunpack.c.h.b16 %v7945
  %v8097 = vunpack.c.l.b16 %v7946
  %v8098 = vunpack.c.h.b16 %v7946
  %v8099 = vunpack.c.l.b16 %v7947
  %v8100 = vunpack.c.h.b16 %v7947
  %v8101 = vunpack.c.l.b16 %v7948
  %v8102 = vunpack.c.h.b16 %v7948
  %v8103 = vunpack.c.l.b16 %v7949
  %v8104 = vunpack.c.h.b16 %v7949
  %v8105 = vunpack.c.l.b16 %v7950
  %v8106 = vunpack.c.h.b16 %v7950
  %v8107 = vunpack.c.l.b16 %v7951
  %v8108 = vunpack.c.h.b16 %v7951
  %v8109 = vunpack.c.l.b16 %v7952
  %v8110 = vunpack.c.h.b16 %v7952
  %v8111 = vunpack.c.l.b16 %v7953
  %v8112 = vunpack.c.h.b16 %v7953
  %v8113 = vunpack.c.l.b16 %v7954
  %v8114 = vunpack.c.h.b16 %v7954
  %v8115 = vunpack.c.l.b16 %v7955
  %v8116 = vunpack.c.h.b16 %v7955
  %v8117 = vunpack.c.l.b16 %v7956
  %v8118 = vunpack.c.h.b16 %v7956
  %v8119 = vunpack.c.l.b16 %v7957
  %v8120 = vunpack.c.h.b16 %v7957
  %v8121 = vunpack.c.l.b16 %v7958
  %v8122 = vunpack.c.h.b16 %v7958
  %v8123 = vunpack.c.l.b16 %v7959
  %v8124 = vunpack.c.h.b16 %v7959
  %v8125 = vunpack.c.l.b16 %v7960
  %v8126 = vunpack.c.h.b16 %v7960
  %v8127 = vunpack.c.l.b16 %v7961
  %v8128 = vunpack.c.h.b16 %v7961
  %v8129 = vunpack.c.l.b16 %v7962
  %v8130 = vunpack.c.h.b16 %v7962
  %v8131 = vunpack.c.l.b16 %v7963
  %v8132 = vunpack.c.h.b16 %v7963
  %v8133 = vunpack.c.l.b16 %v7964
  %v8134 = vunpack.c.h.b16 %v7964
  %v8135 = vunpack.c.l.b16 %v7965
  %v8136 = vunpack.c.h.b16 %v7965
  %v8137 = vunpack.c.l.b16 %v7966
  %v8138 = vunpack.c.h.b16 %v7966
  %v8139 = vunpack.c.l.b16 %v7967
  %v8140 = vunpack.c.h.b16 %v7967
  %v8141 = vunpack.c.l.b16 %v7968
  %v8142 = vunpack.c.h.b16 %v7968
  %v8143 = vunpack.c.l.b16 %v7969
  %v8144 = vunpack.c.h.b16 %v7969
  %v8145 = vunpack.c.l.b16 %v7970
  %v8146 = vunpack.c.h.b16 %v7970
  %v8147 = vunpack.c.l.b16 %v7971
  %v8148 = vunpack.c.h.b16 %v7971
  %v8149 = vunpack.c.l.b16 %v7972
  %v8150 = vunpack.c.h.b16 %v7972
  %v8151 = vunpack.c.l.b16 %v7973
  %v8152 = vunpack.c.h.b16 %v7973
  %v8153 = vunpack.c.l.b16 %v7974
  %v8154 = vunpack.c.h.b16 %v7974
  %v8155 = vunpack.c.l.b16 %v7975
  %v8156 = vunpack.c.h.b16 %v7975
  %v8157 = vunpack.c.l.b16 %v7976
  %v8158 = vunpack.c.h.b16 %v7976
  %v8159 = vunpack.c.l.b16 %v7977
  %v8160 = vunpack.c.h.b16 %v7977
  %v8161 = vunpack.c.l.b16 %v7978
  %v8162 = vunpack.c.h.b16 %v7978
  %v8163 = vunpack.c.l.b16 %v7979
  %v8164 = vunpack.c.h.b16 %v7979
  %v8165 = vunpack.c.l.b16 %v7980
  %v8166 = vunpack.c.h.b16 %v7980
  %v8167 = vunpack.c.l.b16 %v7981
  %v8168 = vunpack.c.h.b16 %v7981
  %v8169 = vunpack.c.l.b16 %v7982
  %v8170 = vunpack.c.h.b16 %v7982
  %v8171 = vunpack.c.l.b16 %v7983
  %v8172 = vunpack.c.h.b16 %v7983
  %v8173 = vunpack.c.l.b16 %v7984
  %v8174 = vunpack.c.h.b16 %v7984
  %v8175 = vunpack.c.l.b16 %v7985
  %v8176 = vunpack.c.h.b16 %v7985
  %v8177 = vunpack.c.l.b16 %v7986
  %v8178 = vunpack.c.h.b16 %v7986
  %v8179 = vunpack.c.l.b16 %v7987
  %v8180 = vunpack.c.h.b16 %v7987
  %v8181 = vunpack.c.l.b16 %v7988
  %v8182 = vunpack.c.h.b16 %v7988
  %v8183 = vunpack.c.l.b16 %v7989
  %v8184 = vunpack.c.h.b16 %v7989
  %v8185 = vunpack.c.l.b16 %v7990
  %v8186 = vunpack.c.h.b16 %v7990
  %v8187 = vunpack.c.l.b16 %v7991
  %v8188 = vunpack.c.h.b16 %v7991
  %v8189 = vunpack.c.l.b16 %v7992
  %v8190 = vunpack.c.h.b16 %v7992
  %v8191 = vunpack.c.l.b16 %v7993
  %v8192 = vunpack.c.h.b16 %v7993
  %v8193 = vpack.c.b16 %v8069, %v8065
  %v8194 = vpack.c.b16 %v8070, %v8066
  %v8195 = vpack.c.b16 %v8071, %v8067
  %v8196 = vpack.c.b16 %v8072, %v8068
  %v8197 = vpack.c.b16 %v8077, %v8073
  %v8198 = vpack.c.b16 %v8078, %v8074
  %v8199 = vpack.c.b16 %v8079, %v8075
  %v8200 = vpack.c.b16 %v8080, %v8076
  %v8201 = vpack.c.b16 %v8085, %v8081
  %v8202 = vpack.c.b16 %v8086, %v8082
  %v8203 = vpack.c.b16 %v8087, %v8083
  %v8204 = vpack.c.b16 %v8088, %v8084
  %v8205 = vpack.c.b16 %v8093, %v8089
  %v8206 = vpack.c.b16 %v8094, %v8090
  %v8207 = vpack.c.b16 %v8095, %v8091
  %v8208 = vpack.c.b16 %v8096, %v8092
  %v8209 = vpack.c.b16 %v8101, %v8097
  %v8210 = vpack.c.b16 %v8102, %v8098
  %v8211 = vpack.c.b16 %v8103, %v8099
  %v8212 = vpack.c.b16 %v8104, %v8100
  %v8213 = vpack.c.b16 %v8109, %v8105
  %v8214 = vpack.c.b16 %v8110, %v8106
  %v8215 = vpack.c.b16 %v8111, %v8107
  %v8216 = vpack.c.b16 %v8112, %v8108
  %v8217 = vpack.c.b16 %v8117, %v8113
  %v8218 = vpack.c.b16 %v8118, %v8114
  %v8219 = vpack.c.b16 %v8119, %v8115
  %v8220 = vpack.c.b16 %v8120, %v8116
  %v8221 = vpack.c.b16 %v8125, %v8121
  %v8222 = vpack.c.b16 %v8126, %v8122
  %v8223 = vpack.c.b16 %v8127, %v8123
  %v8224 = vpack.c.b16 %v8128, %v8124
  %v8225 = vpack.c.b16 %v8133, %v8129
  %v8226 = vpack.c.b16 %v8134, %v8130
  %v8227 = vpack.c.b16 %v8135, %v8131
  %v8228 = vpack.c.b16 %v8136, %v8132
  %v8229 = vpack.c.b16 %v8141, %v8137
  %v8230 = vpack.c.b16 %v8142, %v8138
  %v8231 = vpack.c.b16 %v8143, %v8139
  %v8232 = vpack.c.b16 %v8144, %v8140
  %v8233 = vpack.c.b16 %v8149, %v8145
  %v8234 = vpack.c.b16 %v8150, %v8146
  %v8235 = vpack.c.b16 %v8151, %v8147
  %v8236 = vpack.c.b16 %v8152, %v8148
  %v8237 = vpack.c.b16 %v8157, %v8153
  %v8238 = vpack.c.b16 %v8158, %v8154
  %v8239 = vpack.c.b16 %v8159, %v8155
  %v8240 = vpack.c.b16 %v8160, %v8156
  %v8241 = vpack.c.b16 %v8165, %v8161
  %v8242 = vpack.c.b16 %v8166, %v8162
  %v8243 = vpack.c.b16 %v8167, %v8163
  %v8244 = vpack.c.b16 %v8168, %v8164
  %v8245 = vpack.c.b16 %v8173, %v8169
  %v8246 = vpack.c.b16 %v8174, %v8170
  %v8247 = vpack.c.b16 %v8175, %v8171
  %v8248 = vpack.c.b16 %v8176, %v8172
  %v8249 = vpack.c.b16 %v8181, %v8177
  %v8250 = vpack.c.b16 %v8182, %v8178
  %v8251 = vpack.c.b16 %v8183, %v8179
  %v8252 = vpack.c.b16 %v8184, %v8180
  %v8253 = vpack.c.b16 %v8189, %v8185
  %v8254 = vpack.c.b16 %v8190, %v8186
  %v8255 = vpack.c.b16 %v8191, %v8187
  %v8256 = vpack.c.b16 %v8192, %v8188
  %8321 = vmatpush.bf16.msra.mxu0 %v8221
  %8322 = vmatpush.bf16.msra.mxu0 %v8217
  %8323 = vmatpush.bf16.msra.mxu0 %v8213
  %8324 = vmatpush.bf16.msra.mxu0 %v8209
  %8325 = vmatpush.bf16.msra.mxu0 %v8205
  %8326 = vmatpush.bf16.msra.mxu0 %v8201
  %8327 = vmatpush.bf16.msra.mxu0 %v8197
  %8328 = vmatpush.bf16.msra.mxu0 %v8193
  %8329 = vmatmul.bf16.gmra.mxu0 %v7997
  %v8330 = vpop.f32.mrf.mxu0
  %v8331 = vadd.f32 0.0, %v8330
  %v8332 = vpop.f32.mrf.mxu0
  %8333 = vdwg.mxu0
  %8334 = vmatpush.bf16.msra.mxu0 %v8253
  %8335 = vmatpush.bf16.msra.mxu0 %v8249
  %8336 = vmatpush.bf16.msra.mxu0 %v8245
  %8337 = vmatpush.bf16.msra.mxu0 %v8241
  %8338 = vmatpush.bf16.msra.mxu0 %v8237
  %8339 = vmatpush.bf16.msra.mxu0 %v8233
  %8340 = vmatpush.bf16.msra.mxu0 %v8229
  %8341 = vmatpush.bf16.msra.mxu0 %v8225
  %8342 = vmatmul.bf16.gmra.mxu0 %v7998
  %v8343 = vpop.f32.mrf.mxu0
  %v8344 = vadd.f32 %v8331, %v8343
  %v8345 = vpop.f32.mrf.mxu0
  %8346 = vdwg.mxu0
  %8347 = vmatpush.bf16.msra.mxu0 %v8222
  %8348 = vmatpush.bf16.msra.mxu0 %v8218
  %8349 = vmatpush.bf16.msra.mxu0 %v8214
  %8350 = vmatpush.bf16.msra.mxu0 %v8210
  %8351 = vmatpush.bf16.msra.mxu0 %v8206
  %8352 = vmatpush.bf16.msra.mxu0 %v8202
  %8353 = vmatpush.bf16.msra.mxu0 %v8198
  %8354 = vmatpush.bf16.msra.mxu0 %v8194
  %8355 = vmatmul.bf16.gmra.mxu0 %v7997
  %v8356 = vpop.f32.mrf.mxu0
  %v8357 = vadd.f32 0.0, %v8356
  %v8358 = vpop.f32.mrf.mxu0
  %8359 = vdwg.mxu0
  %8360 = vmatpush.bf16.msra.mxu0 %v8254
  %8361 = vmatpush.bf16.msra.mxu0 %v8250
  %8362 = vmatpush.bf16.msra.mxu0 %v8246
  %8363 = vmatpush.bf16.msra.mxu0 %v8242
  %8364 = vmatpush.bf16.msra.mxu0 %v8238
  %8365 = vmatpush.bf16.msra.mxu0 %v8234
  %8366 = vmatpush.bf16.msra.mxu0 %v8230
  %8367 = vmatpush.bf16.msra.mxu0 %v8226
  %8368 = vmatmul.bf16.gmra.mxu0 %v7998
  %v8369 = vpop.f32.mrf.mxu0
  %v8370 = vadd.f32 %v8357, %v8369
  %v8371 = vpop.f32.mrf.mxu0
  %8372 = vdwg.mxu0
  %8373 = vmatpush.bf16.msra.mxu0 %v8223
  %8374 = vmatpush.bf16.msra.mxu0 %v8219
  %8375 = vmatpush.bf16.msra.mxu0 %v8215
  %8376 = vmatpush.bf16.msra.mxu0 %v8211
  %8377 = vmatpush.bf16.msra.mxu0 %v8207
  %8378 = vmatpush.bf16.msra.mxu0 %v8203
  %8379 = vmatpush.bf16.msra.mxu0 %v8199
  %8380 = vmatpush.bf16.msra.mxu0 %v8195
  %8381 = vmatmul.bf16.gmra.mxu0 %v7997
  %v8382 = vpop.f32.mrf.mxu0
  %v8383 = vadd.f32 0.0, %v8382
  %v8384 = vpop.f32.mrf.mxu0
  %8385 = vdwg.mxu0
  %8386 = vmatpush.bf16.msra.mxu0 %v8255
  %8387 = vmatpush.bf16.msra.mxu0 %v8251
  %8388 = vmatpush.bf16.msra.mxu0 %v8247
  %8389 = vmatpush.bf16.msra.mxu0 %v8243
  %8390 = vmatpush.bf16.msra.mxu0 %v8239
  %8391 = vmatpush.bf16.msra.mxu0 %v8235
  %8392 = vmatpush.bf16.msra.mxu0 %v8231
  %8393 = vmatpush.bf16.msra.mxu0 %v8227
  %8394 = vmatmul.bf16.gmra.mxu0 %v7998
  %v8395 = vpop.f32.mrf.mxu0
  %v8396 = vadd.f32 %v8383, %v8395
  %v8397 = vpop.f32.mrf.mxu0
  %8398 = vdwg.mxu0
  %8399 = vmatpush.bf16.msra.mxu0 %v8224
  %8400 = vmatpush.bf16.msra.mxu0 %v8220
  %8401 = vmatpush.bf16.msra.mxu0 %v8216
  %8402 = vmatpush.bf16.msra.mxu0 %v8212
  %8403 = vmatpush.bf16.msra.mxu0 %v8208
  %8404 = vmatpush.bf16.msra.mxu0 %v8204
  %8405 = vmatpush.bf16.msra.mxu0 %v8200
  %8406 = vmatpush.bf16.msra.mxu0 %v8196
  %8407 = vmatmul.bf16.gmra.mxu0 %v7997
  %v8408 = vpop.f32.mrf.mxu0
  %v8409 = vadd.f32 0.0, %v8408
  %v8410 = vpop.f32.mrf.mxu0
  %8411 = vdwg.mxu0
  %8412 = vmatpush.bf16.msra.mxu0 %v8256
  %8413 = vmatpush.bf16.msra.mxu0 %v8252
  %8414 = vmatpush.bf16.msra.mxu0 %v8248
  %8415 = vmatpush.bf16.msra.mxu0 %v8244
  %8416 = vmatpush.bf16.msra.mxu0 %v8240
  %8417 = vmatpush.bf16.msra.mxu0 %v8236
  %8418 = vmatpush.bf16.msra.mxu0 %v8232
  %8419 = vmatpush.bf16.msra.mxu0 %v8228
  %8420 = vmatmul.bf16.gmra.mxu0 %v7998
  %v8421 = vpop.f32.mrf.mxu0
  %v8422 = vadd.f32 %v8409, %v8421
  %v8423 = vpop.f32.mrf.mxu0
  %8424 = vdwg.mxu0
  %v8425 = vadd.f32 %v7587, %v8344
  %v8426 = vadd.f32 %v7588, %v8370
  %v8427 = vadd.f32 %v7589, %v8396
  %v8428 = vadd.f32 %v7590, %v8422
  %s8429 = scalar_lea.vmem %s21, 768
  %v8430 = vld [vmem:[%s8429] sm:$0xff]
  %v8431 = vld [vmem:[%s8429 + $0x8] sm:$0xff]
  %v8432 = vld [vmem:[%s8429 + $0x10] sm:$0xff]
  %v8433 = vld [vmem:[%s8429 + $0x18] sm:$0xff]
  %v8434 = vld [vmem:[%s8429 + $0x20] sm:$0xff]
  %v8435 = vld [vmem:[%s8429 + $0x28] sm:$0xff]
  %v8436 = vld [vmem:[%s8429 + $0x30] sm:$0xff]
  %v8437 = vld [vmem:[%s8429 + $0x38] sm:$0xff]
  %v8438 = vld [vmem:[%s8429 + $0x40] sm:$0xff]
  %v8439 = vld [vmem:[%s8429 + $0x48] sm:$0xff]
  %v8440 = vld [vmem:[%s8429 + $0x50] sm:$0xff]
  %v8441 = vld [vmem:[%s8429 + $0x58] sm:$0xff]
  %v8442 = vld [vmem:[%s8429 + $0x60] sm:$0xff]
  %v8443 = vld [vmem:[%s8429 + $0x68] sm:$0xff]
  %v8444 = vld [vmem:[%s8429 + $0x70] sm:$0xff]
  %v8445 = vld [vmem:[%s8429 + $0x78] sm:$0xff]
  %v8446 = vld [vmem:[%s8429 + $0x80] sm:$0xff]
  %v8447 = vld [vmem:[%s8429 + $0x88] sm:$0xff]
  %v8448 = vld [vmem:[%s8429 + $0x90] sm:$0xff]
  %v8449 = vld [vmem:[%s8429 + $0x98] sm:$0xff]
  %v8450 = vld [vmem:[%s8429 + $0xa0] sm:$0xff]
  %v8451 = vld [vmem:[%s8429 + $0xa8] sm:$0xff]
  %v8452 = vld [vmem:[%s8429 + $0xb0] sm:$0xff]
  %v8453 = vld [vmem:[%s8429 + $0xb8] sm:$0xff]
  %v8454 = vld [vmem:[%s8429 + $0xc0] sm:$0xff]
  %v8455 = vld [vmem:[%s8429 + $0xc8] sm:$0xff]
  %v8456 = vld [vmem:[%s8429 + $0xd0] sm:$0xff]
  %v8457 = vld [vmem:[%s8429 + $0xd8] sm:$0xff]
  %v8458 = vld [vmem:[%s8429 + $0xe0] sm:$0xff]
  %v8459 = vld [vmem:[%s8429 + $0xe8] sm:$0xff]
  %v8460 = vld [vmem:[%s8429 + $0xf0] sm:$0xff]
  %v8461 = vld [vmem:[%s8429 + $0xf8] sm:$0xff]
  %v8494 = vunpack.c.l.b16 %v8430
  %v8495 = vunpack.c.h.b16 %v8430
  %v8496 = vunpack.c.l.b16 %v8431
  %v8497 = vunpack.c.h.b16 %v8431
  %v8498 = vunpack.c.l.b16 %v8432
  %v8499 = vunpack.c.h.b16 %v8432
  %v8500 = vunpack.c.l.b16 %v8433
  %v8501 = vunpack.c.h.b16 %v8433
  %v8502 = vunpack.c.l.b16 %v8434
  %v8503 = vunpack.c.h.b16 %v8434
  %v8504 = vunpack.c.l.b16 %v8435
  %v8505 = vunpack.c.h.b16 %v8435
  %v8506 = vunpack.c.l.b16 %v8436
  %v8507 = vunpack.c.h.b16 %v8436
  %v8508 = vunpack.c.l.b16 %v8437
  %v8509 = vunpack.c.h.b16 %v8437
  %v8510 = vunpack.c.l.b16 %v8438
  %v8511 = vunpack.c.h.b16 %v8438
  %v8512 = vunpack.c.l.b16 %v8439
  %v8513 = vunpack.c.h.b16 %v8439
  %v8514 = vunpack.c.l.b16 %v8440
  %v8515 = vunpack.c.h.b16 %v8440
  %v8516 = vunpack.c.l.b16 %v8441
  %v8517 = vunpack.c.h.b16 %v8441
  %v8518 = vunpack.c.l.b16 %v8442
  %v8519 = vunpack.c.h.b16 %v8442
  %v8520 = vunpack.c.l.b16 %v8443
  %v8521 = vunpack.c.h.b16 %v8443
  %v8522 = vunpack.c.l.b16 %v8444
  %v8523 = vunpack.c.h.b16 %v8444
  %v8524 = vunpack.c.l.b16 %v8445
  %v8525 = vunpack.c.h.b16 %v8445
  %v8526 = vunpack.c.l.b16 %v8446
  %v8527 = vunpack.c.h.b16 %v8446
  %v8528 = vunpack.c.l.b16 %v8447
  %v8529 = vunpack.c.h.b16 %v8447
  %v8530 = vunpack.c.l.b16 %v8448
  %v8531 = vunpack.c.h.b16 %v8448
  %v8532 = vunpack.c.l.b16 %v8449
  %v8533 = vunpack.c.h.b16 %v8449
  %v8534 = vunpack.c.l.b16 %v8450
  %v8535 = vunpack.c.h.b16 %v8450
  %v8536 = vunpack.c.l.b16 %v8451
  %v8537 = vunpack.c.h.b16 %v8451
  %v8538 = vunpack.c.l.b16 %v8452
  %v8539 = vunpack.c.h.b16 %v8452
  %v8540 = vunpack.c.l.b16 %v8453
  %v8541 = vunpack.c.h.b16 %v8453
  %v8542 = vunpack.c.l.b16 %v8454
  %v8543 = vunpack.c.h.b16 %v8454
  %v8544 = vunpack.c.l.b16 %v8455
  %v8545 = vunpack.c.h.b16 %v8455
  %v8546 = vunpack.c.l.b16 %v8456
  %v8547 = vunpack.c.h.b16 %v8456
  %v8548 = vunpack.c.l.b16 %v8457
  %v8549 = vunpack.c.h.b16 %v8457
  %v8550 = vunpack.c.l.b16 %v8458
  %v8551 = vunpack.c.h.b16 %v8458
  %v8552 = vunpack.c.l.b16 %v8459
  %v8553 = vunpack.c.h.b16 %v8459
  %v8554 = vunpack.c.l.b16 %v8460
  %v8555 = vunpack.c.h.b16 %v8460
  %v8556 = vunpack.c.l.b16 %v8461
  %v8557 = vunpack.c.h.b16 %v8461
  %v8558 = vpack.c.b16 %v8498, %v8494
  %v8559 = vpack.c.b16 %v8499, %v8495
  %v8560 = vpack.c.b16 %v8500, %v8496
  %v8561 = vpack.c.b16 %v8501, %v8497
  %v8562 = vpack.c.b16 %v8506, %v8502
  %v8563 = vpack.c.b16 %v8507, %v8503
  %v8564 = vpack.c.b16 %v8508, %v8504
  %v8565 = vpack.c.b16 %v8509, %v8505
  %v8566 = vpack.c.b16 %v8514, %v8510
  %v8567 = vpack.c.b16 %v8515, %v8511
  %v8568 = vpack.c.b16 %v8516, %v8512
  %v8569 = vpack.c.b16 %v8517, %v8513
  %v8570 = vpack.c.b16 %v8522, %v8518
  %v8571 = vpack.c.b16 %v8523, %v8519
  %v8572 = vpack.c.b16 %v8524, %v8520
  %v8573 = vpack.c.b16 %v8525, %v8521
  %v8574 = vpack.c.b16 %v8530, %v8526
  %v8575 = vpack.c.b16 %v8531, %v8527
  %v8576 = vpack.c.b16 %v8532, %v8528
  %v8577 = vpack.c.b16 %v8533, %v8529
  %v8578 = vpack.c.b16 %v8538, %v8534
  %v8579 = vpack.c.b16 %v8539, %v8535
  %v8580 = vpack.c.b16 %v8540, %v8536
  %v8581 = vpack.c.b16 %v8541, %v8537
  %v8582 = vpack.c.b16 %v8546, %v8542
  %v8583 = vpack.c.b16 %v8547, %v8543
  %v8584 = vpack.c.b16 %v8548, %v8544
  %v8585 = vpack.c.b16 %v8549, %v8545
  %v8586 = vpack.c.b16 %v8554, %v8550
  %v8587 = vpack.c.b16 %v8555, %v8551
  %v8588 = vpack.c.b16 %v8556, %v8552
  %v8589 = vpack.c.b16 %v8557, %v8553
  %8622 = vmatpush.bf16.msra.mxu0 %v8586
  %8623 = vmatpush.bf16.msra.mxu0 %v8582
  %8624 = vmatpush.bf16.msra.mxu0 %v8578
  %8625 = vmatpush.bf16.msra.mxu0 %v8574
  %8626 = vmatpush.bf16.msra.mxu0 %v8570
  %8627 = vmatpush.bf16.msra.mxu0 %v8566
  %8628 = vmatpush.bf16.msra.mxu0 %v8562
  %8629 = vmatpush.bf16.msra.mxu0 %v8558
  %8630 = vmatmul.bf16.gmra.mxu0 %v7928
  %v8631 = vpop.f32.mrf.mxu0
  %v8632 = vadd.f32 0.0, %v8631
  %v8633 = vpop.f32.mrf.mxu0
  %8634 = vdwg.mxu0
  %8635 = vmatpush.bf16.msra.mxu0 %v8587
  %8636 = vmatpush.bf16.msra.mxu0 %v8583
  %8637 = vmatpush.bf16.msra.mxu0 %v8579
  %8638 = vmatpush.bf16.msra.mxu0 %v8575
  %8639 = vmatpush.bf16.msra.mxu0 %v8571
  %8640 = vmatpush.bf16.msra.mxu0 %v8567
  %8641 = vmatpush.bf16.msra.mxu0 %v8563
  %8642 = vmatpush.bf16.msra.mxu0 %v8559
  %8643 = vmatmul.bf16.gmra.mxu0 %v7928
  %v8644 = vpop.f32.mrf.mxu0
  %v8645 = vadd.f32 0.0, %v8644
  %v8646 = vpop.f32.mrf.mxu0
  %8647 = vdwg.mxu0
  %8648 = vmatpush.bf16.msra.mxu0 %v8588
  %8649 = vmatpush.bf16.msra.mxu0 %v8584
  %8650 = vmatpush.bf16.msra.mxu0 %v8580
  %8651 = vmatpush.bf16.msra.mxu0 %v8576
  %8652 = vmatpush.bf16.msra.mxu0 %v8572
  %8653 = vmatpush.bf16.msra.mxu0 %v8568
  %8654 = vmatpush.bf16.msra.mxu0 %v8564
  %8655 = vmatpush.bf16.msra.mxu0 %v8560
  %8656 = vmatmul.bf16.gmra.mxu0 %v7928
  %v8657 = vpop.f32.mrf.mxu0
  %v8658 = vadd.f32 0.0, %v8657
  %v8659 = vpop.f32.mrf.mxu0
  %8660 = vdwg.mxu0
  %8661 = vmatpush.bf16.msra.mxu0 %v8589
  %8662 = vmatpush.bf16.msra.mxu0 %v8585
  %8663 = vmatpush.bf16.msra.mxu0 %v8581
  %8664 = vmatpush.bf16.msra.mxu0 %v8577
  %8665 = vmatpush.bf16.msra.mxu0 %v8573
  %8666 = vmatpush.bf16.msra.mxu0 %v8569
  %8667 = vmatpush.bf16.msra.mxu0 %v8565
  %8668 = vmatpush.bf16.msra.mxu0 %v8561
  %8669 = vmatmul.bf16.gmra.mxu0 %v7928
  %v8670 = vpop.f32.mrf.mxu0
  %v8671 = vadd.f32 0.0, %v8670
  %v8672 = vpop.f32.mrf.mxu0
  %8673 = vdwg.mxu0
  %v8674 = vadd.f32 %v7836, %v8632
  %v8675 = vadd.f32 %v7837, %v8645
  %v8676 = vadd.f32 %v7838, %v8658
  %v8677 = vadd.f32 %v7839, %v8671
  %v8678 = vld [vmem:[%s3] sm:$0x1]
  %v8679 = vld [vmem:[%s10] sm:$0xf]
  %v8680 = vld [vmem:[%s10 + $0x4] sm:$0xf]
  %v8681 = vld [vmem:[%s10 + $0x8] sm:$0xf]
  %v8682 = vld [vmem:[%s10 + $0xc] sm:$0xf]
  %v8683 = vld [vmem:[%s10 + $0x10] sm:$0xf]
  %v8684 = vld [vmem:[%s10 + $0x14] sm:$0xf]
  %v8685 = vld [vmem:[%s11] sm:$0x1]
  %v8687 = vperm.slane %v8685, 0
  %v8695 = vunpack.c.l.b16 %v8679
  %v8696 = vunpack.c.l.b16 %v8680
  %v8697 = vunpack.c.l.b16 %v8681
  %v8698 = vunpack.c.l.b16 %v8682
  %v8699 = vunpack.c.l.b16 %v8683
  %v8700 = vunpack.c.l.b16 %v8684
  %v8701 = vpack.c.b16 %v8696, %v8695
  %v8702 = vpack.c.b16 %v8698, %v8697
  %v8703 = vpack.c.b16 %v8700, %v8699
  %v8708 = vsel %vm511, %v8678, 0
  %8710 = vmatpush.bf16.msra.mxu0 0
  %8711 = vmatpush.bf16.msra.mxu0 0
  %8712 = vmatpush.bf16.msra.mxu0 0
  %8713 = vmatpush.bf16.msra.mxu0 0
  %8714 = vmatpush.bf16.msra.mxu0 0
  %8715 = vmatpush.bf16.msra.mxu0 %v8703
  %8716 = vmatpush.bf16.msra.mxu0 %v8702
  %8717 = vmatpush.bf16.msra.mxu0 %v8701
  %8718 = vmatmul.bf16.gmra.mxu0 %v8708
  %v8719 = vpop.f32.mrf.mxu0
  %v8720 = vadd.f32 %v8687, %v8719
  %v8721 = vpop.f32.mrf.mxu0
  %8722 = vdwg.mxu0
  %v8723 = vpack.c.bf16 %v8720, %v8720
  %v8724 = vld [vmem:[%s22] sm:$0xff]
  %v8725 = vld [vmem:[%s22 + $0x8] sm:$0xff]
  %v8726 = vld [vmem:[%s22 + $0x10] sm:$0xff]
  %v8727 = vld [vmem:[%s22 + $0x18] sm:$0xff]
  %v8728 = vld [vmem:[%s22 + $0x20] sm:$0xff]
  %v8729 = vld [vmem:[%s22 + $0x28] sm:$0xff]
  %v8730 = vld [vmem:[%s22 + $0x30] sm:$0xff]
  %v8731 = vld [vmem:[%s22 + $0x38] sm:$0xff]
  %s8732 = scalar_lea.vmem %s3, 1
  %v8733 = vld [vmem:[%s8732] sm:$0x1]
  %v8735 = vsel %vm511, %v8733, 0
  %8737 = vmatpush.bf16.msra.mxu0 0
  %8738 = vmatpush.bf16.msra.mxu0 0
  %8739 = vmatpush.bf16.msra.mxu0 0
  %8740 = vmatpush.bf16.msra.mxu0 0
  %8741 = vmatpush.bf16.msra.mxu0 0
  %8742 = vmatpush.bf16.msra.mxu0 %v8703
  %8743 = vmatpush.bf16.msra.mxu0 %v8702
  %8744 = vmatpush.bf16.msra.mxu0 %v8701
  %8745 = vmatmul.bf16.gmra.mxu0 %v8735
  %v8746 = vpop.f32.mrf.mxu0
  %v8747 = vadd.f32 %v8687, %v8746
  %v8748 = vpop.f32.mrf.mxu0
  %8749 = vdwg.mxu0
  %v8750 = vpack.c.bf16 %v8747, %v8747
  %s8751 = scalar_lea.vmem %s22, 64
  %v8752 = vld [vmem:[%s8751] sm:$0xff]
  %v8753 = vld [vmem:[%s8751 + $0x8] sm:$0xff]
  %v8754 = vld [vmem:[%s8751 + $0x10] sm:$0xff]
  %v8755 = vld [vmem:[%s8751 + $0x18] sm:$0xff]
  %v8756 = vld [vmem:[%s8751 + $0x20] sm:$0xff]
  %v8757 = vld [vmem:[%s8751 + $0x28] sm:$0xff]
  %v8758 = vld [vmem:[%s8751 + $0x30] sm:$0xff]
  %v8759 = vld [vmem:[%s8751 + $0x38] sm:$0xff]
  %v8768 = vunpack.c.l.b16 %v8752
  %v8769 = vunpack.c.h.b16 %v8752
  %v8770 = vunpack.c.l.b16 %v8753
  %v8771 = vunpack.c.h.b16 %v8753
  %v8772 = vunpack.c.l.b16 %v8754
  %v8773 = vunpack.c.h.b16 %v8754
  %v8774 = vunpack.c.l.b16 %v8755
  %v8775 = vunpack.c.h.b16 %v8755
  %v8776 = vunpack.c.l.b16 %v8756
  %v8777 = vunpack.c.h.b16 %v8756
  %v8778 = vunpack.c.l.b16 %v8757
  %v8779 = vunpack.c.h.b16 %v8757
  %v8780 = vunpack.c.l.b16 %v8758
  %v8781 = vunpack.c.h.b16 %v8758
  %v8782 = vunpack.c.l.b16 %v8759
  %v8783 = vunpack.c.h.b16 %v8759
  %v8784 = vpack.c.b16 %v8772, %v8768
  %v8785 = vpack.c.b16 %v8773, %v8769
  %v8786 = vpack.c.b16 %v8774, %v8770
  %v8787 = vpack.c.b16 %v8775, %v8771
  %v8788 = vpack.c.b16 %v8780, %v8776
  %v8789 = vpack.c.b16 %v8781, %v8777
  %v8790 = vpack.c.b16 %v8782, %v8778
  %v8791 = vpack.c.b16 %v8783, %v8779
  %vm8800 = vcmask 261120
  %v8802 = vsel %vm8800, %v8750, 0
  %8804 = vmatpush.bf16.msra.mxu0 0
  %8805 = vmatpush.bf16.msra.mxu0 0
  %8806 = vmatpush.bf16.msra.mxu0 0
  %8807 = vmatpush.bf16.msra.mxu0 0
  %8808 = vmatpush.bf16.msra.mxu0 0
  %8809 = vmatpush.bf16.msra.mxu0 0
  %8810 = vmatpush.bf16.msra.mxu0 %v8788
  %8811 = vmatpush.bf16.msra.mxu0 %v8784
  %8812 = vmatmul.bf16.gmra.mxu0 %v8802
  %v8813 = vpop.f32.mrf.mxu0
  %v8814 = vadd.f32 0.0, %v8813
  %v8815 = vpop.f32.mrf.mxu0
  %8816 = vdwg.mxu0
  %8817 = vmatpush.bf16.msra.mxu0 0
  %8818 = vmatpush.bf16.msra.mxu0 0
  %8819 = vmatpush.bf16.msra.mxu0 0
  %8820 = vmatpush.bf16.msra.mxu0 0
  %8821 = vmatpush.bf16.msra.mxu0 0
  %8822 = vmatpush.bf16.msra.mxu0 0
  %8823 = vmatpush.bf16.msra.mxu0 %v8789
  %8824 = vmatpush.bf16.msra.mxu0 %v8785
  %8825 = vmatmul.bf16.gmra.mxu0 %v8802
  %v8826 = vpop.f32.mrf.mxu0
  %v8827 = vadd.f32 0.0, %v8826
  %v8828 = vpop.f32.mrf.mxu0
  %8829 = vdwg.mxu0
  %8830 = vmatpush.bf16.msra.mxu0 0
  %8831 = vmatpush.bf16.msra.mxu0 0
  %8832 = vmatpush.bf16.msra.mxu0 0
  %8833 = vmatpush.bf16.msra.mxu0 0
  %8834 = vmatpush.bf16.msra.mxu0 0
  %8835 = vmatpush.bf16.msra.mxu0 0
  %8836 = vmatpush.bf16.msra.mxu0 %v8790
  %8837 = vmatpush.bf16.msra.mxu0 %v8786
  %8838 = vmatmul.bf16.gmra.mxu0 %v8802
  %v8839 = vpop.f32.mrf.mxu0
  %v8840 = vadd.f32 0.0, %v8839
  %v8841 = vpop.f32.mrf.mxu0
  %8842 = vdwg.mxu0
  %8843 = vmatpush.bf16.msra.mxu0 0
  %8844 = vmatpush.bf16.msra.mxu0 0
  %8845 = vmatpush.bf16.msra.mxu0 0
  %8846 = vmatpush.bf16.msra.mxu0 0
  %8847 = vmatpush.bf16.msra.mxu0 0
  %8848 = vmatpush.bf16.msra.mxu0 0
  %8849 = vmatpush.bf16.msra.mxu0 %v8791
  %8850 = vmatpush.bf16.msra.mxu0 %v8787
  %8851 = vmatmul.bf16.gmra.mxu0 %v8802
  %v8852 = vpop.f32.mrf.mxu0
  %v8853 = vadd.f32 0.0, %v8852
  %v8854 = vpop.f32.mrf.mxu0
  %8855 = vdwg.mxu0
  %v8864 = vunpack.c.l.b16 %v8724
  %v8865 = vunpack.c.h.b16 %v8724
  %v8866 = vunpack.c.l.b16 %v8725
  %v8867 = vunpack.c.h.b16 %v8725
  %v8868 = vunpack.c.l.b16 %v8726
  %v8869 = vunpack.c.h.b16 %v8726
  %v8870 = vunpack.c.l.b16 %v8727
  %v8871 = vunpack.c.h.b16 %v8727
  %v8872 = vunpack.c.l.b16 %v8728
  %v8873 = vunpack.c.h.b16 %v8728
  %v8874 = vunpack.c.l.b16 %v8729
  %v8875 = vunpack.c.h.b16 %v8729
  %v8876 = vunpack.c.l.b16 %v8730
  %v8877 = vunpack.c.h.b16 %v8730
  %v8878 = vunpack.c.l.b16 %v8731
  %v8879 = vunpack.c.h.b16 %v8731
  %v8880 = vpack.c.b16 %v8868, %v8864
  %v8881 = vpack.c.b16 %v8869, %v8865
  %v8882 = vpack.c.b16 %v8870, %v8866
  %v8883 = vpack.c.b16 %v8871, %v8867
  %v8884 = vpack.c.b16 %v8876, %v8872
  %v8885 = vpack.c.b16 %v8877, %v8873
  %v8886 = vpack.c.b16 %v8878, %v8874
  %v8887 = vpack.c.b16 %v8879, %v8875
  %v8897 = vsel %vm8800, %v8723, 0
  %8899 = vmatpush.bf16.msra.mxu0 0
  %8900 = vmatpush.bf16.msra.mxu0 0
  %8901 = vmatpush.bf16.msra.mxu0 0
  %8902 = vmatpush.bf16.msra.mxu0 0
  %8903 = vmatpush.bf16.msra.mxu0 0
  %8904 = vmatpush.bf16.msra.mxu0 0
  %8905 = vmatpush.bf16.msra.mxu0 %v8884
  %8906 = vmatpush.bf16.msra.mxu0 %v8880
  %8907 = vmatmul.bf16.gmra.mxu0 %v8897
  %v8908 = vpop.f32.mrf.mxu0
  %v8909 = vadd.f32 %v8814, %v8908
  %v8910 = vpop.f32.mrf.mxu0
  %8911 = vdwg.mxu0
  %8912 = vmatpush.bf16.msra.mxu0 0
  %8913 = vmatpush.bf16.msra.mxu0 0
  %8914 = vmatpush.bf16.msra.mxu0 0
  %8915 = vmatpush.bf16.msra.mxu0 0
  %8916 = vmatpush.bf16.msra.mxu0 0
  %8917 = vmatpush.bf16.msra.mxu0 0
  %8918 = vmatpush.bf16.msra.mxu0 %v8885
  %8919 = vmatpush.bf16.msra.mxu0 %v8881
  %8920 = vmatmul.bf16.gmra.mxu0 %v8897
  %v8921 = vpop.f32.mrf.mxu0
  %v8922 = vadd.f32 %v8827, %v8921
  %v8923 = vpop.f32.mrf.mxu0
  %8924 = vdwg.mxu0
  %8925 = vmatpush.bf16.msra.mxu0 0
  %8926 = vmatpush.bf16.msra.mxu0 0
  %8927 = vmatpush.bf16.msra.mxu0 0
  %8928 = vmatpush.bf16.msra.mxu0 0
  %8929 = vmatpush.bf16.msra.mxu0 0
  %8930 = vmatpush.bf16.msra.mxu0 0
  %8931 = vmatpush.bf16.msra.mxu0 %v8886
  %8932 = vmatpush.bf16.msra.mxu0 %v8882
  %8933 = vmatmul.bf16.gmra.mxu0 %v8897
  %v8934 = vpop.f32.mrf.mxu0
  %v8935 = vadd.f32 %v8840, %v8934
  %v8936 = vpop.f32.mrf.mxu0
  %8937 = vdwg.mxu0
  %8938 = vmatpush.bf16.msra.mxu0 0
  %8939 = vmatpush.bf16.msra.mxu0 0
  %8940 = vmatpush.bf16.msra.mxu0 0
  %8941 = vmatpush.bf16.msra.mxu0 0
  %8942 = vmatpush.bf16.msra.mxu0 0
  %8943 = vmatpush.bf16.msra.mxu0 0
  %8944 = vmatpush.bf16.msra.mxu0 %v8887
  %8945 = vmatpush.bf16.msra.mxu0 %v8883
  %8946 = vmatmul.bf16.gmra.mxu0 %v8897
  %v8947 = vpop.f32.mrf.mxu0
  %v8948 = vadd.f32 %v8853, %v8947
  %v8949 = vpop.f32.mrf.mxu0
  %8950 = vdwg.mxu0
  %s8951 = scalar_lea.vmem %s3, 2
  %v8952 = vld [vmem:[%s8951] sm:$0x1]
  %v8954 = vsel %vm511, %v8952, 0
  %8956 = vmatpush.bf16.msra.mxu0 0
  %8957 = vmatpush.bf16.msra.mxu0 0
  %8958 = vmatpush.bf16.msra.mxu0 0
  %8959 = vmatpush.bf16.msra.mxu0 0
  %8960 = vmatpush.bf16.msra.mxu0 0
  %8961 = vmatpush.bf16.msra.mxu0 %v8703
  %8962 = vmatpush.bf16.msra.mxu0 %v8702
  %8963 = vmatpush.bf16.msra.mxu0 %v8701
  %8964 = vmatmul.bf16.gmra.mxu0 %v8954
  %v8965 = vpop.f32.mrf.mxu0
  %v8966 = vadd.f32 %v8687, %v8965
  %v8967 = vpop.f32.mrf.mxu0
  %8968 = vdwg.mxu0
  %v8969 = vpack.c.bf16 %v8966, %v8966
  %s8970 = scalar_lea.vmem %s22, 128
  %v8971 = vld [vmem:[%s8970] sm:$0xff]
  %v8972 = vld [vmem:[%s8970 + $0x8] sm:$0xff]
  %v8973 = vld [vmem:[%s8970 + $0x10] sm:$0xff]
  %v8974 = vld [vmem:[%s8970 + $0x18] sm:$0xff]
  %v8975 = vld [vmem:[%s8970 + $0x20] sm:$0xff]
  %v8976 = vld [vmem:[%s8970 + $0x28] sm:$0xff]
  %v8977 = vld [vmem:[%s8970 + $0x30] sm:$0xff]
  %v8978 = vld [vmem:[%s8970 + $0x38] sm:$0xff]
  %v8987 = vunpack.c.l.b16 %v8971
  %v8988 = vunpack.c.h.b16 %v8971
  %v8989 = vunpack.c.l.b16 %v8972
  %v8990 = vunpack.c.h.b16 %v8972
  %v8991 = vunpack.c.l.b16 %v8973
  %v8992 = vunpack.c.h.b16 %v8973
  %v8993 = vunpack.c.l.b16 %v8974
  %v8994 = vunpack.c.h.b16 %v8974
  %v8995 = vunpack.c.l.b16 %v8975
  %v8996 = vunpack.c.h.b16 %v8975
  %v8997 = vunpack.c.l.b16 %v8976
  %v8998 = vunpack.c.h.b16 %v8976
  %v8999 = vunpack.c.l.b16 %v8977
  %v9000 = vunpack.c.h.b16 %v8977
  %v9001 = vunpack.c.l.b16 %v8978
  %v9002 = vunpack.c.h.b16 %v8978
  %v9003 = vpack.c.b16 %v8991, %v8987
  %v9004 = vpack.c.b16 %v8992, %v8988
  %v9005 = vpack.c.b16 %v8993, %v8989
  %v9006 = vpack.c.b16 %v8994, %v8990
  %v9007 = vpack.c.b16 %v8999, %v8995
  %v9008 = vpack.c.b16 %v9000, %v8996
  %v9009 = vpack.c.b16 %v9001, %v8997
  %v9010 = vpack.c.b16 %v9002, %v8998
  %v9020 = vsel %vm8800, %v8969, 0
  %9022 = vmatpush.bf16.msra.mxu0 0
  %9023 = vmatpush.bf16.msra.mxu0 0
  %9024 = vmatpush.bf16.msra.mxu0 0
  %9025 = vmatpush.bf16.msra.mxu0 0
  %9026 = vmatpush.bf16.msra.mxu0 0
  %9027 = vmatpush.bf16.msra.mxu0 0
  %9028 = vmatpush.bf16.msra.mxu0 %v9007
  %9029 = vmatpush.bf16.msra.mxu0 %v9003
  %9030 = vmatmul.bf16.gmra.mxu0 %v9020
  %v9031 = vpop.f32.mrf.mxu0
  %v9032 = vadd.f32 0.0, %v9031
  %v9033 = vpop.f32.mrf.mxu0
  %9034 = vdwg.mxu0
  %9035 = vmatpush.bf16.msra.mxu0 0
  %9036 = vmatpush.bf16.msra.mxu0 0
  %9037 = vmatpush.bf16.msra.mxu0 0
  %9038 = vmatpush.bf16.msra.mxu0 0
  %9039 = vmatpush.bf16.msra.mxu0 0
  %9040 = vmatpush.bf16.msra.mxu0 0
  %9041 = vmatpush.bf16.msra.mxu0 %v9008
  %9042 = vmatpush.bf16.msra.mxu0 %v9004
  %9043 = vmatmul.bf16.gmra.mxu0 %v9020
  %v9044 = vpop.f32.mrf.mxu0
  %v9045 = vadd.f32 0.0, %v9044
  %v9046 = vpop.f32.mrf.mxu0
  %9047 = vdwg.mxu0
  %9048 = vmatpush.bf16.msra.mxu0 0
  %9049 = vmatpush.bf16.msra.mxu0 0
  %9050 = vmatpush.bf16.msra.mxu0 0
  %9051 = vmatpush.bf16.msra.mxu0 0
  %9052 = vmatpush.bf16.msra.mxu0 0
  %9053 = vmatpush.bf16.msra.mxu0 0
  %9054 = vmatpush.bf16.msra.mxu0 %v9009
  %9055 = vmatpush.bf16.msra.mxu0 %v9005
  %9056 = vmatmul.bf16.gmra.mxu0 %v9020
  %v9057 = vpop.f32.mrf.mxu0
  %v9058 = vadd.f32 0.0, %v9057
  %v9059 = vpop.f32.mrf.mxu0
  %9060 = vdwg.mxu0
  %9061 = vmatpush.bf16.msra.mxu0 0
  %9062 = vmatpush.bf16.msra.mxu0 0
  %9063 = vmatpush.bf16.msra.mxu0 0
  %9064 = vmatpush.bf16.msra.mxu0 0
  %9065 = vmatpush.bf16.msra.mxu0 0
  %9066 = vmatpush.bf16.msra.mxu0 0
  %9067 = vmatpush.bf16.msra.mxu0 %v9010
  %9068 = vmatpush.bf16.msra.mxu0 %v9006
  %9069 = vmatmul.bf16.gmra.mxu0 %v9020
  %v9070 = vpop.f32.mrf.mxu0
  %v9071 = vadd.f32 0.0, %v9070
  %v9072 = vpop.f32.mrf.mxu0
  %9073 = vdwg.mxu0
  %v9074 = vadd.f32 %v8909, %v9032
  %v9075 = vadd.f32 %v8922, %v9045
  %v9076 = vadd.f32 %v8935, %v9058
  %v9077 = vadd.f32 %v8948, %v9071
  %s9078 = scalar_lea.vmem %s3, 3
  %v9079 = vld [vmem:[%s9078] sm:$0x1]
  %v9081 = vsel %vm511, %v9079, 0
  %9083 = vmatpush.bf16.msra.mxu0 0
  %9084 = vmatpush.bf16.msra.mxu0 0
  %9085 = vmatpush.bf16.msra.mxu0 0
  %9086 = vmatpush.bf16.msra.mxu0 0
  %9087 = vmatpush.bf16.msra.mxu0 0
  %9088 = vmatpush.bf16.msra.mxu0 %v8703
  %9089 = vmatpush.bf16.msra.mxu0 %v8702
  %9090 = vmatpush.bf16.msra.mxu0 %v8701
  %9091 = vmatmul.bf16.gmra.mxu0 %v9081
  %v9092 = vpop.f32.mrf.mxu0
  %v9093 = vadd.f32 %v8687, %v9092
  %v9094 = vpop.f32.mrf.mxu0
  %9095 = vdwg.mxu0
  %v9096 = vpack.c.bf16 %v9093, %v9093
  %s9097 = scalar_lea.vmem %s22, 192
  %v9098 = vld [vmem:[%s9097] sm:$0xff]
  %v9099 = vld [vmem:[%s9097 + $0x8] sm:$0xff]
  %v9100 = vld [vmem:[%s9097 + $0x10] sm:$0xff]
  %v9101 = vld [vmem:[%s9097 + $0x18] sm:$0xff]
  %v9102 = vld [vmem:[%s9097 + $0x20] sm:$0xff]
  %v9103 = vld [vmem:[%s9097 + $0x28] sm:$0xff]
  %v9104 = vld [vmem:[%s9097 + $0x30] sm:$0xff]
  %v9105 = vld [vmem:[%s9097 + $0x38] sm:$0xff]
  %v9114 = vunpack.c.l.b16 %v9098
  %v9115 = vunpack.c.h.b16 %v9098
  %v9116 = vunpack.c.l.b16 %v9099
  %v9117 = vunpack.c.h.b16 %v9099
  %v9118 = vunpack.c.l.b16 %v9100
  %v9119 = vunpack.c.h.b16 %v9100
  %v9120 = vunpack.c.l.b16 %v9101
  %v9121 = vunpack.c.h.b16 %v9101
  %v9122 = vunpack.c.l.b16 %v9102
  %v9123 = vunpack.c.h.b16 %v9102
  %v9124 = vunpack.c.l.b16 %v9103
  %v9125 = vunpack.c.h.b16 %v9103
  %v9126 = vunpack.c.l.b16 %v9104
  %v9127 = vunpack.c.h.b16 %v9104
  %v9128 = vunpack.c.l.b16 %v9105
  %v9129 = vunpack.c.h.b16 %v9105
  %v9130 = vpack.c.b16 %v9118, %v9114
  %v9131 = vpack.c.b16 %v9119, %v9115
  %v9132 = vpack.c.b16 %v9120, %v9116
  %v9133 = vpack.c.b16 %v9121, %v9117
  %v9134 = vpack.c.b16 %v9126, %v9122
  %v9135 = vpack.c.b16 %v9127, %v9123
  %v9136 = vpack.c.b16 %v9128, %v9124
  %v9137 = vpack.c.b16 %v9129, %v9125
  %v9147 = vsel %vm8800, %v9096, 0
  %9149 = vmatpush.bf16.msra.mxu0 0
  %9150 = vmatpush.bf16.msra.mxu0 0
  %9151 = vmatpush.bf16.msra.mxu0 0
  %9152 = vmatpush.bf16.msra.mxu0 0
  %9153 = vmatpush.bf16.msra.mxu0 0
  %9154 = vmatpush.bf16.msra.mxu0 0
  %9155 = vmatpush.bf16.msra.mxu0 %v9134
  %9156 = vmatpush.bf16.msra.mxu0 %v9130
  %9157 = vmatmul.bf16.gmra.mxu0 %v9147
  %v9158 = vpop.f32.mrf.mxu0
  %v9159 = vadd.f32 0.0, %v9158
  %v9160 = vpop.f32.mrf.mxu0
  %9161 = vdwg.mxu0
  %9162 = vmatpush.bf16.msra.mxu0 0
  %9163 = vmatpush.bf16.msra.mxu0 0
  %9164 = vmatpush.bf16.msra.mxu0 0
  %9165 = vmatpush.bf16.msra.mxu0 0
  %9166 = vmatpush.bf16.msra.mxu0 0
  %9167 = vmatpush.bf16.msra.mxu0 0
  %9168 = vmatpush.bf16.msra.mxu0 %v9135
  %9169 = vmatpush.bf16.msra.mxu0 %v9131
  %9170 = vmatmul.bf16.gmra.mxu0 %v9147
  %v9171 = vpop.f32.mrf.mxu0
  %v9172 = vadd.f32 0.0, %v9171
  %v9173 = vpop.f32.mrf.mxu0
  %9174 = vdwg.mxu0
  %9175 = vmatpush.bf16.msra.mxu0 0
  %9176 = vmatpush.bf16.msra.mxu0 0
  %9177 = vmatpush.bf16.msra.mxu0 0
  %9178 = vmatpush.bf16.msra.mxu0 0
  %9179 = vmatpush.bf16.msra.mxu0 0
  %9180 = vmatpush.bf16.msra.mxu0 0
  %9181 = vmatpush.bf16.msra.mxu0 %v9136
  %9182 = vmatpush.bf16.msra.mxu0 %v9132
  %9183 = vmatmul.bf16.gmra.mxu0 %v9147
  %v9184 = vpop.f32.mrf.mxu0
  %v9185 = vadd.f32 0.0, %v9184
  %v9186 = vpop.f32.mrf.mxu0
  %9187 = vdwg.mxu0
  %9188 = vmatpush.bf16.msra.mxu0 0
  %9189 = vmatpush.bf16.msra.mxu0 0
  %9190 = vmatpush.bf16.msra.mxu0 0
  %9191 = vmatpush.bf16.msra.mxu0 0
  %9192 = vmatpush.bf16.msra.mxu0 0
  %9193 = vmatpush.bf16.msra.mxu0 0
  %9194 = vmatpush.bf16.msra.mxu0 %v9137
  %9195 = vmatpush.bf16.msra.mxu0 %v9133
  %9196 = vmatmul.bf16.gmra.mxu0 %v9147
  %v9197 = vpop.f32.mrf.mxu0
  %v9198 = vadd.f32 0.0, %v9197
  %v9199 = vpop.f32.mrf.mxu0
  %9200 = vdwg.mxu0
  %v9201 = vadd.f32 %v9074, %v9159
  %v9202 = vadd.f32 %v9075, %v9172
  %v9203 = vadd.f32 %v9076, %v9185
  %v9204 = vadd.f32 %v9077, %v9198
  %s9205 = scalar_lea.vmem %s3, 4
  %v9206 = vld [vmem:[%s9205] sm:$0x1]
  %v9208 = vsel %vm511, %v9206, 0
  %9210 = vmatpush.bf16.msra.mxu0 0
  %9211 = vmatpush.bf16.msra.mxu0 0
  %9212 = vmatpush.bf16.msra.mxu0 0
  %9213 = vmatpush.bf16.msra.mxu0 0
  %9214 = vmatpush.bf16.msra.mxu0 0
  %9215 = vmatpush.bf16.msra.mxu0 %v8703
  %9216 = vmatpush.bf16.msra.mxu0 %v8702
  %9217 = vmatpush.bf16.msra.mxu0 %v8701
  %9218 = vmatmul.bf16.gmra.mxu0 %v9208
  %v9219 = vpop.f32.mrf.mxu0
  %v9220 = vadd.f32 %v8687, %v9219
  %v9221 = vpop.f32.mrf.mxu0
  %9222 = vdwg.mxu0
  %v9223 = vpack.c.bf16 %v9220, %v9220
  %s9224 = scalar_lea.vmem %s22, 256
  %v9225 = vld [vmem:[%s9224] sm:$0xff]
  %v9226 = vld [vmem:[%s9224 + $0x8] sm:$0xff]
  %v9227 = vld [vmem:[%s9224 + $0x10] sm:$0xff]
  %v9228 = vld [vmem:[%s9224 + $0x18] sm:$0xff]
  %v9229 = vld [vmem:[%s9224 + $0x20] sm:$0xff]
  %v9230 = vld [vmem:[%s9224 + $0x28] sm:$0xff]
  %v9231 = vld [vmem:[%s9224 + $0x30] sm:$0xff]
  %v9232 = vld [vmem:[%s9224 + $0x38] sm:$0xff]
  %v9241 = vunpack.c.l.b16 %v9225
  %v9242 = vunpack.c.h.b16 %v9225
  %v9243 = vunpack.c.l.b16 %v9226
  %v9244 = vunpack.c.h.b16 %v9226
  %v9245 = vunpack.c.l.b16 %v9227
  %v9246 = vunpack.c.h.b16 %v9227
  %v9247 = vunpack.c.l.b16 %v9228
  %v9248 = vunpack.c.h.b16 %v9228
  %v9249 = vunpack.c.l.b16 %v9229
  %v9250 = vunpack.c.h.b16 %v9229
  %v9251 = vunpack.c.l.b16 %v9230
  %v9252 = vunpack.c.h.b16 %v9230
  %v9253 = vunpack.c.l.b16 %v9231
  %v9254 = vunpack.c.h.b16 %v9231
  %v9255 = vunpack.c.l.b16 %v9232
  %v9256 = vunpack.c.h.b16 %v9232
  %v9257 = vpack.c.b16 %v9245, %v9241
  %v9258 = vpack.c.b16 %v9246, %v9242
  %v9259 = vpack.c.b16 %v9247, %v9243
  %v9260 = vpack.c.b16 %v9248, %v9244
  %v9261 = vpack.c.b16 %v9253, %v9249
  %v9262 = vpack.c.b16 %v9254, %v9250
  %v9263 = vpack.c.b16 %v9255, %v9251
  %v9264 = vpack.c.b16 %v9256, %v9252
  %v9274 = vsel %vm8800, %v9223, 0
  %9276 = vmatpush.bf16.msra.mxu0 0
  %9277 = vmatpush.bf16.msra.mxu0 0
  %9278 = vmatpush.bf16.msra.mxu0 0
  %9279 = vmatpush.bf16.msra.mxu0 0
  %9280 = vmatpush.bf16.msra.mxu0 0
  %9281 = vmatpush.bf16.msra.mxu0 0
  %9282 = vmatpush.bf16.msra.mxu0 %v9261
  %9283 = vmatpush.bf16.msra.mxu0 %v9257
  %9284 = vmatmul.bf16.gmra.mxu0 %v9274
  %v9285 = vpop.f32.mrf.mxu0
  %v9286 = vadd.f32 0.0, %v9285
  %v9287 = vpop.f32.mrf.mxu0
  %9288 = vdwg.mxu0
  %9289 = vmatpush.bf16.msra.mxu0 0
  %9290 = vmatpush.bf16.msra.mxu0 0
  %9291 = vmatpush.bf16.msra.mxu0 0
  %9292 = vmatpush.bf16.msra.mxu0 0
  %9293 = vmatpush.bf16.msra.mxu0 0
  %9294 = vmatpush.bf16.msra.mxu0 0
  %9295 = vmatpush.bf16.msra.mxu0 %v9262
  %9296 = vmatpush.bf16.msra.mxu0 %v9258
  %9297 = vmatmul.bf16.gmra.mxu0 %v9274
  %v9298 = vpop.f32.mrf.mxu0
  %v9299 = vadd.f32 0.0, %v9298
  %v9300 = vpop.f32.mrf.mxu0
  %9301 = vdwg.mxu0
  %9302 = vmatpush.bf16.msra.mxu0 0
  %9303 = vmatpush.bf16.msra.mxu0 0
  %9304 = vmatpush.bf16.msra.mxu0 0
  %9305 = vmatpush.bf16.msra.mxu0 0
  %9306 = vmatpush.bf16.msra.mxu0 0
  %9307 = vmatpush.bf16.msra.mxu0 0
  %9308 = vmatpush.bf16.msra.mxu0 %v9263
  %9309 = vmatpush.bf16.msra.mxu0 %v9259
  %9310 = vmatmul.bf16.gmra.mxu0 %v9274
  %v9311 = vpop.f32.mrf.mxu0
  %v9312 = vadd.f32 0.0, %v9311
  %v9313 = vpop.f32.mrf.mxu0
  %9314 = vdwg.mxu0
  %9315 = vmatpush.bf16.msra.mxu0 0
  %9316 = vmatpush.bf16.msra.mxu0 0
  %9317 = vmatpush.bf16.msra.mxu0 0
  %9318 = vmatpush.bf16.msra.mxu0 0
  %9319 = vmatpush.bf16.msra.mxu0 0
  %9320 = vmatpush.bf16.msra.mxu0 0
  %9321 = vmatpush.bf16.msra.mxu0 %v9264
  %9322 = vmatpush.bf16.msra.mxu0 %v9260
  %9323 = vmatmul.bf16.gmra.mxu0 %v9274
  %v9324 = vpop.f32.mrf.mxu0
  %v9325 = vadd.f32 0.0, %v9324
  %v9326 = vpop.f32.mrf.mxu0
  %9327 = vdwg.mxu0
  %v9328 = vadd.f32 %v9201, %v9286
  %v9329 = vadd.f32 %v9202, %v9299
  %v9330 = vadd.f32 %v9203, %v9312
  %v9331 = vadd.f32 %v9204, %v9325
  %s9332 = scalar_lea.vmem %s3, 5
  %v9333 = vld [vmem:[%s9332] sm:$0x1]
  %v9335 = vsel %vm511, %v9333, 0
  %9337 = vmatpush.bf16.msra.mxu0 0
  %9338 = vmatpush.bf16.msra.mxu0 0
  %9339 = vmatpush.bf16.msra.mxu0 0
  %9340 = vmatpush.bf16.msra.mxu0 0
  %9341 = vmatpush.bf16.msra.mxu0 0
  %9342 = vmatpush.bf16.msra.mxu0 %v8703
  %9343 = vmatpush.bf16.msra.mxu0 %v8702
  %9344 = vmatpush.bf16.msra.mxu0 %v8701
  %9345 = vmatmul.bf16.gmra.mxu0 %v9335
  %v9346 = vpop.f32.mrf.mxu0
  %v9347 = vadd.f32 %v8687, %v9346
  %v9348 = vpop.f32.mrf.mxu0
  %9349 = vdwg.mxu0
  %v9350 = vpack.c.bf16 %v9347, %v9347
  %s9351 = scalar_lea.vmem %s22, 320
  %v9352 = vld [vmem:[%s9351] sm:$0xff]
  %v9353 = vld [vmem:[%s9351 + $0x8] sm:$0xff]
  %v9354 = vld [vmem:[%s9351 + $0x10] sm:$0xff]
  %v9355 = vld [vmem:[%s9351 + $0x18] sm:$0xff]
  %v9356 = vld [vmem:[%s9351 + $0x20] sm:$0xff]
  %v9357 = vld [vmem:[%s9351 + $0x28] sm:$0xff]
  %v9358 = vld [vmem:[%s9351 + $0x30] sm:$0xff]
  %v9359 = vld [vmem:[%s9351 + $0x38] sm:$0xff]
  %v9368 = vunpack.c.l.b16 %v9352
  %v9369 = vunpack.c.h.b16 %v9352
  %v9370 = vunpack.c.l.b16 %v9353
  %v9371 = vunpack.c.h.b16 %v9353
  %v9372 = vunpack.c.l.b16 %v9354
  %v9373 = vunpack.c.h.b16 %v9354
  %v9374 = vunpack.c.l.b16 %v9355
  %v9375 = vunpack.c.h.b16 %v9355
  %v9376 = vunpack.c.l.b16 %v9356
  %v9377 = vunpack.c.h.b16 %v9356
  %v9378 = vunpack.c.l.b16 %v9357
  %v9379 = vunpack.c.h.b16 %v9357
  %v9380 = vunpack.c.l.b16 %v9358
  %v9381 = vunpack.c.h.b16 %v9358
  %v9382 = vunpack.c.l.b16 %v9359
  %v9383 = vunpack.c.h.b16 %v9359
  %v9384 = vpack.c.b16 %v9372, %v9368
  %v9385 = vpack.c.b16 %v9373, %v9369
  %v9386 = vpack.c.b16 %v9374, %v9370
  %v9387 = vpack.c.b16 %v9375, %v9371
  %v9388 = vpack.c.b16 %v9380, %v9376
  %v9389 = vpack.c.b16 %v9381, %v9377
  %v9390 = vpack.c.b16 %v9382, %v9378
  %v9391 = vpack.c.b16 %v9383, %v9379
  %v9401 = vsel %vm8800, %v9350, 0
  %9403 = vmatpush.bf16.msra.mxu0 0
  %9404 = vmatpush.bf16.msra.mxu0 0
  %9405 = vmatpush.bf16.msra.mxu0 0
  %9406 = vmatpush.bf16.msra.mxu0 0
  %9407 = vmatpush.bf16.msra.mxu0 0
  %9408 = vmatpush.bf16.msra.mxu0 0
  %9409 = vmatpush.bf16.msra.mxu0 %v9388
  %9410 = vmatpush.bf16.msra.mxu0 %v9384
  %9411 = vmatmul.bf16.gmra.mxu0 %v9401
  %v9412 = vpop.f32.mrf.mxu0
  %v9413 = vadd.f32 0.0, %v9412
  %v9414 = vpop.f32.mrf.mxu0
  %9415 = vdwg.mxu0
  %9416 = vmatpush.bf16.msra.mxu0 0
  %9417 = vmatpush.bf16.msra.mxu0 0
  %9418 = vmatpush.bf16.msra.mxu0 0
  %9419 = vmatpush.bf16.msra.mxu0 0
  %9420 = vmatpush.bf16.msra.mxu0 0
  %9421 = vmatpush.bf16.msra.mxu0 0
  %9422 = vmatpush.bf16.msra.mxu0 %v9389
  %9423 = vmatpush.bf16.msra.mxu0 %v9385
  %9424 = vmatmul.bf16.gmra.mxu0 %v9401
  %v9425 = vpop.f32.mrf.mxu0
  %v9426 = vadd.f32 0.0, %v9425
  %v9427 = vpop.f32.mrf.mxu0
  %9428 = vdwg.mxu0
  %9429 = vmatpush.bf16.msra.mxu0 0
  %9430 = vmatpush.bf16.msra.mxu0 0
  %9431 = vmatpush.bf16.msra.mxu0 0
  %9432 = vmatpush.bf16.msra.mxu0 0
  %9433 = vmatpush.bf16.msra.mxu0 0
  %9434 = vmatpush.bf16.msra.mxu0 0
  %9435 = vmatpush.bf16.msra.mxu0 %v9390
  %9436 = vmatpush.bf16.msra.mxu0 %v9386
  %9437 = vmatmul.bf16.gmra.mxu0 %v9401
  %v9438 = vpop.f32.mrf.mxu0
  %v9439 = vadd.f32 0.0, %v9438
  %v9440 = vpop.f32.mrf.mxu0
  %9441 = vdwg.mxu0
  %9442 = vmatpush.bf16.msra.mxu0 0
  %9443 = vmatpush.bf16.msra.mxu0 0
  %9444 = vmatpush.bf16.msra.mxu0 0
  %9445 = vmatpush.bf16.msra.mxu0 0
  %9446 = vmatpush.bf16.msra.mxu0 0
  %9447 = vmatpush.bf16.msra.mxu0 0
  %9448 = vmatpush.bf16.msra.mxu0 %v9391
  %9449 = vmatpush.bf16.msra.mxu0 %v9387
  %9450 = vmatmul.bf16.gmra.mxu0 %v9401
  %v9451 = vpop.f32.mrf.mxu0
  %v9452 = vadd.f32 0.0, %v9451
  %v9453 = vpop.f32.mrf.mxu0
  %9454 = vdwg.mxu0
  %v9455 = vadd.f32 %v9328, %v9413
  %v9456 = vadd.f32 %v9329, %v9426
  %v9457 = vadd.f32 %v9330, %v9439
  %v9458 = vadd.f32 %v9331, %v9452
  %s9459 = scalar_lea.vmem %s3, 6
  %v9460 = vld [vmem:[%s9459] sm:$0x1]
  %v9462 = vsel %vm511, %v9460, 0
  %9464 = vmatpush.bf16.msra.mxu0 0
  %9465 = vmatpush.bf16.msra.mxu0 0
  %9466 = vmatpush.bf16.msra.mxu0 0
  %9467 = vmatpush.bf16.msra.mxu0 0
  %9468 = vmatpush.bf16.msra.mxu0 0
  %9469 = vmatpush.bf16.msra.mxu0 %v8703
  %9470 = vmatpush.bf16.msra.mxu0 %v8702
  %9471 = vmatpush.bf16.msra.mxu0 %v8701
  %9472 = vmatmul.bf16.gmra.mxu0 %v9462
  %v9473 = vpop.f32.mrf.mxu0
  %v9474 = vadd.f32 %v8687, %v9473
  %v9475 = vpop.f32.mrf.mxu0
  %9476 = vdwg.mxu0
  %v9477 = vpack.c.bf16 %v9474, %v9474
  %s9478 = scalar_lea.vmem %s22, 384
  %v9479 = vld [vmem:[%s9478] sm:$0xff]
  %v9480 = vld [vmem:[%s9478 + $0x8] sm:$0xff]
  %v9481 = vld [vmem:[%s9478 + $0x10] sm:$0xff]
  %v9482 = vld [vmem:[%s9478 + $0x18] sm:$0xff]
  %v9483 = vld [vmem:[%s9478 + $0x20] sm:$0xff]
  %v9484 = vld [vmem:[%s9478 + $0x28] sm:$0xff]
  %v9485 = vld [vmem:[%s9478 + $0x30] sm:$0xff]
  %v9486 = vld [vmem:[%s9478 + $0x38] sm:$0xff]
  %v9495 = vunpack.c.l.b16 %v9479
  %v9496 = vunpack.c.h.b16 %v9479
  %v9497 = vunpack.c.l.b16 %v9480
  %v9498 = vunpack.c.h.b16 %v9480
  %v9499 = vunpack.c.l.b16 %v9481
  %v9500 = vunpack.c.h.b16 %v9481
  %v9501 = vunpack.c.l.b16 %v9482
  %v9502 = vunpack.c.h.b16 %v9482
  %v9503 = vunpack.c.l.b16 %v9483
  %v9504 = vunpack.c.h.b16 %v9483
  %v9505 = vunpack.c.l.b16 %v9484
  %v9506 = vunpack.c.h.b16 %v9484
  %v9507 = vunpack.c.l.b16 %v9485
  %v9508 = vunpack.c.h.b16 %v9485
  %v9509 = vunpack.c.l.b16 %v9486
  %v9510 = vunpack.c.h.b16 %v9486
  %v9511 = vpack.c.b16 %v9499, %v9495
  %v9512 = vpack.c.b16 %v9500, %v9496
  %v9513 = vpack.c.b16 %v9501, %v9497
  %v9514 = vpack.c.b16 %v9502, %v9498
  %v9515 = vpack.c.b16 %v9507, %v9503
  %v9516 = vpack.c.b16 %v9508, %v9504
  %v9517 = vpack.c.b16 %v9509, %v9505
  %v9518 = vpack.c.b16 %v9510, %v9506
  %v9528 = vsel %vm8800, %v9477, 0
  %9530 = vmatpush.bf16.msra.mxu0 0
  %9531 = vmatpush.bf16.msra.mxu0 0
  %9532 = vmatpush.bf16.msra.mxu0 0
  %9533 = vmatpush.bf16.msra.mxu0 0
  %9534 = vmatpush.bf16.msra.mxu0 0
  %9535 = vmatpush.bf16.msra.mxu0 0
  %9536 = vmatpush.bf16.msra.mxu0 %v9515
  %9537 = vmatpush.bf16.msra.mxu0 %v9511
  %9538 = vmatmul.bf16.gmra.mxu0 %v9528
  %v9539 = vpop.f32.mrf.mxu0
  %v9540 = vadd.f32 0.0, %v9539
  %v9541 = vpop.f32.mrf.mxu0
  %9542 = vdwg.mxu0
  %9543 = vmatpush.bf16.msra.mxu0 0
  %9544 = vmatpush.bf16.msra.mxu0 0
  %9545 = vmatpush.bf16.msra.mxu0 0
  %9546 = vmatpush.bf16.msra.mxu0 0
  %9547 = vmatpush.bf16.msra.mxu0 0
  %9548 = vmatpush.bf16.msra.mxu0 0
  %9549 = vmatpush.bf16.msra.mxu0 %v9516
  %9550 = vmatpush.bf16.msra.mxu0 %v9512
  %9551 = vmatmul.bf16.gmra.mxu0 %v9528
  %v9552 = vpop.f32.mrf.mxu0
  %v9553 = vadd.f32 0.0, %v9552
  %v9554 = vpop.f32.mrf.mxu0
  %9555 = vdwg.mxu0
  %9556 = vmatpush.bf16.msra.mxu0 0
  %9557 = vmatpush.bf16.msra.mxu0 0
  %9558 = vmatpush.bf16.msra.mxu0 0
  %9559 = vmatpush.bf16.msra.mxu0 0
  %9560 = vmatpush.bf16.msra.mxu0 0
  %9561 = vmatpush.bf16.msra.mxu0 0
  %9562 = vmatpush.bf16.msra.mxu0 %v9517
  %9563 = vmatpush.bf16.msra.mxu0 %v9513
  %9564 = vmatmul.bf16.gmra.mxu0 %v9528
  %v9565 = vpop.f32.mrf.mxu0
  %v9566 = vadd.f32 0.0, %v9565
  %v9567 = vpop.f32.mrf.mxu0
  %9568 = vdwg.mxu0
  %9569 = vmatpush.bf16.msra.mxu0 0
  %9570 = vmatpush.bf16.msra.mxu0 0
  %9571 = vmatpush.bf16.msra.mxu0 0
  %9572 = vmatpush.bf16.msra.mxu0 0
  %9573 = vmatpush.bf16.msra.mxu0 0
  %9574 = vmatpush.bf16.msra.mxu0 0
  %9575 = vmatpush.bf16.msra.mxu0 %v9518
  %9576 = vmatpush.bf16.msra.mxu0 %v9514
  %9577 = vmatmul.bf16.gmra.mxu0 %v9528
  %v9578 = vpop.f32.mrf.mxu0
  %v9579 = vadd.f32 0.0, %v9578
  %v9580 = vpop.f32.mrf.mxu0
  %9581 = vdwg.mxu0
  %v9582 = vadd.f32 %v9455, %v9540
  %v9583 = vadd.f32 %v9456, %v9553
  %v9584 = vadd.f32 %v9457, %v9566
  %v9585 = vadd.f32 %v9458, %v9579
  %s9586 = scalar_lea.vmem %s3, 7
  %v9587 = vld [vmem:[%s9586] sm:$0x1]
  %v9589 = vsel %vm511, %v9587, 0
  %9591 = vmatpush.bf16.msra.mxu0 0
  %9592 = vmatpush.bf16.msra.mxu0 0
  %9593 = vmatpush.bf16.msra.mxu0 0
  %9594 = vmatpush.bf16.msra.mxu0 0
  %9595 = vmatpush.bf16.msra.mxu0 0
  %9596 = vmatpush.bf16.msra.mxu0 %v8703
  %9597 = vmatpush.bf16.msra.mxu0 %v8702
  %9598 = vmatpush.bf16.msra.mxu0 %v8701
  %9599 = vmatmul.bf16.gmra.mxu0 %v9589
  %v9600 = vpop.f32.mrf.mxu0
  %v9601 = vadd.f32 %v8687, %v9600
  %v9602 = vpop.f32.mrf.mxu0
  %9603 = vdwg.mxu0
  %v9604 = vpack.c.bf16 %v9601, %v9601
  %s9605 = scalar_lea.vmem %s22, 448
  %v9606 = vld [vmem:[%s9605] sm:$0xff]
  %v9607 = vld [vmem:[%s9605 + $0x8] sm:$0xff]
  %v9608 = vld [vmem:[%s9605 + $0x10] sm:$0xff]
  %v9609 = vld [vmem:[%s9605 + $0x18] sm:$0xff]
  %v9610 = vld [vmem:[%s9605 + $0x20] sm:$0xff]
  %v9611 = vld [vmem:[%s9605 + $0x28] sm:$0xff]
  %v9612 = vld [vmem:[%s9605 + $0x30] sm:$0xff]
  %v9613 = vld [vmem:[%s9605 + $0x38] sm:$0xff]
  %v9622 = vunpack.c.l.b16 %v9606
  %v9623 = vunpack.c.h.b16 %v9606
  %v9624 = vunpack.c.l.b16 %v9607
  %v9625 = vunpack.c.h.b16 %v9607
  %v9626 = vunpack.c.l.b16 %v9608
  %v9627 = vunpack.c.h.b16 %v9608
  %v9628 = vunpack.c.l.b16 %v9609
  %v9629 = vunpack.c.h.b16 %v9609
  %v9630 = vunpack.c.l.b16 %v9610
  %v9631 = vunpack.c.h.b16 %v9610
  %v9632 = vunpack.c.l.b16 %v9611
  %v9633 = vunpack.c.h.b16 %v9611
  %v9634 = vunpack.c.l.b16 %v9612
  %v9635 = vunpack.c.h.b16 %v9612
  %v9636 = vunpack.c.l.b16 %v9613
  %v9637 = vunpack.c.h.b16 %v9613
  %v9638 = vpack.c.b16 %v9626, %v9622
  %v9639 = vpack.c.b16 %v9627, %v9623
  %v9640 = vpack.c.b16 %v9628, %v9624
  %v9641 = vpack.c.b16 %v9629, %v9625
  %v9642 = vpack.c.b16 %v9634, %v9630
  %v9643 = vpack.c.b16 %v9635, %v9631
  %v9644 = vpack.c.b16 %v9636, %v9632
  %v9645 = vpack.c.b16 %v9637, %v9633
  %v9655 = vsel %vm8800, %v9604, 0
  %9657 = vmatpush.bf16.msra.mxu0 0
  %9658 = vmatpush.bf16.msra.mxu0 0
  %9659 = vmatpush.bf16.msra.mxu0 0
  %9660 = vmatpush.bf16.msra.mxu0 0
  %9661 = vmatpush.bf16.msra.mxu0 0
  %9662 = vmatpush.bf16.msra.mxu0 0
  %9663 = vmatpush.bf16.msra.mxu0 %v9642
  %9664 = vmatpush.bf16.msra.mxu0 %v9638
  %9665 = vmatmul.bf16.gmra.mxu0 %v9655
  %v9666 = vpop.f32.mrf.mxu0
  %v9667 = vadd.f32 0.0, %v9666
  %v9668 = vpop.f32.mrf.mxu0
  %9669 = vdwg.mxu0
  %9670 = vmatpush.bf16.msra.mxu0 0
  %9671 = vmatpush.bf16.msra.mxu0 0
  %9672 = vmatpush.bf16.msra.mxu0 0
  %9673 = vmatpush.bf16.msra.mxu0 0
  %9674 = vmatpush.bf16.msra.mxu0 0
  %9675 = vmatpush.bf16.msra.mxu0 0
  %9676 = vmatpush.bf16.msra.mxu0 %v9643
  %9677 = vmatpush.bf16.msra.mxu0 %v9639
  %9678 = vmatmul.bf16.gmra.mxu0 %v9655
  %v9679 = vpop.f32.mrf.mxu0
  %v9680 = vadd.f32 0.0, %v9679
  %v9681 = vpop.f32.mrf.mxu0
  %9682 = vdwg.mxu0
  %9683 = vmatpush.bf16.msra.mxu0 0
  %9684 = vmatpush.bf16.msra.mxu0 0
  %9685 = vmatpush.bf16.msra.mxu0 0
  %9686 = vmatpush.bf16.msra.mxu0 0
  %9687 = vmatpush.bf16.msra.mxu0 0
  %9688 = vmatpush.bf16.msra.mxu0 0
  %9689 = vmatpush.bf16.msra.mxu0 %v9644
  %9690 = vmatpush.bf16.msra.mxu0 %v9640
  %9691 = vmatmul.bf16.gmra.mxu0 %v9655
  %v9692 = vpop.f32.mrf.mxu0
  %v9693 = vadd.f32 0.0, %v9692
  %v9694 = vpop.f32.mrf.mxu0
  %9695 = vdwg.mxu0
  %9696 = vmatpush.bf16.msra.mxu0 0
  %9697 = vmatpush.bf16.msra.mxu0 0
  %9698 = vmatpush.bf16.msra.mxu0 0
  %9699 = vmatpush.bf16.msra.mxu0 0
  %9700 = vmatpush.bf16.msra.mxu0 0
  %9701 = vmatpush.bf16.msra.mxu0 0
  %9702 = vmatpush.bf16.msra.mxu0 %v9645
  %9703 = vmatpush.bf16.msra.mxu0 %v9641
  %9704 = vmatmul.bf16.gmra.mxu0 %v9655
  %v9705 = vpop.f32.mrf.mxu0
  %v9706 = vadd.f32 0.0, %v9705
  %v9707 = vpop.f32.mrf.mxu0
  %9708 = vdwg.mxu0
  %v9709 = vadd.f32 %v9582, %v9667
  %v9710 = vadd.f32 %v9583, %v9680
  %v9711 = vadd.f32 %v9584, %v9693
  %v9712 = vadd.f32 %v9585, %v9706
  %s9713 = scalar_lea.vmem %s3, 8
  %v9714 = vld [vmem:[%s9713] sm:$0x1]
  %v9716 = vsel %vm511, %v9714, 0
  %9718 = vmatpush.bf16.msra.mxu0 0
  %9719 = vmatpush.bf16.msra.mxu0 0
  %9720 = vmatpush.bf16.msra.mxu0 0
  %9721 = vmatpush.bf16.msra.mxu0 0
  %9722 = vmatpush.bf16.msra.mxu0 0
  %9723 = vmatpush.bf16.msra.mxu0 %v8703
  %9724 = vmatpush.bf16.msra.mxu0 %v8702
  %9725 = vmatpush.bf16.msra.mxu0 %v8701
  %9726 = vmatmul.bf16.gmra.mxu0 %v9716
  %v9727 = vpop.f32.mrf.mxu0
  %v9728 = vadd.f32 %v8687, %v9727
  %v9729 = vpop.f32.mrf.mxu0
  %9730 = vdwg.mxu0
  %v9731 = vpack.c.bf16 %v9728, %v9728
  %s9732 = scalar_lea.vmem %s22, 512
  %v9733 = vld [vmem:[%s9732] sm:$0xff]
  %v9734 = vld [vmem:[%s9732 + $0x8] sm:$0xff]
  %v9735 = vld [vmem:[%s9732 + $0x10] sm:$0xff]
  %v9736 = vld [vmem:[%s9732 + $0x18] sm:$0xff]
  %v9737 = vld [vmem:[%s9732 + $0x20] sm:$0xff]
  %v9738 = vld [vmem:[%s9732 + $0x28] sm:$0xff]
  %v9739 = vld [vmem:[%s9732 + $0x30] sm:$0xff]
  %v9740 = vld [vmem:[%s9732 + $0x38] sm:$0xff]
  %v9749 = vunpack.c.l.b16 %v9733
  %v9750 = vunpack.c.h.b16 %v9733
  %v9751 = vunpack.c.l.b16 %v9734
  %v9752 = vunpack.c.h.b16 %v9734
  %v9753 = vunpack.c.l.b16 %v9735
  %v9754 = vunpack.c.h.b16 %v9735
  %v9755 = vunpack.c.l.b16 %v9736
  %v9756 = vunpack.c.h.b16 %v9736
  %v9757 = vunpack.c.l.b16 %v9737
  %v9758 = vunpack.c.h.b16 %v9737
  %v9759 = vunpack.c.l.b16 %v9738
  %v9760 = vunpack.c.h.b16 %v9738
  %v9761 = vunpack.c.l.b16 %v9739
  %v9762 = vunpack.c.h.b16 %v9739
  %v9763 = vunpack.c.l.b16 %v9740
  %v9764 = vunpack.c.h.b16 %v9740
  %v9765 = vpack.c.b16 %v9753, %v9749
  %v9766 = vpack.c.b16 %v9754, %v9750
  %v9767 = vpack.c.b16 %v9755, %v9751
  %v9768 = vpack.c.b16 %v9756, %v9752
  %v9769 = vpack.c.b16 %v9761, %v9757
  %v9770 = vpack.c.b16 %v9762, %v9758
  %v9771 = vpack.c.b16 %v9763, %v9759
  %v9772 = vpack.c.b16 %v9764, %v9760
  %v9782 = vsel %vm8800, %v9731, 0
  %9784 = vmatpush.bf16.msra.mxu0 0
  %9785 = vmatpush.bf16.msra.mxu0 0
  %9786 = vmatpush.bf16.msra.mxu0 0
  %9787 = vmatpush.bf16.msra.mxu0 0
  %9788 = vmatpush.bf16.msra.mxu0 0
  %9789 = vmatpush.bf16.msra.mxu0 0
  %9790 = vmatpush.bf16.msra.mxu0 %v9769
  %9791 = vmatpush.bf16.msra.mxu0 %v9765
  %9792 = vmatmul.bf16.gmra.mxu0 %v9782
  %v9793 = vpop.f32.mrf.mxu0
  %v9794 = vadd.f32 0.0, %v9793
  %v9795 = vpop.f32.mrf.mxu0
  %9796 = vdwg.mxu0
  %9797 = vmatpush.bf16.msra.mxu0 0
  %9798 = vmatpush.bf16.msra.mxu0 0
  %9799 = vmatpush.bf16.msra.mxu0 0
  %9800 = vmatpush.bf16.msra.mxu0 0
  %9801 = vmatpush.bf16.msra.mxu0 0
  %9802 = vmatpush.bf16.msra.mxu0 0
  %9803 = vmatpush.bf16.msra.mxu0 %v9770
  %9804 = vmatpush.bf16.msra.mxu0 %v9766
  %9805 = vmatmul.bf16.gmra.mxu0 %v9782
  %v9806 = vpop.f32.mrf.mxu0
  %v9807 = vadd.f32 0.0, %v9806
  %v9808 = vpop.f32.mrf.mxu0
  %9809 = vdwg.mxu0
  %9810 = vmatpush.bf16.msra.mxu0 0
  %9811 = vmatpush.bf16.msra.mxu0 0
  %9812 = vmatpush.bf16.msra.mxu0 0
  %9813 = vmatpush.bf16.msra.mxu0 0
  %9814 = vmatpush.bf16.msra.mxu0 0
  %9815 = vmatpush.bf16.msra.mxu0 0
  %9816 = vmatpush.bf16.msra.mxu0 %v9771
  %9817 = vmatpush.bf16.msra.mxu0 %v9767
  %9818 = vmatmul.bf16.gmra.mxu0 %v9782
  %v9819 = vpop.f32.mrf.mxu0
  %v9820 = vadd.f32 0.0, %v9819
  %v9821 = vpop.f32.mrf.mxu0
  %9822 = vdwg.mxu0
  %9823 = vmatpush.bf16.msra.mxu0 0
  %9824 = vmatpush.bf16.msra.mxu0 0
  %9825 = vmatpush.bf16.msra.mxu0 0
  %9826 = vmatpush.bf16.msra.mxu0 0
  %9827 = vmatpush.bf16.msra.mxu0 0
  %9828 = vmatpush.bf16.msra.mxu0 0
  %9829 = vmatpush.bf16.msra.mxu0 %v9772
  %9830 = vmatpush.bf16.msra.mxu0 %v9768
  %9831 = vmatmul.bf16.gmra.mxu0 %v9782
  %v9832 = vpop.f32.mrf.mxu0
  %v9833 = vadd.f32 0.0, %v9832
  %v9834 = vpop.f32.mrf.mxu0
  %9835 = vdwg.mxu0
  %v9836 = vadd.f32 %v9709, %v9794
  %v9837 = vadd.f32 %v9710, %v9807
  %v9838 = vadd.f32 %v9711, %v9820
  %v9839 = vadd.f32 %v9712, %v9833
  %s9840 = scalar_lea.vmem %s3, 9
  %v9841 = vld [vmem:[%s9840] sm:$0x1]
  %v9843 = vsel %vm511, %v9841, 0
  %9845 = vmatpush.bf16.msra.mxu0 0
  %9846 = vmatpush.bf16.msra.mxu0 0
  %9847 = vmatpush.bf16.msra.mxu0 0
  %9848 = vmatpush.bf16.msra.mxu0 0
  %9849 = vmatpush.bf16.msra.mxu0 0
  %9850 = vmatpush.bf16.msra.mxu0 %v8703
  %9851 = vmatpush.bf16.msra.mxu0 %v8702
  %9852 = vmatpush.bf16.msra.mxu0 %v8701
  %9853 = vmatmul.bf16.gmra.mxu0 %v9843
  %v9854 = vpop.f32.mrf.mxu0
  %v9855 = vadd.f32 %v8687, %v9854
  %v9856 = vpop.f32.mrf.mxu0
  %9857 = vdwg.mxu0
  %v9858 = vpack.c.bf16 %v9855, %v9855
  %s9859 = scalar_lea.vmem %s22, 576
  %v9860 = vld [vmem:[%s9859] sm:$0xff]
  %v9861 = vld [vmem:[%s9859 + $0x8] sm:$0xff]
  %v9862 = vld [vmem:[%s9859 + $0x10] sm:$0xff]
  %v9863 = vld [vmem:[%s9859 + $0x18] sm:$0xff]
  %v9864 = vld [vmem:[%s9859 + $0x20] sm:$0xff]
  %v9865 = vld [vmem:[%s9859 + $0x28] sm:$0xff]
  %v9866 = vld [vmem:[%s9859 + $0x30] sm:$0xff]
  %v9867 = vld [vmem:[%s9859 + $0x38] sm:$0xff]
  %v9876 = vunpack.c.l.b16 %v9860
  %v9877 = vunpack.c.h.b16 %v9860
  %v9878 = vunpack.c.l.b16 %v9861
  %v9879 = vunpack.c.h.b16 %v9861
  %v9880 = vunpack.c.l.b16 %v9862
  %v9881 = vunpack.c.h.b16 %v9862
  %v9882 = vunpack.c.l.b16 %v9863
  %v9883 = vunpack.c.h.b16 %v9863
  %v9884 = vunpack.c.l.b16 %v9864
  %v9885 = vunpack.c.h.b16 %v9864
  %v9886 = vunpack.c.l.b16 %v9865
  %v9887 = vunpack.c.h.b16 %v9865
  %v9888 = vunpack.c.l.b16 %v9866
  %v9889 = vunpack.c.h.b16 %v9866
  %v9890 = vunpack.c.l.b16 %v9867
  %v9891 = vunpack.c.h.b16 %v9867
  %v9892 = vpack.c.b16 %v9880, %v9876
  %v9893 = vpack.c.b16 %v9881, %v9877
  %v9894 = vpack.c.b16 %v9882, %v9878
  %v9895 = vpack.c.b16 %v9883, %v9879
  %v9896 = vpack.c.b16 %v9888, %v9884
  %v9897 = vpack.c.b16 %v9889, %v9885
  %v9898 = vpack.c.b16 %v9890, %v9886
  %v9899 = vpack.c.b16 %v9891, %v9887
  %v9909 = vsel %vm8800, %v9858, 0
  %9911 = vmatpush.bf16.msra.mxu0 0
  %9912 = vmatpush.bf16.msra.mxu0 0
  %9913 = vmatpush.bf16.msra.mxu0 0
  %9914 = vmatpush.bf16.msra.mxu0 0
  %9915 = vmatpush.bf16.msra.mxu0 0
  %9916 = vmatpush.bf16.msra.mxu0 0
  %9917 = vmatpush.bf16.msra.mxu0 %v9896
  %9918 = vmatpush.bf16.msra.mxu0 %v9892
  %9919 = vmatmul.bf16.gmra.mxu0 %v9909
  %v9920 = vpop.f32.mrf.mxu0
  %v9921 = vadd.f32 0.0, %v9920
  %v9922 = vpop.f32.mrf.mxu0
  %9923 = vdwg.mxu0
  %9924 = vmatpush.bf16.msra.mxu0 0
  %9925 = vmatpush.bf16.msra.mxu0 0
  %9926 = vmatpush.bf16.msra.mxu0 0
  %9927 = vmatpush.bf16.msra.mxu0 0
  %9928 = vmatpush.bf16.msra.mxu0 0
  %9929 = vmatpush.bf16.msra.mxu0 0
  %9930 = vmatpush.bf16.msra.mxu0 %v9897
  %9931 = vmatpush.bf16.msra.mxu0 %v9893
  %9932 = vmatmul.bf16.gmra.mxu0 %v9909
  %v9933 = vpop.f32.mrf.mxu0
  %v9934 = vadd.f32 0.0, %v9933
  %v9935 = vpop.f32.mrf.mxu0
  %9936 = vdwg.mxu0
  %9937 = vmatpush.bf16.msra.mxu0 0
  %9938 = vmatpush.bf16.msra.mxu0 0
  %9939 = vmatpush.bf16.msra.mxu0 0
  %9940 = vmatpush.bf16.msra.mxu0 0
  %9941 = vmatpush.bf16.msra.mxu0 0
  %9942 = vmatpush.bf16.msra.mxu0 0
  %9943 = vmatpush.bf16.msra.mxu0 %v9898
  %9944 = vmatpush.bf16.msra.mxu0 %v9894
  %9945 = vmatmul.bf16.gmra.mxu0 %v9909
  %v9946 = vpop.f32.mrf.mxu0
  %v9947 = vadd.f32 0.0, %v9946
  %v9948 = vpop.f32.mrf.mxu0
  %9949 = vdwg.mxu0
  %9950 = vmatpush.bf16.msra.mxu0 0
  %9951 = vmatpush.bf16.msra.mxu0 0
  %9952 = vmatpush.bf16.msra.mxu0 0
  %9953 = vmatpush.bf16.msra.mxu0 0
  %9954 = vmatpush.bf16.msra.mxu0 0
  %9955 = vmatpush.bf16.msra.mxu0 0
  %9956 = vmatpush.bf16.msra.mxu0 %v9899
  %9957 = vmatpush.bf16.msra.mxu0 %v9895
  %9958 = vmatmul.bf16.gmra.mxu0 %v9909
  %v9959 = vpop.f32.mrf.mxu0
  %v9960 = vadd.f32 0.0, %v9959
  %v9961 = vpop.f32.mrf.mxu0
  %9962 = vdwg.mxu0
  %v9963 = vadd.f32 %v9836, %v9921
  %v9964 = vadd.f32 %v9837, %v9934
  %v9965 = vadd.f32 %v9838, %v9947
  %v9966 = vadd.f32 %v9839, %v9960
  %s9967 = scalar_lea.vmem %s3, 10
  %v9968 = vld [vmem:[%s9967] sm:$0x1]
  %v9970 = vsel %vm511, %v9968, 0
  %9972 = vmatpush.bf16.msra.mxu0 0
  %9973 = vmatpush.bf16.msra.mxu0 0
  %9974 = vmatpush.bf16.msra.mxu0 0
  %9975 = vmatpush.bf16.msra.mxu0 0
  %9976 = vmatpush.bf16.msra.mxu0 0
  %9977 = vmatpush.bf16.msra.mxu0 %v8703
  %9978 = vmatpush.bf16.msra.mxu0 %v8702
  %9979 = vmatpush.bf16.msra.mxu0 %v8701
  %9980 = vmatmul.bf16.gmra.mxu0 %v9970
  %v9981 = vpop.f32.mrf.mxu0
  %v9982 = vadd.f32 %v8687, %v9981
  %v9983 = vpop.f32.mrf.mxu0
  %9984 = vdwg.mxu0
  %v9985 = vpack.c.bf16 %v9982, %v9982
  %s9986 = scalar_lea.vmem %s22, 640
  %v9987 = vld [vmem:[%s9986] sm:$0xff]
  %v9988 = vld [vmem:[%s9986 + $0x8] sm:$0xff]
  %v9989 = vld [vmem:[%s9986 + $0x10] sm:$0xff]
  %v9990 = vld [vmem:[%s9986 + $0x18] sm:$0xff]
  %v9991 = vld [vmem:[%s9986 + $0x20] sm:$0xff]
  %v9992 = vld [vmem:[%s9986 + $0x28] sm:$0xff]
  %v9993 = vld [vmem:[%s9986 + $0x30] sm:$0xff]
  %v9994 = vld [vmem:[%s9986 + $0x38] sm:$0xff]
  %v10003 = vunpack.c.l.b16 %v9987
  %v10004 = vunpack.c.h.b16 %v9987
  %v10005 = vunpack.c.l.b16 %v9988
  %v10006 = vunpack.c.h.b16 %v9988
  %v10007 = vunpack.c.l.b16 %v9989
  %v10008 = vunpack.c.h.b16 %v9989
  %v10009 = vunpack.c.l.b16 %v9990
  %v10010 = vunpack.c.h.b16 %v9990
  %v10011 = vunpack.c.l.b16 %v9991
  %v10012 = vunpack.c.h.b16 %v9991
  %v10013 = vunpack.c.l.b16 %v9992
  %v10014 = vunpack.c.h.b16 %v9992
  %v10015 = vunpack.c.l.b16 %v9993
  %v10016 = vunpack.c.h.b16 %v9993
  %v10017 = vunpack.c.l.b16 %v9994
  %v10018 = vunpack.c.h.b16 %v9994
  %v10019 = vpack.c.b16 %v10007, %v10003
  %v10020 = vpack.c.b16 %v10008, %v10004
  %v10021 = vpack.c.b16 %v10009, %v10005
  %v10022 = vpack.c.b16 %v10010, %v10006
  %v10023 = vpack.c.b16 %v10015, %v10011
  %v10024 = vpack.c.b16 %v10016, %v10012
  %v10025 = vpack.c.b16 %v10017, %v10013
  %v10026 = vpack.c.b16 %v10018, %v10014
  %v10036 = vsel %vm8800, %v9985, 0
  %10038 = vmatpush.bf16.msra.mxu0 0
  %10039 = vmatpush.bf16.msra.mxu0 0
  %10040 = vmatpush.bf16.msra.mxu0 0
  %10041 = vmatpush.bf16.msra.mxu0 0
  %10042 = vmatpush.bf16.msra.mxu0 0
  %10043 = vmatpush.bf16.msra.mxu0 0
  %10044 = vmatpush.bf16.msra.mxu0 %v10023
  %10045 = vmatpush.bf16.msra.mxu0 %v10019
  %10046 = vmatmul.bf16.gmra.mxu0 %v10036
  %v10047 = vpop.f32.mrf.mxu0
  %v10048 = vadd.f32 0.0, %v10047
  %v10049 = vpop.f32.mrf.mxu0
  %10050 = vdwg.mxu0
  %10051 = vmatpush.bf16.msra.mxu0 0
  %10052 = vmatpush.bf16.msra.mxu0 0
  %10053 = vmatpush.bf16.msra.mxu0 0
  %10054 = vmatpush.bf16.msra.mxu0 0
  %10055 = vmatpush.bf16.msra.mxu0 0
  %10056 = vmatpush.bf16.msra.mxu0 0
  %10057 = vmatpush.bf16.msra.mxu0 %v10024
  %10058 = vmatpush.bf16.msra.mxu0 %v10020
  %10059 = vmatmul.bf16.gmra.mxu0 %v10036
  %v10060 = vpop.f32.mrf.mxu0
  %v10061 = vadd.f32 0.0, %v10060
  %v10062 = vpop.f32.mrf.mxu0
  %10063 = vdwg.mxu0
  %10064 = vmatpush.bf16.msra.mxu0 0
  %10065 = vmatpush.bf16.msra.mxu0 0
  %10066 = vmatpush.bf16.msra.mxu0 0
  %10067 = vmatpush.bf16.msra.mxu0 0
  %10068 = vmatpush.bf16.msra.mxu0 0
  %10069 = vmatpush.bf16.msra.mxu0 0
  %10070 = vmatpush.bf16.msra.mxu0 %v10025
  %10071 = vmatpush.bf16.msra.mxu0 %v10021
  %10072 = vmatmul.bf16.gmra.mxu0 %v10036
  %v10073 = vpop.f32.mrf.mxu0
  %v10074 = vadd.f32 0.0, %v10073
  %v10075 = vpop.f32.mrf.mxu0
  %10076 = vdwg.mxu0
  %10077 = vmatpush.bf16.msra.mxu0 0
  %10078 = vmatpush.bf16.msra.mxu0 0
  %10079 = vmatpush.bf16.msra.mxu0 0
  %10080 = vmatpush.bf16.msra.mxu0 0
  %10081 = vmatpush.bf16.msra.mxu0 0
  %10082 = vmatpush.bf16.msra.mxu0 0
  %10083 = vmatpush.bf16.msra.mxu0 %v10026
  %10084 = vmatpush.bf16.msra.mxu0 %v10022
  %10085 = vmatmul.bf16.gmra.mxu0 %v10036
  %v10086 = vpop.f32.mrf.mxu0
  %v10087 = vadd.f32 0.0, %v10086
  %v10088 = vpop.f32.mrf.mxu0
  %10089 = vdwg.mxu0
  %v10090 = vadd.f32 %v9963, %v10048
  %v10091 = vadd.f32 %v9964, %v10061
  %v10092 = vadd.f32 %v9965, %v10074
  %v10093 = vadd.f32 %v9966, %v10087
  %s10094 = scalar_lea.vmem %s3, 11
  %v10095 = vld [vmem:[%s10094] sm:$0x1]
  %v10097 = vsel %vm511, %v10095, 0
  %10099 = vmatpush.bf16.msra.mxu0 0
  %10100 = vmatpush.bf16.msra.mxu0 0
  %10101 = vmatpush.bf16.msra.mxu0 0
  %10102 = vmatpush.bf16.msra.mxu0 0
  %10103 = vmatpush.bf16.msra.mxu0 0
  %10104 = vmatpush.bf16.msra.mxu0 %v8703
  %10105 = vmatpush.bf16.msra.mxu0 %v8702
  %10106 = vmatpush.bf16.msra.mxu0 %v8701
  %10107 = vmatmul.bf16.gmra.mxu0 %v10097
  %v10108 = vpop.f32.mrf.mxu0
  %v10109 = vadd.f32 %v8687, %v10108
  %v10110 = vpop.f32.mrf.mxu0
  %10111 = vdwg.mxu0
  %v10112 = vpack.c.bf16 %v10109, %v10109
  %s10113 = scalar_lea.vmem %s22, 704
  %v10114 = vld [vmem:[%s10113] sm:$0xff]
  %v10115 = vld [vmem:[%s10113 + $0x8] sm:$0xff]
  %v10116 = vld [vmem:[%s10113 + $0x10] sm:$0xff]
  %v10117 = vld [vmem:[%s10113 + $0x18] sm:$0xff]
  %v10118 = vld [vmem:[%s10113 + $0x20] sm:$0xff]
  %v10119 = vld [vmem:[%s10113 + $0x28] sm:$0xff]
  %v10120 = vld [vmem:[%s10113 + $0x30] sm:$0xff]
  %v10121 = vld [vmem:[%s10113 + $0x38] sm:$0xff]
  %v10130 = vunpack.c.l.b16 %v10114
  %v10131 = vunpack.c.h.b16 %v10114
  %v10132 = vunpack.c.l.b16 %v10115
  %v10133 = vunpack.c.h.b16 %v10115
  %v10134 = vunpack.c.l.b16 %v10116
  %v10135 = vunpack.c.h.b16 %v10116
  %v10136 = vunpack.c.l.b16 %v10117
  %v10137 = vunpack.c.h.b16 %v10117
  %v10138 = vunpack.c.l.b16 %v10118
  %v10139 = vunpack.c.h.b16 %v10118
  %v10140 = vunpack.c.l.b16 %v10119
  %v10141 = vunpack.c.h.b16 %v10119
  %v10142 = vunpack.c.l.b16 %v10120
  %v10143 = vunpack.c.h.b16 %v10120
  %v10144 = vunpack.c.l.b16 %v10121
  %v10145 = vunpack.c.h.b16 %v10121
  %v10146 = vpack.c.b16 %v10134, %v10130
  %v10147 = vpack.c.b16 %v10135, %v10131
  %v10148 = vpack.c.b16 %v10136, %v10132
  %v10149 = vpack.c.b16 %v10137, %v10133
  %v10150 = vpack.c.b16 %v10142, %v10138
  %v10151 = vpack.c.b16 %v10143, %v10139
  %v10152 = vpack.c.b16 %v10144, %v10140
  %v10153 = vpack.c.b16 %v10145, %v10141
  %v10163 = vsel %vm8800, %v10112, 0
  %10165 = vmatpush.bf16.msra.mxu0 0
  %10166 = vmatpush.bf16.msra.mxu0 0
  %10167 = vmatpush.bf16.msra.mxu0 0
  %10168 = vmatpush.bf16.msra.mxu0 0
  %10169 = vmatpush.bf16.msra.mxu0 0
  %10170 = vmatpush.bf16.msra.mxu0 0
  %10171 = vmatpush.bf16.msra.mxu0 %v10150
  %10172 = vmatpush.bf16.msra.mxu0 %v10146
  %10173 = vmatmul.bf16.gmra.mxu0 %v10163
  %v10174 = vpop.f32.mrf.mxu0
  %v10175 = vadd.f32 0.0, %v10174
  %v10176 = vpop.f32.mrf.mxu0
  %10177 = vdwg.mxu0
  %10178 = vmatpush.bf16.msra.mxu0 0
  %10179 = vmatpush.bf16.msra.mxu0 0
  %10180 = vmatpush.bf16.msra.mxu0 0
  %10181 = vmatpush.bf16.msra.mxu0 0
  %10182 = vmatpush.bf16.msra.mxu0 0
  %10183 = vmatpush.bf16.msra.mxu0 0
  %10184 = vmatpush.bf16.msra.mxu0 %v10151
  %10185 = vmatpush.bf16.msra.mxu0 %v10147
  %10186 = vmatmul.bf16.gmra.mxu0 %v10163
  %v10187 = vpop.f32.mrf.mxu0
  %v10188 = vadd.f32 0.0, %v10187
  %v10189 = vpop.f32.mrf.mxu0
  %10190 = vdwg.mxu0
  %10191 = vmatpush.bf16.msra.mxu0 0
  %10192 = vmatpush.bf16.msra.mxu0 0
  %10193 = vmatpush.bf16.msra.mxu0 0
  %10194 = vmatpush.bf16.msra.mxu0 0
  %10195 = vmatpush.bf16.msra.mxu0 0
  %10196 = vmatpush.bf16.msra.mxu0 0
  %10197 = vmatpush.bf16.msra.mxu0 %v10152
  %10198 = vmatpush.bf16.msra.mxu0 %v10148
  %10199 = vmatmul.bf16.gmra.mxu0 %v10163
  %v10200 = vpop.f32.mrf.mxu0
  %v10201 = vadd.f32 0.0, %v10200
  %v10202 = vpop.f32.mrf.mxu0
  %10203 = vdwg.mxu0
  %10204 = vmatpush.bf16.msra.mxu0 0
  %10205 = vmatpush.bf16.msra.mxu0 0
  %10206 = vmatpush.bf16.msra.mxu0 0
  %10207 = vmatpush.bf16.msra.mxu0 0
  %10208 = vmatpush.bf16.msra.mxu0 0
  %10209 = vmatpush.bf16.msra.mxu0 0
  %10210 = vmatpush.bf16.msra.mxu0 %v10153
  %10211 = vmatpush.bf16.msra.mxu0 %v10149
  %10212 = vmatmul.bf16.gmra.mxu0 %v10163
  %v10213 = vpop.f32.mrf.mxu0
  %v10214 = vadd.f32 0.0, %v10213
  %v10215 = vpop.f32.mrf.mxu0
  %10216 = vdwg.mxu0
  %v10217 = vadd.f32 %v10090, %v10175
  %v10218 = vadd.f32 %v10091, %v10188
  %v10219 = vadd.f32 %v10092, %v10201
  %v10220 = vadd.f32 %v10093, %v10214
  %s10221 = scalar_lea.vmem %s3, 12
  %v10222 = vld [vmem:[%s10221] sm:$0x1]
  %v10224 = vsel %vm511, %v10222, 0
  %10226 = vmatpush.bf16.msra.mxu0 0
  %10227 = vmatpush.bf16.msra.mxu0 0
  %10228 = vmatpush.bf16.msra.mxu0 0
  %10229 = vmatpush.bf16.msra.mxu0 0
  %10230 = vmatpush.bf16.msra.mxu0 0
  %10231 = vmatpush.bf16.msra.mxu0 %v8703
  %10232 = vmatpush.bf16.msra.mxu0 %v8702
  %10233 = vmatpush.bf16.msra.mxu0 %v8701
  %10234 = vmatmul.bf16.gmra.mxu0 %v10224
  %v10235 = vpop.f32.mrf.mxu0
  %v10236 = vadd.f32 %v8687, %v10235
  %v10237 = vpop.f32.mrf.mxu0
  %10238 = vdwg.mxu0
  %v10239 = vpack.c.bf16 %v10236, %v10236
  %s10240 = scalar_lea.vmem %s22, 768
  %v10241 = vld [vmem:[%s10240] sm:$0xff]
  %v10242 = vld [vmem:[%s10240 + $0x8] sm:$0xff]
  %v10243 = vld [vmem:[%s10240 + $0x10] sm:$0xff]
  %v10244 = vld [vmem:[%s10240 + $0x18] sm:$0xff]
  %v10245 = vld [vmem:[%s10240 + $0x20] sm:$0xff]
  %v10246 = vld [vmem:[%s10240 + $0x28] sm:$0xff]
  %v10247 = vld [vmem:[%s10240 + $0x30] sm:$0xff]
  %v10248 = vld [vmem:[%s10240 + $0x38] sm:$0xff]
  %v10257 = vunpack.c.l.b16 %v10241
  %v10258 = vunpack.c.h.b16 %v10241
  %v10259 = vunpack.c.l.b16 %v10242
  %v10260 = vunpack.c.h.b16 %v10242
  %v10261 = vunpack.c.l.b16 %v10243
  %v10262 = vunpack.c.h.b16 %v10243
  %v10263 = vunpack.c.l.b16 %v10244
  %v10264 = vunpack.c.h.b16 %v10244
  %v10265 = vunpack.c.l.b16 %v10245
  %v10266 = vunpack.c.h.b16 %v10245
  %v10267 = vunpack.c.l.b16 %v10246
  %v10268 = vunpack.c.h.b16 %v10246
  %v10269 = vunpack.c.l.b16 %v10247
  %v10270 = vunpack.c.h.b16 %v10247
  %v10271 = vunpack.c.l.b16 %v10248
  %v10272 = vunpack.c.h.b16 %v10248
  %v10273 = vpack.c.b16 %v10261, %v10257
  %v10274 = vpack.c.b16 %v10262, %v10258
  %v10275 = vpack.c.b16 %v10263, %v10259
  %v10276 = vpack.c.b16 %v10264, %v10260
  %v10277 = vpack.c.b16 %v10269, %v10265
  %v10278 = vpack.c.b16 %v10270, %v10266
  %v10279 = vpack.c.b16 %v10271, %v10267
  %v10280 = vpack.c.b16 %v10272, %v10268
  %v10290 = vsel %vm8800, %v10239, 0
  %10292 = vmatpush.bf16.msra.mxu0 0
  %10293 = vmatpush.bf16.msra.mxu0 0
  %10294 = vmatpush.bf16.msra.mxu0 0
  %10295 = vmatpush.bf16.msra.mxu0 0
  %10296 = vmatpush.bf16.msra.mxu0 0
  %10297 = vmatpush.bf16.msra.mxu0 0
  %10298 = vmatpush.bf16.msra.mxu0 %v10277
  %10299 = vmatpush.bf16.msra.mxu0 %v10273
  %10300 = vmatmul.bf16.gmra.mxu0 %v10290
  %v10301 = vpop.f32.mrf.mxu0
  %v10302 = vadd.f32 0.0, %v10301
  %v10303 = vpop.f32.mrf.mxu0
  %10304 = vdwg.mxu0
  %10305 = vmatpush.bf16.msra.mxu0 0
  %10306 = vmatpush.bf16.msra.mxu0 0
  %10307 = vmatpush.bf16.msra.mxu0 0
  %10308 = vmatpush.bf16.msra.mxu0 0
  %10309 = vmatpush.bf16.msra.mxu0 0
  %10310 = vmatpush.bf16.msra.mxu0 0
  %10311 = vmatpush.bf16.msra.mxu0 %v10278
  %10312 = vmatpush.bf16.msra.mxu0 %v10274
  %10313 = vmatmul.bf16.gmra.mxu0 %v10290
  %v10314 = vpop.f32.mrf.mxu0
  %v10315 = vadd.f32 0.0, %v10314
  %v10316 = vpop.f32.mrf.mxu0
  %10317 = vdwg.mxu0
  %10318 = vmatpush.bf16.msra.mxu0 0
  %10319 = vmatpush.bf16.msra.mxu0 0
  %10320 = vmatpush.bf16.msra.mxu0 0
  %10321 = vmatpush.bf16.msra.mxu0 0
  %10322 = vmatpush.bf16.msra.mxu0 0
  %10323 = vmatpush.bf16.msra.mxu0 0
  %10324 = vmatpush.bf16.msra.mxu0 %v10279
  %10325 = vmatpush.bf16.msra.mxu0 %v10275
  %10326 = vmatmul.bf16.gmra.mxu0 %v10290
  %v10327 = vpop.f32.mrf.mxu0
  %v10328 = vadd.f32 0.0, %v10327
  %v10329 = vpop.f32.mrf.mxu0
  %10330 = vdwg.mxu0
  %10331 = vmatpush.bf16.msra.mxu0 0
  %10332 = vmatpush.bf16.msra.mxu0 0
  %10333 = vmatpush.bf16.msra.mxu0 0
  %10334 = vmatpush.bf16.msra.mxu0 0
  %10335 = vmatpush.bf16.msra.mxu0 0
  %10336 = vmatpush.bf16.msra.mxu0 0
  %10337 = vmatpush.bf16.msra.mxu0 %v10280
  %10338 = vmatpush.bf16.msra.mxu0 %v10276
  %10339 = vmatmul.bf16.gmra.mxu0 %v10290
  %v10340 = vpop.f32.mrf.mxu0
  %v10341 = vadd.f32 0.0, %v10340
  %v10342 = vpop.f32.mrf.mxu0
  %10343 = vdwg.mxu0
  %v10344 = vadd.f32 %v10217, %v10302
  %v10345 = vadd.f32 %v10218, %v10315
  %v10346 = vadd.f32 %v10219, %v10328
  %v10347 = vadd.f32 %v10220, %v10341
  %s10348 = scalar_lea.vmem %s3, 13
  %v10349 = vld [vmem:[%s10348] sm:$0x1]
  %v10351 = vsel %vm511, %v10349, 0
  %10353 = vmatpush.bf16.msra.mxu0 0
  %10354 = vmatpush.bf16.msra.mxu0 0
  %10355 = vmatpush.bf16.msra.mxu0 0
  %10356 = vmatpush.bf16.msra.mxu0 0
  %10357 = vmatpush.bf16.msra.mxu0 0
  %10358 = vmatpush.bf16.msra.mxu0 %v8703
  %10359 = vmatpush.bf16.msra.mxu0 %v8702
  %10360 = vmatpush.bf16.msra.mxu0 %v8701
  %10361 = vmatmul.bf16.gmra.mxu0 %v10351
  %v10362 = vpop.f32.mrf.mxu0
  %v10363 = vadd.f32 %v8687, %v10362
  %v10364 = vpop.f32.mrf.mxu0
  %10365 = vdwg.mxu0
  %v10366 = vpack.c.bf16 %v10363, %v10363
  %s10367 = scalar_lea.vmem %s22, 832
  %v10368 = vld [vmem:[%s10367] sm:$0xff]
  %v10369 = vld [vmem:[%s10367 + $0x8] sm:$0xff]
  %v10370 = vld [vmem:[%s10367 + $0x10] sm:$0xff]
  %v10371 = vld [vmem:[%s10367 + $0x18] sm:$0xff]
  %v10372 = vld [vmem:[%s10367 + $0x20] sm:$0xff]
  %v10373 = vld [vmem:[%s10367 + $0x28] sm:$0xff]
  %v10374 = vld [vmem:[%s10367 + $0x30] sm:$0xff]
  %v10375 = vld [vmem:[%s10367 + $0x38] sm:$0xff]
  %v10384 = vunpack.c.l.b16 %v10368
  %v10385 = vunpack.c.h.b16 %v10368
  %v10386 = vunpack.c.l.b16 %v10369
  %v10387 = vunpack.c.h.b16 %v10369
  %v10388 = vunpack.c.l.b16 %v10370
  %v10389 = vunpack.c.h.b16 %v10370
  %v10390 = vunpack.c.l.b16 %v10371
  %v10391 = vunpack.c.h.b16 %v10371
  %v10392 = vunpack.c.l.b16 %v10372
  %v10393 = vunpack.c.h.b16 %v10372
  %v10394 = vunpack.c.l.b16 %v10373
  %v10395 = vunpack.c.h.b16 %v10373
  %v10396 = vunpack.c.l.b16 %v10374
  %v10397 = vunpack.c.h.b16 %v10374
  %v10398 = vunpack.c.l.b16 %v10375
  %v10399 = vunpack.c.h.b16 %v10375
  %v10400 = vpack.c.b16 %v10388, %v10384
  %v10401 = vpack.c.b16 %v10389, %v10385
  %v10402 = vpack.c.b16 %v10390, %v10386
  %v10403 = vpack.c.b16 %v10391, %v10387
  %v10404 = vpack.c.b16 %v10396, %v10392
  %v10405 = vpack.c.b16 %v10397, %v10393
  %v10406 = vpack.c.b16 %v10398, %v10394
  %v10407 = vpack.c.b16 %v10399, %v10395
  %v10417 = vsel %vm8800, %v10366, 0
  %10419 = vmatpush.bf16.msra.mxu0 0
  %10420 = vmatpush.bf16.msra.mxu0 0
  %10421 = vmatpush.bf16.msra.mxu0 0
  %10422 = vmatpush.bf16.msra.mxu0 0
  %10423 = vmatpush.bf16.msra.mxu0 0
  %10424 = vmatpush.bf16.msra.mxu0 0
  %10425 = vmatpush.bf16.msra.mxu0 %v10404
  %10426 = vmatpush.bf16.msra.mxu0 %v10400
  %10427 = vmatmul.bf16.gmra.mxu0 %v10417
  %v10428 = vpop.f32.mrf.mxu0
  %v10429 = vadd.f32 0.0, %v10428
  %v10430 = vpop.f32.mrf.mxu0
  %10431 = vdwg.mxu0
  %10432 = vmatpush.bf16.msra.mxu0 0
  %10433 = vmatpush.bf16.msra.mxu0 0
  %10434 = vmatpush.bf16.msra.mxu0 0
  %10435 = vmatpush.bf16.msra.mxu0 0
  %10436 = vmatpush.bf16.msra.mxu0 0
  %10437 = vmatpush.bf16.msra.mxu0 0
  %10438 = vmatpush.bf16.msra.mxu0 %v10405
  %10439 = vmatpush.bf16.msra.mxu0 %v10401
  %10440 = vmatmul.bf16.gmra.mxu0 %v10417
  %v10441 = vpop.f32.mrf.mxu0
  %v10442 = vadd.f32 0.0, %v10441
  %v10443 = vpop.f32.mrf.mxu0
  %10444 = vdwg.mxu0
  %10445 = vmatpush.bf16.msra.mxu0 0
  %10446 = vmatpush.bf16.msra.mxu0 0
  %10447 = vmatpush.bf16.msra.mxu0 0
  %10448 = vmatpush.bf16.msra.mxu0 0
  %10449 = vmatpush.bf16.msra.mxu0 0
  %10450 = vmatpush.bf16.msra.mxu0 0
  %10451 = vmatpush.bf16.msra.mxu0 %v10406
  %10452 = vmatpush.bf16.msra.mxu0 %v10402
  %10453 = vmatmul.bf16.gmra.mxu0 %v10417
  %v10454 = vpop.f32.mrf.mxu0
  %v10455 = vadd.f32 0.0, %v10454
  %v10456 = vpop.f32.mrf.mxu0
  %10457 = vdwg.mxu0
  %10458 = vmatpush.bf16.msra.mxu0 0
  %10459 = vmatpush.bf16.msra.mxu0 0
  %10460 = vmatpush.bf16.msra.mxu0 0
  %10461 = vmatpush.bf16.msra.mxu0 0
  %10462 = vmatpush.bf16.msra.mxu0 0
  %10463 = vmatpush.bf16.msra.mxu0 0
  %10464 = vmatpush.bf16.msra.mxu0 %v10407
  %10465 = vmatpush.bf16.msra.mxu0 %v10403
  %10466 = vmatmul.bf16.gmra.mxu0 %v10417
  %v10467 = vpop.f32.mrf.mxu0
  %v10468 = vadd.f32 0.0, %v10467
  %v10469 = vpop.f32.mrf.mxu0
  %10470 = vdwg.mxu0
  %v10471 = vadd.f32 %v10344, %v10429
  %v10472 = vadd.f32 %v10345, %v10442
  %v10473 = vadd.f32 %v10346, %v10455
  %v10474 = vadd.f32 %v10347, %v10468
  %s10475 = scalar_lea.vmem %s3, 14
  %v10476 = vld [vmem:[%s10475] sm:$0x1]
  %v10478 = vsel %vm511, %v10476, 0
  %10480 = vmatpush.bf16.msra.mxu0 0
  %10481 = vmatpush.bf16.msra.mxu0 0
  %10482 = vmatpush.bf16.msra.mxu0 0
  %10483 = vmatpush.bf16.msra.mxu0 0
  %10484 = vmatpush.bf16.msra.mxu0 0
  %10485 = vmatpush.bf16.msra.mxu0 %v8703
  %10486 = vmatpush.bf16.msra.mxu0 %v8702
  %10487 = vmatpush.bf16.msra.mxu0 %v8701
  %10488 = vmatmul.bf16.gmra.mxu0 %v10478
  %v10489 = vpop.f32.mrf.mxu0
  %v10490 = vadd.f32 %v8687, %v10489
  %v10491 = vpop.f32.mrf.mxu0
  %10492 = vdwg.mxu0
  %v10493 = vpack.c.bf16 %v10490, %v10490
  %s10494 = scalar_lea.vmem %s22, 896
  %v10495 = vld [vmem:[%s10494] sm:$0xff]
  %v10496 = vld [vmem:[%s10494 + $0x8] sm:$0xff]
  %v10497 = vld [vmem:[%s10494 + $0x10] sm:$0xff]
  %v10498 = vld [vmem:[%s10494 + $0x18] sm:$0xff]
  %v10499 = vld [vmem:[%s10494 + $0x20] sm:$0xff]
  %v10500 = vld [vmem:[%s10494 + $0x28] sm:$0xff]
  %v10501 = vld [vmem:[%s10494 + $0x30] sm:$0xff]
  %v10502 = vld [vmem:[%s10494 + $0x38] sm:$0xff]
  %v10511 = vunpack.c.l.b16 %v10495
  %v10512 = vunpack.c.h.b16 %v10495
  %v10513 = vunpack.c.l.b16 %v10496
  %v10514 = vunpack.c.h.b16 %v10496
  %v10515 = vunpack.c.l.b16 %v10497
  %v10516 = vunpack.c.h.b16 %v10497
  %v10517 = vunpack.c.l.b16 %v10498
  %v10518 = vunpack.c.h.b16 %v10498
  %v10519 = vunpack.c.l.b16 %v10499
  %v10520 = vunpack.c.h.b16 %v10499
  %v10521 = vunpack.c.l.b16 %v10500
  %v10522 = vunpack.c.h.b16 %v10500
  %v10523 = vunpack.c.l.b16 %v10501
  %v10524 = vunpack.c.h.b16 %v10501
  %v10525 = vunpack.c.l.b16 %v10502
  %v10526 = vunpack.c.h.b16 %v10502
  %v10527 = vpack.c.b16 %v10515, %v10511
  %v10528 = vpack.c.b16 %v10516, %v10512
  %v10529 = vpack.c.b16 %v10517, %v10513
  %v10530 = vpack.c.b16 %v10518, %v10514
  %v10531 = vpack.c.b16 %v10523, %v10519
  %v10532 = vpack.c.b16 %v10524, %v10520
  %v10533 = vpack.c.b16 %v10525, %v10521
  %v10534 = vpack.c.b16 %v10526, %v10522
  %v10544 = vsel %vm8800, %v10493, 0
  %10546 = vmatpush.bf16.msra.mxu0 0
  %10547 = vmatpush.bf16.msra.mxu0 0
  %10548 = vmatpush.bf16.msra.mxu0 0
  %10549 = vmatpush.bf16.msra.mxu0 0
  %10550 = vmatpush.bf16.msra.mxu0 0
  %10551 = vmatpush.bf16.msra.mxu0 0
  %10552 = vmatpush.bf16.msra.mxu0 %v10531
  %10553 = vmatpush.bf16.msra.mxu0 %v10527
  %10554 = vmatmul.bf16.gmra.mxu0 %v10544
  %v10555 = vpop.f32.mrf.mxu0
  %v10556 = vadd.f32 0.0, %v10555
  %v10557 = vpop.f32.mrf.mxu0
  %10558 = vdwg.mxu0
  %10559 = vmatpush.bf16.msra.mxu0 0
  %10560 = vmatpush.bf16.msra.mxu0 0
  %10561 = vmatpush.bf16.msra.mxu0 0
  %10562 = vmatpush.bf16.msra.mxu0 0
  %10563 = vmatpush.bf16.msra.mxu0 0
  %10564 = vmatpush.bf16.msra.mxu0 0
  %10565 = vmatpush.bf16.msra.mxu0 %v10532
  %10566 = vmatpush.bf16.msra.mxu0 %v10528
  %10567 = vmatmul.bf16.gmra.mxu0 %v10544
  %v10568 = vpop.f32.mrf.mxu0
  %v10569 = vadd.f32 0.0, %v10568
  %v10570 = vpop.f32.mrf.mxu0
  %10571 = vdwg.mxu0
  %10572 = vmatpush.bf16.msra.mxu0 0
  %10573 = vmatpush.bf16.msra.mxu0 0
  %10574 = vmatpush.bf16.msra.mxu0 0
  %10575 = vmatpush.bf16.msra.mxu0 0
  %10576 = vmatpush.bf16.msra.mxu0 0
  %10577 = vmatpush.bf16.msra.mxu0 0
  %10578 = vmatpush.bf16.msra.mxu0 %v10533
  %10579 = vmatpush.bf16.msra.mxu0 %v10529
  %10580 = vmatmul.bf16.gmra.mxu0 %v10544
  %v10581 = vpop.f32.mrf.mxu0
  %v10582 = vadd.f32 0.0, %v10581
  %v10583 = vpop.f32.mrf.mxu0
  %10584 = vdwg.mxu0
  %10585 = vmatpush.bf16.msra.mxu0 0
  %10586 = vmatpush.bf16.msra.mxu0 0
  %10587 = vmatpush.bf16.msra.mxu0 0
  %10588 = vmatpush.bf16.msra.mxu0 0
  %10589 = vmatpush.bf16.msra.mxu0 0
  %10590 = vmatpush.bf16.msra.mxu0 0
  %10591 = vmatpush.bf16.msra.mxu0 %v10534
  %10592 = vmatpush.bf16.msra.mxu0 %v10530
  %10593 = vmatmul.bf16.gmra.mxu0 %v10544
  %v10594 = vpop.f32.mrf.mxu0
  %v10595 = vadd.f32 0.0, %v10594
  %v10596 = vpop.f32.mrf.mxu0
  %10597 = vdwg.mxu0
  %v10598 = vadd.f32 %v10471, %v10556
  %v10599 = vadd.f32 %v10472, %v10569
  %v10600 = vadd.f32 %v10473, %v10582
  %v10601 = vadd.f32 %v10474, %v10595
  %s10602 = scalar_lea.vmem %s3, 15
  %v10603 = vld [vmem:[%s10602] sm:$0x1]
  %v10605 = vsel %vm511, %v10603, 0
  %10607 = vmatpush.bf16.msra.mxu0 0
  %10608 = vmatpush.bf16.msra.mxu0 0
  %10609 = vmatpush.bf16.msra.mxu0 0
  %10610 = vmatpush.bf16.msra.mxu0 0
  %10611 = vmatpush.bf16.msra.mxu0 0
  %10612 = vmatpush.bf16.msra.mxu0 %v8703
  %10613 = vmatpush.bf16.msra.mxu0 %v8702
  %10614 = vmatpush.bf16.msra.mxu0 %v8701
  %10615 = vmatmul.bf16.gmra.mxu0 %v10605
  %v10616 = vpop.f32.mrf.mxu0
  %v10617 = vadd.f32 %v8687, %v10616
  %v10618 = vpop.f32.mrf.mxu0
  %10619 = vdwg.mxu0
  %v10620 = vpack.c.bf16 %v10617, %v10617
  %s10621 = scalar_lea.vmem %s22, 960
  %v10622 = vld [vmem:[%s10621] sm:$0xff]
  %v10623 = vld [vmem:[%s10621 + $0x8] sm:$0xff]
  %v10624 = vld [vmem:[%s10621 + $0x10] sm:$0xff]
  %v10625 = vld [vmem:[%s10621 + $0x18] sm:$0xff]
  %v10626 = vld [vmem:[%s10621 + $0x20] sm:$0xff]
  %v10627 = vld [vmem:[%s10621 + $0x28] sm:$0xff]
  %v10628 = vld [vmem:[%s10621 + $0x30] sm:$0xff]
  %v10629 = vld [vmem:[%s10621 + $0x38] sm:$0xff]
  %v10638 = vunpack.c.l.b16 %v10622
  %v10639 = vunpack.c.h.b16 %v10622
  %v10640 = vunpack.c.l.b16 %v10623
  %v10641 = vunpack.c.h.b16 %v10623
  %v10642 = vunpack.c.l.b16 %v10624
  %v10643 = vunpack.c.h.b16 %v10624
  %v10644 = vunpack.c.l.b16 %v10625
  %v10645 = vunpack.c.h.b16 %v10625
  %v10646 = vunpack.c.l.b16 %v10626
  %v10647 = vunpack.c.h.b16 %v10626
  %v10648 = vunpack.c.l.b16 %v10627
  %v10649 = vunpack.c.h.b16 %v10627
  %v10650 = vunpack.c.l.b16 %v10628
  %v10651 = vunpack.c.h.b16 %v10628
  %v10652 = vunpack.c.l.b16 %v10629
  %v10653 = vunpack.c.h.b16 %v10629
  %v10654 = vpack.c.b16 %v10642, %v10638
  %v10655 = vpack.c.b16 %v10643, %v10639
  %v10656 = vpack.c.b16 %v10644, %v10640
  %v10657 = vpack.c.b16 %v10645, %v10641
  %v10658 = vpack.c.b16 %v10650, %v10646
  %v10659 = vpack.c.b16 %v10651, %v10647
  %v10660 = vpack.c.b16 %v10652, %v10648
  %v10661 = vpack.c.b16 %v10653, %v10649
  %v10671 = vsel %vm8800, %v10620, 0
  %10673 = vmatpush.bf16.msra.mxu0 0
  %10674 = vmatpush.bf16.msra.mxu0 0
  %10675 = vmatpush.bf16.msra.mxu0 0
  %10676 = vmatpush.bf16.msra.mxu0 0
  %10677 = vmatpush.bf16.msra.mxu0 0
  %10678 = vmatpush.bf16.msra.mxu0 0
  %10679 = vmatpush.bf16.msra.mxu0 %v10658
  %10680 = vmatpush.bf16.msra.mxu0 %v10654
  %10681 = vmatmul.bf16.gmra.mxu0 %v10671
  %v10682 = vpop.f32.mrf.mxu0
  %v10683 = vadd.f32 0.0, %v10682
  %v10684 = vpop.f32.mrf.mxu0
  %10685 = vdwg.mxu0
  %10686 = vmatpush.bf16.msra.mxu0 0
  %10687 = vmatpush.bf16.msra.mxu0 0
  %10688 = vmatpush.bf16.msra.mxu0 0
  %10689 = vmatpush.bf16.msra.mxu0 0
  %10690 = vmatpush.bf16.msra.mxu0 0
  %10691 = vmatpush.bf16.msra.mxu0 0
  %10692 = vmatpush.bf16.msra.mxu0 %v10659
  %10693 = vmatpush.bf16.msra.mxu0 %v10655
  %10694 = vmatmul.bf16.gmra.mxu0 %v10671
  %v10695 = vpop.f32.mrf.mxu0
  %v10696 = vadd.f32 0.0, %v10695
  %v10697 = vpop.f32.mrf.mxu0
  %10698 = vdwg.mxu0
  %10699 = vmatpush.bf16.msra.mxu0 0
  %10700 = vmatpush.bf16.msra.mxu0 0
  %10701 = vmatpush.bf16.msra.mxu0 0
  %10702 = vmatpush.bf16.msra.mxu0 0
  %10703 = vmatpush.bf16.msra.mxu0 0
  %10704 = vmatpush.bf16.msra.mxu0 0
  %10705 = vmatpush.bf16.msra.mxu0 %v10660
  %10706 = vmatpush.bf16.msra.mxu0 %v10656
  %10707 = vmatmul.bf16.gmra.mxu0 %v10671
  %v10708 = vpop.f32.mrf.mxu0
  %v10709 = vadd.f32 0.0, %v10708
  %v10710 = vpop.f32.mrf.mxu0
  %10711 = vdwg.mxu0
  %10712 = vmatpush.bf16.msra.mxu0 0
  %10713 = vmatpush.bf16.msra.mxu0 0
  %10714 = vmatpush.bf16.msra.mxu0 0
  %10715 = vmatpush.bf16.msra.mxu0 0
  %10716 = vmatpush.bf16.msra.mxu0 0
  %10717 = vmatpush.bf16.msra.mxu0 0
  %10718 = vmatpush.bf16.msra.mxu0 %v10661
  %10719 = vmatpush.bf16.msra.mxu0 %v10657
  %10720 = vmatmul.bf16.gmra.mxu0 %v10671
  %v10721 = vpop.f32.mrf.mxu0
  %v10722 = vadd.f32 0.0, %v10721
  %v10723 = vpop.f32.mrf.mxu0
  %10724 = vdwg.mxu0
  %v10725 = vadd.f32 %v10598, %v10683
  %v10726 = vadd.f32 %v10599, %v10696
  %v10727 = vadd.f32 %v10600, %v10709
  %v10728 = vadd.f32 %v10601, %v10722
  %10732 = vrot.lane.b32.xlu0 %v2623, 6
  %v10733 = vpop.permute.xlu0 %10732
  %10734 = vrot.lane.b32.xlu0 %v2727, 6
  %v10735 = vpop.permute.xlu0 %10734
  %10736 = vrot.lane.b32.xlu0 %v2831, 6
  %v10737 = vpop.permute.xlu0 %10736
  %vm10738 = vcmask 48128
  %v10739 = vsel %vm10738, %v10733, %v10735
  %v10740 = vsel %vm10738, %v10735, %v10737
  %10744 = vrot.lane.b32.xlu0 %v3493, 50
  %v10745 = vpop.permute.xlu0 %10744
  %v10747 = vsel %vm10738, %v1203, %v10733
  %vm10748 = vcmask 408576
  %v10749 = vsel %vm10748, %v10740, %v10745
  %vm10750 = vcmask 859136
  %v10751 = vsel %vm10750, %v10749, 0.0
  %v10754 = vrot.slane %v10739, 6
  %v10755 = vrot.slane %v10751, 4
  %vm10756 = vcmask 1041408
  %v10757 = vsel %vm10756, %v10747, %v10754
  %vm10758 = vcmask 1043456
  %v10759 = vsel %vm10758, %v10757, %v10755
  %10761 = vst [vmem:[%s24] sm:$0x3f] %v10759
  %v10762 = vld [vmem:[%s23] sm:$0xf]
  %v10764 = vperm.slane %v10762, 0
  %v10765 = vperm.slane %v10762, 1
  %v10766 = vperm.slane %v10762, 2
  %v10767 = vperm.slane %v10762, 3
  %v10776 = vunpack.c.l.b16 %v4707
  %v10777 = vunpack.c.h.b16 %v4707
  %v10778 = vunpack.c.l.b16 %v4708
  %v10779 = vunpack.c.h.b16 %v4708
  %v10780 = vunpack.c.l.b16 %v4709
  %v10781 = vunpack.c.h.b16 %v4709
  %v10782 = vunpack.c.l.b16 %v4710
  %v10783 = vunpack.c.h.b16 %v4710
  %v10784 = vpack.c.b16 %v10776, %v10776
  %v10785 = vpack.c.b16 %v10777, %v10777
  %v10786 = vpack.c.b16 %v10778, %v10778
  %v10787 = vpack.c.b16 %v10779, %v10779
  %v10788 = vpack.c.b16 %v10780, %v10780
  %v10789 = vpack.c.b16 %v10781, %v10781
  %v10790 = vpack.c.b16 %v10782, %v10782
  %v10791 = vpack.c.b16 %v10783, %v10783
  %v11056 = vunpack.c.l.b16 %v4713
  %v11057 = vunpack.c.h.b16 %v4713
  %v11058 = vunpack.c.l.b16 %v4714
  %v11059 = vunpack.c.h.b16 %v4714
  %v11060 = vunpack.c.l.b16 %v4715
  %v11061 = vunpack.c.h.b16 %v4715
  %v11062 = vunpack.c.l.b16 %v4716
  %v11063 = vunpack.c.h.b16 %v4716
  %v11064 = vunpack.c.l.b16 %v4717
  %v11065 = vunpack.c.h.b16 %v4717
  %v11066 = vunpack.c.l.b16 %v4718
  %v11067 = vunpack.c.h.b16 %v4718
  %v11068 = vunpack.c.l.b16 %v4719
  %v11069 = vunpack.c.h.b16 %v4719
  %v11070 = vunpack.c.l.b16 %v4720
  %v11071 = vunpack.c.h.b16 %v4720
  %v11072 = vunpack.c.l.b16 %v4721
  %v11073 = vunpack.c.h.b16 %v4721
  %v11074 = vunpack.c.l.b16 %v4722
  %v11075 = vunpack.c.h.b16 %v4722
  %v11076 = vunpack.c.l.b16 %v4723
  %v11077 = vunpack.c.h.b16 %v4723
  %v11078 = vunpack.c.l.b16 %v4724
  %v11079 = vunpack.c.h.b16 %v4724
  %v11080 = vunpack.c.l.b16 %v4725
  %v11081 = vunpack.c.h.b16 %v4725
  %v11082 = vunpack.c.l.b16 %v4726
  %v11083 = vunpack.c.h.b16 %v4726
  %v11084 = vunpack.c.l.b16 %v4727
  %v11085 = vunpack.c.h.b16 %v4727
  %v11086 = vunpack.c.l.b16 %v4728
  %v11087 = vunpack.c.h.b16 %v4728
  %v11088 = vunpack.c.l.b16 %v4729
  %v11089 = vunpack.c.h.b16 %v4729
  %v11090 = vunpack.c.l.b16 %v4730
  %v11091 = vunpack.c.h.b16 %v4730
  %v11092 = vunpack.c.l.b16 %v4731
  %v11093 = vunpack.c.h.b16 %v4731
  %v11094 = vunpack.c.l.b16 %v4732
  %v11095 = vunpack.c.h.b16 %v4732
  %v11096 = vunpack.c.l.b16 %v4733
  %v11097 = vunpack.c.h.b16 %v4733
  %v11098 = vunpack.c.l.b16 %v4734
  %v11099 = vunpack.c.h.b16 %v4734
  %v11100 = vunpack.c.l.b16 %v4735
  %v11101 = vunpack.c.h.b16 %v4735
  %v11102 = vunpack.c.l.b16 %v4736
  %v11103 = vunpack.c.h.b16 %v4736
  %v11104 = vunpack.c.l.b16 %v4737
  %v11105 = vunpack.c.h.b16 %v4737
  %v11106 = vunpack.c.l.b16 %v4738
  %v11107 = vunpack.c.h.b16 %v4738
  %v11108 = vunpack.c.l.b16 %v4739
  %v11109 = vunpack.c.h.b16 %v4739
  %v11110 = vunpack.c.l.b16 %v4740
  %v11111 = vunpack.c.h.b16 %v4740
  %v11112 = vunpack.c.l.b16 %v4741
  %v11113 = vunpack.c.h.b16 %v4741
  %v11114 = vunpack.c.l.b16 %v4742
  %v11115 = vunpack.c.h.b16 %v4742
  %v11116 = vunpack.c.l.b16 %v4743
  %v11117 = vunpack.c.h.b16 %v4743
  %v11118 = vunpack.c.l.b16 %v4744
  %v11119 = vunpack.c.h.b16 %v4744
  %v11120 = vunpack.c.l.b16 %v4745
  %v11121 = vunpack.c.h.b16 %v4745
  %v11122 = vunpack.c.l.b16 %v4746
  %v11123 = vunpack.c.h.b16 %v4746
  %v11124 = vunpack.c.l.b16 %v4747
  %v11125 = vunpack.c.h.b16 %v4747
  %v11126 = vunpack.c.l.b16 %v4748
  %v11127 = vunpack.c.h.b16 %v4748
  %v11128 = vunpack.c.l.b16 %v4749
  %v11129 = vunpack.c.h.b16 %v4749
  %v11130 = vunpack.c.l.b16 %v4750
  %v11131 = vunpack.c.h.b16 %v4750
  %v11132 = vunpack.c.l.b16 %v4751
  %v11133 = vunpack.c.h.b16 %v4751
  %v11134 = vunpack.c.l.b16 %v4752
  %v11135 = vunpack.c.h.b16 %v4752
  %v11136 = vunpack.c.l.b16 %v4753
  %v11137 = vunpack.c.h.b16 %v4753
  %v11138 = vunpack.c.l.b16 %v4754
  %v11139 = vunpack.c.h.b16 %v4754
  %v11140 = vunpack.c.l.b16 %v4755
  %v11141 = vunpack.c.h.b16 %v4755
  %v11142 = vunpack.c.l.b16 %v4756
  %v11143 = vunpack.c.h.b16 %v4756
  %v11144 = vunpack.c.l.b16 %v4757
  %v11145 = vunpack.c.h.b16 %v4757
  %v11146 = vunpack.c.l.b16 %v4758
  %v11147 = vunpack.c.h.b16 %v4758
  %v11148 = vunpack.c.l.b16 %v4759
  %v11149 = vunpack.c.h.b16 %v4759
  %v11150 = vunpack.c.l.b16 %v4760
  %v11151 = vunpack.c.h.b16 %v4760
  %v11152 = vunpack.c.l.b16 %v4761
  %v11153 = vunpack.c.h.b16 %v4761
  %v11154 = vunpack.c.l.b16 %v4762
  %v11155 = vunpack.c.h.b16 %v4762
  %v11156 = vunpack.c.l.b16 %v4763
  %v11157 = vunpack.c.h.b16 %v4763
  %v11158 = vunpack.c.l.b16 %v4764
  %v11159 = vunpack.c.h.b16 %v4764
  %v11160 = vunpack.c.l.b16 %v4765
  %v11161 = vunpack.c.h.b16 %v4765
  %v11162 = vunpack.c.l.b16 %v4766
  %v11163 = vunpack.c.h.b16 %v4766
  %v11164 = vunpack.c.l.b16 %v4767
  %v11165 = vunpack.c.h.b16 %v4767
  %v11166 = vunpack.c.l.b16 %v4768
  %v11167 = vunpack.c.h.b16 %v4768
  %v11168 = vunpack.c.l.b16 %v4769
  %v11169 = vunpack.c.h.b16 %v4769
  %v11170 = vunpack.c.l.b16 %v4770
  %v11171 = vunpack.c.h.b16 %v4770
  %v11172 = vunpack.c.l.b16 %v4771
  %v11173 = vunpack.c.h.b16 %v4771
  %v11174 = vunpack.c.l.b16 %v4772
  %v11175 = vunpack.c.h.b16 %v4772
  %v11176 = vunpack.c.l.b16 %v4773
  %v11177 = vunpack.c.h.b16 %v4773
  %v11178 = vunpack.c.l.b16 %v4774
  %v11179 = vunpack.c.h.b16 %v4774
  %v11180 = vunpack.c.l.b16 %v4775
  %v11181 = vunpack.c.h.b16 %v4775
  %v11182 = vunpack.c.l.b16 %v4776
  %v11183 = vunpack.c.h.b16 %v4776
  %v11184 = vunpack.c.l.b16 %v4777
  %v11185 = vunpack.c.h.b16 %v4777
  %v11186 = vunpack.c.l.b16 %v4778
  %v11187 = vunpack.c.h.b16 %v4778
  %v11188 = vunpack.c.l.b16 %v4779
  %v11189 = vunpack.c.h.b16 %v4779
  %v11190 = vunpack.c.l.b16 %v4780
  %v11191 = vunpack.c.h.b16 %v4780
  %v11192 = vunpack.c.l.b16 %v4781
  %v11193 = vunpack.c.h.b16 %v4781
  %v11194 = vunpack.c.l.b16 %v4782
  %v11195 = vunpack.c.h.b16 %v4782
  %v11196 = vunpack.c.l.b16 %v4783
  %v11197 = vunpack.c.h.b16 %v4783
  %v11198 = vunpack.c.l.b16 %v4784
  %v11199 = vunpack.c.h.b16 %v4784
  %v11200 = vunpack.c.l.b16 %v4785
  %v11201 = vunpack.c.h.b16 %v4785
  %v11202 = vunpack.c.l.b16 %v4786
  %v11203 = vunpack.c.h.b16 %v4786
  %v11204 = vunpack.c.l.b16 %v4787
  %v11205 = vunpack.c.h.b16 %v4787
  %v11206 = vunpack.c.l.b16 %v4788
  %v11207 = vunpack.c.h.b16 %v4788
  %v11208 = vunpack.c.l.b16 %v4789
  %v11209 = vunpack.c.h.b16 %v4789
  %v11210 = vunpack.c.l.b16 %v4790
  %v11211 = vunpack.c.h.b16 %v4790
  %v11212 = vunpack.c.l.b16 %v4791
  %v11213 = vunpack.c.h.b16 %v4791
  %v11214 = vunpack.c.l.b16 %v4792
  %v11215 = vunpack.c.h.b16 %v4792
  %v11216 = vunpack.c.l.b16 %v4793
  %v11217 = vunpack.c.h.b16 %v4793
  %v11218 = vunpack.c.l.b16 %v4794
  %v11219 = vunpack.c.h.b16 %v4794
  %v11220 = vunpack.c.l.b16 %v4795
  %v11221 = vunpack.c.h.b16 %v4795
  %v11222 = vunpack.c.l.b16 %v4796
  %v11223 = vunpack.c.h.b16 %v4796
  %v11224 = vunpack.c.l.b16 %v4797
  %v11225 = vunpack.c.h.b16 %v4797
  %v11226 = vunpack.c.l.b16 %v4798
  %v11227 = vunpack.c.h.b16 %v4798
  %v11228 = vunpack.c.l.b16 %v4799
  %v11229 = vunpack.c.h.b16 %v4799
  %v11230 = vunpack.c.l.b16 %v4800
  %v11231 = vunpack.c.h.b16 %v4800
  %v11232 = vunpack.c.l.b16 %v4801
  %v11233 = vunpack.c.h.b16 %v4801
  %v11234 = vunpack.c.l.b16 %v4802
  %v11235 = vunpack.c.h.b16 %v4802
  %v11236 = vunpack.c.l.b16 %v4803
  %v11237 = vunpack.c.h.b16 %v4803
  %v11238 = vunpack.c.l.b16 %v4804
  %v11239 = vunpack.c.h.b16 %v4804
  %v11240 = vunpack.c.l.b16 %v4805
  %v11241 = vunpack.c.h.b16 %v4805
  %v11242 = vunpack.c.l.b16 %v4806
  %v11243 = vunpack.c.h.b16 %v4806
  %v11244 = vunpack.c.l.b16 %v4807
  %v11245 = vunpack.c.h.b16 %v4807
  %v11246 = vunpack.c.l.b16 %v4808
  %v11247 = vunpack.c.h.b16 %v4808
  %v11248 = vunpack.c.l.b16 %v4809
  %v11249 = vunpack.c.h.b16 %v4809
  %v11250 = vunpack.c.l.b16 %v4810
  %v11251 = vunpack.c.h.b16 %v4810
  %v11252 = vunpack.c.l.b16 %v4811
  %v11253 = vunpack.c.h.b16 %v4811
  %v11254 = vunpack.c.l.b16 %v4812
  %v11255 = vunpack.c.h.b16 %v4812
  %v11256 = vunpack.c.l.b16 %v4813
  %v11257 = vunpack.c.h.b16 %v4813
  %v11258 = vunpack.c.l.b16 %v4814
  %v11259 = vunpack.c.h.b16 %v4814
  %v11260 = vunpack.c.l.b16 %v4815
  %v11261 = vunpack.c.h.b16 %v4815
  %v11262 = vunpack.c.l.b16 %v4816
  %v11263 = vunpack.c.h.b16 %v4816
  %v11264 = vunpack.c.l.b16 %v4817
  %v11265 = vunpack.c.h.b16 %v4817
  %v11266 = vunpack.c.l.b16 %v4818
  %v11267 = vunpack.c.h.b16 %v4818
  %v11268 = vunpack.c.l.b16 %v4819
  %v11269 = vunpack.c.h.b16 %v4819
  %v11270 = vunpack.c.l.b16 %v4820
  %v11271 = vunpack.c.h.b16 %v4820
  %v11272 = vunpack.c.l.b16 %v4821
  %v11273 = vunpack.c.h.b16 %v4821
  %v11274 = vunpack.c.l.b16 %v4822
  %v11275 = vunpack.c.h.b16 %v4822
  %v11276 = vunpack.c.l.b16 %v4823
  %v11277 = vunpack.c.h.b16 %v4823
  %v11278 = vunpack.c.l.b16 %v4824
  %v11279 = vunpack.c.h.b16 %v4824
  %v11280 = vunpack.c.l.b16 %v4825
  %v11281 = vunpack.c.h.b16 %v4825
  %v11282 = vunpack.c.l.b16 %v4826
  %v11283 = vunpack.c.h.b16 %v4826
  %v11284 = vunpack.c.l.b16 %v4827
  %v11285 = vunpack.c.h.b16 %v4827
  %v11286 = vunpack.c.l.b16 %v4828
  %v11287 = vunpack.c.h.b16 %v4828
  %v11288 = vunpack.c.l.b16 %v4829
  %v11289 = vunpack.c.h.b16 %v4829
  %v11290 = vunpack.c.l.b16 %v4830
  %v11291 = vunpack.c.h.b16 %v4830
  %v11292 = vunpack.c.l.b16 %v4831
  %v11293 = vunpack.c.h.b16 %v4831
  %v11294 = vunpack.c.l.b16 %v4832
  %v11295 = vunpack.c.h.b16 %v4832
  %v11296 = vunpack.c.l.b16 %v4833
  %v11297 = vunpack.c.h.b16 %v4833
  %v11298 = vunpack.c.l.b16 %v4834
  %v11299 = vunpack.c.h.b16 %v4834
  %v11300 = vunpack.c.l.b16 %v4835
  %v11301 = vunpack.c.h.b16 %v4835
  %v11302 = vunpack.c.l.b16 %v4836
  %v11303 = vunpack.c.h.b16 %v4836
  %v11304 = vunpack.c.l.b16 %v4837
  %v11305 = vunpack.c.h.b16 %v4837
  %v11306 = vunpack.c.l.b16 %v4838
  %v11307 = vunpack.c.h.b16 %v4838
  %v11308 = vunpack.c.l.b16 %v4839
  %v11309 = vunpack.c.h.b16 %v4839
  %v11310 = vunpack.c.l.b16 %v4840
  %v11311 = vunpack.c.h.b16 %v4840
  %v11312 = vunpack.c.l.b16 %v4841
  %v11313 = vunpack.c.h.b16 %v4841
  %v11314 = vunpack.c.l.b16 %v4842
  %v11315 = vunpack.c.h.b16 %v4842
  %v11316 = vunpack.c.l.b16 %v4843
  %v11317 = vunpack.c.h.b16 %v4843
  %v11318 = vunpack.c.l.b16 %v4844
  %v11319 = vunpack.c.h.b16 %v4844
  %v11320 = vunpack.c.l.b16 %v4845
  %v11321 = vunpack.c.h.b16 %v4845
  %v11322 = vunpack.c.l.b16 %v4846
  %v11323 = vunpack.c.h.b16 %v4846
  %v11324 = vunpack.c.l.b16 %v4847
  %v11325 = vunpack.c.h.b16 %v4847
  %v11326 = vunpack.c.l.b16 %v4848
  %v11327 = vunpack.c.h.b16 %v4848
  %v11328 = vunpack.c.l.b16 %v4849
  %v11329 = vunpack.c.h.b16 %v4849
  %v11330 = vunpack.c.l.b16 %v4850
  %v11331 = vunpack.c.h.b16 %v4850
  %v11332 = vunpack.c.l.b16 %v4851
  %v11333 = vunpack.c.h.b16 %v4851
  %v11334 = vunpack.c.l.b16 %v4852
  %v11335 = vunpack.c.h.b16 %v4852
  %v11336 = vunpack.c.l.b16 %v4853
  %v11337 = vunpack.c.h.b16 %v4853
  %v11338 = vunpack.c.l.b16 %v4854
  %v11339 = vunpack.c.h.b16 %v4854
  %v11340 = vunpack.c.l.b16 %v4855
  %v11341 = vunpack.c.h.b16 %v4855
  %v11342 = vunpack.c.l.b16 %v4856
  %v11343 = vunpack.c.h.b16 %v4856
  %v11344 = vunpack.c.l.b16 %v4857
  %v11345 = vunpack.c.h.b16 %v4857
  %v11346 = vunpack.c.l.b16 %v4858
  %v11347 = vunpack.c.h.b16 %v4858
  %v11348 = vunpack.c.l.b16 %v4859
  %v11349 = vunpack.c.h.b16 %v4859
  %v11350 = vunpack.c.l.b16 %v4860
  %v11351 = vunpack.c.h.b16 %v4860
  %v11352 = vunpack.c.l.b16 %v4861
  %v11353 = vunpack.c.h.b16 %v4861
  %v11354 = vunpack.c.l.b16 %v4862
  %v11355 = vunpack.c.h.b16 %v4862
  %v11356 = vunpack.c.l.b16 %v4863
  %v11357 = vunpack.c.h.b16 %v4863
  %v11358 = vunpack.c.l.b16 %v4864
  %v11359 = vunpack.c.h.b16 %v4864
  %v11360 = vunpack.c.l.b16 %v4865
  %v11361 = vunpack.c.h.b16 %v4865
  %v11362 = vunpack.c.l.b16 %v4866
  %v11363 = vunpack.c.h.b16 %v4866
  %v11364 = vunpack.c.l.b16 %v4867
  %v11365 = vunpack.c.h.b16 %v4867
  %v11366 = vunpack.c.l.b16 %v4868
  %v11367 = vunpack.c.h.b16 %v4868
  %v11368 = vunpack.c.l.b16 %v4869
  %v11369 = vunpack.c.h.b16 %v4869
  %v11370 = vunpack.c.l.b16 %v4870
  %v11371 = vunpack.c.h.b16 %v4870
  %v11372 = vunpack.c.l.b16 %v4871
  %v11373 = vunpack.c.h.b16 %v4871
  %v11374 = vunpack.c.l.b16 %v4872
  %v11375 = vunpack.c.h.b16 %v4872
  %v11376 = vunpack.c.l.b16 %v4873
  %v11377 = vunpack.c.h.b16 %v4873
  %v11378 = vunpack.c.l.b16 %v4874
  %v11379 = vunpack.c.h.b16 %v4874
  %v11380 = vunpack.c.l.b16 %v4875
  %v11381 = vunpack.c.h.b16 %v4875
  %v11382 = vunpack.c.l.b16 %v4876
  %v11383 = vunpack.c.h.b16 %v4876
  %v11384 = vunpack.c.l.b16 %v4877
  %v11385 = vunpack.c.h.b16 %v4877
  %v11386 = vunpack.c.l.b16 %v4878
  %v11387 = vunpack.c.h.b16 %v4878
  %v11388 = vunpack.c.l.b16 %v4879
  %v11389 = vunpack.c.h.b16 %v4879
  %v11390 = vunpack.c.l.b16 %v4880
  %v11391 = vunpack.c.h.b16 %v4880
  %v11392 = vunpack.c.l.b16 %v4881
  %v11393 = vunpack.c.h.b16 %v4881
  %v11394 = vunpack.c.l.b16 %v4882
  %v11395 = vunpack.c.h.b16 %v4882
  %v11396 = vunpack.c.l.b16 %v4883
  %v11397 = vunpack.c.h.b16 %v4883
  %v11398 = vunpack.c.l.b16 %v4884
  %v11399 = vunpack.c.h.b16 %v4884
  %v11400 = vunpack.c.l.b16 %v4885
  %v11401 = vunpack.c.h.b16 %v4885
  %v11402 = vunpack.c.l.b16 %v4886
  %v11403 = vunpack.c.h.b16 %v4886
  %v11404 = vunpack.c.l.b16 %v4887
  %v11405 = vunpack.c.h.b16 %v4887
  %v11406 = vunpack.c.l.b16 %v4888
  %v11407 = vunpack.c.h.b16 %v4888
  %v11408 = vunpack.c.l.b16 %v4889
  %v11409 = vunpack.c.h.b16 %v4889
  %v11410 = vunpack.c.l.b16 %v4890
  %v11411 = vunpack.c.h.b16 %v4890
  %v11412 = vunpack.c.l.b16 %v4891
  %v11413 = vunpack.c.h.b16 %v4891
  %v11414 = vunpack.c.l.b16 %v4892
  %v11415 = vunpack.c.h.b16 %v4892
  %v11416 = vunpack.c.l.b16 %v4893
  %v11417 = vunpack.c.h.b16 %v4893
  %v11418 = vunpack.c.l.b16 %v4894
  %v11419 = vunpack.c.h.b16 %v4894
  %v11420 = vunpack.c.l.b16 %v4895
  %v11421 = vunpack.c.h.b16 %v4895
  %v11422 = vunpack.c.l.b16 %v4896
  %v11423 = vunpack.c.h.b16 %v4896
  %v11424 = vunpack.c.l.b16 %v4897
  %v11425 = vunpack.c.h.b16 %v4897
  %v11426 = vunpack.c.l.b16 %v4898
  %v11427 = vunpack.c.h.b16 %v4898
  %v11428 = vunpack.c.l.b16 %v4899
  %v11429 = vunpack.c.h.b16 %v4899
  %v11430 = vunpack.c.l.b16 %v4900
  %v11431 = vunpack.c.h.b16 %v4900
  %v11432 = vunpack.c.l.b16 %v4901
  %v11433 = vunpack.c.h.b16 %v4901
  %v11434 = vunpack.c.l.b16 %v4902
  %v11435 = vunpack.c.h.b16 %v4902
  %v11436 = vunpack.c.l.b16 %v4903
  %v11437 = vunpack.c.h.b16 %v4903
  %v11438 = vunpack.c.l.b16 %v4904
  %v11439 = vunpack.c.h.b16 %v4904
  %v11440 = vunpack.c.l.b16 %v4905
  %v11441 = vunpack.c.h.b16 %v4905
  %v11442 = vunpack.c.l.b16 %v4906
  %v11443 = vunpack.c.h.b16 %v4906
  %v11444 = vunpack.c.l.b16 %v4907
  %v11445 = vunpack.c.h.b16 %v4907
  %v11446 = vunpack.c.l.b16 %v4908
  %v11447 = vunpack.c.h.b16 %v4908
  %v11448 = vunpack.c.l.b16 %v4909
  %v11449 = vunpack.c.h.b16 %v4909
  %v11450 = vunpack.c.l.b16 %v4910
  %v11451 = vunpack.c.h.b16 %v4910
  %v11452 = vunpack.c.l.b16 %v4911
  %v11453 = vunpack.c.h.b16 %v4911
  %v11454 = vunpack.c.l.b16 %v4912
  %v11455 = vunpack.c.h.b16 %v4912
  %v11456 = vunpack.c.l.b16 %v4913
  %v11457 = vunpack.c.h.b16 %v4913
  %v11458 = vunpack.c.l.b16 %v4914
  %v11459 = vunpack.c.h.b16 %v4914
  %v11460 = vunpack.c.l.b16 %v4915
  %v11461 = vunpack.c.h.b16 %v4915
  %v11462 = vunpack.c.l.b16 %v4916
  %v11463 = vunpack.c.h.b16 %v4916
  %v11464 = vunpack.c.l.b16 %v4917
  %v11465 = vunpack.c.h.b16 %v4917
  %v11466 = vunpack.c.l.b16 %v4918
  %v11467 = vunpack.c.h.b16 %v4918
  %v11468 = vunpack.c.l.b16 %v4919
  %v11469 = vunpack.c.h.b16 %v4919
  %v11470 = vunpack.c.l.b16 %v4920
  %v11471 = vunpack.c.h.b16 %v4920
  %v11472 = vunpack.c.l.b16 %v4921
  %v11473 = vunpack.c.h.b16 %v4921
  %v11474 = vunpack.c.l.b16 %v4922
  %v11475 = vunpack.c.h.b16 %v4922
  %v11476 = vunpack.c.l.b16 %v4923
  %v11477 = vunpack.c.h.b16 %v4923
  %v11478 = vunpack.c.l.b16 %v4924
  %v11479 = vunpack.c.h.b16 %v4924
  %v11480 = vunpack.c.l.b16 %v4925
  %v11481 = vunpack.c.h.b16 %v4925
  %v11482 = vunpack.c.l.b16 %v4926
  %v11483 = vunpack.c.h.b16 %v4926
  %v11484 = vunpack.c.l.b16 %v4927
  %v11485 = vunpack.c.h.b16 %v4927
  %v11486 = vunpack.c.l.b16 %v4928
  %v11487 = vunpack.c.h.b16 %v4928
  %v11488 = vunpack.c.l.b16 %v4929
  %v11489 = vunpack.c.h.b16 %v4929
  %v11490 = vunpack.c.l.b16 %v4930
  %v11491 = vunpack.c.h.b16 %v4930
  %v11492 = vunpack.c.l.b16 %v4931
  %v11493 = vunpack.c.h.b16 %v4931
  %v11494 = vunpack.c.l.b16 %v4932
  %v11495 = vunpack.c.h.b16 %v4932
  %v11496 = vunpack.c.l.b16 %v4933
  %v11497 = vunpack.c.h.b16 %v4933
  %v11498 = vunpack.c.l.b16 %v4934
  %v11499 = vunpack.c.h.b16 %v4934
  %v11500 = vunpack.c.l.b16 %v4935
  %v11501 = vunpack.c.h.b16 %v4935
  %v11502 = vunpack.c.l.b16 %v4936
  %v11503 = vunpack.c.h.b16 %v4936
  %v11504 = vunpack.c.l.b16 %v4937
  %v11505 = vunpack.c.h.b16 %v4937
  %v11506 = vunpack.c.l.b16 %v4938
  %v11507 = vunpack.c.h.b16 %v4938
  %v11508 = vunpack.c.l.b16 %v4939
  %v11509 = vunpack.c.h.b16 %v4939
  %v11510 = vunpack.c.l.b16 %v4940
  %v11511 = vunpack.c.h.b16 %v4940
  %v11512 = vunpack.c.l.b16 %v4941
  %v11513 = vunpack.c.h.b16 %v4941
  %v11514 = vunpack.c.l.b16 %v4942
  %v11515 = vunpack.c.h.b16 %v4942
  %v11516 = vunpack.c.l.b16 %v4943
  %v11517 = vunpack.c.h.b16 %v4943
  %v11518 = vunpack.c.l.b16 %v4944
  %v11519 = vunpack.c.h.b16 %v4944
  %v11520 = vunpack.c.l.b16 %v4945
  %v11521 = vunpack.c.h.b16 %v4945
  %v11522 = vunpack.c.l.b16 %v4946
  %v11523 = vunpack.c.h.b16 %v4946
  %v11524 = vunpack.c.l.b16 %v4947
  %v11525 = vunpack.c.h.b16 %v4947
  %v11526 = vunpack.c.l.b16 %v4948
  %v11527 = vunpack.c.h.b16 %v4948
  %v11528 = vunpack.c.l.b16 %v4949
  %v11529 = vunpack.c.h.b16 %v4949
  %v11530 = vunpack.c.l.b16 %v4950
  %v11531 = vunpack.c.h.b16 %v4950
  %v11532 = vunpack.c.l.b16 %v4951
  %v11533 = vunpack.c.h.b16 %v4951
  %v11534 = vunpack.c.l.b16 %v4952
  %v11535 = vunpack.c.h.b16 %v4952
  %v11536 = vunpack.c.l.b16 %v4953
  %v11537 = vunpack.c.h.b16 %v4953
  %v11538 = vunpack.c.l.b16 %v4954
  %v11539 = vunpack.c.h.b16 %v4954
  %v11540 = vunpack.c.l.b16 %v4955
  %v11541 = vunpack.c.h.b16 %v4955
  %v11542 = vunpack.c.l.b16 %v4956
  %v11543 = vunpack.c.h.b16 %v4956
  %v11544 = vunpack.c.l.b16 %v4957
  %v11545 = vunpack.c.h.b16 %v4957
  %v11546 = vunpack.c.l.b16 %v4958
  %v11547 = vunpack.c.h.b16 %v4958
  %v11548 = vunpack.c.l.b16 %v4959
  %v11549 = vunpack.c.h.b16 %v4959
  %v11550 = vunpack.c.l.b16 %v4960
  %v11551 = vunpack.c.h.b16 %v4960
  %v11552 = vunpack.c.l.b16 %v4961
  %v11553 = vunpack.c.h.b16 %v4961
  %v11554 = vunpack.c.l.b16 %v4962
  %v11555 = vunpack.c.h.b16 %v4962
  %v11556 = vunpack.c.l.b16 %v4963
  %v11557 = vunpack.c.h.b16 %v4963
  %v11558 = vunpack.c.l.b16 %v4964
  %v11559 = vunpack.c.h.b16 %v4964
  %v11560 = vunpack.c.l.b16 %v4965
  %v11561 = vunpack.c.h.b16 %v4965
  %v11562 = vunpack.c.l.b16 %v4966
  %v11563 = vunpack.c.h.b16 %v4966
  %v11564 = vunpack.c.l.b16 %v4967
  %v11565 = vunpack.c.h.b16 %v4967
  %v11566 = vunpack.c.l.b16 %v4968
  %v11567 = vunpack.c.h.b16 %v4968
  %v11568 = vpack.c.b16 %v11060, %v11056
  %v11569 = vpack.c.b16 %v11061, %v11057
  %v11570 = vpack.c.b16 %v11062, %v11058
  %v11571 = vpack.c.b16 %v11063, %v11059
  %v11572 = vpack.c.b16 %v11068, %v11064
  %v11573 = vpack.c.b16 %v11069, %v11065
  %v11574 = vpack.c.b16 %v11070, %v11066
  %v11575 = vpack.c.b16 %v11071, %v11067
  %v11576 = vpack.c.b16 %v11076, %v11072
  %v11577 = vpack.c.b16 %v11077, %v11073
  %v11578 = vpack.c.b16 %v11078, %v11074
  %v11579 = vpack.c.b16 %v11079, %v11075
  %v11580 = vpack.c.b16 %v11084, %v11080
  %v11581 = vpack.c.b16 %v11085, %v11081
  %v11582 = vpack.c.b16 %v11086, %v11082
  %v11583 = vpack.c.b16 %v11087, %v11083
  %v11584 = vpack.c.b16 %v11092, %v11088
  %v11585 = vpack.c.b16 %v11093, %v11089
  %v11586 = vpack.c.b16 %v11094, %v11090
  %v11587 = vpack.c.b16 %v11095, %v11091
  %v11588 = vpack.c.b16 %v11100, %v11096
  %v11589 = vpack.c.b16 %v11101, %v11097
  %v11590 = vpack.c.b16 %v11102, %v11098
  %v11591 = vpack.c.b16 %v11103, %v11099
  %v11592 = vpack.c.b16 %v11108, %v11104
  %v11593 = vpack.c.b16 %v11109, %v11105
  %v11594 = vpack.c.b16 %v11110, %v11106
  %v11595 = vpack.c.b16 %v11111, %v11107
  %v11596 = vpack.c.b16 %v11116, %v11112
  %v11597 = vpack.c.b16 %v11117, %v11113
  %v11598 = vpack.c.b16 %v11118, %v11114
  %v11599 = vpack.c.b16 %v11119, %v11115
  %v11600 = vpack.c.b16 %v11124, %v11120
  %v11601 = vpack.c.b16 %v11125, %v11121
  %v11602 = vpack.c.b16 %v11126, %v11122
  %v11603 = vpack.c.b16 %v11127, %v11123
  %v11604 = vpack.c.b16 %v11132, %v11128
  %v11605 = vpack.c.b16 %v11133, %v11129
  %v11606 = vpack.c.b16 %v11134, %v11130
  %v11607 = vpack.c.b16 %v11135, %v11131
  %v11608 = vpack.c.b16 %v11140, %v11136
  %v11609 = vpack.c.b16 %v11141, %v11137
  %v11610 = vpack.c.b16 %v11142, %v11138
  %v11611 = vpack.c.b16 %v11143, %v11139
  %v11612 = vpack.c.b16 %v11148, %v11144
  %v11613 = vpack.c.b16 %v11149, %v11145
  %v11614 = vpack.c.b16 %v11150, %v11146
  %v11615 = vpack.c.b16 %v11151, %v11147
  %v11616 = vpack.c.b16 %v11156, %v11152
  %v11617 = vpack.c.b16 %v11157, %v11153
  %v11618 = vpack.c.b16 %v11158, %v11154
  %v11619 = vpack.c.b16 %v11159, %v11155
  %v11620 = vpack.c.b16 %v11164, %v11160
  %v11621 = vpack.c.b16 %v11165, %v11161
  %v11622 = vpack.c.b16 %v11166, %v11162
  %v11623 = vpack.c.b16 %v11167, %v11163
  %v11624 = vpack.c.b16 %v11172, %v11168
  %v11625 = vpack.c.b16 %v11173, %v11169
  %v11626 = vpack.c.b16 %v11174, %v11170
  %v11627 = vpack.c.b16 %v11175, %v11171
  %v11628 = vpack.c.b16 %v11180, %v11176
  %v11629 = vpack.c.b16 %v11181, %v11177
  %v11630 = vpack.c.b16 %v11182, %v11178
  %v11631 = vpack.c.b16 %v11183, %v11179
  %v11632 = vpack.c.b16 %v11188, %v11184
  %v11633 = vpack.c.b16 %v11189, %v11185
  %v11634 = vpack.c.b16 %v11190, %v11186
  %v11635 = vpack.c.b16 %v11191, %v11187
  %v11636 = vpack.c.b16 %v11196, %v11192
  %v11637 = vpack.c.b16 %v11197, %v11193
  %v11638 = vpack.c.b16 %v11198, %v11194
  %v11639 = vpack.c.b16 %v11199, %v11195
  %v11640 = vpack.c.b16 %v11204, %v11200
  %v11641 = vpack.c.b16 %v11205, %v11201
  %v11642 = vpack.c.b16 %v11206, %v11202
  %v11643 = vpack.c.b16 %v11207, %v11203
  %v11644 = vpack.c.b16 %v11212, %v11208
  %v11645 = vpack.c.b16 %v11213, %v11209
  %v11646 = vpack.c.b16 %v11214, %v11210
  %v11647 = vpack.c.b16 %v11215, %v11211
  %v11648 = vpack.c.b16 %v11220, %v11216
  %v11649 = vpack.c.b16 %v11221, %v11217
  %v11650 = vpack.c.b16 %v11222, %v11218
  %v11651 = vpack.c.b16 %v11223, %v11219
  %v11652 = vpack.c.b16 %v11228, %v11224
  %v11653 = vpack.c.b16 %v11229, %v11225
  %v11654 = vpack.c.b16 %v11230, %v11226
  %v11655 = vpack.c.b16 %v11231, %v11227
  %v11656 = vpack.c.b16 %v11236, %v11232
  %v11657 = vpack.c.b16 %v11237, %v11233
  %v11658 = vpack.c.b16 %v11238, %v11234
  %v11659 = vpack.c.b16 %v11239, %v11235
  %v11660 = vpack.c.b16 %v11244, %v11240
  %v11661 = vpack.c.b16 %v11245, %v11241
  %v11662 = vpack.c.b16 %v11246, %v11242
  %v11663 = vpack.c.b16 %v11247, %v11243
  %v11664 = vpack.c.b16 %v11252, %v11248
  %v11665 = vpack.c.b16 %v11253, %v11249
  %v11666 = vpack.c.b16 %v11254, %v11250
  %v11667 = vpack.c.b16 %v11255, %v11251
  %v11668 = vpack.c.b16 %v11260, %v11256
  %v11669 = vpack.c.b16 %v11261, %v11257
  %v11670 = vpack.c.b16 %v11262, %v11258
  %v11671 = vpack.c.b16 %v11263, %v11259
  %v11672 = vpack.c.b16 %v11268, %v11264
  %v11673 = vpack.c.b16 %v11269, %v11265
  %v11674 = vpack.c.b16 %v11270, %v11266
  %v11675 = vpack.c.b16 %v11271, %v11267
  %v11676 = vpack.c.b16 %v11276, %v11272
  %v11677 = vpack.c.b16 %v11277, %v11273
  %v11678 = vpack.c.b16 %v11278, %v11274
  %v11679 = vpack.c.b16 %v11279, %v11275
  %v11680 = vpack.c.b16 %v11284, %v11280
  %v11681 = vpack.c.b16 %v11285, %v11281
  %v11682 = vpack.c.b16 %v11286, %v11282
  %v11683 = vpack.c.b16 %v11287, %v11283
  %v11684 = vpack.c.b16 %v11292, %v11288
  %v11685 = vpack.c.b16 %v11293, %v11289
  %v11686 = vpack.c.b16 %v11294, %v11290
  %v11687 = vpack.c.b16 %v11295, %v11291
  %v11688 = vpack.c.b16 %v11300, %v11296
  %v11689 = vpack.c.b16 %v11301, %v11297
  %v11690 = vpack.c.b16 %v11302, %v11298
  %v11691 = vpack.c.b16 %v11303, %v11299
  %v11692 = vpack.c.b16 %v11308, %v11304
  %v11693 = vpack.c.b16 %v11309, %v11305
  %v11694 = vpack.c.b16 %v11310, %v11306
  %v11695 = vpack.c.b16 %v11311, %v11307
  %v11696 = vpack.c.b16 %v11316, %v11312
  %v11697 = vpack.c.b16 %v11317, %v11313
  %v11698 = vpack.c.b16 %v11318, %v11314
  %v11699 = vpack.c.b16 %v11319, %v11315
  %v11700 = vpack.c.b16 %v11324, %v11320
  %v11701 = vpack.c.b16 %v11325, %v11321
  %v11702 = vpack.c.b16 %v11326, %v11322
  %v11703 = vpack.c.b16 %v11327, %v11323
  %v11704 = vpack.c.b16 %v11332, %v11328
  %v11705 = vpack.c.b16 %v11333, %v11329
  %v11706 = vpack.c.b16 %v11334, %v11330
  %v11707 = vpack.c.b16 %v11335, %v11331
  %v11708 = vpack.c.b16 %v11340, %v11336
  %v11709 = vpack.c.b16 %v11341, %v11337
  %v11710 = vpack.c.b16 %v11342, %v11338
  %v11711 = vpack.c.b16 %v11343, %v11339
  %v11712 = vpack.c.b16 %v11348, %v11344
  %v11713 = vpack.c.b16 %v11349, %v11345
  %v11714 = vpack.c.b16 %v11350, %v11346
  %v11715 = vpack.c.b16 %v11351, %v11347
  %v11716 = vpack.c.b16 %v11356, %v11352
  %v11717 = vpack.c.b16 %v11357, %v11353
  %v11718 = vpack.c.b16 %v11358, %v11354
  %v11719 = vpack.c.b16 %v11359, %v11355
  %v11720 = vpack.c.b16 %v11364, %v11360
  %v11721 = vpack.c.b16 %v11365, %v11361
  %v11722 = vpack.c.b16 %v11366, %v11362
  %v11723 = vpack.c.b16 %v11367, %v11363
  %v11724 = vpack.c.b16 %v11372, %v11368
  %v11725 = vpack.c.b16 %v11373, %v11369
  %v11726 = vpack.c.b16 %v11374, %v11370
  %v11727 = vpack.c.b16 %v11375, %v11371
  %v11728 = vpack.c.b16 %v11380, %v11376
  %v11729 = vpack.c.b16 %v11381, %v11377
  %v11730 = vpack.c.b16 %v11382, %v11378
  %v11731 = vpack.c.b16 %v11383, %v11379
  %v11732 = vpack.c.b16 %v11388, %v11384
  %v11733 = vpack.c.b16 %v11389, %v11385
  %v11734 = vpack.c.b16 %v11390, %v11386
  %v11735 = vpack.c.b16 %v11391, %v11387
  %v11736 = vpack.c.b16 %v11396, %v11392
  %v11737 = vpack.c.b16 %v11397, %v11393
  %v11738 = vpack.c.b16 %v11398, %v11394
  %v11739 = vpack.c.b16 %v11399, %v11395
  %v11740 = vpack.c.b16 %v11404, %v11400
  %v11741 = vpack.c.b16 %v11405, %v11401
  %v11742 = vpack.c.b16 %v11406, %v11402
  %v11743 = vpack.c.b16 %v11407, %v11403
  %v11744 = vpack.c.b16 %v11412, %v11408
  %v11745 = vpack.c.b16 %v11413, %v11409
  %v11746 = vpack.c.b16 %v11414, %v11410
  %v11747 = vpack.c.b16 %v11415, %v11411
  %v11748 = vpack.c.b16 %v11420, %v11416
  %v11749 = vpack.c.b16 %v11421, %v11417
  %v11750 = vpack.c.b16 %v11422, %v11418
  %v11751 = vpack.c.b16 %v11423, %v11419
  %v11752 = vpack.c.b16 %v11428, %v11424
  %v11753 = vpack.c.b16 %v11429, %v11425
  %v11754 = vpack.c.b16 %v11430, %v11426
  %v11755 = vpack.c.b16 %v11431, %v11427
  %v11756 = vpack.c.b16 %v11436, %v11432
  %v11757 = vpack.c.b16 %v11437, %v11433
  %v11758 = vpack.c.b16 %v11438, %v11434
  %v11759 = vpack.c.b16 %v11439, %v11435
  %v11760 = vpack.c.b16 %v11444, %v11440
  %v11761 = vpack.c.b16 %v11445, %v11441
  %v11762 = vpack.c.b16 %v11446, %v11442
  %v11763 = vpack.c.b16 %v11447, %v11443
  %v11764 = vpack.c.b16 %v11452, %v11448
  %v11765 = vpack.c.b16 %v11453, %v11449
  %v11766 = vpack.c.b16 %v11454, %v11450
  %v11767 = vpack.c.b16 %v11455, %v11451
  %v11768 = vpack.c.b16 %v11460, %v11456
  %v11769 = vpack.c.b16 %v11461, %v11457
  %v11770 = vpack.c.b16 %v11462, %v11458
  %v11771 = vpack.c.b16 %v11463, %v11459
  %v11772 = vpack.c.b16 %v11468, %v11464
  %v11773 = vpack.c.b16 %v11469, %v11465
  %v11774 = vpack.c.b16 %v11470, %v11466
  %v11775 = vpack.c.b16 %v11471, %v11467
  %v11776 = vpack.c.b16 %v11476, %v11472
  %v11777 = vpack.c.b16 %v11477, %v11473
  %v11778 = vpack.c.b16 %v11478, %v11474
  %v11779 = vpack.c.b16 %v11479, %v11475
  %v11780 = vpack.c.b16 %v11484, %v11480
  %v11781 = vpack.c.b16 %v11485, %v11481
  %v11782 = vpack.c.b16 %v11486, %v11482
  %v11783 = vpack.c.b16 %v11487, %v11483
  %v11784 = vpack.c.b16 %v11492, %v11488
  %v11785 = vpack.c.b16 %v11493, %v11489
  %v11786 = vpack.c.b16 %v11494, %v11490
  %v11787 = vpack.c.b16 %v11495, %v11491
  %v11788 = vpack.c.b16 %v11500, %v11496
  %v11789 = vpack.c.b16 %v11501, %v11497
  %v11790 = vpack.c.b16 %v11502, %v11498
  %v11791 = vpack.c.b16 %v11503, %v11499
  %v11792 = vpack.c.b16 %v11508, %v11504
  %v11793 = vpack.c.b16 %v11509, %v11505
  %v11794 = vpack.c.b16 %v11510, %v11506
  %v11795 = vpack.c.b16 %v11511, %v11507
  %v11796 = vpack.c.b16 %v11516, %v11512
  %v11797 = vpack.c.b16 %v11517, %v11513
  %v11798 = vpack.c.b16 %v11518, %v11514
  %v11799 = vpack.c.b16 %v11519, %v11515
  %v11800 = vpack.c.b16 %v11524, %v11520
  %v11801 = vpack.c.b16 %v11525, %v11521
  %v11802 = vpack.c.b16 %v11526, %v11522
  %v11803 = vpack.c.b16 %v11527, %v11523
  %v11804 = vpack.c.b16 %v11532, %v11528
  %v11805 = vpack.c.b16 %v11533, %v11529
  %v11806 = vpack.c.b16 %v11534, %v11530
  %v11807 = vpack.c.b16 %v11535, %v11531
  %v11808 = vpack.c.b16 %v11540, %v11536
  %v11809 = vpack.c.b16 %v11541, %v11537
  %v11810 = vpack.c.b16 %v11542, %v11538
  %v11811 = vpack.c.b16 %v11543, %v11539
  %v11812 = vpack.c.b16 %v11548, %v11544
  %v11813 = vpack.c.b16 %v11549, %v11545
  %v11814 = vpack.c.b16 %v11550, %v11546
  %v11815 = vpack.c.b16 %v11551, %v11547
  %v11816 = vpack.c.b16 %v11556, %v11552
  %v11817 = vpack.c.b16 %v11557, %v11553
  %v11818 = vpack.c.b16 %v11558, %v11554
  %v11819 = vpack.c.b16 %v11559, %v11555
  %v11820 = vpack.c.b16 %v11564, %v11560
  %v11821 = vpack.c.b16 %v11565, %v11561
  %v11822 = vpack.c.b16 %v11566, %v11562
  %v11823 = vpack.c.b16 %v11567, %v11563
  %12080 = vmatpush.bf16.msra.mxu0 %v11596
  %12081 = vmatpush.bf16.msra.mxu0 %v11592
  %12082 = vmatpush.bf16.msra.mxu0 %v11588
  %12083 = vmatpush.bf16.msra.mxu0 %v11584
  %12084 = vmatpush.bf16.msra.mxu0 %v11580
  %12085 = vmatpush.bf16.msra.mxu0 %v11576
  %12086 = vmatpush.bf16.msra.mxu0 %v11572
  %12087 = vmatpush.bf16.msra.mxu0 %v11568
  %12088 = vmatmul.bf16.gmra.mxu0 %v10784
  %v12089 = vpop.f32.mrf.mxu0
  %v12090 = vadd.f32 %v10764, %v12089
  %v12091 = vpop.f32.mrf.mxu0
  %12092 = vdwg.mxu0
  %12093 = vmatpush.bf16.msra.mxu0 %v11628
  %12094 = vmatpush.bf16.msra.mxu0 %v11624
  %12095 = vmatpush.bf16.msra.mxu0 %v11620
  %12096 = vmatpush.bf16.msra.mxu0 %v11616
  %12097 = vmatpush.bf16.msra.mxu0 %v11612
  %12098 = vmatpush.bf16.msra.mxu0 %v11608
  %12099 = vmatpush.bf16.msra.mxu0 %v11604
  %12100 = vmatpush.bf16.msra.mxu0 %v11600
  %12101 = vmatmul.bf16.gmra.mxu0 %v10785
  %v12102 = vpop.f32.mrf.mxu0
  %v12103 = vadd.f32 %v12090, %v12102
  %v12104 = vpop.f32.mrf.mxu0
  %12105 = vdwg.mxu0
  %12106 = vmatpush.bf16.msra.mxu0 %v11660
  %12107 = vmatpush.bf16.msra.mxu0 %v11656
  %12108 = vmatpush.bf16.msra.mxu0 %v11652
  %12109 = vmatpush.bf16.msra.mxu0 %v11648
  %12110 = vmatpush.bf16.msra.mxu0 %v11644
  %12111 = vmatpush.bf16.msra.mxu0 %v11640
  %12112 = vmatpush.bf16.msra.mxu0 %v11636
  %12113 = vmatpush.bf16.msra.mxu0 %v11632
  %12114 = vmatmul.bf16.gmra.mxu0 %v10786
  %v12115 = vpop.f32.mrf.mxu0
  %v12116 = vadd.f32 %v12103, %v12115
  %v12117 = vpop.f32.mrf.mxu0
  %12118 = vdwg.mxu0
  %12119 = vmatpush.bf16.msra.mxu0 %v11692
  %12120 = vmatpush.bf16.msra.mxu0 %v11688
  %12121 = vmatpush.bf16.msra.mxu0 %v11684
  %12122 = vmatpush.bf16.msra.mxu0 %v11680
  %12123 = vmatpush.bf16.msra.mxu0 %v11676
  %12124 = vmatpush.bf16.msra.mxu0 %v11672
  %12125 = vmatpush.bf16.msra.mxu0 %v11668
  %12126 = vmatpush.bf16.msra.mxu0 %v11664
  %12127 = vmatmul.bf16.gmra.mxu0 %v10787
  %v12128 = vpop.f32.mrf.mxu0
  %v12129 = vadd.f32 %v12116, %v12128
  %v12130 = vpop.f32.mrf.mxu0
  %12131 = vdwg.mxu0
  %12132 = vmatpush.bf16.msra.mxu0 %v11724
  %12133 = vmatpush.bf16.msra.mxu0 %v11720
  %12134 = vmatpush.bf16.msra.mxu0 %v11716
  %12135 = vmatpush.bf16.msra.mxu0 %v11712
  %12136 = vmatpush.bf16.msra.mxu0 %v11708
  %12137 = vmatpush.bf16.msra.mxu0 %v11704
  %12138 = vmatpush.bf16.msra.mxu0 %v11700
  %12139 = vmatpush.bf16.msra.mxu0 %v11696
  %12140 = vmatmul.bf16.gmra.mxu0 %v10788
  %v12141 = vpop.f32.mrf.mxu0
  %v12142 = vadd.f32 %v12129, %v12141
  %v12143 = vpop.f32.mrf.mxu0
  %12144 = vdwg.mxu0
  %12145 = vmatpush.bf16.msra.mxu0 %v11756
  %12146 = vmatpush.bf16.msra.mxu0 %v11752
  %12147 = vmatpush.bf16.msra.mxu0 %v11748
  %12148 = vmatpush.bf16.msra.mxu0 %v11744
  %12149 = vmatpush.bf16.msra.mxu0 %v11740
  %12150 = vmatpush.bf16.msra.mxu0 %v11736
  %12151 = vmatpush.bf16.msra.mxu0 %v11732
  %12152 = vmatpush.bf16.msra.mxu0 %v11728
  %12153 = vmatmul.bf16.gmra.mxu0 %v10789
  %v12154 = vpop.f32.mrf.mxu0
  %v12155 = vadd.f32 %v12142, %v12154
  %v12156 = vpop.f32.mrf.mxu0
  %12157 = vdwg.mxu0
  %12158 = vmatpush.bf16.msra.mxu0 %v11788
  %12159 = vmatpush.bf16.msra.mxu0 %v11784
  %12160 = vmatpush.bf16.msra.mxu0 %v11780
  %12161 = vmatpush.bf16.msra.mxu0 %v11776
  %12162 = vmatpush.bf16.msra.mxu0 %v11772
  %12163 = vmatpush.bf16.msra.mxu0 %v11768
  %12164 = vmatpush.bf16.msra.mxu0 %v11764
  %12165 = vmatpush.bf16.msra.mxu0 %v11760
  %12166 = vmatmul.bf16.gmra.mxu0 %v10790
  %v12167 = vpop.f32.mrf.mxu0
  %v12168 = vadd.f32 %v12155, %v12167
  %v12169 = vpop.f32.mrf.mxu0
  %12170 = vdwg.mxu0
  %12171 = vmatpush.bf16.msra.mxu0 %v11820
  %12172 = vmatpush.bf16.msra.mxu0 %v11816
  %12173 = vmatpush.bf16.msra.mxu0 %v11812
  %12174 = vmatpush.bf16.msra.mxu0 %v11808
  %12175 = vmatpush.bf16.msra.mxu0 %v11804
  %12176 = vmatpush.bf16.msra.mxu0 %v11800
  %12177 = vmatpush.bf16.msra.mxu0 %v11796
  %12178 = vmatpush.bf16.msra.mxu0 %v11792
  %12179 = vmatmul.bf16.gmra.mxu0 %v10791
  %v12180 = vpop.f32.mrf.mxu0
  %v12181 = vadd.f32 %v12168, %v12180
  %v12182 = vpop.f32.mrf.mxu0
  %12183 = vdwg.mxu0
  %12184 = vmatpush.bf16.msra.mxu0 %v11597
  %12185 = vmatpush.bf16.msra.mxu0 %v11593
  %12186 = vmatpush.bf16.msra.mxu0 %v11589
  %12187 = vmatpush.bf16.msra.mxu0 %v11585
  %12188 = vmatpush.bf16.msra.mxu0 %v11581
  %12189 = vmatpush.bf16.msra.mxu0 %v11577
  %12190 = vmatpush.bf16.msra.mxu0 %v11573
  %12191 = vmatpush.bf16.msra.mxu0 %v11569
  %12192 = vmatmul.bf16.gmra.mxu0 %v10784
  %v12193 = vpop.f32.mrf.mxu0
  %v12194 = vadd.f32 %v10765, %v12193
  %v12195 = vpop.f32.mrf.mxu0
  %12196 = vdwg.mxu0
  %12197 = vmatpush.bf16.msra.mxu0 %v11629
  %12198 = vmatpush.bf16.msra.mxu0 %v11625
  %12199 = vmatpush.bf16.msra.mxu0 %v11621
  %12200 = vmatpush.bf16.msra.mxu0 %v11617
  %12201 = vmatpush.bf16.msra.mxu0 %v11613
  %12202 = vmatpush.bf16.msra.mxu0 %v11609
  %12203 = vmatpush.bf16.msra.mxu0 %v11605
  %12204 = vmatpush.bf16.msra.mxu0 %v11601
  %12205 = vmatmul.bf16.gmra.mxu0 %v10785
  %v12206 = vpop.f32.mrf.mxu0
  %v12207 = vadd.f32 %v12194, %v12206
  %v12208 = vpop.f32.mrf.mxu0
  %12209 = vdwg.mxu0
  %12210 = vmatpush.bf16.msra.mxu0 %v11661
  %12211 = vmatpush.bf16.msra.mxu0 %v11657
  %12212 = vmatpush.bf16.msra.mxu0 %v11653
  %12213 = vmatpush.bf16.msra.mxu0 %v11649
  %12214 = vmatpush.bf16.msra.mxu0 %v11645
  %12215 = vmatpush.bf16.msra.mxu0 %v11641
  %12216 = vmatpush.bf16.msra.mxu0 %v11637
  %12217 = vmatpush.bf16.msra.mxu0 %v11633
  %12218 = vmatmul.bf16.gmra.mxu0 %v10786
  %v12219 = vpop.f32.mrf.mxu0
  %v12220 = vadd.f32 %v12207, %v12219
  %v12221 = vpop.f32.mrf.mxu0
  %12222 = vdwg.mxu0
  %12223 = vmatpush.bf16.msra.mxu0 %v11693
  %12224 = vmatpush.bf16.msra.mxu0 %v11689
  %12225 = vmatpush.bf16.msra.mxu0 %v11685
  %12226 = vmatpush.bf16.msra.mxu0 %v11681
  %12227 = vmatpush.bf16.msra.mxu0 %v11677
  %12228 = vmatpush.bf16.msra.mxu0 %v11673
  %12229 = vmatpush.bf16.msra.mxu0 %v11669
  %12230 = vmatpush.bf16.msra.mxu0 %v11665
  %12231 = vmatmul.bf16.gmra.mxu0 %v10787
  %v12232 = vpop.f32.mrf.mxu0
  %v12233 = vadd.f32 %v12220, %v12232
  %v12234 = vpop.f32.mrf.mxu0
  %12235 = vdwg.mxu0
  %12236 = vmatpush.bf16.msra.mxu0 %v11725
  %12237 = vmatpush.bf16.msra.mxu0 %v11721
  %12238 = vmatpush.bf16.msra.mxu0 %v11717
  %12239 = vmatpush.bf16.msra.mxu0 %v11713
  %12240 = vmatpush.bf16.msra.mxu0 %v11709
  %12241 = vmatpush.bf16.msra.mxu0 %v11705
  %12242 = vmatpush.bf16.msra.mxu0 %v11701
  %12243 = vmatpush.bf16.msra.mxu0 %v11697
  %12244 = vmatmul.bf16.gmra.mxu0 %v10788
  %v12245 = vpop.f32.mrf.mxu0
  %v12246 = vadd.f32 %v12233, %v12245
  %v12247 = vpop.f32.mrf.mxu0
  %12248 = vdwg.mxu0
  %12249 = vmatpush.bf16.msra.mxu0 %v11757
  %12250 = vmatpush.bf16.msra.mxu0 %v11753
  %12251 = vmatpush.bf16.msra.mxu0 %v11749
  %12252 = vmatpush.bf16.msra.mxu0 %v11745
  %12253 = vmatpush.bf16.msra.mxu0 %v11741
  %12254 = vmatpush.bf16.msra.mxu0 %v11737
  %12255 = vmatpush.bf16.msra.mxu0 %v11733
  %12256 = vmatpush.bf16.msra.mxu0 %v11729
  %12257 = vmatmul.bf16.gmra.mxu0 %v10789
  %v12258 = vpop.f32.mrf.mxu0
  %v12259 = vadd.f32 %v12246, %v12258
  %v12260 = vpop.f32.mrf.mxu0
  %12261 = vdwg.mxu0
  %12262 = vmatpush.bf16.msra.mxu0 %v11789
  %12263 = vmatpush.bf16.msra.mxu0 %v11785
  %12264 = vmatpush.bf16.msra.mxu0 %v11781
  %12265 = vmatpush.bf16.msra.mxu0 %v11777
  %12266 = vmatpush.bf16.msra.mxu0 %v11773
  %12267 = vmatpush.bf16.msra.mxu0 %v11769
  %12268 = vmatpush.bf16.msra.mxu0 %v11765
  %12269 = vmatpush.bf16.msra.mxu0 %v11761
  %12270 = vmatmul.bf16.gmra.mxu0 %v10790
  %v12271 = vpop.f32.mrf.mxu0
  %v12272 = vadd.f32 %v12259, %v12271
  %v12273 = vpop.f32.mrf.mxu0
  %12274 = vdwg.mxu0
  %12275 = vmatpush.bf16.msra.mxu0 %v11821
  %12276 = vmatpush.bf16.msra.mxu0 %v11817
  %12277 = vmatpush.bf16.msra.mxu0 %v11813
  %12278 = vmatpush.bf16.msra.mxu0 %v11809
  %12279 = vmatpush.bf16.msra.mxu0 %v11805
  %12280 = vmatpush.bf16.msra.mxu0 %v11801
  %12281 = vmatpush.bf16.msra.mxu0 %v11797
  %12282 = vmatpush.bf16.msra.mxu0 %v11793
  %12283 = vmatmul.bf16.gmra.mxu0 %v10791
  %v12284 = vpop.f32.mrf.mxu0
  %v12285 = vadd.f32 %v12272, %v12284
  %v12286 = vpop.f32.mrf.mxu0
  %12287 = vdwg.mxu0
  %12288 = vmatpush.bf16.msra.mxu0 %v11598
  %12289 = vmatpush.bf16.msra.mxu0 %v11594
  %12290 = vmatpush.bf16.msra.mxu0 %v11590
  %12291 = vmatpush.bf16.msra.mxu0 %v11586
  %12292 = vmatpush.bf16.msra.mxu0 %v11582
  %12293 = vmatpush.bf16.msra.mxu0 %v11578
  %12294 = vmatpush.bf16.msra.mxu0 %v11574
  %12295 = vmatpush.bf16.msra.mxu0 %v11570
  %12296 = vmatmul.bf16.gmra.mxu0 %v10784
  %v12297 = vpop.f32.mrf.mxu0
  %v12298 = vadd.f32 %v10766, %v12297
  %v12299 = vpop.f32.mrf.mxu0
  %12300 = vdwg.mxu0
  %12301 = vmatpush.bf16.msra.mxu0 %v11630
  %12302 = vmatpush.bf16.msra.mxu0 %v11626
  %12303 = vmatpush.bf16.msra.mxu0 %v11622
  %12304 = vmatpush.bf16.msra.mxu0 %v11618
  %12305 = vmatpush.bf16.msra.mxu0 %v11614
  %12306 = vmatpush.bf16.msra.mxu0 %v11610
  %12307 = vmatpush.bf16.msra.mxu0 %v11606
  %12308 = vmatpush.bf16.msra.mxu0 %v11602
  %12309 = vmatmul.bf16.gmra.mxu0 %v10785
  %v12310 = vpop.f32.mrf.mxu0
  %v12311 = vadd.f32 %v12298, %v12310
  %v12312 = vpop.f32.mrf.mxu0
  %12313 = vdwg.mxu0
  %12314 = vmatpush.bf16.msra.mxu0 %v11662
  %12315 = vmatpush.bf16.msra.mxu0 %v11658
  %12316 = vmatpush.bf16.msra.mxu0 %v11654
  %12317 = vmatpush.bf16.msra.mxu0 %v11650
  %12318 = vmatpush.bf16.msra.mxu0 %v11646
  %12319 = vmatpush.bf16.msra.mxu0 %v11642
  %12320 = vmatpush.bf16.msra.mxu0 %v11638
  %12321 = vmatpush.bf16.msra.mxu0 %v11634
  %12322 = vmatmul.bf16.gmra.mxu0 %v10786
  %v12323 = vpop.f32.mrf.mxu0
  %v12324 = vadd.f32 %v12311, %v12323
  %v12325 = vpop.f32.mrf.mxu0
  %12326 = vdwg.mxu0
  %12327 = vmatpush.bf16.msra.mxu0 %v11694
  %12328 = vmatpush.bf16.msra.mxu0 %v11690
  %12329 = vmatpush.bf16.msra.mxu0 %v11686
  %12330 = vmatpush.bf16.msra.mxu0 %v11682
  %12331 = vmatpush.bf16.msra.mxu0 %v11678
  %12332 = vmatpush.bf16.msra.mxu0 %v11674
  %12333 = vmatpush.bf16.msra.mxu0 %v11670
  %12334 = vmatpush.bf16.msra.mxu0 %v11666
  %12335 = vmatmul.bf16.gmra.mxu0 %v10787
  %v12336 = vpop.f32.mrf.mxu0
  %v12337 = vadd.f32 %v12324, %v12336
  %v12338 = vpop.f32.mrf.mxu0
  %12339 = vdwg.mxu0
  %12340 = vmatpush.bf16.msra.mxu0 %v11726
  %12341 = vmatpush.bf16.msra.mxu0 %v11722
  %12342 = vmatpush.bf16.msra.mxu0 %v11718
  %12343 = vmatpush.bf16.msra.mxu0 %v11714
  %12344 = vmatpush.bf16.msra.mxu0 %v11710
  %12345 = vmatpush.bf16.msra.mxu0 %v11706
  %12346 = vmatpush.bf16.msra.mxu0 %v11702
  %12347 = vmatpush.bf16.msra.mxu0 %v11698
  %12348 = vmatmul.bf16.gmra.mxu0 %v10788
  %v12349 = vpop.f32.mrf.mxu0
  %v12350 = vadd.f32 %v12337, %v12349
  %v12351 = vpop.f32.mrf.mxu0
  %12352 = vdwg.mxu0
  %12353 = vmatpush.bf16.msra.mxu0 %v11758
  %12354 = vmatpush.bf16.msra.mxu0 %v11754
  %12355 = vmatpush.bf16.msra.mxu0 %v11750
  %12356 = vmatpush.bf16.msra.mxu0 %v11746
  %12357 = vmatpush.bf16.msra.mxu0 %v11742
  %12358 = vmatpush.bf16.msra.mxu0 %v11738
  %12359 = vmatpush.bf16.msra.mxu0 %v11734
  %12360 = vmatpush.bf16.msra.mxu0 %v11730
  %12361 = vmatmul.bf16.gmra.mxu0 %v10789
  %v12362 = vpop.f32.mrf.mxu0
  %v12363 = vadd.f32 %v12350, %v12362
  %v12364 = vpop.f32.mrf.mxu0
  %12365 = vdwg.mxu0
  %12366 = vmatpush.bf16.msra.mxu0 %v11790
  %12367 = vmatpush.bf16.msra.mxu0 %v11786
  %12368 = vmatpush.bf16.msra.mxu0 %v11782
  %12369 = vmatpush.bf16.msra.mxu0 %v11778
  %12370 = vmatpush.bf16.msra.mxu0 %v11774
  %12371 = vmatpush.bf16.msra.mxu0 %v11770
  %12372 = vmatpush.bf16.msra.mxu0 %v11766
  %12373 = vmatpush.bf16.msra.mxu0 %v11762
  %12374 = vmatmul.bf16.gmra.mxu0 %v10790
  %v12375 = vpop.f32.mrf.mxu0
  %v12376 = vadd.f32 %v12363, %v12375
  %v12377 = vpop.f32.mrf.mxu0
  %12378 = vdwg.mxu0
  %12379 = vmatpush.bf16.msra.mxu0 %v11822
  %12380 = vmatpush.bf16.msra.mxu0 %v11818
  %12381 = vmatpush.bf16.msra.mxu0 %v11814
  %12382 = vmatpush.bf16.msra.mxu0 %v11810
  %12383 = vmatpush.bf16.msra.mxu0 %v11806
  %12384 = vmatpush.bf16.msra.mxu0 %v11802
  %12385 = vmatpush.bf16.msra.mxu0 %v11798
  %12386 = vmatpush.bf16.msra.mxu0 %v11794
  %12387 = vmatmul.bf16.gmra.mxu0 %v10791
  %v12388 = vpop.f32.mrf.mxu0
  %v12389 = vadd.f32 %v12376, %v12388
  %v12390 = vpop.f32.mrf.mxu0
  %12391 = vdwg.mxu0
  %12392 = vmatpush.bf16.msra.mxu0 %v11599
  %12393 = vmatpush.bf16.msra.mxu0 %v11595
  %12394 = vmatpush.bf16.msra.mxu0 %v11591
  %12395 = vmatpush.bf16.msra.mxu0 %v11587
  %12396 = vmatpush.bf16.msra.mxu0 %v11583
  %12397 = vmatpush.bf16.msra.mxu0 %v11579
  %12398 = vmatpush.bf16.msra.mxu0 %v11575
  %12399 = vmatpush.bf16.msra.mxu0 %v11571
  %12400 = vmatmul.bf16.gmra.mxu0 %v10784
  %v12401 = vpop.f32.mrf.mxu0
  %v12402 = vadd.f32 %v10767, %v12401
  %v12403 = vpop.f32.mrf.mxu0
  %12404 = vdwg.mxu0
  %12405 = vmatpush.bf16.msra.mxu0 %v11631
  %12406 = vmatpush.bf16.msra.mxu0 %v11627
  %12407 = vmatpush.bf16.msra.mxu0 %v11623
  %12408 = vmatpush.bf16.msra.mxu0 %v11619
  %12409 = vmatpush.bf16.msra.mxu0 %v11615
  %12410 = vmatpush.bf16.msra.mxu0 %v11611
  %12411 = vmatpush.bf16.msra.mxu0 %v11607
  %12412 = vmatpush.bf16.msra.mxu0 %v11603
  %12413 = vmatmul.bf16.gmra.mxu0 %v10785
  %v12414 = vpop.f32.mrf.mxu0
  %v12415 = vadd.f32 %v12402, %v12414
  %v12416 = vpop.f32.mrf.mxu0
  %12417 = vdwg.mxu0
  %12418 = vmatpush.bf16.msra.mxu0 %v11663
  %12419 = vmatpush.bf16.msra.mxu0 %v11659
  %12420 = vmatpush.bf16.msra.mxu0 %v11655
  %12421 = vmatpush.bf16.msra.mxu0 %v11651
  %12422 = vmatpush.bf16.msra.mxu0 %v11647
  %12423 = vmatpush.bf16.msra.mxu0 %v11643
  %12424 = vmatpush.bf16.msra.mxu0 %v11639
  %12425 = vmatpush.bf16.msra.mxu0 %v11635
  %12426 = vmatmul.bf16.gmra.mxu0 %v10786
  %v12427 = vpop.f32.mrf.mxu0
  %v12428 = vadd.f32 %v12415, %v12427
  %v12429 = vpop.f32.mrf.mxu0
  %12430 = vdwg.mxu0
  %12431 = vmatpush.bf16.msra.mxu0 %v11695
  %12432 = vmatpush.bf16.msra.mxu0 %v11691
  %12433 = vmatpush.bf16.msra.mxu0 %v11687
  %12434 = vmatpush.bf16.msra.mxu0 %v11683
  %12435 = vmatpush.bf16.msra.mxu0 %v11679
  %12436 = vmatpush.bf16.msra.mxu0 %v11675
  %12437 = vmatpush.bf16.msra.mxu0 %v11671
  %12438 = vmatpush.bf16.msra.mxu0 %v11667
  %12439 = vmatmul.bf16.gmra.mxu0 %v10787
  %v12440 = vpop.f32.mrf.mxu0
  %v12441 = vadd.f32 %v12428, %v12440
  %v12442 = vpop.f32.mrf.mxu0
  %12443 = vdwg.mxu0
  %12444 = vmatpush.bf16.msra.mxu0 %v11727
  %12445 = vmatpush.bf16.msra.mxu0 %v11723
  %12446 = vmatpush.bf16.msra.mxu0 %v11719
  %12447 = vmatpush.bf16.msra.mxu0 %v11715
  %12448 = vmatpush.bf16.msra.mxu0 %v11711
  %12449 = vmatpush.bf16.msra.mxu0 %v11707
  %12450 = vmatpush.bf16.msra.mxu0 %v11703
  %12451 = vmatpush.bf16.msra.mxu0 %v11699
  %12452 = vmatmul.bf16.gmra.mxu0 %v10788
  %v12453 = vpop.f32.mrf.mxu0
  %v12454 = vadd.f32 %v12441, %v12453
  %v12455 = vpop.f32.mrf.mxu0
  %12456 = vdwg.mxu0
  %12457 = vmatpush.bf16.msra.mxu0 %v11759
  %12458 = vmatpush.bf16.msra.mxu0 %v11755
  %12459 = vmatpush.bf16.msra.mxu0 %v11751
  %12460 = vmatpush.bf16.msra.mxu0 %v11747
  %12461 = vmatpush.bf16.msra.mxu0 %v11743
  %12462 = vmatpush.bf16.msra.mxu0 %v11739
  %12463 = vmatpush.bf16.msra.mxu0 %v11735
  %12464 = vmatpush.bf16.msra.mxu0 %v11731
  %12465 = vmatmul.bf16.gmra.mxu0 %v10789
  %v12466 = vpop.f32.mrf.mxu0
  %v12467 = vadd.f32 %v12454, %v12466
  %v12468 = vpop.f32.mrf.mxu0
  %12469 = vdwg.mxu0
  %12470 = vmatpush.bf16.msra.mxu0 %v11791
  %12471 = vmatpush.bf16.msra.mxu0 %v11787
  %12472 = vmatpush.bf16.msra.mxu0 %v11783
  %12473 = vmatpush.bf16.msra.mxu0 %v11779
  %12474 = vmatpush.bf16.msra.mxu0 %v11775
  %12475 = vmatpush.bf16.msra.mxu0 %v11771
  %12476 = vmatpush.bf16.msra.mxu0 %v11767
  %12477 = vmatpush.bf16.msra.mxu0 %v11763
  %12478 = vmatmul.bf16.gmra.mxu0 %v10790
  %v12479 = vpop.f32.mrf.mxu0
  %v12480 = vadd.f32 %v12467, %v12479
  %v12481 = vpop.f32.mrf.mxu0
  %12482 = vdwg.mxu0
  %12483 = vmatpush.bf16.msra.mxu0 %v11823
  %12484 = vmatpush.bf16.msra.mxu0 %v11819
  %12485 = vmatpush.bf16.msra.mxu0 %v11815
  %12486 = vmatpush.bf16.msra.mxu0 %v11811
  %12487 = vmatpush.bf16.msra.mxu0 %v11807
  %12488 = vmatpush.bf16.msra.mxu0 %v11803
  %12489 = vmatpush.bf16.msra.mxu0 %v11799
  %12490 = vmatpush.bf16.msra.mxu0 %v11795
  %12491 = vmatmul.bf16.gmra.mxu0 %v10791
  %v12492 = vpop.f32.mrf.mxu0
  %v12493 = vadd.f32 %v12480, %v12492
  %v12494 = vpop.f32.mrf.mxu0
  %12495 = vdwg.mxu0
  %v12500 = vrot.slane %v12285, 6
  %v12501 = vrot.slane %v12389, 4
  %v12502 = vrot.slane %v12493, 2
  %v12503 = vsel %vm10756, %v12181, %v12500
  %vm12504 = vcmask 1045508
  %v12505 = vsel %vm12504, %v12501, %v12502
  %v12506 = vsel %vm10758, %v12503, %v12505
  %12508 = vst [vmem:[%s24 + $0x6] sm:$0xff] %v12506
  %v12509 = vld [vmem:[%s23 + $0x4] sm:$0xf]
  %v12511 = vperm.slane %v12509, 0
  %v12512 = vperm.slane %v12509, 1
  %v12513 = vperm.slane %v12509, 2
  %v12514 = vperm.slane %v12509, 3
  %v12521 = vunpack.c.l.b16 %v4711
  %v12522 = vunpack.c.h.b16 %v4711
  %v12523 = vunpack.c.l.b16 %v4712
  %v12524 = vunpack.c.h.b16 %v4712
  %v12525 = vpack.c.b16 %v12521, %v12521
  %v12526 = vpack.c.b16 %v12522, %v12522
  %v12527 = vpack.c.b16 %v12523, %v12523
  %v12528 = vpack.c.b16 %v12524, %v12524
  %v12661 = vunpack.c.l.b16 %v4969
  %v12662 = vunpack.c.h.b16 %v4969
  %v12663 = vunpack.c.l.b16 %v4970
  %v12664 = vunpack.c.h.b16 %v4970
  %v12665 = vunpack.c.l.b16 %v4971
  %v12666 = vunpack.c.h.b16 %v4971
  %v12667 = vunpack.c.l.b16 %v4972
  %v12668 = vunpack.c.h.b16 %v4972
  %v12669 = vunpack.c.l.b16 %v4973
  %v12670 = vunpack.c.h.b16 %v4973
  %v12671 = vunpack.c.l.b16 %v4974
  %v12672 = vunpack.c.h.b16 %v4974
  %v12673 = vunpack.c.l.b16 %v4975
  %v12674 = vunpack.c.h.b16 %v4975
  %v12675 = vunpack.c.l.b16 %v4976
  %v12676 = vunpack.c.h.b16 %v4976
  %v12677 = vunpack.c.l.b16 %v4977
  %v12678 = vunpack.c.h.b16 %v4977
  %v12679 = vunpack.c.l.b16 %v4978
  %v12680 = vunpack.c.h.b16 %v4978
  %v12681 = vunpack.c.l.b16 %v4979
  %v12682 = vunpack.c.h.b16 %v4979
  %v12683 = vunpack.c.l.b16 %v4980
  %v12684 = vunpack.c.h.b16 %v4980
  %v12685 = vunpack.c.l.b16 %v4981
  %v12686 = vunpack.c.h.b16 %v4981
  %v12687 = vunpack.c.l.b16 %v4982
  %v12688 = vunpack.c.h.b16 %v4982
  %v12689 = vunpack.c.l.b16 %v4983
  %v12690 = vunpack.c.h.b16 %v4983
  %v12691 = vunpack.c.l.b16 %v4984
  %v12692 = vunpack.c.h.b16 %v4984
  %v12693 = vunpack.c.l.b16 %v4985
  %v12694 = vunpack.c.h.b16 %v4985
  %v12695 = vunpack.c.l.b16 %v4986
  %v12696 = vunpack.c.h.b16 %v4986
  %v12697 = vunpack.c.l.b16 %v4987
  %v12698 = vunpack.c.h.b16 %v4987
  %v12699 = vunpack.c.l.b16 %v4988
  %v12700 = vunpack.c.h.b16 %v4988
  %v12701 = vunpack.c.l.b16 %v4989
  %v12702 = vunpack.c.h.b16 %v4989
  %v12703 = vunpack.c.l.b16 %v4990
  %v12704 = vunpack.c.h.b16 %v4990
  %v12705 = vunpack.c.l.b16 %v4991
  %v12706 = vunpack.c.h.b16 %v4991
  %v12707 = vunpack.c.l.b16 %v4992
  %v12708 = vunpack.c.h.b16 %v4992
  %v12709 = vunpack.c.l.b16 %v4993
  %v12710 = vunpack.c.h.b16 %v4993
  %v12711 = vunpack.c.l.b16 %v4994
  %v12712 = vunpack.c.h.b16 %v4994
  %v12713 = vunpack.c.l.b16 %v4995
  %v12714 = vunpack.c.h.b16 %v4995
  %v12715 = vunpack.c.l.b16 %v4996
  %v12716 = vunpack.c.h.b16 %v4996
  %v12717 = vunpack.c.l.b16 %v4997
  %v12718 = vunpack.c.h.b16 %v4997
  %v12719 = vunpack.c.l.b16 %v4998
  %v12720 = vunpack.c.h.b16 %v4998
  %v12721 = vunpack.c.l.b16 %v4999
  %v12722 = vunpack.c.h.b16 %v4999
  %v12723 = vunpack.c.l.b16 %v5000
  %v12724 = vunpack.c.h.b16 %v5000
  %v12725 = vunpack.c.l.b16 %v5001
  %v12726 = vunpack.c.h.b16 %v5001
  %v12727 = vunpack.c.l.b16 %v5002
  %v12728 = vunpack.c.h.b16 %v5002
  %v12729 = vunpack.c.l.b16 %v5003
  %v12730 = vunpack.c.h.b16 %v5003
  %v12731 = vunpack.c.l.b16 %v5004
  %v12732 = vunpack.c.h.b16 %v5004
  %v12733 = vunpack.c.l.b16 %v5005
  %v12734 = vunpack.c.h.b16 %v5005
  %v12735 = vunpack.c.l.b16 %v5006
  %v12736 = vunpack.c.h.b16 %v5006
  %v12737 = vunpack.c.l.b16 %v5007
  %v12738 = vunpack.c.h.b16 %v5007
  %v12739 = vunpack.c.l.b16 %v5008
  %v12740 = vunpack.c.h.b16 %v5008
  %v12741 = vunpack.c.l.b16 %v5009
  %v12742 = vunpack.c.h.b16 %v5009
  %v12743 = vunpack.c.l.b16 %v5010
  %v12744 = vunpack.c.h.b16 %v5010
  %v12745 = vunpack.c.l.b16 %v5011
  %v12746 = vunpack.c.h.b16 %v5011
  %v12747 = vunpack.c.l.b16 %v5012
  %v12748 = vunpack.c.h.b16 %v5012
  %v12749 = vunpack.c.l.b16 %v5013
  %v12750 = vunpack.c.h.b16 %v5013
  %v12751 = vunpack.c.l.b16 %v5014
  %v12752 = vunpack.c.h.b16 %v5014
  %v12753 = vunpack.c.l.b16 %v5015
  %v12754 = vunpack.c.h.b16 %v5015
  %v12755 = vunpack.c.l.b16 %v5016
  %v12756 = vunpack.c.h.b16 %v5016
  %v12757 = vunpack.c.l.b16 %v5017
  %v12758 = vunpack.c.h.b16 %v5017
  %v12759 = vunpack.c.l.b16 %v5018
  %v12760 = vunpack.c.h.b16 %v5018
  %v12761 = vunpack.c.l.b16 %v5019
  %v12762 = vunpack.c.h.b16 %v5019
  %v12763 = vunpack.c.l.b16 %v5020
  %v12764 = vunpack.c.h.b16 %v5020
  %v12765 = vunpack.c.l.b16 %v5021
  %v12766 = vunpack.c.h.b16 %v5021
  %v12767 = vunpack.c.l.b16 %v5022
  %v12768 = vunpack.c.h.b16 %v5022
  %v12769 = vunpack.c.l.b16 %v5023
  %v12770 = vunpack.c.h.b16 %v5023
  %v12771 = vunpack.c.l.b16 %v5024
  %v12772 = vunpack.c.h.b16 %v5024
  %v12773 = vunpack.c.l.b16 %v5025
  %v12774 = vunpack.c.h.b16 %v5025
  %v12775 = vunpack.c.l.b16 %v5026
  %v12776 = vunpack.c.h.b16 %v5026
  %v12777 = vunpack.c.l.b16 %v5027
  %v12778 = vunpack.c.h.b16 %v5027
  %v12779 = vunpack.c.l.b16 %v5028
  %v12780 = vunpack.c.h.b16 %v5028
  %v12781 = vunpack.c.l.b16 %v5029
  %v12782 = vunpack.c.h.b16 %v5029
  %v12783 = vunpack.c.l.b16 %v5030
  %v12784 = vunpack.c.h.b16 %v5030
  %v12785 = vunpack.c.l.b16 %v5031
  %v12786 = vunpack.c.h.b16 %v5031
  %v12787 = vunpack.c.l.b16 %v5032
  %v12788 = vunpack.c.h.b16 %v5032
  %v12789 = vunpack.c.l.b16 %v5033
  %v12790 = vunpack.c.h.b16 %v5033
  %v12791 = vunpack.c.l.b16 %v5034
  %v12792 = vunpack.c.h.b16 %v5034
  %v12793 = vunpack.c.l.b16 %v5035
  %v12794 = vunpack.c.h.b16 %v5035
  %v12795 = vunpack.c.l.b16 %v5036
  %v12796 = vunpack.c.h.b16 %v5036
  %v12797 = vunpack.c.l.b16 %v5037
  %v12798 = vunpack.c.h.b16 %v5037
  %v12799 = vunpack.c.l.b16 %v5038
  %v12800 = vunpack.c.h.b16 %v5038
  %v12801 = vunpack.c.l.b16 %v5039
  %v12802 = vunpack.c.h.b16 %v5039
  %v12803 = vunpack.c.l.b16 %v5040
  %v12804 = vunpack.c.h.b16 %v5040
  %v12805 = vunpack.c.l.b16 %v5041
  %v12806 = vunpack.c.h.b16 %v5041
  %v12807 = vunpack.c.l.b16 %v5042
  %v12808 = vunpack.c.h.b16 %v5042
  %v12809 = vunpack.c.l.b16 %v5043
  %v12810 = vunpack.c.h.b16 %v5043
  %v12811 = vunpack.c.l.b16 %v5044
  %v12812 = vunpack.c.h.b16 %v5044
  %v12813 = vunpack.c.l.b16 %v5045
  %v12814 = vunpack.c.h.b16 %v5045
  %v12815 = vunpack.c.l.b16 %v5046
  %v12816 = vunpack.c.h.b16 %v5046
  %v12817 = vunpack.c.l.b16 %v5047
  %v12818 = vunpack.c.h.b16 %v5047
  %v12819 = vunpack.c.l.b16 %v5048
  %v12820 = vunpack.c.h.b16 %v5048
  %v12821 = vunpack.c.l.b16 %v5049
  %v12822 = vunpack.c.h.b16 %v5049
  %v12823 = vunpack.c.l.b16 %v5050
  %v12824 = vunpack.c.h.b16 %v5050
  %v12825 = vunpack.c.l.b16 %v5051
  %v12826 = vunpack.c.h.b16 %v5051
  %v12827 = vunpack.c.l.b16 %v5052
  %v12828 = vunpack.c.h.b16 %v5052
  %v12829 = vunpack.c.l.b16 %v5053
  %v12830 = vunpack.c.h.b16 %v5053
  %v12831 = vunpack.c.l.b16 %v5054
  %v12832 = vunpack.c.h.b16 %v5054
  %v12833 = vunpack.c.l.b16 %v5055
  %v12834 = vunpack.c.h.b16 %v5055
  %v12835 = vunpack.c.l.b16 %v5056
  %v12836 = vunpack.c.h.b16 %v5056
  %v12837 = vunpack.c.l.b16 %v5057
  %v12838 = vunpack.c.h.b16 %v5057
  %v12839 = vunpack.c.l.b16 %v5058
  %v12840 = vunpack.c.h.b16 %v5058
  %v12841 = vunpack.c.l.b16 %v5059
  %v12842 = vunpack.c.h.b16 %v5059
  %v12843 = vunpack.c.l.b16 %v5060
  %v12844 = vunpack.c.h.b16 %v5060
  %v12845 = vunpack.c.l.b16 %v5061
  %v12846 = vunpack.c.h.b16 %v5061
  %v12847 = vunpack.c.l.b16 %v5062
  %v12848 = vunpack.c.h.b16 %v5062
  %v12849 = vunpack.c.l.b16 %v5063
  %v12850 = vunpack.c.h.b16 %v5063
  %v12851 = vunpack.c.l.b16 %v5064
  %v12852 = vunpack.c.h.b16 %v5064
  %v12853 = vunpack.c.l.b16 %v5065
  %v12854 = vunpack.c.h.b16 %v5065
  %v12855 = vunpack.c.l.b16 %v5066
  %v12856 = vunpack.c.h.b16 %v5066
  %v12857 = vunpack.c.l.b16 %v5067
  %v12858 = vunpack.c.h.b16 %v5067
  %v12859 = vunpack.c.l.b16 %v5068
  %v12860 = vunpack.c.h.b16 %v5068
  %v12861 = vunpack.c.l.b16 %v5069
  %v12862 = vunpack.c.h.b16 %v5069
  %v12863 = vunpack.c.l.b16 %v5070
  %v12864 = vunpack.c.h.b16 %v5070
  %v12865 = vunpack.c.l.b16 %v5071
  %v12866 = vunpack.c.h.b16 %v5071
  %v12867 = vunpack.c.l.b16 %v5072
  %v12868 = vunpack.c.h.b16 %v5072
  %v12869 = vunpack.c.l.b16 %v5073
  %v12870 = vunpack.c.h.b16 %v5073
  %v12871 = vunpack.c.l.b16 %v5074
  %v12872 = vunpack.c.h.b16 %v5074
  %v12873 = vunpack.c.l.b16 %v5075
  %v12874 = vunpack.c.h.b16 %v5075
  %v12875 = vunpack.c.l.b16 %v5076
  %v12876 = vunpack.c.h.b16 %v5076
  %v12877 = vunpack.c.l.b16 %v5077
  %v12878 = vunpack.c.h.b16 %v5077
  %v12879 = vunpack.c.l.b16 %v5078
  %v12880 = vunpack.c.h.b16 %v5078
  %v12881 = vunpack.c.l.b16 %v5079
  %v12882 = vunpack.c.h.b16 %v5079
  %v12883 = vunpack.c.l.b16 %v5080
  %v12884 = vunpack.c.h.b16 %v5080
  %v12885 = vunpack.c.l.b16 %v5081
  %v12886 = vunpack.c.h.b16 %v5081
  %v12887 = vunpack.c.l.b16 %v5082
  %v12888 = vunpack.c.h.b16 %v5082
  %v12889 = vunpack.c.l.b16 %v5083
  %v12890 = vunpack.c.h.b16 %v5083
  %v12891 = vunpack.c.l.b16 %v5084
  %v12892 = vunpack.c.h.b16 %v5084
  %v12893 = vunpack.c.l.b16 %v5085
  %v12894 = vunpack.c.h.b16 %v5085
  %v12895 = vunpack.c.l.b16 %v5086
  %v12896 = vunpack.c.h.b16 %v5086
  %v12897 = vunpack.c.l.b16 %v5087
  %v12898 = vunpack.c.h.b16 %v5087
  %v12899 = vunpack.c.l.b16 %v5088
  %v12900 = vunpack.c.h.b16 %v5088
  %v12901 = vunpack.c.l.b16 %v5089
  %v12902 = vunpack.c.h.b16 %v5089
  %v12903 = vunpack.c.l.b16 %v5090
  %v12904 = vunpack.c.h.b16 %v5090
  %v12905 = vunpack.c.l.b16 %v5091
  %v12906 = vunpack.c.h.b16 %v5091
  %v12907 = vunpack.c.l.b16 %v5092
  %v12908 = vunpack.c.h.b16 %v5092
  %v12909 = vunpack.c.l.b16 %v5093
  %v12910 = vunpack.c.h.b16 %v5093
  %v12911 = vunpack.c.l.b16 %v5094
  %v12912 = vunpack.c.h.b16 %v5094
  %v12913 = vunpack.c.l.b16 %v5095
  %v12914 = vunpack.c.h.b16 %v5095
  %v12915 = vunpack.c.l.b16 %v5096
  %v12916 = vunpack.c.h.b16 %v5096
  %v12917 = vpack.c.b16 %v12665, %v12661
  %v12918 = vpack.c.b16 %v12666, %v12662
  %v12919 = vpack.c.b16 %v12667, %v12663
  %v12920 = vpack.c.b16 %v12668, %v12664
  %v12921 = vpack.c.b16 %v12673, %v12669
  %v12922 = vpack.c.b16 %v12674, %v12670
  %v12923 = vpack.c.b16 %v12675, %v12671
  %v12924 = vpack.c.b16 %v12676, %v12672
  %v12925 = vpack.c.b16 %v12681, %v12677
  %v12926 = vpack.c.b16 %v12682, %v12678
  %v12927 = vpack.c.b16 %v12683, %v12679
  %v12928 = vpack.c.b16 %v12684, %v12680
  %v12929 = vpack.c.b16 %v12689, %v12685
  %v12930 = vpack.c.b16 %v12690, %v12686
  %v12931 = vpack.c.b16 %v12691, %v12687
  %v12932 = vpack.c.b16 %v12692, %v12688
  %v12933 = vpack.c.b16 %v12697, %v12693
  %v12934 = vpack.c.b16 %v12698, %v12694
  %v12935 = vpack.c.b16 %v12699, %v12695
  %v12936 = vpack.c.b16 %v12700, %v12696
  %v12937 = vpack.c.b16 %v12705, %v12701
  %v12938 = vpack.c.b16 %v12706, %v12702
  %v12939 = vpack.c.b16 %v12707, %v12703
  %v12940 = vpack.c.b16 %v12708, %v12704
  %v12941 = vpack.c.b16 %v12713, %v12709
  %v12942 = vpack.c.b16 %v12714, %v12710
  %v12943 = vpack.c.b16 %v12715, %v12711
  %v12944 = vpack.c.b16 %v12716, %v12712
  %v12945 = vpack.c.b16 %v12721, %v12717
  %v12946 = vpack.c.b16 %v12722, %v12718
  %v12947 = vpack.c.b16 %v12723, %v12719
  %v12948 = vpack.c.b16 %v12724, %v12720
  %v12949 = vpack.c.b16 %v12729, %v12725
  %v12950 = vpack.c.b16 %v12730, %v12726
  %v12951 = vpack.c.b16 %v12731, %v12727
  %v12952 = vpack.c.b16 %v12732, %v12728
  %v12953 = vpack.c.b16 %v12737, %v12733
  %v12954 = vpack.c.b16 %v12738, %v12734
  %v12955 = vpack.c.b16 %v12739, %v12735
  %v12956 = vpack.c.b16 %v12740, %v12736
  %v12957 = vpack.c.b16 %v12745, %v12741
  %v12958 = vpack.c.b16 %v12746, %v12742
  %v12959 = vpack.c.b16 %v12747, %v12743
  %v12960 = vpack.c.b16 %v12748, %v12744
  %v12961 = vpack.c.b16 %v12753, %v12749
  %v12962 = vpack.c.b16 %v12754, %v12750
  %v12963 = vpack.c.b16 %v12755, %v12751
  %v12964 = vpack.c.b16 %v12756, %v12752
  %v12965 = vpack.c.b16 %v12761, %v12757
  %v12966 = vpack.c.b16 %v12762, %v12758
  %v12967 = vpack.c.b16 %v12763, %v12759
  %v12968 = vpack.c.b16 %v12764, %v12760
  %v12969 = vpack.c.b16 %v12769, %v12765
  %v12970 = vpack.c.b16 %v12770, %v12766
  %v12971 = vpack.c.b16 %v12771, %v12767
  %v12972 = vpack.c.b16 %v12772, %v12768
  %v12973 = vpack.c.b16 %v12777, %v12773
  %v12974 = vpack.c.b16 %v12778, %v12774
  %v12975 = vpack.c.b16 %v12779, %v12775
  %v12976 = vpack.c.b16 %v12780, %v12776
  %v12977 = vpack.c.b16 %v12785, %v12781
  %v12978 = vpack.c.b16 %v12786, %v12782
  %v12979 = vpack.c.b16 %v12787, %v12783
  %v12980 = vpack.c.b16 %v12788, %v12784
  %v12981 = vpack.c.b16 %v12793, %v12789
  %v12982 = vpack.c.b16 %v12794, %v12790
  %v12983 = vpack.c.b16 %v12795, %v12791
  %v12984 = vpack.c.b16 %v12796, %v12792
  %v12985 = vpack.c.b16 %v12801, %v12797
  %v12986 = vpack.c.b16 %v12802, %v12798
  %v12987 = vpack.c.b16 %v12803, %v12799
  %v12988 = vpack.c.b16 %v12804, %v12800
  %v12989 = vpack.c.b16 %v12809, %v12805
  %v12990 = vpack.c.b16 %v12810, %v12806
  %v12991 = vpack.c.b16 %v12811, %v12807
  %v12992 = vpack.c.b16 %v12812, %v12808
  %v12993 = vpack.c.b16 %v12817, %v12813
  %v12994 = vpack.c.b16 %v12818, %v12814
  %v12995 = vpack.c.b16 %v12819, %v12815
  %v12996 = vpack.c.b16 %v12820, %v12816
  %v12997 = vpack.c.b16 %v12825, %v12821
  %v12998 = vpack.c.b16 %v12826, %v12822
  %v12999 = vpack.c.b16 %v12827, %v12823
  %v13000 = vpack.c.b16 %v12828, %v12824
  %v13001 = vpack.c.b16 %v12833, %v12829
  %v13002 = vpack.c.b16 %v12834, %v12830
  %v13003 = vpack.c.b16 %v12835, %v12831
  %v13004 = vpack.c.b16 %v12836, %v12832
  %v13005 = vpack.c.b16 %v12841, %v12837
  %v13006 = vpack.c.b16 %v12842, %v12838
  %v13007 = vpack.c.b16 %v12843, %v12839
  %v13008 = vpack.c.b16 %v12844, %v12840
  %v13009 = vpack.c.b16 %v12849, %v12845
  %v13010 = vpack.c.b16 %v12850, %v12846
  %v13011 = vpack.c.b16 %v12851, %v12847
  %v13012 = vpack.c.b16 %v12852, %v12848
  %v13013 = vpack.c.b16 %v12857, %v12853
  %v13014 = vpack.c.b16 %v12858, %v12854
  %v13015 = vpack.c.b16 %v12859, %v12855
  %v13016 = vpack.c.b16 %v12860, %v12856
  %v13017 = vpack.c.b16 %v12865, %v12861
  %v13018 = vpack.c.b16 %v12866, %v12862
  %v13019 = vpack.c.b16 %v12867, %v12863
  %v13020 = vpack.c.b16 %v12868, %v12864
  %v13021 = vpack.c.b16 %v12873, %v12869
  %v13022 = vpack.c.b16 %v12874, %v12870
  %v13023 = vpack.c.b16 %v12875, %v12871
  %v13024 = vpack.c.b16 %v12876, %v12872
  %v13025 = vpack.c.b16 %v12881, %v12877
  %v13026 = vpack.c.b16 %v12882, %v12878
  %v13027 = vpack.c.b16 %v12883, %v12879
  %v13028 = vpack.c.b16 %v12884, %v12880
  %v13029 = vpack.c.b16 %v12889, %v12885
  %v13030 = vpack.c.b16 %v12890, %v12886
  %v13031 = vpack.c.b16 %v12891, %v12887
  %v13032 = vpack.c.b16 %v12892, %v12888
  %v13033 = vpack.c.b16 %v12897, %v12893
  %v13034 = vpack.c.b16 %v12898, %v12894
  %v13035 = vpack.c.b16 %v12899, %v12895
  %v13036 = vpack.c.b16 %v12900, %v12896
  %v13037 = vpack.c.b16 %v12905, %v12901
  %v13038 = vpack.c.b16 %v12906, %v12902
  %v13039 = vpack.c.b16 %v12907, %v12903
  %v13040 = vpack.c.b16 %v12908, %v12904
  %v13041 = vpack.c.b16 %v12913, %v12909
  %v13042 = vpack.c.b16 %v12914, %v12910
  %v13043 = vpack.c.b16 %v12915, %v12911
  %v13044 = vpack.c.b16 %v12916, %v12912
  %13173 = vmatpush.bf16.msra.mxu0 %v12945
  %13174 = vmatpush.bf16.msra.mxu0 %v12941
  %13175 = vmatpush.bf16.msra.mxu0 %v12937
  %13176 = vmatpush.bf16.msra.mxu0 %v12933
  %13177 = vmatpush.bf16.msra.mxu0 %v12929
  %13178 = vmatpush.bf16.msra.mxu0 %v12925
  %13179 = vmatpush.bf16.msra.mxu0 %v12921
  %13180 = vmatpush.bf16.msra.mxu0 %v12917
  %13181 = vmatmul.bf16.gmra.mxu0 %v12525
  %v13182 = vpop.f32.mrf.mxu0
  %v13183 = vadd.f32 %v12511, %v13182
  %v13184 = vpop.f32.mrf.mxu0
  %13185 = vdwg.mxu0
  %13186 = vmatpush.bf16.msra.mxu0 %v12977
  %13187 = vmatpush.bf16.msra.mxu0 %v12973
  %13188 = vmatpush.bf16.msra.mxu0 %v12969
  %13189 = vmatpush.bf16.msra.mxu0 %v12965
  %13190 = vmatpush.bf16.msra.mxu0 %v12961
  %13191 = vmatpush.bf16.msra.mxu0 %v12957
  %13192 = vmatpush.bf16.msra.mxu0 %v12953
  %13193 = vmatpush.bf16.msra.mxu0 %v12949
  %13194 = vmatmul.bf16.gmra.mxu0 %v12526
  %v13195 = vpop.f32.mrf.mxu0
  %v13196 = vadd.f32 %v13183, %v13195
  %v13197 = vpop.f32.mrf.mxu0
  %13198 = vdwg.mxu0
  %13199 = vmatpush.bf16.msra.mxu0 %v13009
  %13200 = vmatpush.bf16.msra.mxu0 %v13005
  %13201 = vmatpush.bf16.msra.mxu0 %v13001
  %13202 = vmatpush.bf16.msra.mxu0 %v12997
  %13203 = vmatpush.bf16.msra.mxu0 %v12993
  %13204 = vmatpush.bf16.msra.mxu0 %v12989
  %13205 = vmatpush.bf16.msra.mxu0 %v12985
  %13206 = vmatpush.bf16.msra.mxu0 %v12981
  %13207 = vmatmul.bf16.gmra.mxu0 %v12527
  %v13208 = vpop.f32.mrf.mxu0
  %v13209 = vadd.f32 %v13196, %v13208
  %v13210 = vpop.f32.mrf.mxu0
  %13211 = vdwg.mxu0
  %13212 = vmatpush.bf16.msra.mxu0 %v13041
  %13213 = vmatpush.bf16.msra.mxu0 %v13037
  %13214 = vmatpush.bf16.msra.mxu0 %v13033
  %13215 = vmatpush.bf16.msra.mxu0 %v13029
  %13216 = vmatpush.bf16.msra.mxu0 %v13025
  %13217 = vmatpush.bf16.msra.mxu0 %v13021
  %13218 = vmatpush.bf16.msra.mxu0 %v13017
  %13219 = vmatpush.bf16.msra.mxu0 %v13013
  %13220 = vmatmul.bf16.gmra.mxu0 %v12528
  %v13221 = vpop.f32.mrf.mxu0
  %v13222 = vadd.f32 %v13209, %v13221
  %v13223 = vpop.f32.mrf.mxu0
  %13224 = vdwg.mxu0
  %13225 = vmatpush.bf16.msra.mxu0 %v12946
  %13226 = vmatpush.bf16.msra.mxu0 %v12942
  %13227 = vmatpush.bf16.msra.mxu0 %v12938
  %13228 = vmatpush.bf16.msra.mxu0 %v12934
  %13229 = vmatpush.bf16.msra.mxu0 %v12930
  %13230 = vmatpush.bf16.msra.mxu0 %v12926
  %13231 = vmatpush.bf16.msra.mxu0 %v12922
  %13232 = vmatpush.bf16.msra.mxu0 %v12918
  %13233 = vmatmul.bf16.gmra.mxu0 %v12525
  %v13234 = vpop.f32.mrf.mxu0
  %v13235 = vadd.f32 %v12512, %v13234
  %v13236 = vpop.f32.mrf.mxu0
  %13237 = vdwg.mxu0
  %13238 = vmatpush.bf16.msra.mxu0 %v12978
  %13239 = vmatpush.bf16.msra.mxu0 %v12974
  %13240 = vmatpush.bf16.msra.mxu0 %v12970
  %13241 = vmatpush.bf16.msra.mxu0 %v12966
  %13242 = vmatpush.bf16.msra.mxu0 %v12962
  %13243 = vmatpush.bf16.msra.mxu0 %v12958
  %13244 = vmatpush.bf16.msra.mxu0 %v12954
  %13245 = vmatpush.bf16.msra.mxu0 %v12950
  %13246 = vmatmul.bf16.gmra.mxu0 %v12526
  %v13247 = vpop.f32.mrf.mxu0
  %v13248 = vadd.f32 %v13235, %v13247
  %v13249 = vpop.f32.mrf.mxu0
  %13250 = vdwg.mxu0
  %13251 = vmatpush.bf16.msra.mxu0 %v13010
  %13252 = vmatpush.bf16.msra.mxu0 %v13006
  %13253 = vmatpush.bf16.msra.mxu0 %v13002
  %13254 = vmatpush.bf16.msra.mxu0 %v12998
  %13255 = vmatpush.bf16.msra.mxu0 %v12994
  %13256 = vmatpush.bf16.msra.mxu0 %v12990
  %13257 = vmatpush.bf16.msra.mxu0 %v12986
  %13258 = vmatpush.bf16.msra.mxu0 %v12982
  %13259 = vmatmul.bf16.gmra.mxu0 %v12527
  %v13260 = vpop.f32.mrf.mxu0
  %v13261 = vadd.f32 %v13248, %v13260
  %v13262 = vpop.f32.mrf.mxu0
  %13263 = vdwg.mxu0
  %13264 = vmatpush.bf16.msra.mxu0 %v13042
  %13265 = vmatpush.bf16.msra.mxu0 %v13038
  %13266 = vmatpush.bf16.msra.mxu0 %v13034
  %13267 = vmatpush.bf16.msra.mxu0 %v13030
  %13268 = vmatpush.bf16.msra.mxu0 %v13026
  %13269 = vmatpush.bf16.msra.mxu0 %v13022
  %13270 = vmatpush.bf16.msra.mxu0 %v13018
  %13271 = vmatpush.bf16.msra.mxu0 %v13014
  %13272 = vmatmul.bf16.gmra.mxu0 %v12528
  %v13273 = vpop.f32.mrf.mxu0
  %v13274 = vadd.f32 %v13261, %v13273
  %v13275 = vpop.f32.mrf.mxu0
  %13276 = vdwg.mxu0
  %13277 = vmatpush.bf16.msra.mxu0 %v12947
  %13278 = vmatpush.bf16.msra.mxu0 %v12943
  %13279 = vmatpush.bf16.msra.mxu0 %v12939
  %13280 = vmatpush.bf16.msra.mxu0 %v12935
  %13281 = vmatpush.bf16.msra.mxu0 %v12931
  %13282 = vmatpush.bf16.msra.mxu0 %v12927
  %13283 = vmatpush.bf16.msra.mxu0 %v12923
  %13284 = vmatpush.bf16.msra.mxu0 %v12919
  %13285 = vmatmul.bf16.gmra.mxu0 %v12525
  %v13286 = vpop.f32.mrf.mxu0
  %v13287 = vadd.f32 %v12513, %v13286
  %v13288 = vpop.f32.mrf.mxu0
  %13289 = vdwg.mxu0
  %13290 = vmatpush.bf16.msra.mxu0 %v12979
  %13291 = vmatpush.bf16.msra.mxu0 %v12975
  %13292 = vmatpush.bf16.msra.mxu0 %v12971
  %13293 = vmatpush.bf16.msra.mxu0 %v12967
  %13294 = vmatpush.bf16.msra.mxu0 %v12963
  %13295 = vmatpush.bf16.msra.mxu0 %v12959
  %13296 = vmatpush.bf16.msra.mxu0 %v12955
  %13297 = vmatpush.bf16.msra.mxu0 %v12951
  %13298 = vmatmul.bf16.gmra.mxu0 %v12526
  %v13299 = vpop.f32.mrf.mxu0
  %v13300 = vadd.f32 %v13287, %v13299
  %v13301 = vpop.f32.mrf.mxu0
  %13302 = vdwg.mxu0
  %13303 = vmatpush.bf16.msra.mxu0 %v13011
  %13304 = vmatpush.bf16.msra.mxu0 %v13007
  %13305 = vmatpush.bf16.msra.mxu0 %v13003
  %13306 = vmatpush.bf16.msra.mxu0 %v12999
  %13307 = vmatpush.bf16.msra.mxu0 %v12995
  %13308 = vmatpush.bf16.msra.mxu0 %v12991
  %13309 = vmatpush.bf16.msra.mxu0 %v12987
  %13310 = vmatpush.bf16.msra.mxu0 %v12983
  %13311 = vmatmul.bf16.gmra.mxu0 %v12527
  %v13312 = vpop.f32.mrf.mxu0
  %v13313 = vadd.f32 %v13300, %v13312
  %v13314 = vpop.f32.mrf.mxu0
  %13315 = vdwg.mxu0
  %13316 = vmatpush.bf16.msra.mxu0 %v13043
  %13317 = vmatpush.bf16.msra.mxu0 %v13039
  %13318 = vmatpush.bf16.msra.mxu0 %v13035
  %13319 = vmatpush.bf16.msra.mxu0 %v13031
  %13320 = vmatpush.bf16.msra.mxu0 %v13027
  %13321 = vmatpush.bf16.msra.mxu0 %v13023
  %13322 = vmatpush.bf16.msra.mxu0 %v13019
  %13323 = vmatpush.bf16.msra.mxu0 %v13015
  %13324 = vmatmul.bf16.gmra.mxu0 %v12528
  %v13325 = vpop.f32.mrf.mxu0
  %v13326 = vadd.f32 %v13313, %v13325
  %v13327 = vpop.f32.mrf.mxu0
  %13328 = vdwg.mxu0
  %13329 = vmatpush.bf16.msra.mxu0 %v12948
  %13330 = vmatpush.bf16.msra.mxu0 %v12944
  %13331 = vmatpush.bf16.msra.mxu0 %v12940
  %13332 = vmatpush.bf16.msra.mxu0 %v12936
  %13333 = vmatpush.bf16.msra.mxu0 %v12932
  %13334 = vmatpush.bf16.msra.mxu0 %v12928
  %13335 = vmatpush.bf16.msra.mxu0 %v12924
  %13336 = vmatpush.bf16.msra.mxu0 %v12920
  %13337 = vmatmul.bf16.gmra.mxu0 %v12525
  %v13338 = vpop.f32.mrf.mxu0
  %v13339 = vadd.f32 %v12514, %v13338
  %v13340 = vpop.f32.mrf.mxu0
  %13341 = vdwg.mxu0
  %13342 = vmatpush.bf16.msra.mxu0 %v12980
  %13343 = vmatpush.bf16.msra.mxu0 %v12976
  %13344 = vmatpush.bf16.msra.mxu0 %v12972
  %13345 = vmatpush.bf16.msra.mxu0 %v12968
  %13346 = vmatpush.bf16.msra.mxu0 %v12964
  %13347 = vmatpush.bf16.msra.mxu0 %v12960
  %13348 = vmatpush.bf16.msra.mxu0 %v12956
  %13349 = vmatpush.bf16.msra.mxu0 %v12952
  %13350 = vmatmul.bf16.gmra.mxu0 %v12526
  %v13351 = vpop.f32.mrf.mxu0
  %v13352 = vadd.f32 %v13339, %v13351
  %v13353 = vpop.f32.mrf.mxu0
  %13354 = vdwg.mxu0
  %13355 = vmatpush.bf16.msra.mxu0 %v13012
  %13356 = vmatpush.bf16.msra.mxu0 %v13008
  %13357 = vmatpush.bf16.msra.mxu0 %v13004
  %13358 = vmatpush.bf16.msra.mxu0 %v13000
  %13359 = vmatpush.bf16.msra.mxu0 %v12996
  %13360 = vmatpush.bf16.msra.mxu0 %v12992
  %13361 = vmatpush.bf16.msra.mxu0 %v12988
  %13362 = vmatpush.bf16.msra.mxu0 %v12984
  %13363 = vmatmul.bf16.gmra.mxu0 %v12527
  %v13364 = vpop.f32.mrf.mxu0
  %v13365 = vadd.f32 %v13352, %v13364
  %v13366 = vpop.f32.mrf.mxu0
  %13367 = vdwg.mxu0
  %13368 = vmatpush.bf16.msra.mxu0 %v13044
  %13369 = vmatpush.bf16.msra.mxu0 %v13040
  %13370 = vmatpush.bf16.msra.mxu0 %v13036
  %13371 = vmatpush.bf16.msra.mxu0 %v13032
  %13372 = vmatpush.bf16.msra.mxu0 %v13028
  %13373 = vmatpush.bf16.msra.mxu0 %v13024
  %13374 = vmatpush.bf16.msra.mxu0 %v13020
  %13375 = vmatpush.bf16.msra.mxu0 %v13016
  %13376 = vmatmul.bf16.gmra.mxu0 %v12528
  %v13377 = vpop.f32.mrf.mxu0
  %v13378 = vadd.f32 %v13365, %v13377
  %v13379 = vpop.f32.mrf.mxu0
  %13380 = vdwg.mxu0
  %v13385 = vrot.slane %v13274, 6
  %v13386 = vrot.slane %v13326, 4
  %v13387 = vrot.slane %v13378, 2
  %v13388 = vsel %vm10756, %v13222, %v13385
  %v13389 = vsel %vm12504, %v13386, %v13387
  %v13390 = vsel %vm10758, %v13388, %v13389
  %13392 = vst [vmem:[%s24 + $0xe] sm:$0xff] %v13390
  %v13393 = vld [vmem:[%s23 + $0x8] sm:$0xf]
  %v13395 = vperm.slane %v13393, 0
  %v13396 = vperm.slane %v13393, 1
  %v13397 = vperm.slane %v13393, 2
  %v13398 = vperm.slane %v13393, 3
  %v13403 = vadd.f32 %v8425, %v13395
  %v13404 = vadd.f32 %v8426, %v13396
  %v13405 = vadd.f32 %v8427, %v13397
  %v13406 = vadd.f32 %v8428, %v13398
  %v13411 = vrot.slane %v13404, 6
  %v13412 = vrot.slane %v13405, 4
  %v13413 = vrot.slane %v13406, 2
  %v13414 = vsel %vm10756, %v13403, %v13411
  %v13415 = vsel %vm12504, %v13412, %v13413
  %v13416 = vsel %vm10758, %v13414, %v13415
  %13418 = vst [vmem:[%s24 + $0x16] sm:$0xff] %v13416
  %v13419 = vld [vmem:[%s23 + $0xc] sm:$0xf]
  %v13421 = vperm.slane %v13419, 0
  %v13422 = vperm.slane %v13419, 1
  %v13423 = vperm.slane %v13419, 2
  %v13424 = vperm.slane %v13419, 3
  %v13429 = vadd.f32 %v8674, %v13421
  %v13430 = vadd.f32 %v8675, %v13422
  %v13431 = vadd.f32 %v8676, %v13423
  %v13432 = vadd.f32 %v8677, %v13424
  %v13437 = vrot.slane %v13430, 6
  %v13438 = vrot.slane %v13431, 4
  %v13439 = vrot.slane %v13432, 2
  %v13440 = vsel %vm10756, %v13429, %v13437
  %v13441 = vsel %vm12504, %v13438, %v13439
  %v13442 = vsel %vm10758, %v13440, %v13441
  %13444 = vst [vmem:[%s24 + $0x1e] sm:$0xff] %v13442
  %v13445 = vld [vmem:[%s23 + $0x10] sm:$0xf]
  %v13447 = vperm.slane %v13445, 0
  %v13448 = vperm.slane %v13445, 1
  %v13449 = vperm.slane %v13445, 2
  %v13450 = vperm.slane %v13445, 3
  %v13455 = vadd.f32 %v10725, %v13447
  %v13456 = vadd.f32 %v10726, %v13448
  %v13457 = vadd.f32 %v10727, %v13449
  %v13458 = vadd.f32 %v10728, %v13450
  %v13463 = vrot.slane %v13456, 6
  %v13464 = vrot.slane %v13457, 4
  %v13465 = vrot.slane %v13458, 2
  %v13466 = vsel %vm10756, %v13455, %v13463
  %v13467 = vsel %vm12504, %v13464, %v13465
  %v13468 = vsel %vm10758, %v13466, %v13467
  %13470 = vst [vmem:[%s24 + $0x26] sm:$0xff] %v13468
  // Predicated region
  $region98: #{smirk_encoder_forward.1} parent=0 // pred_check
    _
  $region99: #{smirk_encoder_forward.1} parent=0 // pred_check_branch
    %13472 = sbr.rel (0) target = $region101
  $region100: #{smirk_encoder_forward.1} parent=0 // pred_region
    _
  $region101: #{smirk_encoder_forward.1} parent=0 // pred_fallthru
    _
  // Predicated region
  $region102: #{smirk_encoder_forward.1} parent=0 // pred_check
    _
  $region103: #{smirk_encoder_forward.1} parent=0 // pred_check_branch
    %13474 = sbr.rel (0) target = $region105
  $region104: #{smirk_encoder_forward.1} parent=0 // pred_region
    _
  $region105: #{smirk_encoder_forward.1} parent=0 // pred_fallthru
    _

</llo_original>
